<compile_context>
chip_gen: v5e
topology: v5e:2x2
jax: 0.10.0
libtpu: 0.0.40
codegen_flags: <defaults>
</compile_context>

<pallas_src>
import functools

import jax
import jax.numpy as jnp
from jax.experimental import pallas as pl
from jax.experimental.pallas import tpu as pltpu

_EPS = 1e-5


def _round_up(v, m):
    return ((v + m - 1) // m) * m


@functools.lru_cache(maxsize=None)
def _vmem_limit_bytes():
    """Generation-aware scoped VMEM limit (conservative, always <= physical)."""
    cap = 64 * 1024 * 1024
    try:
        info = pltpu.get_tpu_info()
        cap = int(getattr(info, "vmem_capacity_bytes", cap)) or cap
    except Exception:
        pass
    # v5e / v6e report ~128 MiB -> 64 MiB scoped; v7x (64 MiB) / unknown -> 48 MiB.
    return 64 * 1024 * 1024 if cap >= 100 * 1024 * 1024 else 48 * 1024 * 1024


def _pick_tm(m, cp, vmem_limit):
    """Row-tile for the flat (M, Cpad) kernels: big, multiple of 8, divides M."""
    cap = max(8, min(2048, vmem_limit // (cp * 2 * 12), m))
    cap -= cap % 8
    cap = max(cap, 8)
    for cand in range(cap, 7, -8):
        if m % cand == 0:
            return cand, m                 # pad-free path
    return cap, _round_up(m, cap)          # ragged path (masked stats)


def _pick_th(h):
    """Row-tile for the 3x3 conv: divides H, <=32, prefer >=2 tiles."""
    best = 1
    for cand in range(1, h + 1):
        if h % cand == 0 and cand <= 32:
            best = cand
    if best == h and h > 1:
        for cand in range(h // 2, 0, -1):
            if h % cand == 0:
                return cand
    return best


# ----------------------------------------------------------------------------
# Kernel 1a: 1x1 conv (pointwise matmul) + bias + per-tile BN partial sums.
# ----------------------------------------------------------------------------
def _conv1x1_kernel(x_ref, w_ref, b_ref, y_ref, stats_ref, *, m_true):
    acc = jnp.dot(x_ref[...], w_ref[...],
                  preferred_element_type=jnp.float32) + b_ref[...]
    y_ref[...] = acc.astype(y_ref.dtype)
    if m_true is not None:                 # ragged last tile: mask padded rows
        tm = x_ref.shape[0]
        rows = pl.program_id(0) * tm + jax.lax.broadcasted_iota(
            jnp.int32, (tm, 1), 0)
        acc = jnp.where(rows < m_true, acc, 0.0)
    stats_ref[...] = jnp.stack([jnp.sum(acc, 0), jnp.sum(acc * acc, 0)], 0)


# ----------------------------------------------------------------------------
# Kernel 1b: fused [previous repeat's BN2-affine + LeakyReLU (+residual)]
#            -> 1x1 conv.  Also emits the activated x (new residual stream).
# ----------------------------------------------------------------------------
def _epi_conv1x1_kernel(*refs, m_true, use_residual):
    if use_residual:
        (y2_ref, sc_ref, sh_ref, res_ref, w_ref, b_ref,
         y1_ref, stats_ref, x_ref) = refs
    else:
        (y2_ref, sc_ref, sh_ref, w_ref, b_ref,
         y1_ref, stats_ref, x_ref) = refs
    z = y2_ref[...].astype(jnp.float32) * sc_ref[...] + sh_ref[...]
    z = jnp.where(z > 0, z, 0.1 * z)
    if use_residual:
        z = z + res_ref[...].astype(jnp.float32)
    xact = z.astype(jnp.bfloat16)
    x_ref[...] = xact
    acc = jnp.dot(xact, w_ref[...],
                  preferred_element_type=jnp.float32) + b_ref[...]
    y1_ref[...] = acc.astype(y1_ref.dtype)
    if m_true is not None:
        tm = xact.shape[0]
        rows = pl.program_id(0) * tm + jax.lax.broadcasted_iota(
            jnp.int32, (tm, 1), 0)
        acc = jnp.where(rows < m_true, acc, 0.0)
    stats_ref[...] = jnp.stack([jnp.sum(acc, 0), jnp.sum(acc * acc, 0)], 0)


# ----------------------------------------------------------------------------
# Kernel 2: fused [BN1-affine + LeakyReLU] -> 3x3 conv (padding=1) on a row
# tile with a 1-row halo.  grid = (N, H//TH), both axes parallel.
# ----------------------------------------------------------------------------
def _conv3x3_kernel(y1m_ref, y1t_ref, y1b_ref, sc_ref, sh_ref, w_ref, b_ref,
                    y2_ref, stats_ref, xp_ref, *, th, wimg):
    wp = wimg + 2
    c2p = y1m_ref.shape[-1]
    cp = y2_ref.shape[-1]
    i = pl.program_id(1)
    last = pl.num_programs(1) - 1
    sc = sc_ref[0]
    sh = sh_ref[0]

    def bn_act(v):
        z = v.astype(jnp.float32) * sc + sh
        return jnp.where(z > 0, z, 0.1 * z)

    # Halo rows at image boundaries are zero padding, not neighbours.
    a_top = (bn_act(y1t_ref[...]) *
             (i > 0).astype(jnp.float32)).astype(jnp.bfloat16)     # (1, W, C2p)
    a_mid = bn_act(y1m_ref[...]).astype(jnp.bfloat16)              # (TH, W, C2p)
    a_bot = (bn_act(y1b_ref[...]) *
             (i < last).astype(jnp.float32)).astype(jnp.bfloat16)  # (1, W, C2p)

    # Pack the (TH+2, W+2, C2p) zero-bordered block ONCE, flattened, into VMEM.
    rows = jnp.concatenate([a_top, a_mid, a_bot], axis=0)          # (TH+2, W, .)
    zcol = jnp.zeros((th + 2, 1, c2p), jnp.bfloat16)
    padded = jnp.concatenate([zcol, rows, zcol], axis=1)           # (TH+2, W+2, .)
    xp_ref[pl.ds(0, (th + 2) * wp), :] = padded.reshape((th + 2) * wp, c2p)

    # 9-tap shifted-window matmuls: each tap is a CONTIGUOUS row-offset window
    # of the flat scratch; accumulate in a local f32 value (no VMEM RMW).  The
    # 2 halo columns per output row are garbage and discarded below.
    # TODO(synk): on v6e/v7x stack the 3 kx-taps along K (K=3*C2p) to run the
    # 256-deep MXU at full contraction depth.
    nwide = th * wp
    acc = jnp.zeros((nwide, cp), jnp.float32)
    for t in range(9):
        ky, kx = divmod(t, 3)
        tap = xp_ref[pl.ds(ky * wp + kx, nwide), :]
        acc = acc + jnp.dot(tap, w_ref[t], preferred_element_type=jnp.float32)

    valid = acc.reshape(th, wp, cp)[:, :wimg, :] + b_ref[0]        # (TH, W, Cp)
    y2_ref[...] = valid.astype(y2_ref.dtype)
    v2 = valid.reshape(th * wimg, cp)
    stats_ref[...] = jnp.stack([jnp.sum(v2, 0), jnp.sum(v2 * v2, 0)], 0)


# ----------------------------------------------------------------------------
# Kernel 3: trailing epilogue for the LAST repeat only.
# ----------------------------------------------------------------------------
def _bn_leaky_res_kernel(y_ref, sc_ref, sh_ref, res_ref, out_ref):
    z = y_ref[...].astype(jnp.float32) * sc_ref[...] + sh_ref[...]
    z = jnp.where(z > 0, z, 0.1 * z)
    out_ref[...] = (z + res_ref[...].astype(jnp.float32)).astype(out_ref.dtype)


def _bn_leaky_kernel(y_ref, sc_ref, sh_ref, out_ref):
    z = y_ref[...].astype(jnp.float32) * sc_ref[...] + sh_ref[...]
    out_ref[...] = jnp.where(z > 0, z, 0.1 * z).astype(out_ref.dtype)


# ----------------------------------------------------------------------------
# pallas_call wrappers
# ----------------------------------------------------------------------------
def _conv1x1(x_flat, w_mat, bias, tm, m_true):
    mpad, cin_p = x_flat.shape
    cout_p = w_mat.shape[1]
    n_tiles = mpad // tm
    kernel = functools.partial(
        _conv1x1_kernel, m_true=None if mpad == m_true else m_true)
    return pl.pallas_call(
        kernel,
        out_shape=(jax.ShapeDtypeStruct((mpad, cout_p), jnp.bfloat16),
                   jax.ShapeDtypeStruct((n_tiles, 2, cout_p), jnp.float32)),
        grid_spec=pltpu.PrefetchScalarGridSpec(
            num_scalar_prefetch=0,
            grid=(n_tiles,),
            in_specs=[
                pl.BlockSpec((tm, cin_p), lambda i: (i, 0)),
                pl.BlockSpec((cin_p, cout_p), lambda i: (0, 0)),
                pl.BlockSpec((1, cout_p), lambda i: (0, 0)),
            ],
            out_specs=[
                pl.BlockSpec((tm, cout_p), lambda i: (i, 0)),
                pl.BlockSpec((None, 2, cout_p), lambda i: (i, 0, 0)),
            ]),
        compiler_params=pltpu.CompilerParams(
            dimension_semantics=("parallel",),
            vmem_limit_bytes=_vmem_limit_bytes()),
    )(x_flat, w_mat, bias)


def _epi_conv1x1(y2_flat, scale, shift, res, w_mat, bias, tm, m_true,
                 use_residual):
    mpad, cp = y2_flat.shape
    c2p = w_mat.shape[1]
    n_tiles = mpad // tm
    kernel = functools.partial(
        _epi_conv1x1_kernel,
        m_true=None if mpad == m_true else m_true,
        use_residual=use_residual)
    in_specs = [pl.BlockSpec((tm, cp), lambda i: (i, 0)),
                pl.BlockSpec((1, cp), lambda i: (0, 0)),
                pl.BlockSpec((1, cp), lambda i: (0, 0))]
    args = [y2_flat, scale, shift]
    if use_residual:
        in_specs.append(pl.BlockSpec((tm, cp), lambda i: (i, 0)))
        args.append(res)
    in_specs += [pl.BlockSpec((cp, c2p), lambda i: (0, 0)),
                 pl.BlockSpec((1, c2p), lambda i: (0, 0))]
    args += [w_mat, bias]
    return pl.pallas_call(
        kernel,
        out_shape=(jax.ShapeDtypeStruct((mpad, c2p), jnp.bfloat16),
                   jax.ShapeDtypeStruct((n_tiles, 2, c2p), jnp.float32),
                   jax.ShapeDtypeStruct((mpad, cp), jnp.bfloat16)),
        grid_spec=pltpu.PrefetchScalarGridSpec(
            num_scalar_prefetch=0,
            grid=(n_tiles,),
            in_specs=in_specs,
            out_specs=[
                pl.BlockSpec((tm, c2p), lambda i: (i, 0)),
                pl.BlockSpec((None, 2, c2p), lambda i: (i, 0, 0)),
                pl.BlockSpec((tm, cp), lambda i: (i, 0)),
            ]),
        compiler_params=pltpu.CompilerParams(
            dimension_semantics=("parallel",),
            vmem_limit_bytes=_vmem_limit_bytes()),
    )(*args)


def _conv3x3(y1_img, scale1, shift1, w_mat, bias, th):
    n, h, w, c2p = y1_img.shape
    cp = w_mat.shape[-1]
    nr = h // th
    wp = w + 2
    kernel = functools.partial(_conv3x3_kernel, th=th, wimg=w)
    return pl.pallas_call(
        kernel,
        out_shape=(jax.ShapeDtypeStruct((n, h, w, cp), jnp.bfloat16),
                   jax.ShapeDtypeStruct((n * nr, 2, cp), jnp.float32)),
        grid_spec=pltpu.PrefetchScalarGridSpec(
            num_scalar_prefetch=0,
            grid=(n, nr),
            in_specs=[
                pl.BlockSpec((None, th, w, c2p), lambda b, i: (b, i, 0, 0)),
                pl.BlockSpec((None, 1, w, c2p),
                             lambda b, i: (b, jnp.maximum(i * th - 1, 0), 0, 0)),
                pl.BlockSpec((None, 1, w, c2p),
                             lambda b, i: (b, jnp.minimum(i * th + th, h - 1),
                                           0, 0)),
                pl.BlockSpec((1, c2p), lambda b, i: (0, 0)),
                pl.BlockSpec((1, c2p), lambda b, i: (0, 0)),
                pl.BlockSpec((9, c2p, cp), lambda b, i: (0, 0, 0)),
                pl.BlockSpec((1, cp), lambda b, i: (0, 0)),
            ],
            out_specs=[
                pl.BlockSpec((None, th, w, cp), lambda b, i: (b, i, 0, 0)),
                pl.BlockSpec((None, 2, cp), lambda b, i: (b * nr + i, 0, 0)),
            ],
            scratch_shapes=[
                pltpu.VMEM(((th + 2) * wp + 8, c2p), jnp.bfloat16),
            ]),
        compiler_params=pltpu.CompilerParams(
            dimension_semantics=("parallel", "parallel"),
            vmem_limit_bytes=_vmem_limit_bytes()),
    )(y1_img, y1_img, y1_img, scale1, shift1, w_mat, bias)


def _bn_act(y_flat, scale, shift, res, tm):
    mpad, cp = y_flat.shape
    n_tiles = mpad // tm
    cparams = pltpu.CompilerParams(dimension_semantics=("parallel",),
                                   vmem_limit_bytes=_vmem_limit_bytes())
    out_shape = jax.ShapeDtypeStruct((mpad, cp), jnp.bfloat16)
    if res is not None:
        return pl.pallas_call(
            _bn_leaky_res_kernel,
            out_shape=out_shape,
            grid_spec=pltpu.PrefetchScalarGridSpec(
                num_scalar_prefetch=0,
                grid=(n_tiles,),
                in_specs=[
                    pl.BlockSpec((tm, cp), lambda i: (i, 0)),
                    pl.BlockSpec((1, cp), lambda i: (0, 0)),
                    pl.BlockSpec((1, cp), lambda i: (0, 0)),
                    pl.BlockSpec((tm, cp), lambda i: (i, 0)),
                ],
                out_specs=pl.BlockSpec((tm, cp), lambda i: (i, 0))),
            compiler_params=cparams,
        )(y_flat, scale, shift, res)
    return pl.pallas_call(
        _bn_leaky_kernel,
        out_shape=out_shape,
        grid_spec=pltpu.PrefetchScalarGridSpec(
            num_scalar_prefetch=0,
            grid=(n_tiles,),
            in_specs=[
                pl.BlockSpec((tm, cp), lambda i: (i, 0)),
                pl.BlockSpec((1, cp), lambda i: (0, 0)),
                pl.BlockSpec((1, cp), lambda i: (0, 0)),
            ],
            out_specs=pl.BlockSpec((tm, cp), lambda i: (i, 0))),
        compiler_params=cparams,
    )(y_flat, scale, shift)


def _scale_shift(stats, count, gamma, beta, cpad):
    """Fold batch statistics + BN affine into (scale, shift) (f32, padded)."""
    tot = jnp.sum(stats, axis=0)                          # (2, Cpad)
    mean = tot[0] / count
    var = jnp.maximum(tot[1] / count - mean * mean, 0.0)  # guard cancellation
    g = jnp.pad(gamma.astype(jnp.float32), (0, cpad - gamma.shape[0]))
    b = jnp.pad(beta.astype(jnp.float32), (0, cpad - beta.shape[0]))
    scale = g * jax.lax.rsqrt(var + _EPS)
    shift = b - mean * scale
    return scale.reshape(1, cpad), shift.reshape(1, cpad)


# ----------------------------------------------------------------------------
# Forward pass for the whole ResidualBlock.
# params: tuple of per-repeat tuples (w1, b1, g1, be1, w2, b2, g2, be2)
#   w1: (C//2, C, 1, 1)  b1,g1,be1: (C//2,)
#   w2: (C, C//2, 3, 3)  b2,g2,be2: (C,)
# ----------------------------------------------------------------------------
@functools.partial(jax.jit, static_argnames=("use_residual",))
def residual_block_forward(x_nchw, params, use_residual=True):
    if len(params) == 0:
        return x_nchw.astype(jnp.float32)

    n, c, h, w = x_nchw.shape
    c2 = c // 2
    cp = _round_up(c, 128)         # lane-dense channel padding
    c2p = _round_up(c2, 128)
    m = n * h * w
    tm, mpad = _pick_tm(m, cp, _vmem_limit_bytes())
    th = _pick_th(h)

    # NCHW -> NHWC once; residual stream lives as a lane-dense (M, Cpad) slab.
    x_nhwc = jnp.transpose(x_nchw, (0, 2, 3, 1)).astype(jnp.bfloat16)
    x_flat = jnp.pad(x_nhwc, ((0, 0), (0, 0), (0, 0), (0, cp - c))).reshape(m, cp)
    if mpad != m:
        x_flat = jnp.pad(x_flat, ((0, mpad - m), (0, 0)))

    def pad_rows(a):
        return a if mpad == m else jnp.pad(a, ((0, mpad - m), (0, 0)))

    y2_flat = scale2 = shift2 = None
    residual = x_flat

    for r, (w1, b1, g1, be1, w2, b2, g2, be2) in enumerate(params):
        w1m = jnp.pad(jnp.transpose(w1[:, :, 0, 0], (1, 0)),
                      ((0, cp - c), (0, c2p - c2))).astype(jnp.bfloat16)
        b1p = jnp.pad(b1.astype(jnp.float32), (0, c2p - c2)).reshape(1, c2p)
        w2m = jnp.pad(jnp.transpose(w2, (2, 3, 1, 0)).reshape(9, c2, c),
                      ((0, 0), (0, c2p - c2), (0, cp - c))).astype(jnp.bfloat16)
        b2p = jnp.pad(b2.astype(jnp.float32), (0, cp - c)).reshape(1, cp)

        # ---- 1x1 conv (C -> C/2) + per-tile BN stats; for r>0 the previous
        # repeat's BN2-affine + LeakyReLU (+ residual) is fused in. ------------
        if r == 0:
            y1, st1 = _conv1x1(x_flat, w1m, b1p, tm, m)
        else:
            y1, st1, xact = _epi_conv1x1(y2_flat, scale2, shift2,
                                         residual if use_residual else None,
                                         w1m, b1p, tm, m, use_residual)
            residual = xact
        scale1, shift1 = _scale_shift(st1, m, g1, be1, c2p)

        # ---- [BN1 + LeakyReLU fused] -> 3x3 conv (C/2 -> C, padding=1) ------
        y1_img = (y1 if mpad == m else y1[:m]).reshape(n, h, w, c2p)
        y2_img, st2 = _conv3x3(y1_img, scale1, shift1, w2m, b2p, th)
        scale2, shift2 = _scale_shift(st2, m, g2, be2, cp)
        y2_flat = pad_rows(y2_img.reshape(m, cp))

    # ---- trailing epilogue of the last repeat ------------------------------
    out = _bn_act(y2_flat, scale2, shift2,
                  residual if use_residual else None, tm)
    out = out if mpad == m else out[:m]
    out_nhwc = out.reshape(n, h, w, cp)[..., :c].astype(jnp.float32)
    return jnp.transpose(out_nhwc, (0, 3, 1, 2))


# ----------------------------------------------------------------------------
# Pure-JAX f32 reference (conv + train-mode BN + LeakyReLU + residual).
# ----------------------------------------------------------------------------
def _reference(x, params, use_residual=True, eps=_EPS):
    def bn_lrelu(y, g, b):
        mean = jnp.mean(y, axis=(0, 2, 3), keepdims=True)
        var = jnp.mean((y - mean) ** 2, axis=(0, 2, 3), keepdims=True)
        z = (y - mean) / jnp.sqrt(var + eps)
        z = z * g[None, :, None, None] + b[None, :, None, None]
        return jnp.where(z > 0, z, 0.1 * z)

    for (w1, b1, g1, be1, w2, b2, g2, be2) in params:
        res = x
        y = jax.lax.conv_general_dilated(
            x, w1, (1, 1), "VALID",
            dimension_numbers=("NCHW", "OIHW", "NCHW")) + b1[None, :, None, None]
        y = bn_lrelu(y, g1, be1)
        y = jax.lax.conv_general_dilated(
            y, w2, (1, 1), "SAME",
            dimension_numbers=("NCHW", "OIHW", "NCHW")) + b2[None, :, None, None]
        y = bn_lrelu(y, g2, be2)
        x = y + res if use_residual else y
    return x


if __name__ == "__main__":
    key = jax.random.PRNGKey(0)
    N, C, H, W = 2, 8, 16, 16
    NUM_REPEATS = 2
    C2 = C // 2

    keys = jax.random.split(key, 1 + 8 * NUM_REPEATS)
    x = jax.random.normal(keys[0], (N, C, H, W), dtype=jnp.float32)

    params = []
    ki = 1
    for _ in range(NUM_REPEATS):
        b1_bound = 1.0 / (C ** 0.5)
        b2_bound = 1.0 / ((C2 * 9) ** 0.5)
        w1 = jax.random.uniform(keys[ki], (C2, C, 1, 1), jnp.float32,
                                -b1_bound, b1_bound); ki += 1
        b1 = jax.random.uniform(keys[ki], (C2,), jnp.float32,
                                -b1_bound, b1_bound); ki += 1
        g1 = 1.0 + 0.1 * jax.random.normal(keys[ki], (C2,), jnp.float32); ki += 1
        be1 = 0.1 * jax.random.normal(keys[ki], (C2,), jnp.float32); ki += 1
        w2 = jax.random.uniform(keys[ki], (C, C2, 3, 3), jnp.float32,
                                -b2_bound, b2_bound); ki += 1
        b2 = jax.random.uniform(keys[ki], (C,), jnp.float32,
                                -b2_bound, b2_bound); ki += 1
        g2 = 1.0 + 0.1 * jax.random.normal(keys[ki], (C,), jnp.float32); ki += 1
        be2 = 0.1 * jax.random.normal(keys[ki], (C,), jnp.float32); ki += 1
        params.append((w1, b1, g1, be1, w2, b2, g2, be2))
    params = tuple(params)

    out = residual_block_forward(x, params, use_residual=True)
    out = jax.block_until_ready(out)

    ref = _reference(x, params, use_residual=True)
    assert out.shape == (N, C, H, W)
    max_err = float(jnp.max(jnp.abs(out - ref)))
    rel_rms = float(jnp.sqrt(jnp.mean((out - ref) ** 2)
                             / (jnp.mean(ref ** 2) + 1e-12)))
    # bf16 matmul operands / bf16 intermediates -> loosened tolerance vs f32 ref
    assert rel_rms < 5e-2 and max_err < 3e-1, \
        f"mismatch vs reference: rel_rms={rel_rms:.4f}, max_abs={max_err:.4f}"

    print("KERNEL_OK")
</pallas_src>

<mosaic_0001>
module attributes {stable_mosaic.version = 11 : i64} {
  func.func @_conv1x1_kernel(%arg0: i32, %arg1: memref<512x128xbf16, #tpu.memory_space<vmem>>, %arg2: memref<128x128xbf16, #tpu.memory_space<vmem>>, %arg3: memref<1x128xf32, #tpu.memory_space<vmem>>, %arg4: memref<512x128xbf16, #tpu.memory_space<vmem>>, %arg5: memref<1x2x128xf32, #tpu.memory_space<vmem>>) attributes {dimension_semantics = [#tpu.dimension_semantics<parallel>], iteration_bounds = array<i64: 1>, scalar_prefetch = 0 : i64, scratch_operands = 0 : i64, tpu.core_type = #tpu.core_type<tc>, window_params = [{transform_indices = @transform_0, window_bounds = array<i64: 512, 128>}, {pipeline_mode = #tpu.pipeline_mode<synchronous>, transform_indices = @transform_1, window_bounds = array<i64: 128, 128>}, {pipeline_mode = #tpu.pipeline_mode<synchronous>, transform_indices = @transform_2, window_bounds = array<i64: 1, 128>}, {transform_indices = @transform_3, window_bounds = array<i64: 512, 128>}, {transform_indices = @transform_4, window_bounds = array<i64: 1, 2, 128>}]} {
    %c0 = arith.constant 0 : index
    %c0_0 = arith.constant 0 : index
    %0 = vector.load %arg1[%c0, %c0_0] : memref<512x128xbf16, #tpu.memory_space<vmem>>, vector<512x128xbf16>
    %c0_1 = arith.constant 0 : index
    %c0_2 = arith.constant 0 : index
    %1 = vector.load %arg2[%c0_1, %c0_2] : memref<128x128xbf16, #tpu.memory_space<vmem>>, vector<128x128xbf16>
    %cst = arith.constant dense<0.000000e+00> : vector<512x128xf32>
    %2 = tpu.matmul %0, %1, %cst {dimension_numbers = #tpu.dot_dimension_numbers<[1], [0], [0], [1], [0, 0, 1, 1], [], []>} : vector<512x128xbf16>, vector<128x128xbf16>, vector<512x128xf32> -> vector<512x128xf32>
    %c0_3 = arith.constant 0 : index
    %c0_4 = arith.constant 0 : index
    %3 = vector.load %arg3[%c0_3, %c0_4] : memref<1x128xf32, #tpu.memory_space<vmem>>, vector<1x128xf32>
    %4 = vector.broadcast %3 : vector<1x128xf32> to vector<512x128xf32>
    %5 = arith.addf %2, %4 : vector<512x128xf32>
    %6 = arith.truncf %5 : vector<512x128xf32> to vector<512x128xbf16>
    %c0_5 = arith.constant 0 : index
    %c0_6 = arith.constant 0 : index
    %7 = vector.load %arg4[%c0_5, %c0_6] : memref<512x128xbf16, #tpu.memory_space<vmem>>, vector<512x128xbf16>
    tpu.vector_store %arg4[%c0_5, %c0_6], %6 {strides = array<i32>} : memref<512x128xbf16, #tpu.memory_space<vmem>>, vector<512x128xbf16>,
    %cst_7 = arith.constant dense<0.000000e+00> : vector<128xf32>
    %8 = vector.multi_reduction <add>, %5, %cst_7 [0] : vector<512x128xf32> to vector<128xf32>
    %9 = arith.mulf %5, %5 : vector<512x128xf32>
    %cst_8 = arith.constant dense<0.000000e+00> : vector<128xf32>
    %10 = vector.multi_reduction <add>, %9, %cst_8 [0] : vector<512x128xf32> to vector<128xf32>
    %11 = vector.shape_cast %8 : vector<128xf32> to vector<1x128xf32>
    %12 = vector.shape_cast %10 : vector<128xf32> to vector<1x128xf32>
    %13 = tpu.concatenate %11, %12 in 0 : vector<1x128xf32>, vector<1x128xf32> -> vector<2x128xf32>
    %c0_9 = arith.constant 0 : index
    %c0_10 = arith.constant 0 : index
    %c0_11 = arith.constant 0 : index
    %14 = vector.load %arg5[%c0_9, %c0_10, %c0_11] : memref<1x2x128xf32, #tpu.memory_space<vmem>>, vector<1x2x128xf32>
    %15 = vector.shape_cast %14 : vector<1x2x128xf32> to vector<2x128xf32>
    %16 = vector.shape_cast %13 : vector<2x128xf32> to vector<1x2x128xf32>
    tpu.vector_store %arg5[%c0_9, %c0_10, %c0_11], %16 {strides = array<i32>} : memref<1x2x128xf32, #tpu.memory_space<vmem>>, vector<1x2x128xf32>,
    return
  }
  func.func @transform_0(%arg0: i32) -> (i32, i32) {
    %c0_i32 = arith.constant 0 : i32
    %c0_i32_0 = arith.constant 0 : i32
    return %arg0, %c0_i32 : i32, i32
  }
  func.func @transform_1(%arg0: i32) -> (i32, i32) {
    %c0_i32 = arith.constant 0 : i32
    %c0_i32_0 = arith.constant 0 : i32
    %c0_i32_1 = arith.constant 0 : i32
    return %c0_i32, %c0_i32_0 : i32, i32
  }
  func.func @transform_2(%arg0: i32) -> (i32, i32) {
    %c0_i32 = arith.constant 0 : i32
    %c0_i32_0 = arith.constant 0 : i32
    %c0_i32_1 = arith.constant 0 : i32
    return %c0_i32, %c0_i32_0 : i32, i32
  }
  func.func @transform_3(%arg0: i32) -> (i32, i32) {
    %c0_i32 = arith.constant 0 : i32
    %c0_i32_0 = arith.constant 0 : i32
    return %arg0, %c0_i32 : i32, i32
  }
  func.func @transform_4(%arg0: i32) -> (i32, i32, i32) {
    %c0_i32 = arith.constant 0 : i32
    %c0_i32_0 = arith.constant 0 : i32
    %c0_i32_1 = arith.constant 0 : i32
    return %arg0, %c0_i32, %c0_i32_0 : i32, i32, i32
  }
}

module attributes {stable_mosaic.version = 11 : i64} {
  func.func @_conv3x3_kernel(%arg0: i32, %arg1: i32, %arg2: memref<1x8x16x128xbf16, #tpu.memory_space<vmem>>, %arg3: memref<1x1x16x128xbf16, #tpu.memory_space<vmem>>, %arg4: memref<1x1x16x128xbf16, #tpu.memory_space<vmem>>, %arg5: memref<1x128xf32, #tpu.memory_space<vmem>>, %arg6: memref<1x128xf32, #tpu.memory_space<vmem>>, %arg7: memref<9x128x128xbf16, #tpu.memory_space<vmem>>, %arg8: memref<1x128xf32, #tpu.memory_space<vmem>>, %arg9: memref<1x8x16x128xbf16, #tpu.memory_space<vmem>>, %arg10: memref<1x2x128xf32, #tpu.memory_space<vmem>>, %arg11: memref<188x128xbf16, #tpu.memory_space<vmem>>) attributes {dimension_semantics = [#tpu.dimension_semantics<parallel>, #tpu.dimension_semantics<parallel>], iteration_bounds = array<i64: 2, 2>, scalar_prefetch = 0 : i64, scratch_operands = 1 : i64, tpu.core_type = #tpu.core_type<tc>, window_params = [{transform_indices = @transform_0, window_bounds = array<i64: 1, 8, 16, 128>}, {transform_indices = @transform_1, window_bounds = array<i64: 1, 1, 16, 128>}, {transform_indices = @transform_2, window_bounds = array<i64: 1, 1, 16, 128>}, {pipeline_mode = #tpu.pipeline_mode<synchronous>, transform_indices = @transform_3, window_bounds = array<i64: 1, 128>}, {pipeline_mode = #tpu.pipeline_mode<synchronous>, transform_indices = @transform_4, window_bounds = array<i64: 1, 128>}, {pipeline_mode = #tpu.pipeline_mode<synchronous>, transform_indices = @transform_5, window_bounds = array<i64: 9, 128, 128>}, {pipeline_mode = #tpu.pipeline_mode<synchronous>, transform_indices = @transform_6, window_bounds = array<i64: 1, 128>}, {transform_indices = @transform_7, window_bounds = array<i64: 1, 8, 16, 128>}, {transform_indices = @transform_8, window_bounds = array<i64: 1, 2, 128>}]} {
    %c0 = arith.constant 0 : index
    %c0_0 = arith.constant 0 : index
    %0 = vector.load %arg5[%c0, %c0_0] : memref<1x128xf32, #tpu.memory_space<vmem>>, vector<1x128xf32>
    %1 = vector.shape_cast %0 : vector<1x128xf32> to vector<128xf32>
    %c0_1 = arith.constant 0 : index
    %c0_2 = arith.constant 0 : index
    %2 = vector.load %arg6[%c0_1, %c0_2] : memref<1x128xf32, #tpu.memory_space<vmem>>, vector<1x128xf32>
    %3 = vector.shape_cast %2 : vector<1x128xf32> to vector<128xf32>
    %c0_3 = arith.constant 0 : index
    %c0_4 = arith.constant 0 : index
    %c0_5 = arith.constant 0 : index
    %c0_6 = arith.constant 0 : index
    %4 = vector.load %arg3[%c0_3, %c0_4, %c0_5, %c0_6] : memref<1x1x16x128xbf16, #tpu.memory_space<vmem>>, vector<1x1x16x128xbf16>
    %5 = vector.shape_cast %4 : vector<1x1x16x128xbf16> to vector<1x16x128xbf16>
    %6 = arith.extf %5 : vector<1x16x128xbf16> to vector<1x16x128xf32>
    %7 = vector.shape_cast %1 : vector<128xf32> to vector<1x1x128xf32>
    %8 = vector.broadcast %7 : vector<1x1x128xf32> to vector<1x16x128xf32>
    %9 = arith.mulf %6, %8 : vector<1x16x128xf32>
    %10 = vector.shape_cast %3 : vector<128xf32> to vector<1x1x128xf32>
    %11 = vector.broadcast %10 : vector<1x1x128xf32> to vector<1x16x128xf32>
    %12 = arith.addf %9, %11 : vector<1x16x128xf32>
    %cst = arith.constant 0.000000e+00 : f32
    %13 = vector.broadcast %cst : f32 to vector<1x16x128xf32>
    %14 = arith.cmpf ogt, %12, %13 : vector<1x16x128xf32>
    %cst_7 = arith.constant 1.000000e-01 : f32
    %15 = vector.broadcast %cst_7 : f32 to vector<1x16x128xf32>
    %16 = arith.mulf %15, %12 : vector<1x16x128xf32>
    %17 = arith.select %14, %12, %16 : vector<1x16x128xi1>, vector<1x16x128xf32>
    %c0_i32 = arith.constant 0 : i32
    %18 = arith.cmpi sgt, %arg1, %c0_i32 : i32
    %19 = arith.extui %18 : i1 to i32
    %20 = arith.sitofp %19 : i32 to f32
    %21 = vector.broadcast %20 : f32 to vector<1x16x128xf32>
    %22 = arith.mulf %17, %21 : vector<1x16x128xf32>
    %23 = arith.truncf %22 : vector<1x16x128xf32> to vector<1x16x128xbf16>
    %c0_8 = arith.constant 0 : index
    %c0_9 = arith.constant 0 : index
    %c0_10 = arith.constant 0 : index
    %c0_11 = arith.constant 0 : index
    %24 = vector.load %arg2[%c0_8, %c0_9, %c0_10, %c0_11] : memref<1x8x16x128xbf16, #tpu.memory_space<vmem>>, vector<1x8x16x128xbf16>
    %25 = vector.shape_cast %24 : vector<1x8x16x128xbf16> to vector<8x16x128xbf16>
    %26 = arith.extf %25 : vector<8x16x128xbf16> to vector<8x16x128xf32>
    %27 = vector.shape_cast %1 : vector<128xf32> to vector<1x1x128xf32>
    %28 = vector.broadcast %27 : vector<1x1x128xf32> to vector<8x16x128xf32>
    %29 = arith.mulf %26, %28 : vector<8x16x128xf32>
    %30 = vector.shape_cast %3 : vector<128xf32> to vector<1x1x128xf32>
    %31 = vector.broadcast %30 : vector<1x1x128xf32> to vector<8x16x128xf32>
    %32 = arith.addf %29, %31 : vector<8x16x128xf32>
    %cst_12 = arith.constant 0.000000e+00 : f32
    %33 = vector.broadcast %cst_12 : f32 to vector<8x16x128xf32>
    %34 = arith.cmpf ogt, %32, %33 : vector<8x16x128xf32>
    %cst_13 = arith.constant 1.000000e-01 : f32
    %35 = vector.broadcast %cst_13 : f32 to vector<8x16x128xf32>
    %36 = arith.mulf %35, %32 : vector<8x16x128xf32>
    %37 = arith.select %34, %32, %36 : vector<8x16x128xi1>, vector<8x16x128xf32>
    %38 = arith.truncf %37 : vector<8x16x128xf32> to vector<8x16x128xbf16>
    %c0_14 = arith.constant 0 : index
    %c0_15 = arith.constant 0 : index
    %c0_16 = arith.constant 0 : index
    %c0_17 = arith.constant 0 : index
    %39 = vector.load %arg4[%c0_14, %c0_15, %c0_16, %c0_17] : memref<1x1x16x128xbf16, #tpu.memory_space<vmem>>, vector<1x1x16x128xbf16>
    %40 = vector.shape_cast %39 : vector<1x1x16x128xbf16> to vector<1x16x128xbf16>
    %41 = arith.extf %40 : vector<1x16x128xbf16> to vector<1x16x128xf32>
    %42 = vector.shape_cast %1 : vector<128xf32> to vector<1x1x128xf32>
    %43 = vector.broadcast %42 : vector<1x1x128xf32> to vector<1x16x128xf32>
    %44 = arith.mulf %41, %43 : vector<1x16x128xf32>
    %45 = vector.shape_cast %3 : vector<128xf32> to vector<1x1x128xf32>
    %46 = vector.broadcast %45 : vector<1x1x128xf32> to vector<1x16x128xf32>
    %47 = arith.addf %44, %46 : vector<1x16x128xf32>
    %cst_18 = arith.constant 0.000000e+00 : f32
    %48 = vector.broadcast %cst_18 : f32 to vector<1x16x128xf32>
    %49 = arith.cmpf ogt, %47, %48 : vector<1x16x128xf32>
    %cst_19 = arith.constant 1.000000e-01 : f32
    %50 = vector.broadcast %cst_19 : f32 to vector<1x16x128xf32>
    %51 = arith.mulf %50, %47 : vector<1x16x128xf32>
    %52 = arith.select %49, %47, %51 : vector<1x16x128xi1>, vector<1x16x128xf32>
    %c1_i32 = arith.constant 1 : i32
    %53 = arith.cmpi slt, %arg1, %c1_i32 : i32
    %54 = arith.extui %53 : i1 to i32
    %55 = arith.sitofp %54 : i32 to f32
    %56 = vector.broadcast %55 : f32 to vector<1x16x128xf32>
    %57 = arith.mulf %52, %56 : vector<1x16x128xf32>
    %58 = arith.truncf %57 : vector<1x16x128xf32> to vector<1x16x128xbf16>
    %59 = tpu.concatenate %23, %38, %58 in 0 : vector<1x16x128xbf16>, vector<8x16x128xbf16>, vector<1x16x128xbf16> -> vector<10x16x128xbf16>
    %cst_20 = arith.constant 0.000000e+00 : bf16
    %60 = vector.broadcast %cst_20 : bf16 to vector<10x1x128xbf16>
    %61 = tpu.concatenate %60, %59, %60 in 1 : vector<10x1x128xbf16>, vector<10x16x128xbf16>, vector<10x1x128xbf16> -> vector<10x18x128xbf16>
    %62 = vector.shape_cast %61 : vector<10x18x128xbf16> to vector<180x128xbf16>
    %c0_21 = arith.constant 0 : index
    %c0_22 = arith.constant 0 : index
    %63 = vector.load %arg11[%c0_21, %c0_22] : memref<188x128xbf16, #tpu.memory_space<vmem>>, vector<180x128xbf16>
    tpu.vector_store %arg11[%c0_21, %c0_22], %62 {strides = array<i32>} : memref<188x128xbf16, #tpu.memory_space<vmem>>, vector<180x128xbf16>,
    %cst_23 = arith.constant 0.000000e+00 : f32
    %64 = vector.broadcast %cst_23 : f32 to vector<144x128xf32>
    %c0_24 = arith.constant 0 : index
    %c0_25 = arith.constant 0 : index
    %65 = vector.load %arg11[%c0_24, %c0_25] : memref<188x128xbf16, #tpu.memory_space<vmem>>, vector<144x128xbf16>
    %c0_26 = arith.constant 0 : index
    %c0_27 = arith.constant 0 : index
    %c0_28 = arith.constant 0 : index
    %66 = vector.load %arg7[%c0_26, %c0_27, %c0_28] : memref<9x128x128xbf16, #tpu.memory_space<vmem>>, vector<1x128x128xbf16>
    %67 = vector.shape_cast %66 : vector<1x128x128xbf16> to vector<128x128xbf16>
    %cst_29 = arith.constant dense<0.000000e+00> : vector<144x128xf32>
    %68 = tpu.matmul %65, %67, %cst_29 {dimension_numbers = #tpu.dot_dimension_numbers<[1], [0], [0], [1], [0, 0, 1, 1], [], []>} : vector<144x128xbf16>, vector<128x128xbf16>, vector<144x128xf32> -> vector<144x128xf32>
    %69 = arith.addf %64, %68 : vector<144x128xf32>
    %c1 = arith.constant 1 : index
    %c0_30 = arith.constant 0 : index
    %70 = vector.load %arg11[%c1, %c0_30] : memref<188x128xbf16, #tpu.memory_space<vmem>>, vector<144x128xbf16>
    %c1_31 = arith.constant 1 : index
    %c0_32 = arith.constant 0 : index
    %c0_33 = arith.constant 0 : index
    %71 = vector.load %arg7[%c1_31, %c0_32, %c0_33] : memref<9x128x128xbf16, #tpu.memory_space<vmem>>, vector<1x128x128xbf16>
    %72 = vector.shape_cast %71 : vector<1x128x128xbf16> to vector<128x128xbf16>
    %cst_34 = arith.constant dense<0.000000e+00> : vector<144x128xf32>
    %73 = tpu.matmul %70, %72, %cst_34 {dimension_numbers = #tpu.dot_dimension_numbers<[1], [0], [0], [1], [0, 0, 1, 1], [], []>} : vector<144x128xbf16>, vector<128x128xbf16>, vector<144x128xf32> -> vector<144x128xf32>
    %74 = arith.addf %69, %73 : vector<144x128xf32>
    %c2 = arith.constant 2 : index
    %c0_35 = arith.constant 0 : index
    %75 = vector.load %arg11[%c2, %c0_35] : memref<188x128xbf16, #tpu.memory_space<vmem>>, vector<144x128xbf16>
    %c2_36 = arith.constant 2 : index
    %c0_37 = arith.constant 0 : index
    %c0_38 = arith.constant 0 : index
    %76 = vector.load %arg7[%c2_36, %c0_37, %c0_38] : memref<9x128x128xbf16, #tpu.memory_space<vmem>>, vector<1x128x128xbf16>
    %77 = vector.shape_cast %76 : vector<1x128x128xbf16> to vector<128x128xbf16>
    %cst_39 = arith.constant dense<0.000000e+00> : vector<144x128xf32>
    %78 = tpu.matmul %75, %77, %cst_39 {dimension_numbers = #tpu.dot_dimension_numbers<[1], [0], [0], [1], [0, 0, 1, 1], [], []>} : vector<144x128xbf16>, vector<128x128xbf16>, vector<144x128xf32> -> vector<144x128xf32>
    %79 = arith.addf %74, %78 : vector<144x128xf32>
    %c18 = arith.constant 18 : index
    %c0_40 = arith.constant 0 : index
    %80 = vector.load %arg11[%c18, %c0_40] : memref<188x128xbf16, #tpu.memory_space<vmem>>, vector<144x128xbf16>
    %c3 = arith.constant 3 : index
    %c0_41 = arith.constant 0 : index
    %c0_42 = arith.constant 0 : index
    %81 = vector.load %arg7[%c3, %c0_41, %c0_42] : memref<9x128x128xbf16, #tpu.memory_space<vmem>>, vector<1x128x128xbf16>
    %82 = vector.shape_cast %81 : vector<1x128x128xbf16> to vector<128x128xbf16>
    %cst_43 = arith.constant dense<0.000000e+00> : vector<144x128xf32>
    %83 = tpu.matmul %80, %82, %cst_43 {dimension_numbers = #tpu.dot_dimension_numbers<[1], [0], [0], [1], [0, 0, 1, 1], [], []>} : vector<144x128xbf16>, vector<128x128xbf16>, vector<144x128xf32> -> vector<144x128xf32>
    %84 = arith.addf %79, %83 : vector<144x128xf32>
    %c19 = arith.constant 19 : index
    %c0_44 = arith.constant 0 : index
    %85 = vector.load %arg11[%c19, %c0_44] : memref<188x128xbf16, #tpu.memory_space<vmem>>, vector<144x128xbf16>
    %c4 = arith.constant 4 : index
    %c0_45 = arith.constant 0 : index
    %c0_46 = arith.constant 0 : index
    %86 = vector.load %arg7[%c4, %c0_45, %c0_46] : memref<9x128x128xbf16, #tpu.memory_space<vmem>>, vector<1x128x128xbf16>
    %87 = vector.shape_cast %86 : vector<1x128x128xbf16> to vector<128x128xbf16>
    %cst_47 = arith.constant dense<0.000000e+00> : vector<144x128xf32>
    %88 = tpu.matmul %85, %87, %cst_47 {dimension_numbers = #tpu.dot_dimension_numbers<[1], [0], [0], [1], [0, 0, 1, 1], [], []>} : vector<144x128xbf16>, vector<128x128xbf16>, vector<144x128xf32> -> vector<144x128xf32>
    %89 = arith.addf %84, %88 : vector<144x128xf32>
    %c20 = arith.constant 20 : index
    %c0_48 = arith.constant 0 : index
    %90 = vector.load %arg11[%c20, %c0_48] : memref<188x128xbf16, #tpu.memory_space<vmem>>, vector<144x128xbf16>
    %c5 = arith.constant 5 : index
    %c0_49 = arith.constant 0 : index
    %c0_50 = arith.constant 0 : index
    %91 = vector.load %arg7[%c5, %c0_49, %c0_50] : memref<9x128x128xbf16, #tpu.memory_space<vmem>>, vector<1x128x128xbf16>
    %92 = vector.shape_cast %91 : vector<1x128x128xbf16> to vector<128x128xbf16>
    %cst_51 = arith.constant dense<0.000000e+00> : vector<144x128xf32>
    %93 = tpu.matmul %90, %92, %cst_51 {dimension_numbers = #tpu.dot_dimension_numbers<[1], [0], [0], [1], [0, 0, 1, 1], [], []>} : vector<144x128xbf16>, vector<128x128xbf16>, vector<144x128xf32> -> vector<144x128xf32>
    %94 = arith.addf %89, %93 : vector<144x128xf32>
    %c36 = arith.constant 36 : index
    %c0_52 = arith.constant 0 : index
    %95 = vector.load %arg11[%c36, %c0_52] : memref<188x128xbf16, #tpu.memory_space<vmem>>, vector<144x128xbf16>
    %c6 = arith.constant 6 : index
    %c0_53 = arith.constant 0 : index
    %c0_54 = arith.constant 0 : index
    %96 = vector.load %arg7[%c6, %c0_53, %c0_54] : memref<9x128x128xbf16, #tpu.memory_space<vmem>>, vector<1x128x128xbf16>
    %97 = vector.shape_cast %96 : vector<1x128x128xbf16> to vector<128x128xbf16>
    %cst_55 = arith.constant dense<0.000000e+00> : vector<144x128xf32>
    %98 = tpu.matmul %95, %97, %cst_55 {dimension_numbers = #tpu.dot_dimension_numbers<[1], [0], [0], [1], [0, 0, 1, 1], [], []>} : vector<144x128xbf16>, vector<128x128xbf16>, vector<144x128xf32> -> vector<144x128xf32>
    %99 = arith.addf %94, %98 : vector<144x128xf32>
    %c37 = arith.constant 37 : index
    %c0_56 = arith.constant 0 : index
    %100 = vector.load %arg11[%c37, %c0_56] : memref<188x128xbf16, #tpu.memory_space<vmem>>, vector<144x128xbf16>
    %c7 = arith.constant 7 : index
    %c0_57 = arith.constant 0 : index
    %c0_58 = arith.constant 0 : index
    %101 = vector.load %arg7[%c7, %c0_57, %c0_58] : memref<9x128x128xbf16, #tpu.memory_space<vmem>>, vector<1x128x128xbf16>
    %102 = vector.shape_cast %101 : vector<1x128x128xbf16> to vector<128x128xbf16>
    %cst_59 = arith.constant dense<0.000000e+00> : vector<144x128xf32>
    %103 = tpu.matmul %100, %102, %cst_59 {dimension_numbers = #tpu.dot_dimension_numbers<[1], [0], [0], [1], [0, 0, 1, 1], [], []>} : vector<144x128xbf16>, vector<128x128xbf16>, vector<144x128xf32> -> vector<144x128xf32>
    %104 = arith.addf %99, %103 : vector<144x128xf32>
    %c38 = arith.constant 38 : index
    %c0_60 = arith.constant 0 : index
    %105 = vector.load %arg11[%c38, %c0_60] : memref<188x128xbf16, #tpu.memory_space<vmem>>, vector<144x128xbf16>
    %c8 = arith.constant 8 : index
    %c0_61 = arith.constant 0 : index
    %c0_62 = arith.constant 0 : index
    %106 = vector.load %arg7[%c8, %c0_61, %c0_62] : memref<9x128x128xbf16, #tpu.memory_space<vmem>>, vector<1x128x128xbf16>
    %107 = vector.shape_cast %106 : vector<1x128x128xbf16> to vector<128x128xbf16>
    %cst_63 = arith.constant dense<0.000000e+00> : vector<144x128xf32>
    %108 = tpu.matmul %105, %107, %cst_63 {dimension_numbers = #tpu.dot_dimension_numbers<[1], [0], [0], [1], [0, 0, 1, 1], [], []>} : vector<144x128xbf16>, vector<128x128xbf16>, vector<144x128xf32> -> vector<144x128xf32>
    %109 = arith.addf %104, %108 : vector<144x128xf32>
    %110 = vector.shape_cast %109 : vector<144x128xf32> to vector<8x18x128xf32>
    %111 = vector.extract_strided_slice %110 {offsets = [0, 0, 0], sizes = [8, 16, 128], strides = [1, 1, 1]} : vector<8x18x128xf32> to vector<8x16x128xf32>
    %c0_64 = arith.constant 0 : index
    %c0_65 = arith.constant 0 : index
    %112 = vector.load %arg8[%c0_64, %c0_65] : memref<1x128xf32, #tpu.memory_space<vmem>>, vector<1x128xf32>
    %113 = vector.shape_cast %112 : vector<1x128xf32> to vector<128xf32>
    %114 = vector.shape_cast %113 : vector<128xf32> to vector<1x1x128xf32>
    %115 = vector.broadcast %114 : vector<1x1x128xf32> to vector<8x16x128xf32>
    %116 = arith.addf %111, %115 : vector<8x16x128xf32>
    %117 = arith.truncf %116 : vector<8x16x128xf32> to vector<8x16x128xbf16>
    %c0_66 = arith.constant 0 : index
    %c0_67 = arith.constant 0 : index
    %c0_68 = arith.constant 0 : index
    %c0_69 = arith.constant 0 : index
    %118 = vector.load %arg9[%c0_66, %c0_67, %c0_68, %c0_69] : memref<1x8x16x128xbf16, #tpu.memory_space<vmem>>, vector<1x8x16x128xbf16>
    %119 = vector.shape_cast %118 : vector<1x8x16x128xbf16> to vector<8x16x128xbf16>
    %120 = vector.shape_cast %117 : vector<8x16x128xbf16> to vector<1x8x16x128xbf16>
    tpu.vector_store %arg9[%c0_66, %c0_67, %c0_68, %c0_69], %120 {strides = array<i32>} : memref<1x8x16x128xbf16, #tpu.memory_space<vmem>>, vector<1x8x16x128xbf16>,
    %121 = vector.shape_cast %116 : vector<8x16x128xf32> to vector<128x128xf32>
    %cst_70 = arith.constant dense<0.000000e+00> : vector<128xf32>
    %122 = vector.multi_reduction <add>, %121, %cst_70 [0] : vector<128x128xf32> to vector<128xf32>
    %123 = arith.mulf %121, %121 : vector<128x128xf32>
    %cst_71 = arith.constant dense<0.000000e+00> : vector<128xf32>
    %124 = vector.multi_reduction <add>, %123, %cst_71 [0] : vector<128x128xf32> to vector<128xf32>
    %125 = vector.shape_cast %122 : vector<128xf32> to vector<1x128xf32>
    %126 = vector.shape_cast %124 : vector<128xf32> to vector<1x128xf32>
    %127 = tpu.concatenate %125, %126 in 0 : vector<1x128xf32>, vector<1x128xf32> -> vector<2x128xf32>
    %c0_72 = arith.constant 0 : index
    %c0_73 = arith.constant 0 : index
    %c0_74 = arith.constant 0 : index
    %128 = vector.load %arg10[%c0_72, %c0_73, %c0_74] : memref<1x2x128xf32, #tpu.memory_space<vmem>>, vector<1x2x128xf32>
    %129 = vector.shape_cast %128 : vector<1x2x128xf32> to vector<2x128xf32>
    %130 = vector.shape_cast %127 : vector<2x128xf32> to vector<1x2x128xf32>
    tpu.vector_store %arg10[%c0_72, %c0_73, %c0_74], %130 {strides = array<i32>} : memref<1x2x128xf32, #tpu.memory_space<vmem>>, vector<1x2x128xf32>,
    return
  }
  func.func @transform_0(%arg0: i32, %arg1: i32) -> (i32, i32, i32, i32) {
    %c0_i32 = arith.constant 0 : i32
    %c0_i32_0 = arith.constant 0 : i32
    %c0_i32_1 = arith.constant 0 : i32
    return %arg0, %arg1, %c0_i32, %c0_i32_0 : i32, i32, i32, i32
  }
  func.func @transform_1(%arg0: i32, %arg1: i32) -> (i32, i32, i32, i32) {
    %c8_i32 = arith.constant 8 : i32
    %0 = arith.muli %arg1, %c8_i32 : i32
    %c1_i32 = arith.constant 1 : i32
    %1 = arith.subi %0, %c1_i32 : i32
    %c0_i32 = arith.constant 0 : i32
    %2 = arith.maxsi %1, %c0_i32 : i32
    %c0_i32_0 = arith.constant 0 : i32
    %c0_i32_1 = arith.constant 0 : i32
    %c0_i32_2 = arith.constant 0 : i32
    return %arg0, %2, %c0_i32_0, %c0_i32_1 : i32, i32, i32, i32
  }
  func.func @transform_2(%arg0: i32, %arg1: i32) -> (i32, i32, i32, i32) {
    %c8_i32 = arith.constant 8 : i32
    %0 = arith.muli %arg1, %c8_i32 : i32
    %c8_i32_0 = arith.constant 8 : i32
    %1 = arith.addi %0, %c8_i32_0 : i32
    %c15_i32 = arith.constant 15 : i32
    %2 = arith.minsi %1, %c15_i32 : i32
    %c0_i32 = arith.constant 0 : i32
    %c0_i32_1 = arith.constant 0 : i32
    %c0_i32_2 = arith.constant 0 : i32
    return %arg0, %2, %c0_i32, %c0_i32_1 : i32, i32, i32, i32
  }
  func.func @transform_3(%arg0: i32, %arg1: i32) -> (i32, i32) {
    %c0_i32 = arith.constant 0 : i32
    %c0_i32_0 = arith.constant 0 : i32
    %c0_i32_1 = arith.constant 0 : i32
    return %c0_i32, %c0_i32_0 : i32, i32
  }
  func.func @transform_4(%arg0: i32, %arg1: i32) -> (i32, i32) {
    %c0_i32 = arith.constant 0 : i32
    %c0_i32_0 = arith.constant 0 : i32
    %c0_i32_1 = arith.constant 0 : i32
    return %c0_i32, %c0_i32_0 : i32, i32
  }
  func.func @transform_5(%arg0: i32, %arg1: i32) -> (i32, i32, i32) {
    %c0_i32 = arith.constant 0 : i32
    %c0_i32_0 = arith.constant 0 : i32
    %c0_i32_1 = arith.constant 0 : i32
    %c0_i32_2 = arith.constant 0 : i32
    return %c0_i32, %c0_i32_0, %c0_i32_1 : i32, i32, i32
  }
  func.func @transform_6(%arg0: i32, %arg1: i32) -> (i32, i32) {
    %c0_i32 = arith.constant 0 : i32
    %c0_i32_0 = arith.constant 0 : i32
    %c0_i32_1 = arith.constant 0 : i32
    return %c0_i32, %c0_i32_0 : i32, i32
  }
  func.func @transform_7(%arg0: i32, %arg1: i32) -> (i32, i32, i32, i32) {
    %c0_i32 = arith.constant 0 : i32
    %c0_i32_0 = arith.constant 0 : i32
    %c0_i32_1 = arith.constant 0 : i32
    return %arg0, %arg1, %c0_i32, %c0_i32_0 : i32, i32, i32, i32
  }
  func.func @transform_8(%arg0: i32, %arg1: i32) -> (i32, i32, i32) {
    %c2_i32 = arith.constant 2 : i32
    %0 = arith.muli %arg0, %c2_i32 : i32
    %1 = arith.addi %0, %arg1 : i32
    %c0_i32 = arith.constant 0 : i32
    %c0_i32_0 = arith.constant 0 : i32
    %c0_i32_1 = arith.constant 0 : i32
    return %1, %c0_i32, %c0_i32_0 : i32, i32, i32
  }
}

module attributes {stable_mosaic.version = 11 : i64} {
  func.func @_epi_conv1x1_kernel(%arg0: i32, %arg1: memref<512x128xbf16, #tpu.memory_space<vmem>>, %arg2: memref<1x128xf32, #tpu.memory_space<vmem>>, %arg3: memref<1x128xf32, #tpu.memory_space<vmem>>, %arg4: memref<512x128xbf16, #tpu.memory_space<vmem>>, %arg5: memref<128x128xbf16, #tpu.memory_space<vmem>>, %arg6: memref<1x128xf32, #tpu.memory_space<vmem>>, %arg7: memref<512x128xbf16, #tpu.memory_space<vmem>>, %arg8: memref<1x2x128xf32, #tpu.memory_space<vmem>>, %arg9: memref<512x128xbf16, #tpu.memory_space<vmem>>) attributes {dimension_semantics = [#tpu.dimension_semantics<parallel>], iteration_bounds = array<i64: 1>, scalar_prefetch = 0 : i64, scratch_operands = 0 : i64, tpu.core_type = #tpu.core_type<tc>, window_params = [{transform_indices = @transform_0, window_bounds = array<i64: 512, 128>}, {pipeline_mode = #tpu.pipeline_mode<synchronous>, transform_indices = @transform_1, window_bounds = array<i64: 1, 128>}, {pipeline_mode = #tpu.pipeline_mode<synchronous>, transform_indices = @transform_2, window_bounds = array<i64: 1, 128>}, {transform_indices = @transform_3, window_bounds = array<i64: 512, 128>}, {pipeline_mode = #tpu.pipeline_mode<synchronous>, transform_indices = @transform_4, window_bounds = array<i64: 128, 128>}, {pipeline_mode = #tpu.pipeline_mode<synchronous>, transform_indices = @transform_5, window_bounds = array<i64: 1, 128>}, {transform_indices = @transform_6, window_bounds = array<i64: 512, 128>}, {transform_indices = @transform_7, window_bounds = array<i64: 1, 2, 128>}, {transform_indices = @transform_8, window_bounds = array<i64: 512, 128>}]} {
    %c0 = arith.constant 0 : index
    %c0_0 = arith.constant 0 : index
    %0 = vector.load %arg1[%c0, %c0_0] : memref<512x128xbf16, #tpu.memory_space<vmem>>, vector<512x128xbf16>
    %1 = arith.extf %0 : vector<512x128xbf16> to vector<512x128xf32>
    %c0_1 = arith.constant 0 : index
    %c0_2 = arith.constant 0 : index
    %2 = vector.load %arg2[%c0_1, %c0_2] : memref<1x128xf32, #tpu.memory_space<vmem>>, vector<1x128xf32>
    %3 = vector.broadcast %2 : vector<1x128xf32> to vector<512x128xf32>
    %4 = arith.mulf %1, %3 : vector<512x128xf32>
    %c0_3 = arith.constant 0 : index
    %c0_4 = arith.constant 0 : index
    %5 = vector.load %arg3[%c0_3, %c0_4] : memref<1x128xf32, #tpu.memory_space<vmem>>, vector<1x128xf32>
    %6 = vector.broadcast %5 : vector<1x128xf32> to vector<512x128xf32>
    %7 = arith.addf %4, %6 : vector<512x128xf32>
    %cst = arith.constant 0.000000e+00 : f32
    %8 = vector.broadcast %cst : f32 to vector<512x128xf32>
    %9 = arith.cmpf ogt, %7, %8 : vector<512x128xf32>
    %cst_5 = arith.constant 1.000000e-01 : f32
    %10 = vector.broadcast %cst_5 : f32 to vector<512x128xf32>
    %11 = arith.mulf %10, %7 : vector<512x128xf32>
    %12 = arith.select %9, %7, %11 : vector<512x128xi1>, vector<512x128xf32>
    %c0_6 = arith.constant 0 : index
    %c0_7 = arith.constant 0 : index
    %13 = vector.load %arg4[%c0_6, %c0_7] : memref<512x128xbf16, #tpu.memory_space<vmem>>, vector<512x128xbf16>
    %14 = arith.extf %13 : vector<512x128xbf16> to vector<512x128xf32>
    %15 = arith.addf %12, %14 : vector<512x128xf32>
    %16 = arith.truncf %15 : vector<512x128xf32> to vector<512x128xbf16>
    %c0_8 = arith.constant 0 : index
    %c0_9 = arith.constant 0 : index
    %17 = vector.load %arg9[%c0_8, %c0_9] : memref<512x128xbf16, #tpu.memory_space<vmem>>, vector<512x128xbf16>
    tpu.vector_store %arg9[%c0_8, %c0_9], %16 {strides = array<i32>} : memref<512x128xbf16, #tpu.memory_space<vmem>>, vector<512x128xbf16>,
    %c0_10 = arith.constant 0 : index
    %c0_11 = arith.constant 0 : index
    %18 = vector.load %arg5[%c0_10, %c0_11] : memref<128x128xbf16, #tpu.memory_space<vmem>>, vector<128x128xbf16>
    %cst_12 = arith.constant dense<0.000000e+00> : vector<512x128xf32>
    %19 = tpu.matmul %16, %18, %cst_12 {dimension_numbers = #tpu.dot_dimension_numbers<[1], [0], [0], [1], [0, 0, 1, 1], [], []>} : vector<512x128xbf16>, vector<128x128xbf16>, vector<512x128xf32> -> vector<512x128xf32>
    %c0_13 = arith.constant 0 : index
    %c0_14 = arith.constant 0 : index
    %20 = vector.load %arg6[%c0_13, %c0_14] : memref<1x128xf32, #tpu.memory_space<vmem>>, vector<1x128xf32>
    %21 = vector.broadcast %20 : vector<1x128xf32> to vector<512x128xf32>
    %22 = arith.addf %19, %21 : vector<512x128xf32>
    %23 = arith.truncf %22 : vector<512x128xf32> to vector<512x128xbf16>
    %c0_15 = arith.constant 0 : index
    %c0_16 = arith.constant 0 : index
    %24 = vector.load %arg7[%c0_15, %c0_16] : memref<512x128xbf16, #tpu.memory_space<vmem>>, vector<512x128xbf16>
    tpu.vector_store %arg7[%c0_15, %c0_16], %23 {strides = array<i32>} : memref<512x128xbf16, #tpu.memory_space<vmem>>, vector<512x128xbf16>,
    %cst_17 = arith.constant dense<0.000000e+00> : vector<128xf32>
    %25 = vector.multi_reduction <add>, %22, %cst_17 [0] : vector<512x128xf32> to vector<128xf32>
    %26 = arith.mulf %22, %22 : vector<512x128xf32>
    %cst_18 = arith.constant dense<0.000000e+00> : vector<128xf32>
    %27 = vector.multi_reduction <add>, %26, %cst_18 [0] : vector<512x128xf32> to vector<128xf32>
    %28 = vector.shape_cast %25 : vector<128xf32> to vector<1x128xf32>
    %29 = vector.shape_cast %27 : vector<128xf32> to vector<1x128xf32>
    %30 = tpu.concatenate %28, %29 in 0 : vector<1x128xf32>, vector<1x128xf32> -> vector<2x128xf32>
    %c0_19 = arith.constant 0 : index
    %c0_20 = arith.constant 0 : index
    %c0_21 = arith.constant 0 : index
    %31 = vector.load %arg8[%c0_19, %c0_20, %c0_21] : memref<1x2x128xf32, #tpu.memory_space<vmem>>, vector<1x2x128xf32>
    %32 = vector.shape_cast %31 : vector<1x2x128xf32> to vector<2x128xf32>
    %33 = vector.shape_cast %30 : vector<2x128xf32> to vector<1x2x128xf32>
    tpu.vector_store %arg8[%c0_19, %c0_20, %c0_21], %33 {strides = array<i32>} : memref<1x2x128xf32, #tpu.memory_space<vmem>>, vector<1x2x128xf32>,
    return
  }
  func.func @transform_0(%arg0: i32) -> (i32, i32) {
    %c0_i32 = arith.constant 0 : i32
    %c0_i32_0 = arith.constant 0 : i32
    return %arg0, %c0_i32 : i32, i32
  }
  func.func @transform_1(%arg0: i32) -> (i32, i32) {
    %c0_i32 = arith.constant 0 : i32
    %c0_i32_0 = arith.constant 0 : i32
    %c0_i32_1 = arith.constant 0 : i32
    return %c0_i32, %c0_i32_0 : i32, i32
  }
  func.func @transform_2(%arg0: i32) -> (i32, i32) {
    %c0_i32 = arith.constant 0 : i32
    %c0_i32_0 = arith.constant 0 : i32
    %c0_i32_1 = arith.constant 0 : i32
    return %c0_i32, %c0_i32_0 : i32, i32
  }
  func.func @transform_3(%arg0: i32) -> (i32, i32) {
    %c0_i32 = arith.constant 0 : i32
    %c0_i32_0 = arith.constant 0 : i32
    return %arg0, %c0_i32 : i32, i32
  }
  func.func @transform_4(%arg0: i32) -> (i32, i32) {
    %c0_i32 = arith.constant 0 : i32
    %c0_i32_0 = arith.constant 0 : i32
    %c0_i32_1 = arith.constant 0 : i32
    return %c0_i32, %c0_i32_0 : i32, i32
  }
  func.func @transform_5(%arg0: i32) -> (i32, i32) {
    %c0_i32 = arith.constant 0 : i32
    %c0_i32_0 = arith.constant 0 : i32
    %c0_i32_1 = arith.constant 0 : i32
    return %c0_i32, %c0_i32_0 : i32, i32
  }
  func.func @transform_6(%arg0: i32) -> (i32, i32) {
    %c0_i32 = arith.constant 0 : i32
    %c0_i32_0 = arith.constant 0 : i32
    return %arg0, %c0_i32 : i32, i32
  }
  func.func @transform_7(%arg0: i32) -> (i32, i32, i32) {
    %c0_i32 = arith.constant 0 : i32
    %c0_i32_0 = arith.constant 0 : i32
    %c0_i32_1 = arith.constant 0 : i32
    return %arg0, %c0_i32, %c0_i32_0 : i32, i32, i32
  }
  func.func @transform_8(%arg0: i32) -> (i32, i32) {
    %c0_i32 = arith.constant 0 : i32
    %c0_i32_0 = arith.constant 0 : i32
    return %arg0, %c0_i32 : i32, i32
  }
}

module attributes {stable_mosaic.version = 11 : i64} {
  func.func @_bn_leaky_res_kernel(%arg0: i32, %arg1: memref<512x128xbf16, #tpu.memory_space<vmem>>, %arg2: memref<1x128xf32, #tpu.memory_space<vmem>>, %arg3: memref<1x128xf32, #tpu.memory_space<vmem>>, %arg4: memref<512x128xbf16, #tpu.memory_space<vmem>>, %arg5: memref<512x128xbf16, #tpu.memory_space<vmem>>) attributes {dimension_semantics = [#tpu.dimension_semantics<parallel>], iteration_bounds = array<i64: 1>, scalar_prefetch = 0 : i64, scratch_operands = 0 : i64, tpu.core_type = #tpu.core_type<tc>, window_params = [{transform_indices = @transform_0, window_bounds = array<i64: 512, 128>}, {pipeline_mode = #tpu.pipeline_mode<synchronous>, transform_indices = @transform_1, window_bounds = array<i64: 1, 128>}, {pipeline_mode = #tpu.pipeline_mode<synchronous>, transform_indices = @transform_2, window_bounds = array<i64: 1, 128>}, {transform_indices = @transform_3, window_bounds = array<i64: 512, 128>}, {transform_indices = @transform_4, window_bounds = array<i64: 512, 128>}]} {
    %c0 = arith.constant 0 : index
    %c0_0 = arith.constant 0 : index
    %0 = vector.load %arg1[%c0, %c0_0] : memref<512x128xbf16, #tpu.memory_space<vmem>>, vector<512x128xbf16>
    %1 = arith.extf %0 : vector<512x128xbf16> to vector<512x128xf32>
    %c0_1 = arith.constant 0 : index
    %c0_2 = arith.constant 0 : index
    %2 = vector.load %arg2[%c0_1, %c0_2] : memref<1x128xf32, #tpu.memory_space<vmem>>, vector<1x128xf32>
    %3 = vector.broadcast %2 : vector<1x128xf32> to vector<512x128xf32>
    %4 = arith.mulf %1, %3 : vector<512x128xf32>
    %c0_3 = arith.constant 0 : index
    %c0_4 = arith.constant 0 : index
    %5 = vector.load %arg3[%c0_3, %c0_4] : memref<1x128xf32, #tpu.memory_space<vmem>>, vector<1x128xf32>
    %6 = vector.broadcast %5 : vector<1x128xf32> to vector<512x128xf32>
    %7 = arith.addf %4, %6 : vector<512x128xf32>
    %cst = arith.constant 0.000000e+00 : f32
    %8 = vector.broadcast %cst : f32 to vector<512x128xf32>
    %9 = arith.cmpf ogt, %7, %8 : vector<512x128xf32>
    %cst_5 = arith.constant 1.000000e-01 : f32
    %10 = vector.broadcast %cst_5 : f32 to vector<512x128xf32>
    %11 = arith.mulf %10, %7 : vector<512x128xf32>
    %12 = arith.select %9, %7, %11 : vector<512x128xi1>, vector<512x128xf32>
    %c0_6 = arith.constant 0 : index
    %c0_7 = arith.constant 0 : index
    %13 = vector.load %arg4[%c0_6, %c0_7] : memref<512x128xbf16, #tpu.memory_space<vmem>>, vector<512x128xbf16>
    %14 = arith.extf %13 : vector<512x128xbf16> to vector<512x128xf32>
    %15 = arith.addf %12, %14 : vector<512x128xf32>
    %16 = arith.truncf %15 : vector<512x128xf32> to vector<512x128xbf16>
    %c0_8 = arith.constant 0 : index
    %c0_9 = arith.constant 0 : index
    %17 = vector.load %arg5[%c0_8, %c0_9] : memref<512x128xbf16, #tpu.memory_space<vmem>>, vector<512x128xbf16>
    tpu.vector_store %arg5[%c0_8, %c0_9], %16 {strides = array<i32>} : memref<512x128xbf16, #tpu.memory_space<vmem>>, vector<512x128xbf16>,
    return
  }
  func.func @transform_0(%arg0: i32) -> (i32, i32) {
    %c0_i32 = arith.constant 0 : i32
    %c0_i32_0 = arith.constant 0 : i32
    return %arg0, %c0_i32 : i32, i32
  }
  func.func @transform_1(%arg0: i32) -> (i32, i32) {
    %c0_i32 = arith.constant 0 : i32
    %c0_i32_0 = arith.constant 0 : i32
    %c0_i32_1 = arith.constant 0 : i32
    return %c0_i32, %c0_i32_0 : i32, i32
  }
  func.func @transform_2(%arg0: i32) -> (i32, i32) {
    %c0_i32 = arith.constant 0 : i32
    %c0_i32_0 = arith.constant 0 : i32
    %c0_i32_1 = arith.constant 0 : i32
    return %c0_i32, %c0_i32_0 : i32, i32
  }
  func.func @transform_3(%arg0: i32) -> (i32, i32) {
    %c0_i32 = arith.constant 0 : i32
    %c0_i32_0 = arith.constant 0 : i32
    return %arg0, %c0_i32 : i32, i32
  }
  func.func @transform_4(%arg0: i32) -> (i32, i32) {
    %c0_i32 = arith.constant 0 : i32
    %c0_i32_0 = arith.constant 0 : i32
    return %arg0, %c0_i32 : i32, i32
  }
}

</mosaic_0001>

<llo_original>
// kernel: residual_block_forward.5
$region0: #{residual_block_forward.5}
  #allocation0 [shape = 'u32[]', space=smem, size = 0x4, offset = 0x4, fixed_abs, tag = 'smem constant byte address 0x4 - core index']
  #allocation1 [shape = 'u32[72,128]{1,0:T(1,128)}', space=vmem, size = 0x9000, scoped, tag = 'internal scratch']
  %s0 = inlined_call_operand.vmem [shape: bf16[512,128], index: 0, kind: input, shape index: {}]
  %s1 = inlined_call_operand.vmem [shape: bf16[128,128], index: 1, kind: input, shape index: {}]
  %s2 = inlined_call_operand.vmem [shape: f32[1,128], index: 2, kind: input, shape index: {}]
  %s3 = inlined_call_operand.vmem [shape: bf16[512,128], index: 3, kind: output, shape index: {0}]
  %s4 = inlined_call_operand.vmem [shape: f32[1,2,128], index: 4, kind: output, shape index: {1}]
  %5 = xla_tuple %s3, %s4
  %s6 = sld [smem:[#allocation0]]
  $region30: #{residual_block_forward.5} parent=0
    _
  %s8 = ssub.s32 1, %s6
  %s9 = scalar_select 0, %s8, %s6
  // Predicated region
  $region2: #{residual_block_forward.5} parent=0 // pred_check
    _
  $region3: #{residual_block_forward.5} parent=0 // pred_check_branch
    %11 = sbr.rel (0) target = $region5
  $region4: #{residual_block_forward.5} parent=0 // pred_region
    _
  $region5: #{residual_block_forward.5} parent=0 // pred_fallthru
    _
  // Predicated region
  $region6: #{residual_block_forward.5} parent=0 // pred_check
    _
  $region7: #{residual_block_forward.5} parent=0 // pred_check_branch
    %13 = sbr.rel (0) target = $region9
  $region8: #{residual_block_forward.5} parent=0 // pred_region
    _
  $region9: #{residual_block_forward.5} parent=0 // pred_fallthru
    _
  // Predicated region
  $region10: #{residual_block_forward.5} parent=0 // pred_check
    _
  $region11: #{residual_block_forward.5} parent=0 // pred_check_branch
    %15 = sbr.rel (0) target = $region13
  $region12: #{residual_block_forward.5} parent=0 // pred_region
    _
  $region13: #{residual_block_forward.5} parent=0 // pred_fallthru
    _
  %v16 = vld [vmem:[%s0] sm:$0xf]
  %v17 = vld [vmem:[%s0 + $0x4] sm:$0xf]
  %v18 = vld [vmem:[%s0 + $0x8] sm:$0xf]
  %v19 = vld [vmem:[%s0 + $0xc] sm:$0xf]
  %v20 = vld [vmem:[%s0 + $0x10] sm:$0xf]
  %v21 = vld [vmem:[%s0 + $0x14] sm:$0xf]
  %v22 = vld [vmem:[%s0 + $0x18] sm:$0xf]
  %v23 = vld [vmem:[%s0 + $0x1c] sm:$0xf]
  %v24 = vld [vmem:[%s0 + $0x20] sm:$0xf]
  %v25 = vld [vmem:[%s0 + $0x24] sm:$0xf]
  %v26 = vld [vmem:[%s0 + $0x28] sm:$0xf]
  %v27 = vld [vmem:[%s0 + $0x2c] sm:$0xf]
  %v28 = vld [vmem:[%s0 + $0x30] sm:$0xf]
  %v29 = vld [vmem:[%s0 + $0x34] sm:$0xf]
  %v30 = vld [vmem:[%s0 + $0x38] sm:$0xf]
  %v31 = vld [vmem:[%s0 + $0x3c] sm:$0xf]
  %v32 = vld [vmem:[%s0 + $0x40] sm:$0xf]
  %v33 = vld [vmem:[%s0 + $0x44] sm:$0xf]
  %v34 = vld [vmem:[%s0 + $0x48] sm:$0xf]
  %v35 = vld [vmem:[%s0 + $0x4c] sm:$0xf]
  %v36 = vld [vmem:[%s0 + $0x50] sm:$0xf]
  %v37 = vld [vmem:[%s0 + $0x54] sm:$0xf]
  %v38 = vld [vmem:[%s0 + $0x58] sm:$0xf]
  %v39 = vld [vmem:[%s0 + $0x5c] sm:$0xf]
  %v40 = vld [vmem:[%s0 + $0x60] sm:$0xf]
  %v41 = vld [vmem:[%s0 + $0x64] sm:$0xf]
  %v42 = vld [vmem:[%s0 + $0x68] sm:$0xf]
  %v43 = vld [vmem:[%s0 + $0x6c] sm:$0xf]
  %v44 = vld [vmem:[%s0 + $0x70] sm:$0xf]
  %v45 = vld [vmem:[%s0 + $0x74] sm:$0xf]
  %v46 = vld [vmem:[%s0 + $0x78] sm:$0xf]
  %v47 = vld [vmem:[%s0 + $0x7c] sm:$0xf]
  %v48 = vld [vmem:[%s0 + $0x80] sm:$0xf]
  %v49 = vld [vmem:[%s0 + $0x84] sm:$0xf]
  %v50 = vld [vmem:[%s0 + $0x88] sm:$0xf]
  %v51 = vld [vmem:[%s0 + $0x8c] sm:$0xf]
  %v52 = vld [vmem:[%s0 + $0x90] sm:$0xf]
  %v53 = vld [vmem:[%s0 + $0x94] sm:$0xf]
  %v54 = vld [vmem:[%s0 + $0x98] sm:$0xf]
  %v55 = vld [vmem:[%s0 + $0x9c] sm:$0xf]
  %v56 = vld [vmem:[%s0 + $0xa0] sm:$0xf]
  %v57 = vld [vmem:[%s0 + $0xa4] sm:$0xf]
  %v58 = vld [vmem:[%s0 + $0xa8] sm:$0xf]
  %v59 = vld [vmem:[%s0 + $0xac] sm:$0xf]
  %v60 = vld [vmem:[%s0 + $0xb0] sm:$0xf]
  %v61 = vld [vmem:[%s0 + $0xb4] sm:$0xf]
  %v62 = vld [vmem:[%s0 + $0xb8] sm:$0xf]
  %v63 = vld [vmem:[%s0 + $0xbc] sm:$0xf]
  %v64 = vld [vmem:[%s0 + $0xc0] sm:$0xf]
  %v65 = vld [vmem:[%s0 + $0xc4] sm:$0xf]
  %v66 = vld [vmem:[%s0 + $0xc8] sm:$0xf]
  %v67 = vld [vmem:[%s0 + $0xcc] sm:$0xf]
  %v68 = vld [vmem:[%s0 + $0xd0] sm:$0xf]
  %v69 = vld [vmem:[%s0 + $0xd4] sm:$0xf]
  %v70 = vld [vmem:[%s0 + $0xd8] sm:$0xf]
  %v71 = vld [vmem:[%s0 + $0xdc] sm:$0xf]
  %v72 = vld [vmem:[%s0 + $0xe0] sm:$0xf]
  %v73 = vld [vmem:[%s0 + $0xe4] sm:$0xf]
  %v74 = vld [vmem:[%s0 + $0xe8] sm:$0xf]
  %v75 = vld [vmem:[%s0 + $0xec] sm:$0xf]
  %v76 = vld [vmem:[%s0 + $0xf0] sm:$0xf]
  %v77 = vld [vmem:[%s0 + $0xf4] sm:$0xf]
  %v78 = vld [vmem:[%s0 + $0xf8] sm:$0xf]
  %v79 = vld [vmem:[%s0 + $0xfc] sm:$0xf]
  %v80 = vld [vmem:[%s1] sm:$0xf]
  %v81 = vld [vmem:[%s1 + $0x4] sm:$0xf]
  %v82 = vld [vmem:[%s1 + $0x8] sm:$0xf]
  %v83 = vld [vmem:[%s1 + $0xc] sm:$0xf]
  %v84 = vld [vmem:[%s1 + $0x10] sm:$0xf]
  %v85 = vld [vmem:[%s1 + $0x14] sm:$0xf]
  %v86 = vld [vmem:[%s1 + $0x18] sm:$0xf]
  %v87 = vld [vmem:[%s1 + $0x1c] sm:$0xf]
  %v88 = vld [vmem:[%s1 + $0x20] sm:$0xf]
  %v89 = vld [vmem:[%s1 + $0x24] sm:$0xf]
  %v90 = vld [vmem:[%s1 + $0x28] sm:$0xf]
  %v91 = vld [vmem:[%s1 + $0x2c] sm:$0xf]
  %v92 = vld [vmem:[%s1 + $0x30] sm:$0xf]
  %v93 = vld [vmem:[%s1 + $0x34] sm:$0xf]
  %v94 = vld [vmem:[%s1 + $0x38] sm:$0xf]
  %v95 = vld [vmem:[%s1 + $0x3c] sm:$0xf]
  %v96 = vld [vmem:[%s2] sm:$0x1]
  %v98 = vperm.slane %v96, 0
  %v164 = vunpack.c.l.b16 %v16
  %v165 = vunpack.c.l.b16 %v17
  %v166 = vunpack.c.l.b16 %v18
  %v167 = vunpack.c.l.b16 %v19
  %v168 = vunpack.c.l.b16 %v20
  %v169 = vunpack.c.l.b16 %v21
  %v170 = vunpack.c.l.b16 %v22
  %v171 = vunpack.c.l.b16 %v23
  %v172 = vunpack.c.l.b16 %v24
  %v173 = vunpack.c.l.b16 %v25
  %v174 = vunpack.c.l.b16 %v26
  %v175 = vunpack.c.l.b16 %v27
  %v176 = vunpack.c.l.b16 %v28
  %v177 = vunpack.c.l.b16 %v29
  %v178 = vunpack.c.l.b16 %v30
  %v179 = vunpack.c.l.b16 %v31
  %v180 = vunpack.c.l.b16 %v32
  %v181 = vunpack.c.l.b16 %v33
  %v182 = vunpack.c.l.b16 %v34
  %v183 = vunpack.c.l.b16 %v35
  %v184 = vunpack.c.l.b16 %v36
  %v185 = vunpack.c.l.b16 %v37
  %v186 = vunpack.c.l.b16 %v38
  %v187 = vunpack.c.l.b16 %v39
  %v188 = vunpack.c.l.b16 %v40
  %v189 = vunpack.c.l.b16 %v41
  %v190 = vunpack.c.l.b16 %v42
  %v191 = vunpack.c.l.b16 %v43
  %v192 = vunpack.c.l.b16 %v44
  %v193 = vunpack.c.l.b16 %v45
  %v194 = vunpack.c.l.b16 %v46
  %v195 = vunpack.c.l.b16 %v47
  %v196 = vunpack.c.l.b16 %v48
  %v197 = vunpack.c.l.b16 %v49
  %v198 = vunpack.c.l.b16 %v50
  %v199 = vunpack.c.l.b16 %v51
  %v200 = vunpack.c.l.b16 %v52
  %v201 = vunpack.c.l.b16 %v53
  %v202 = vunpack.c.l.b16 %v54
  %v203 = vunpack.c.l.b16 %v55
  %v204 = vunpack.c.l.b16 %v56
  %v205 = vunpack.c.l.b16 %v57
  %v206 = vunpack.c.l.b16 %v58
  %v207 = vunpack.c.l.b16 %v59
  %v208 = vunpack.c.l.b16 %v60
  %v209 = vunpack.c.l.b16 %v61
  %v210 = vunpack.c.l.b16 %v62
  %v211 = vunpack.c.l.b16 %v63
  %v212 = vunpack.c.l.b16 %v64
  %v213 = vunpack.c.l.b16 %v65
  %v214 = vunpack.c.l.b16 %v66
  %v215 = vunpack.c.l.b16 %v67
  %v216 = vunpack.c.l.b16 %v68
  %v217 = vunpack.c.l.b16 %v69
  %v218 = vunpack.c.l.b16 %v70
  %v219 = vunpack.c.l.b16 %v71
  %v220 = vunpack.c.l.b16 %v72
  %v221 = vunpack.c.l.b16 %v73
  %v222 = vunpack.c.l.b16 %v74
  %v223 = vunpack.c.l.b16 %v75
  %v224 = vunpack.c.l.b16 %v76
  %v225 = vunpack.c.l.b16 %v77
  %v226 = vunpack.c.l.b16 %v78
  %v227 = vunpack.c.l.b16 %v79
  %v228 = vpack.c.b16 %v165, %v164
  %v229 = vpack.c.b16 %v167, %v166
  %v230 = vpack.c.b16 %v169, %v168
  %v231 = vpack.c.b16 %v171, %v170
  %v232 = vpack.c.b16 %v173, %v172
  %v233 = vpack.c.b16 %v175, %v174
  %v234 = vpack.c.b16 %v177, %v176
  %v235 = vpack.c.b16 %v179, %v178
  %v236 = vpack.c.b16 %v181, %v180
  %v237 = vpack.c.b16 %v183, %v182
  %v238 = vpack.c.b16 %v185, %v184
  %v239 = vpack.c.b16 %v187, %v186
  %v240 = vpack.c.b16 %v189, %v188
  %v241 = vpack.c.b16 %v191, %v190
  %v242 = vpack.c.b16 %v193, %v192
  %v243 = vpack.c.b16 %v195, %v194
  %v244 = vpack.c.b16 %v197, %v196
  %v245 = vpack.c.b16 %v199, %v198
  %v246 = vpack.c.b16 %v201, %v200
  %v247 = vpack.c.b16 %v203, %v202
  %v248 = vpack.c.b16 %v205, %v204
  %v249 = vpack.c.b16 %v207, %v206
  %v250 = vpack.c.b16 %v209, %v208
  %v251 = vpack.c.b16 %v211, %v210
  %v252 = vpack.c.b16 %v213, %v212
  %v253 = vpack.c.b16 %v215, %v214
  %v254 = vpack.c.b16 %v217, %v216
  %v255 = vpack.c.b16 %v219, %v218
  %v256 = vpack.c.b16 %v221, %v220
  %v257 = vpack.c.b16 %v223, %v222
  %v258 = vpack.c.b16 %v225, %v224
  %v259 = vpack.c.b16 %v227, %v226
  %v308 = vunpack.c.l.b16 %v80
  %v309 = vunpack.c.l.b16 %v81
  %v310 = vunpack.c.l.b16 %v82
  %v311 = vunpack.c.l.b16 %v83
  %v312 = vunpack.c.l.b16 %v84
  %v313 = vunpack.c.l.b16 %v85
  %v314 = vunpack.c.l.b16 %v86
  %v315 = vunpack.c.l.b16 %v87
  %v316 = vunpack.c.l.b16 %v88
  %v317 = vunpack.c.l.b16 %v89
  %v318 = vunpack.c.l.b16 %v90
  %v319 = vunpack.c.l.b16 %v91
  %v320 = vunpack.c.l.b16 %v92
  %v321 = vunpack.c.l.b16 %v93
  %v322 = vunpack.c.l.b16 %v94
  %v323 = vunpack.c.l.b16 %v95
  %v324 = vpack.c.b16 %v309, %v308
  %v325 = vpack.c.b16 %v311, %v310
  %v326 = vpack.c.b16 %v313, %v312
  %v327 = vpack.c.b16 %v315, %v314
  %v328 = vpack.c.b16 %v317, %v316
  %v329 = vpack.c.b16 %v319, %v318
  %v330 = vpack.c.b16 %v321, %v320
  %v331 = vpack.c.b16 %v323, %v322
  %340 = vmatpush.bf16.msra.mxu0 %v331
  %341 = vmatpush.bf16.msra.mxu0 %v330
  %342 = vmatpush.bf16.msra.mxu0 %v329
  %343 = vmatpush.bf16.msra.mxu0 %v328
  %344 = vmatpush.bf16.msra.mxu0 %v327
  %345 = vmatpush.bf16.msra.mxu0 %v326
  %346 = vmatpush.bf16.msra.mxu0 %v325
  %347 = vmatpush.bf16.msra.mxu0 %v324
  %348 = vmatmul.bf16.gmra.mxu0 %v228
  %v349 = vpop.f32.mrf.mxu0
  %v350 = vadd.f32 %v98, %v349
  %v351 = vpop.f32.mrf.mxu0
  %v352 = vadd.f32 %v98, %v351
  %353 = vmatmul.bf16.gmra.mxu0 %v229
  %v354 = vpop.f32.mrf.mxu0
  %v355 = vadd.f32 %v98, %v354
  %v356 = vpop.f32.mrf.mxu0
  %v357 = vadd.f32 %v98, %v356
  %358 = vmatmul.bf16.gmra.mxu0 %v230
  %v359 = vpop.f32.mrf.mxu0
  %v360 = vadd.f32 %v98, %v359
  %v361 = vpop.f32.mrf.mxu0
  %v362 = vadd.f32 %v98, %v361
  %363 = vmatmul.bf16.gmra.mxu0 %v231
  %v364 = vpop.f32.mrf.mxu0
  %v365 = vadd.f32 %v98, %v364
  %v366 = vpop.f32.mrf.mxu0
  %v367 = vadd.f32 %v98, %v366
  %368 = vmatmul.bf16.gmra.mxu0 %v232
  %v369 = vpop.f32.mrf.mxu0
  %v370 = vadd.f32 %v98, %v369
  %v371 = vpop.f32.mrf.mxu0
  %v372 = vadd.f32 %v98, %v371
  %373 = vmatmul.bf16.gmra.mxu0 %v233
  %v374 = vpop.f32.mrf.mxu0
  %v375 = vadd.f32 %v98, %v374
  %v376 = vpop.f32.mrf.mxu0
  %v377 = vadd.f32 %v98, %v376
  %378 = vmatmul.bf16.gmra.mxu0 %v234
  %v379 = vpop.f32.mrf.mxu0
  %v380 = vadd.f32 %v98, %v379
  %v381 = vpop.f32.mrf.mxu0
  %v382 = vadd.f32 %v98, %v381
  %383 = vmatmul.bf16.gmra.mxu0 %v235
  %v384 = vpop.f32.mrf.mxu0
  %v385 = vadd.f32 %v98, %v384
  %v386 = vpop.f32.mrf.mxu0
  %v387 = vadd.f32 %v98, %v386
  %388 = vmatmul.bf16.gmra.mxu0 %v236
  %v389 = vpop.f32.mrf.mxu0
  %v390 = vadd.f32 %v98, %v389
  %v391 = vpop.f32.mrf.mxu0
  %v392 = vadd.f32 %v98, %v391
  %393 = vmatmul.bf16.gmra.mxu0 %v237
  %v394 = vpop.f32.mrf.mxu0
  %v395 = vadd.f32 %v98, %v394
  %v396 = vpop.f32.mrf.mxu0
  %v397 = vadd.f32 %v98, %v396
  %398 = vmatmul.bf16.gmra.mxu0 %v238
  %v399 = vpop.f32.mrf.mxu0
  %v400 = vadd.f32 %v98, %v399
  %v401 = vpop.f32.mrf.mxu0
  %v402 = vadd.f32 %v98, %v401
  %403 = vmatmul.bf16.gmra.mxu0 %v239
  %v404 = vpop.f32.mrf.mxu0
  %v405 = vadd.f32 %v98, %v404
  %v406 = vpop.f32.mrf.mxu0
  %v407 = vadd.f32 %v98, %v406
  %408 = vmatmul.bf16.gmra.mxu0 %v240
  %v409 = vpop.f32.mrf.mxu0
  %v410 = vadd.f32 %v98, %v409
  %v411 = vpop.f32.mrf.mxu0
  %v412 = vadd.f32 %v98, %v411
  %413 = vmatmul.bf16.gmra.mxu0 %v241
  %v414 = vpop.f32.mrf.mxu0
  %v415 = vadd.f32 %v98, %v414
  %v416 = vpop.f32.mrf.mxu0
  %v417 = vadd.f32 %v98, %v416
  %418 = vmatmul.bf16.gmra.mxu0 %v242
  %v419 = vpop.f32.mrf.mxu0
  %v420 = vadd.f32 %v98, %v419
  %v421 = vpop.f32.mrf.mxu0
  %v422 = vadd.f32 %v98, %v421
  %423 = vmatmul.bf16.gmra.mxu0 %v243
  %v424 = vpop.f32.mrf.mxu0
  %v425 = vadd.f32 %v98, %v424
  %v426 = vpop.f32.mrf.mxu0
  %v427 = vadd.f32 %v98, %v426
  %428 = vmatmul.bf16.gmra.mxu0 %v244
  %v429 = vpop.f32.mrf.mxu0
  %v430 = vadd.f32 %v98, %v429
  %v431 = vpop.f32.mrf.mxu0
  %v432 = vadd.f32 %v98, %v431
  %433 = vmatmul.bf16.gmra.mxu0 %v245
  %v434 = vpop.f32.mrf.mxu0
  %v435 = vadd.f32 %v98, %v434
  %v436 = vpop.f32.mrf.mxu0
  %v437 = vadd.f32 %v98, %v436
  %438 = vmatmul.bf16.gmra.mxu0 %v246
  %v439 = vpop.f32.mrf.mxu0
  %v440 = vadd.f32 %v98, %v439
  %v441 = vpop.f32.mrf.mxu0
  %v442 = vadd.f32 %v98, %v441
  %443 = vmatmul.bf16.gmra.mxu0 %v247
  %v444 = vpop.f32.mrf.mxu0
  %v445 = vadd.f32 %v98, %v444
  %v446 = vpop.f32.mrf.mxu0
  %v447 = vadd.f32 %v98, %v446
  %448 = vmatmul.bf16.gmra.mxu0 %v248
  %v449 = vpop.f32.mrf.mxu0
  %v450 = vadd.f32 %v98, %v449
  %v451 = vpop.f32.mrf.mxu0
  %v452 = vadd.f32 %v98, %v451
  %453 = vmatmul.bf16.gmra.mxu0 %v249
  %v454 = vpop.f32.mrf.mxu0
  %v455 = vadd.f32 %v98, %v454
  %v456 = vpop.f32.mrf.mxu0
  %v457 = vadd.f32 %v98, %v456
  %458 = vmatmul.bf16.gmra.mxu0 %v250
  %v459 = vpop.f32.mrf.mxu0
  %v460 = vadd.f32 %v98, %v459
  %v461 = vpop.f32.mrf.mxu0
  %v462 = vadd.f32 %v98, %v461
  %463 = vmatmul.bf16.gmra.mxu0 %v251
  %v464 = vpop.f32.mrf.mxu0
  %v465 = vadd.f32 %v98, %v464
  %v466 = vpop.f32.mrf.mxu0
  %v467 = vadd.f32 %v98, %v466
  %468 = vmatmul.bf16.gmra.mxu0 %v252
  %v469 = vpop.f32.mrf.mxu0
  %v470 = vadd.f32 %v98, %v469
  %v471 = vpop.f32.mrf.mxu0
  %v472 = vadd.f32 %v98, %v471
  %473 = vmatmul.bf16.gmra.mxu0 %v253
  %v474 = vpop.f32.mrf.mxu0
  %v475 = vadd.f32 %v98, %v474
  %v476 = vpop.f32.mrf.mxu0
  %v477 = vadd.f32 %v98, %v476
  %478 = vmatmul.bf16.gmra.mxu0 %v254
  %v479 = vpop.f32.mrf.mxu0
  %v480 = vadd.f32 %v98, %v479
  %v481 = vpop.f32.mrf.mxu0
  %v482 = vadd.f32 %v98, %v481
  %483 = vmatmul.bf16.gmra.mxu0 %v255
  %v484 = vpop.f32.mrf.mxu0
  %v485 = vadd.f32 %v98, %v484
  %v486 = vpop.f32.mrf.mxu0
  %v487 = vadd.f32 %v98, %v486
  %488 = vmatmul.bf16.gmra.mxu0 %v256
  %v489 = vpop.f32.mrf.mxu0
  %v490 = vadd.f32 %v98, %v489
  %v491 = vpop.f32.mrf.mxu0
  %v492 = vadd.f32 %v98, %v491
  %493 = vmatmul.bf16.gmra.mxu0 %v257
  %v494 = vpop.f32.mrf.mxu0
  %v495 = vadd.f32 %v98, %v494
  %v496 = vpop.f32.mrf.mxu0
  %v497 = vadd.f32 %v98, %v496
  %498 = vmatmul.bf16.gmra.mxu0 %v258
  %v499 = vpop.f32.mrf.mxu0
  %v500 = vadd.f32 %v98, %v499
  %v501 = vpop.f32.mrf.mxu0
  %v502 = vadd.f32 %v98, %v501
  %503 = vmatmul.bf16.gmra.mxu0 %v259
  %v504 = vpop.f32.mrf.mxu0
  %v505 = vadd.f32 %v98, %v504
  %v506 = vpop.f32.mrf.mxu0
  %v507 = vadd.f32 %v98, %v506
  %508 = vdwg.mxu0
  %v509 = vpack.c.bf16 %v350, %v350
  %v510 = vpack.c.bf16 %v352, %v352
  %v511 = vpack.c.bf16 %v355, %v355
  %v512 = vpack.c.bf16 %v357, %v357
  %v513 = vpack.c.bf16 %v360, %v360
  %v514 = vpack.c.bf16 %v362, %v362
  %v515 = vpack.c.bf16 %v365, %v365
  %v516 = vpack.c.bf16 %v367, %v367
  %v517 = vpack.c.bf16 %v370, %v370
  %v518 = vpack.c.bf16 %v372, %v372
  %v519 = vpack.c.bf16 %v375, %v375
  %v520 = vpack.c.bf16 %v377, %v377
  %v521 = vpack.c.bf16 %v380, %v380
  %v522 = vpack.c.bf16 %v382, %v382
  %v523 = vpack.c.bf16 %v385, %v385
  %v524 = vpack.c.bf16 %v387, %v387
  %v525 = vpack.c.bf16 %v390, %v390
  %v526 = vpack.c.bf16 %v392, %v392
  %v527 = vpack.c.bf16 %v395, %v395
  %v528 = vpack.c.bf16 %v397, %v397
  %v529 = vpack.c.bf16 %v400, %v400
  %v530 = vpack.c.bf16 %v402, %v402
  %v531 = vpack.c.bf16 %v405, %v405
  %v532 = vpack.c.bf16 %v407, %v407
  %v533 = vpack.c.bf16 %v410, %v410
  %v534 = vpack.c.bf16 %v412, %v412
  %v535 = vpack.c.bf16 %v415, %v415
  %v536 = vpack.c.bf16 %v417, %v417
  %v537 = vpack.c.bf16 %v420, %v420
  %v538 = vpack.c.bf16 %v422, %v422
  %v539 = vpack.c.bf16 %v425, %v425
  %v540 = vpack.c.bf16 %v427, %v427
  %v541 = vpack.c.bf16 %v430, %v430
  %v542 = vpack.c.bf16 %v432, %v432
  %v543 = vpack.c.bf16 %v435, %v435
  %v544 = vpack.c.bf16 %v437, %v437
  %v545 = vpack.c.bf16 %v440, %v440
  %v546 = vpack.c.bf16 %v442, %v442
  %v547 = vpack.c.bf16 %v445, %v445
  %v548 = vpack.c.bf16 %v447, %v447
  %v549 = vpack.c.bf16 %v450, %v450
  %v550 = vpack.c.bf16 %v452, %v452
  %v551 = vpack.c.bf16 %v455, %v455
  %v552 = vpack.c.bf16 %v457, %v457
  %v553 = vpack.c.bf16 %v460, %v460
  %v554 = vpack.c.bf16 %v462, %v462
  %v555 = vpack.c.bf16 %v465, %v465
  %v556 = vpack.c.bf16 %v467, %v467
  %v557 = vpack.c.bf16 %v470, %v470
  %v558 = vpack.c.bf16 %v472, %v472
  %v559 = vpack.c.bf16 %v475, %v475
  %v560 = vpack.c.bf16 %v477, %v477
  %v561 = vpack.c.bf16 %v480, %v480
  %v562 = vpack.c.bf16 %v482, %v482
  %v563 = vpack.c.bf16 %v485, %v485
  %v564 = vpack.c.bf16 %v487, %v487
  %v565 = vpack.c.bf16 %v490, %v490
  %v566 = vpack.c.bf16 %v492, %v492
  %v567 = vpack.c.bf16 %v495, %v495
  %v568 = vpack.c.bf16 %v497, %v497
  %v569 = vpack.c.bf16 %v500, %v500
  %v570 = vpack.c.bf16 %v502, %v502
  %v571 = vpack.c.bf16 %v505, %v505
  %v572 = vpack.c.bf16 %v507, %v507
  %573 = vst [vmem:[%s3] sm:$0xf] %v509
  %574 = vst [vmem:[%s3 + $0x4] sm:$0xf] %v510
  %575 = vst [vmem:[%s3 + $0x8] sm:$0xf] %v511
  %576 = vst [vmem:[%s3 + $0xc] sm:$0xf] %v512
  %577 = vst [vmem:[%s3 + $0x10] sm:$0xf] %v513
  %578 = vst [vmem:[%s3 + $0x14] sm:$0xf] %v514
  %579 = vst [vmem:[%s3 + $0x18] sm:$0xf] %v515
  %580 = vst [vmem:[%s3 + $0x1c] sm:$0xf] %v516
  %581 = vst [vmem:[%s3 + $0x20] sm:$0xf] %v517
  %582 = vst [vmem:[%s3 + $0x24] sm:$0xf] %v518
  %583 = vst [vmem:[%s3 + $0x28] sm:$0xf] %v519
  %584 = vst [vmem:[%s3 + $0x2c] sm:$0xf] %v520
  %585 = vst [vmem:[%s3 + $0x30] sm:$0xf] %v521
  %586 = vst [vmem:[%s3 + $0x34] sm:$0xf] %v522
  %587 = vst [vmem:[%s3 + $0x38] sm:$0xf] %v523
  %588 = vst [vmem:[%s3 + $0x3c] sm:$0xf] %v524
  %589 = vst [vmem:[%s3 + $0x40] sm:$0xf] %v525
  %590 = vst [vmem:[%s3 + $0x44] sm:$0xf] %v526
  %591 = vst [vmem:[%s3 + $0x48] sm:$0xf] %v527
  %592 = vst [vmem:[%s3 + $0x4c] sm:$0xf] %v528
  %593 = vst [vmem:[%s3 + $0x50] sm:$0xf] %v529
  %594 = vst [vmem:[%s3 + $0x54] sm:$0xf] %v530
  %595 = vst [vmem:[%s3 + $0x58] sm:$0xf] %v531
  %596 = vst [vmem:[%s3 + $0x5c] sm:$0xf] %v532
  %597 = vst [vmem:[%s3 + $0x60] sm:$0xf] %v533
  %598 = vst [vmem:[%s3 + $0x64] sm:$0xf] %v534
  %599 = vst [vmem:[%s3 + $0x68] sm:$0xf] %v535
  %600 = vst [vmem:[%s3 + $0x6c] sm:$0xf] %v536
  %601 = vst [vmem:[%s3 + $0x70] sm:$0xf] %v537
  %602 = vst [vmem:[%s3 + $0x74] sm:$0xf] %v538
  %603 = vst [vmem:[%s3 + $0x78] sm:$0xf] %v539
  %604 = vst [vmem:[%s3 + $0x7c] sm:$0xf] %v540
  %605 = vst [vmem:[%s3 + $0x80] sm:$0xf] %v541
  %606 = vst [vmem:[%s3 + $0x84] sm:$0xf] %v542
  %607 = vst [vmem:[%s3 + $0x88] sm:$0xf] %v543
  %608 = vst [vmem:[%s3 + $0x8c] sm:$0xf] %v544
  %609 = vst [vmem:[%s3 + $0x90] sm:$0xf] %v545
  %610 = vst [vmem:[%s3 + $0x94] sm:$0xf] %v546
  %611 = vst [vmem:[%s3 + $0x98] sm:$0xf] %v547
  %612 = vst [vmem:[%s3 + $0x9c] sm:$0xf] %v548
  %613 = vst [vmem:[%s3 + $0xa0] sm:$0xf] %v549
  %614 = vst [vmem:[%s3 + $0xa4] sm:$0xf] %v550
  %615 = vst [vmem:[%s3 + $0xa8] sm:$0xf] %v551
  %616 = vst [vmem:[%s3 + $0xac] sm:$0xf] %v552
  %617 = vst [vmem:[%s3 + $0xb0] sm:$0xf] %v553
  %618 = vst [vmem:[%s3 + $0xb4] sm:$0xf] %v554
  %619 = vst [vmem:[%s3 + $0xb8] sm:$0xf] %v555
  %620 = vst [vmem:[%s3 + $0xbc] sm:$0xf] %v556
  %621 = vst [vmem:[%s3 + $0xc0] sm:$0xf] %v557
  %622 = vst [vmem:[%s3 + $0xc4] sm:$0xf] %v558
  %623 = vst [vmem:[%s3 + $0xc8] sm:$0xf] %v559
  %624 = vst [vmem:[%s3 + $0xcc] sm:$0xf] %v560
  %625 = vst [vmem:[%s3 + $0xd0] sm:$0xf] %v561
  %626 = vst [vmem:[%s3 + $0xd4] sm:$0xf] %v562
  %627 = vst [vmem:[%s3 + $0xd8] sm:$0xf] %v563
  %628 = vst [vmem:[%s3 + $0xdc] sm:$0xf] %v564
  %629 = vst [vmem:[%s3 + $0xe0] sm:$0xf] %v565
  %630 = vst [vmem:[%s3 + $0xe4] sm:$0xf] %v566
  %631 = vst [vmem:[%s3 + $0xe8] sm:$0xf] %v567
  %632 = vst [vmem:[%s3 + $0xec] sm:$0xf] %v568
  %633 = vst [vmem:[%s3 + $0xf0] sm:$0xf] %v569
  %634 = vst [vmem:[%s3 + $0xf4] sm:$0xf] %v570
  %635 = vst [vmem:[%s3 + $0xf8] sm:$0xf] %v571
  %636 = vst [vmem:[%s3 + $0xfc] sm:$0xf] %v572
  %v637 = vadd.f32 %v350, %v352
  %v638 = vadd.f32 %v637, %v355
  %v639 = vadd.f32 %v638, %v357
  %v640 = vadd.f32 %v639, %v360
  %v641 = vadd.f32 %v640, %v362
  %v642 = vadd.f32 %v641, %v365
  %v643 = vadd.f32 %v642, %v367
  %v644 = vadd.f32 %v643, %v370
  %v645 = vadd.f32 %v644, %v372
  %v646 = vadd.f32 %v645, %v375
  %v647 = vadd.f32 %v646, %v377
  %v648 = vadd.f32 %v647, %v380
  %v649 = vadd.f32 %v648, %v382
  %v650 = vadd.f32 %v649, %v385
  %v651 = vadd.f32 %v650, %v387
  %v652 = vadd.f32 %v651, %v390
  %v653 = vadd.f32 %v652, %v392
  %v654 = vadd.f32 %v653, %v395
  %v655 = vadd.f32 %v654, %v397
  %v656 = vadd.f32 %v655, %v400
  %v657 = vadd.f32 %v656, %v402
  %v658 = vadd.f32 %v657, %v405
  %v659 = vadd.f32 %v658, %v407
  %v660 = vadd.f32 %v659, %v410
  %v661 = vadd.f32 %v660, %v412
  %v662 = vadd.f32 %v661, %v415
  %v663 = vadd.f32 %v662, %v417
  %v664 = vadd.f32 %v663, %v420
  %v665 = vadd.f32 %v664, %v422
  %v666 = vadd.f32 %v665, %v425
  %v667 = vadd.f32 %v666, %v427
  %v668 = vadd.f32 %v667, %v430
  %v669 = vadd.f32 %v668, %v432
  %v670 = vadd.f32 %v669, %v435
  %v671 = vadd.f32 %v670, %v437
  %v672 = vadd.f32 %v671, %v440
  %v673 = vadd.f32 %v672, %v442
  %v674 = vadd.f32 %v673, %v445
  %v675 = vadd.f32 %v674, %v447
  %v676 = vadd.f32 %v675, %v450
  %v677 = vadd.f32 %v676, %v452
  %v678 = vadd.f32 %v677, %v455
  %v679 = vadd.f32 %v678, %v457
  %v680 = vadd.f32 %v679, %v460
  %v681 = vadd.f32 %v680, %v462
  %v682 = vadd.f32 %v681, %v465
  %v683 = vadd.f32 %v682, %v467
  %v684 = vadd.f32 %v683, %v470
  %v685 = vadd.f32 %v684, %v472
  %v686 = vadd.f32 %v685, %v475
  %v687 = vadd.f32 %v686, %v477
  %v688 = vadd.f32 %v687, %v480
  %v689 = vadd.f32 %v688, %v482
  %v690 = vadd.f32 %v689, %v485
  %v691 = vadd.f32 %v690, %v487
  %v692 = vadd.f32 %v691, %v490
  %v693 = vadd.f32 %v692, %v492
  %v694 = vadd.f32 %v693, %v495
  %v695 = vadd.f32 %v694, %v497
  %v696 = vadd.f32 %v695, %v500
  %v697 = vadd.f32 %v696, %v502
  %v698 = vadd.f32 %v697, %v505
  %v699 = vadd.f32 %v698, %v507
  %v700 = vrot.slane %v699, 4
  %v701 = vadd.f32 %v699, %v700
  %v702 = vrot.slane %v701, 2
  %v703 = vadd.f32 %v701, %v702
  %v704 = vrot.slane %v703, 1
  %v705 = vadd.f32 %v703, %v704
  %v706 = vmul.f32 %v350, %v350
  %v707 = vmul.f32 %v352, %v352
  %v708 = vmul.f32 %v355, %v355
  %v709 = vmul.f32 %v357, %v357
  %v710 = vmul.f32 %v360, %v360
  %v711 = vmul.f32 %v362, %v362
  %v712 = vmul.f32 %v365, %v365
  %v713 = vmul.f32 %v367, %v367
  %v714 = vmul.f32 %v370, %v370
  %v715 = vmul.f32 %v372, %v372
  %v716 = vmul.f32 %v375, %v375
  %v717 = vmul.f32 %v377, %v377
  %v718 = vmul.f32 %v380, %v380
  %v719 = vmul.f32 %v382, %v382
  %v720 = vmul.f32 %v385, %v385
  %v721 = vmul.f32 %v387, %v387
  %v722 = vmul.f32 %v390, %v390
  %v723 = vmul.f32 %v392, %v392
  %v724 = vmul.f32 %v395, %v395
  %v725 = vmul.f32 %v397, %v397
  %v726 = vmul.f32 %v400, %v400
  %v727 = vmul.f32 %v402, %v402
  %v728 = vmul.f32 %v405, %v405
  %v729 = vmul.f32 %v407, %v407
  %v730 = vmul.f32 %v410, %v410
  %v731 = vmul.f32 %v412, %v412
  %v732 = vmul.f32 %v415, %v415
  %v733 = vmul.f32 %v417, %v417
  %v734 = vmul.f32 %v420, %v420
  %v735 = vmul.f32 %v422, %v422
  %v736 = vmul.f32 %v425, %v425
  %v737 = vmul.f32 %v427, %v427
  %v738 = vmul.f32 %v430, %v430
  %v739 = vmul.f32 %v432, %v432
  %v740 = vmul.f32 %v435, %v435
  %v741 = vmul.f32 %v437, %v437
  %v742 = vmul.f32 %v440, %v440
  %v743 = vmul.f32 %v442, %v442
  %v744 = vmul.f32 %v445, %v445
  %v745 = vmul.f32 %v447, %v447
  %v746 = vmul.f32 %v450, %v450
  %v747 = vmul.f32 %v452, %v452
  %v748 = vmul.f32 %v455, %v455
  %v749 = vmul.f32 %v457, %v457
  %v750 = vmul.f32 %v460, %v460
  %v751 = vmul.f32 %v462, %v462
  %v752 = vmul.f32 %v465, %v465
  %v753 = vmul.f32 %v467, %v467
  %v754 = vmul.f32 %v470, %v470
  %v755 = vmul.f32 %v472, %v472
  %v756 = vmul.f32 %v475, %v475
  %v757 = vmul.f32 %v477, %v477
  %v758 = vmul.f32 %v480, %v480
  %v759 = vmul.f32 %v482, %v482
  %v760 = vmul.f32 %v485, %v485
  %v761 = vmul.f32 %v487, %v487
  %v762 = vmul.f32 %v490, %v490
  %v763 = vmul.f32 %v492, %v492
  %v764 = vmul.f32 %v495, %v495
  %v765 = vmul.f32 %v497, %v497
  %v766 = vmul.f32 %v500, %v500
  %v767 = vmul.f32 %v502, %v502
  %v768 = vmul.f32 %v505, %v505
  %v769 = vmul.f32 %v507, %v507
  %v770 = vadd.f32 %v706, %v707
  %v771 = vadd.f32 %v770, %v708
  %v772 = vadd.f32 %v771, %v709
  %v773 = vadd.f32 %v772, %v710
  %v774 = vadd.f32 %v773, %v711
  %v775 = vadd.f32 %v774, %v712
  %v776 = vadd.f32 %v775, %v713
  %v777 = vadd.f32 %v776, %v714
  %v778 = vadd.f32 %v777, %v715
  %v779 = vadd.f32 %v778, %v716
  %v780 = vadd.f32 %v779, %v717
  %v781 = vadd.f32 %v780, %v718
  %v782 = vadd.f32 %v781, %v719
  %v783 = vadd.f32 %v782, %v720
  %v784 = vadd.f32 %v783, %v721
  %v785 = vadd.f32 %v784, %v722
  %v786 = vadd.f32 %v785, %v723
  %v787 = vadd.f32 %v786, %v724
  %v788 = vadd.f32 %v787, %v725
  %v789 = vadd.f32 %v788, %v726
  %v790 = vadd.f32 %v789, %v727
  %v791 = vadd.f32 %v790, %v728
  %v792 = vadd.f32 %v791, %v729
  %v793 = vadd.f32 %v792, %v730
  %v794 = vadd.f32 %v793, %v731
  %v795 = vadd.f32 %v794, %v732
  %v796 = vadd.f32 %v795, %v733
  %v797 = vadd.f32 %v796, %v734
  %v798 = vadd.f32 %v797, %v735
  %v799 = vadd.f32 %v798, %v736
  %v800 = vadd.f32 %v799, %v737
  %v801 = vadd.f32 %v800, %v738
  %v802 = vadd.f32 %v801, %v739
  %v803 = vadd.f32 %v802, %v740
  %v804 = vadd.f32 %v803, %v741
  %v805 = vadd.f32 %v804, %v742
  %v806 = vadd.f32 %v805, %v743
  %v807 = vadd.f32 %v806, %v744
  %v808 = vadd.f32 %v807, %v745
  %v809 = vadd.f32 %v808, %v746
  %v810 = vadd.f32 %v809, %v747
  %v811 = vadd.f32 %v810, %v748
  %v812 = vadd.f32 %v811, %v749
  %v813 = vadd.f32 %v812, %v750
  %v814 = vadd.f32 %v813, %v751
  %v815 = vadd.f32 %v814, %v752
  %v816 = vadd.f32 %v815, %v753
  %v817 = vadd.f32 %v816, %v754
  %v818 = vadd.f32 %v817, %v755
  %v819 = vadd.f32 %v818, %v756
  %v820 = vadd.f32 %v819, %v757
  %v821 = vadd.f32 %v820, %v758
  %v822 = vadd.f32 %v821, %v759
  %v823 = vadd.f32 %v822, %v760
  %v824 = vadd.f32 %v823, %v761
  %v825 = vadd.f32 %v824, %v762
  %v826 = vadd.f32 %v825, %v763
  %v827 = vadd.f32 %v826, %v764
  %v828 = vadd.f32 %v827, %v765
  %v829 = vadd.f32 %v828, %v766
  %v830 = vadd.f32 %v829, %v767
  %v831 = vadd.f32 %v830, %v768
  %v832 = vadd.f32 %v831, %v769
  %v833 = vrot.slane %v832, 4
  %v834 = vadd.f32 %v832, %v833
  %v835 = vrot.slane %v834, 2
  %v836 = vadd.f32 %v834, %v835
  %v837 = vrot.slane %v836, 1
  %v838 = vadd.f32 %v836, %v837
  %vm839 = vcmask 1040384
  %v840 = vsel %vm839, %v705, %v838
  %841 = vst [vmem:[%s4] sm:$0x3] %v840
  // Predicated region
  $region14: #{residual_block_forward.5} parent=0 // pred_check
    _
  $region15: #{residual_block_forward.5} parent=0 // pred_check_branch
    %843 = sbr.rel (0) target = $region17
  $region16: #{residual_block_forward.5} parent=0 // pred_region
    _
  $region17: #{residual_block_forward.5} parent=0 // pred_fallthru
    _
  // Predicated region
  $region18: #{residual_block_forward.5} parent=0 // pred_check
    _
  $region19: #{residual_block_forward.5} parent=0 // pred_check_branch
    %845 = sbr.rel (0) target = $region21
  $region20: #{residual_block_forward.5} parent=0 // pred_region
    _
  $region21: #{residual_block_forward.5} parent=0 // pred_fallthru
    _
  // Predicated region
  $region22: #{residual_block_forward.5} parent=0 // pred_check
    _
  $region23: #{residual_block_forward.5} parent=0 // pred_check_branch
    %847 = sbr.rel (0) target = $region25
  $region24: #{residual_block_forward.5} parent=0 // pred_region
    _
  $region25: #{residual_block_forward.5} parent=0 // pred_fallthru
    _
  // Predicated region
  $region26: #{residual_block_forward.5} parent=0 // pred_check
    _
  $region27: #{residual_block_forward.5} parent=0 // pred_check_branch
    %849 = sbr.rel (0) target = $region29
  $region28: #{residual_block_forward.5} parent=0 // pred_region
    _
  $region29: #{residual_block_forward.5} parent=0 // pred_fallthru
    _

// kernel: residual_block_forward.9
$region0: #{residual_block_forward.9}
  #allocation0 [shape = 'u32[]', space=smem, size = 0x4, offset = 0x4, fixed_abs, tag = 'smem constant byte address 0x4 - core index']
  #allocation1 [shape = 'u32[72,128]{1,0:T(1,128)}', space=vmem, size = 0x9000, scoped, tag = 'internal scratch']
  %s0 = inlined_call_operand.vmem [shape: bf16[512,128], index: 0, kind: input, shape index: {}]
  %s1 = inlined_call_operand.vmem [shape: f32[1,128], index: 1, kind: input, shape index: {}]
  %s2 = inlined_call_operand.vmem [shape: f32[1,128], index: 2, kind: input, shape index: {}]
  %s3 = inlined_call_operand.vmem [shape: bf16[512,128], index: 3, kind: input, shape index: {}]
  %s4 = inlined_call_operand.vmem [shape: bf16[512,128], index: 4, kind: output, shape index: {}]
  %s5 = sld [smem:[#allocation0]]
  $region26: #{residual_block_forward.9} parent=0
    _
  %s7 = ssub.s32 1, %s5
  %s8 = scalar_select 0, %s7, %s5
  // Predicated region
  $region2: #{residual_block_forward.9} parent=0 // pred_check
    _
  $region3: #{residual_block_forward.9} parent=0 // pred_check_branch
    %10 = sbr.rel (0) target = $region5
  $region4: #{residual_block_forward.9} parent=0 // pred_region
    _
  $region5: #{residual_block_forward.9} parent=0 // pred_fallthru
    _
  // Predicated region
  $region6: #{residual_block_forward.9} parent=0 // pred_check
    _
  $region7: #{residual_block_forward.9} parent=0 // pred_check_branch
    %12 = sbr.rel (0) target = $region9
  $region8: #{residual_block_forward.9} parent=0 // pred_region
    _
  $region9: #{residual_block_forward.9} parent=0 // pred_fallthru
    _
  // Predicated region
  $region10: #{residual_block_forward.9} parent=0 // pred_check
    _
  $region11: #{residual_block_forward.9} parent=0 // pred_check_branch
    %14 = sbr.rel (0) target = $region13
  $region12: #{residual_block_forward.9} parent=0 // pred_region
    _
  $region13: #{residual_block_forward.9} parent=0 // pred_fallthru
    _
  // Predicated region
  $region14: #{residual_block_forward.9} parent=0 // pred_check
    _
  $region15: #{residual_block_forward.9} parent=0 // pred_check_branch
    %16 = sbr.rel (0) target = $region17
  $region16: #{residual_block_forward.9} parent=0 // pred_region
    _
  $region17: #{residual_block_forward.9} parent=0 // pred_fallthru
    _
  %v17 = vld [vmem:[%s0] sm:$0xf]
  %v18 = vld [vmem:[%s0 + $0x4] sm:$0xf]
  %v19 = vld [vmem:[%s0 + $0x8] sm:$0xf]
  %v20 = vld [vmem:[%s0 + $0xc] sm:$0xf]
  %v21 = vld [vmem:[%s0 + $0x10] sm:$0xf]
  %v22 = vld [vmem:[%s0 + $0x14] sm:$0xf]
  %v23 = vld [vmem:[%s0 + $0x18] sm:$0xf]
  %v24 = vld [vmem:[%s0 + $0x1c] sm:$0xf]
  %v25 = vld [vmem:[%s0 + $0x20] sm:$0xf]
  %v26 = vld [vmem:[%s0 + $0x24] sm:$0xf]
  %v27 = vld [vmem:[%s0 + $0x28] sm:$0xf]
  %v28 = vld [vmem:[%s0 + $0x2c] sm:$0xf]
  %v29 = vld [vmem:[%s0 + $0x30] sm:$0xf]
  %v30 = vld [vmem:[%s0 + $0x34] sm:$0xf]
  %v31 = vld [vmem:[%s0 + $0x38] sm:$0xf]
  %v32 = vld [vmem:[%s0 + $0x3c] sm:$0xf]
  %v33 = vld [vmem:[%s0 + $0x40] sm:$0xf]
  %v34 = vld [vmem:[%s0 + $0x44] sm:$0xf]
  %v35 = vld [vmem:[%s0 + $0x48] sm:$0xf]
  %v36 = vld [vmem:[%s0 + $0x4c] sm:$0xf]
  %v37 = vld [vmem:[%s0 + $0x50] sm:$0xf]
  %v38 = vld [vmem:[%s0 + $0x54] sm:$0xf]
  %v39 = vld [vmem:[%s0 + $0x58] sm:$0xf]
  %v40 = vld [vmem:[%s0 + $0x5c] sm:$0xf]
  %v41 = vld [vmem:[%s0 + $0x60] sm:$0xf]
  %v42 = vld [vmem:[%s0 + $0x64] sm:$0xf]
  %v43 = vld [vmem:[%s0 + $0x68] sm:$0xf]
  %v44 = vld [vmem:[%s0 + $0x6c] sm:$0xf]
  %v45 = vld [vmem:[%s0 + $0x70] sm:$0xf]
  %v46 = vld [vmem:[%s0 + $0x74] sm:$0xf]
  %v47 = vld [vmem:[%s0 + $0x78] sm:$0xf]
  %v48 = vld [vmem:[%s0 + $0x7c] sm:$0xf]
  %v49 = vld [vmem:[%s0 + $0x80] sm:$0xf]
  %v50 = vld [vmem:[%s0 + $0x84] sm:$0xf]
  %v51 = vld [vmem:[%s0 + $0x88] sm:$0xf]
  %v52 = vld [vmem:[%s0 + $0x8c] sm:$0xf]
  %v53 = vld [vmem:[%s0 + $0x90] sm:$0xf]
  %v54 = vld [vmem:[%s0 + $0x94] sm:$0xf]
  %v55 = vld [vmem:[%s0 + $0x98] sm:$0xf]
  %v56 = vld [vmem:[%s0 + $0x9c] sm:$0xf]
  %v57 = vld [vmem:[%s0 + $0xa0] sm:$0xf]
  %v58 = vld [vmem:[%s0 + $0xa4] sm:$0xf]
  %v59 = vld [vmem:[%s0 + $0xa8] sm:$0xf]
  %v60 = vld [vmem:[%s0 + $0xac] sm:$0xf]
  %v61 = vld [vmem:[%s0 + $0xb0] sm:$0xf]
  %v62 = vld [vmem:[%s0 + $0xb4] sm:$0xf]
  %v63 = vld [vmem:[%s0 + $0xb8] sm:$0xf]
  %v64 = vld [vmem:[%s0 + $0xbc] sm:$0xf]
  %v65 = vld [vmem:[%s0 + $0xc0] sm:$0xf]
  %v66 = vld [vmem:[%s0 + $0xc4] sm:$0xf]
  %v67 = vld [vmem:[%s0 + $0xc8] sm:$0xf]
  %v68 = vld [vmem:[%s0 + $0xcc] sm:$0xf]
  %v69 = vld [vmem:[%s0 + $0xd0] sm:$0xf]
  %v70 = vld [vmem:[%s0 + $0xd4] sm:$0xf]
  %v71 = vld [vmem:[%s0 + $0xd8] sm:$0xf]
  %v72 = vld [vmem:[%s0 + $0xdc] sm:$0xf]
  %v73 = vld [vmem:[%s0 + $0xe0] sm:$0xf]
  %v74 = vld [vmem:[%s0 + $0xe4] sm:$0xf]
  %v75 = vld [vmem:[%s0 + $0xe8] sm:$0xf]
  %v76 = vld [vmem:[%s0 + $0xec] sm:$0xf]
  %v77 = vld [vmem:[%s0 + $0xf0] sm:$0xf]
  %v78 = vld [vmem:[%s0 + $0xf4] sm:$0xf]
  %v79 = vld [vmem:[%s0 + $0xf8] sm:$0xf]
  %v80 = vld [vmem:[%s0 + $0xfc] sm:$0xf]
  %v81 = vunpack.c.l.bf16 %v17
  %v82 = vunpack.c.l.bf16 %v18
  %v83 = vunpack.c.l.bf16 %v19
  %v84 = vunpack.c.l.bf16 %v20
  %v85 = vunpack.c.l.bf16 %v21
  %v86 = vunpack.c.l.bf16 %v22
  %v87 = vunpack.c.l.bf16 %v23
  %v88 = vunpack.c.l.bf16 %v24
  %v89 = vunpack.c.l.bf16 %v25
  %v90 = vunpack.c.l.bf16 %v26
  %v91 = vunpack.c.l.bf16 %v27
  %v92 = vunpack.c.l.bf16 %v28
  %v93 = vunpack.c.l.bf16 %v29
  %v94 = vunpack.c.l.bf16 %v30
  %v95 = vunpack.c.l.bf16 %v31
  %v96 = vunpack.c.l.bf16 %v32
  %v97 = vunpack.c.l.bf16 %v33
  %v98 = vunpack.c.l.bf16 %v34
  %v99 = vunpack.c.l.bf16 %v35
  %v100 = vunpack.c.l.bf16 %v36
  %v101 = vunpack.c.l.bf16 %v37
  %v102 = vunpack.c.l.bf16 %v38
  %v103 = vunpack.c.l.bf16 %v39
  %v104 = vunpack.c.l.bf16 %v40
  %v105 = vunpack.c.l.bf16 %v41
  %v106 = vunpack.c.l.bf16 %v42
  %v107 = vunpack.c.l.bf16 %v43
  %v108 = vunpack.c.l.bf16 %v44
  %v109 = vunpack.c.l.bf16 %v45
  %v110 = vunpack.c.l.bf16 %v46
  %v111 = vunpack.c.l.bf16 %v47
  %v112 = vunpack.c.l.bf16 %v48
  %v113 = vunpack.c.l.bf16 %v49
  %v114 = vunpack.c.l.bf16 %v50
  %v115 = vunpack.c.l.bf16 %v51
  %v116 = vunpack.c.l.bf16 %v52
  %v117 = vunpack.c.l.bf16 %v53
  %v118 = vunpack.c.l.bf16 %v54
  %v119 = vunpack.c.l.bf16 %v55
  %v120 = vunpack.c.l.bf16 %v56
  %v121 = vunpack.c.l.bf16 %v57
  %v122 = vunpack.c.l.bf16 %v58
  %v123 = vunpack.c.l.bf16 %v59
  %v124 = vunpack.c.l.bf16 %v60
  %v125 = vunpack.c.l.bf16 %v61
  %v126 = vunpack.c.l.bf16 %v62
  %v127 = vunpack.c.l.bf16 %v63
  %v128 = vunpack.c.l.bf16 %v64
  %v129 = vunpack.c.l.bf16 %v65
  %v130 = vunpack.c.l.bf16 %v66
  %v131 = vunpack.c.l.bf16 %v67
  %v132 = vunpack.c.l.bf16 %v68
  %v133 = vunpack.c.l.bf16 %v69
  %v134 = vunpack.c.l.bf16 %v70
  %v135 = vunpack.c.l.bf16 %v71
  %v136 = vunpack.c.l.bf16 %v72
  %v137 = vunpack.c.l.bf16 %v73
  %v138 = vunpack.c.l.bf16 %v74
  %v139 = vunpack.c.l.bf16 %v75
  %v140 = vunpack.c.l.bf16 %v76
  %v141 = vunpack.c.l.bf16 %v77
  %v142 = vunpack.c.l.bf16 %v78
  %v143 = vunpack.c.l.bf16 %v79
  %v144 = vunpack.c.l.bf16 %v80
  %v145 = vld [vmem:[%s1] sm:$0x1]
  %v147 = vperm.slane %v145, 0
  %v149 = vmul.f32 %v81, %v147
  %v150 = vmul.f32 %v82, %v147
  %v151 = vmul.f32 %v83, %v147
  %v152 = vmul.f32 %v84, %v147
  %v153 = vmul.f32 %v85, %v147
  %v154 = vmul.f32 %v86, %v147
  %v155 = vmul.f32 %v87, %v147
  %v156 = vmul.f32 %v88, %v147
  %v157 = vmul.f32 %v89, %v147
  %v158 = vmul.f32 %v90, %v147
  %v159 = vmul.f32 %v91, %v147
  %v160 = vmul.f32 %v92, %v147
  %v161 = vmul.f32 %v93, %v147
  %v162 = vmul.f32 %v94, %v147
  %v163 = vmul.f32 %v95, %v147
  %v164 = vmul.f32 %v96, %v147
  %v165 = vmul.f32 %v97, %v147
  %v166 = vmul.f32 %v98, %v147
  %v167 = vmul.f32 %v99, %v147
  %v168 = vmul.f32 %v100, %v147
  %v169 = vmul.f32 %v101, %v147
  %v170 = vmul.f32 %v102, %v147
  %v171 = vmul.f32 %v103, %v147
  %v172 = vmul.f32 %v104, %v147
  %v173 = vmul.f32 %v105, %v147
  %v174 = vmul.f32 %v106, %v147
  %v175 = vmul.f32 %v107, %v147
  %v176 = vmul.f32 %v108, %v147
  %v177 = vmul.f32 %v109, %v147
  %v178 = vmul.f32 %v110, %v147
  %v179 = vmul.f32 %v111, %v147
  %v180 = vmul.f32 %v112, %v147
  %v181 = vmul.f32 %v113, %v147
  %v182 = vmul.f32 %v114, %v147
  %v183 = vmul.f32 %v115, %v147
  %v184 = vmul.f32 %v116, %v147
  %v185 = vmul.f32 %v117, %v147
  %v186 = vmul.f32 %v118, %v147
  %v187 = vmul.f32 %v119, %v147
  %v188 = vmul.f32 %v120, %v147
  %v189 = vmul.f32 %v121, %v147
  %v190 = vmul.f32 %v122, %v147
  %v191 = vmul.f32 %v123, %v147
  %v192 = vmul.f32 %v124, %v147
  %v193 = vmul.f32 %v125, %v147
  %v194 = vmul.f32 %v126, %v147
  %v195 = vmul.f32 %v127, %v147
  %v196 = vmul.f32 %v128, %v147
  %v197 = vmul.f32 %v129, %v147
  %v198 = vmul.f32 %v130, %v147
  %v199 = vmul.f32 %v131, %v147
  %v200 = vmul.f32 %v132, %v147
  %v201 = vmul.f32 %v133, %v147
  %v202 = vmul.f32 %v134, %v147
  %v203 = vmul.f32 %v135, %v147
  %v204 = vmul.f32 %v136, %v147
  %v205 = vmul.f32 %v137, %v147
  %v206 = vmul.f32 %v138, %v147
  %v207 = vmul.f32 %v139, %v147
  %v208 = vmul.f32 %v140, %v147
  %v209 = vmul.f32 %v141, %v147
  %v210 = vmul.f32 %v142, %v147
  %v211 = vmul.f32 %v143, %v147
  %v212 = vmul.f32 %v144, %v147
  %v213 = vld [vmem:[%s2] sm:$0x1]
  %v215 = vperm.slane %v213, 0
  %v217 = vadd.f32 %v149, %v215
  %v218 = vadd.f32 %v150, %v215
  %v219 = vadd.f32 %v151, %v215
  %v220 = vadd.f32 %v152, %v215
  %v221 = vadd.f32 %v153, %v215
  %v222 = vadd.f32 %v154, %v215
  %v223 = vadd.f32 %v155, %v215
  %v224 = vadd.f32 %v156, %v215
  %v225 = vadd.f32 %v157, %v215
  %v226 = vadd.f32 %v158, %v215
  %v227 = vadd.f32 %v159, %v215
  %v228 = vadd.f32 %v160, %v215
  %v229 = vadd.f32 %v161, %v215
  %v230 = vadd.f32 %v162, %v215
  %v231 = vadd.f32 %v163, %v215
  %v232 = vadd.f32 %v164, %v215
  %v233 = vadd.f32 %v165, %v215
  %v234 = vadd.f32 %v166, %v215
  %v235 = vadd.f32 %v167, %v215
  %v236 = vadd.f32 %v168, %v215
  %v237 = vadd.f32 %v169, %v215
  %v238 = vadd.f32 %v170, %v215
  %v239 = vadd.f32 %v171, %v215
  %v240 = vadd.f32 %v172, %v215
  %v241 = vadd.f32 %v173, %v215
  %v242 = vadd.f32 %v174, %v215
  %v243 = vadd.f32 %v175, %v215
  %v244 = vadd.f32 %v176, %v215
  %v245 = vadd.f32 %v177, %v215
  %v246 = vadd.f32 %v178, %v215
  %v247 = vadd.f32 %v179, %v215
  %v248 = vadd.f32 %v180, %v215
  %v249 = vadd.f32 %v181, %v215
  %v250 = vadd.f32 %v182, %v215
  %v251 = vadd.f32 %v183, %v215
  %v252 = vadd.f32 %v184, %v215
  %v253 = vadd.f32 %v185, %v215
  %v254 = vadd.f32 %v186, %v215
  %v255 = vadd.f32 %v187, %v215
  %v256 = vadd.f32 %v188, %v215
  %v257 = vadd.f32 %v189, %v215
  %v258 = vadd.f32 %v190, %v215
  %v259 = vadd.f32 %v191, %v215
  %v260 = vadd.f32 %v192, %v215
  %v261 = vadd.f32 %v193, %v215
  %v262 = vadd.f32 %v194, %v215
  %v263 = vadd.f32 %v195, %v215
  %v264 = vadd.f32 %v196, %v215
  %v265 = vadd.f32 %v197, %v215
  %v266 = vadd.f32 %v198, %v215
  %v267 = vadd.f32 %v199, %v215
  %v268 = vadd.f32 %v200, %v215
  %v269 = vadd.f32 %v201, %v215
  %v270 = vadd.f32 %v202, %v215
  %v271 = vadd.f32 %v203, %v215
  %v272 = vadd.f32 %v204, %v215
  %v273 = vadd.f32 %v205, %v215
  %v274 = vadd.f32 %v206, %v215
  %v275 = vadd.f32 %v207, %v215
  %v276 = vadd.f32 %v208, %v215
  %v277 = vadd.f32 %v209, %v215
  %v278 = vadd.f32 %v210, %v215
  %v279 = vadd.f32 %v211, %v215
  %v280 = vadd.f32 %v212, %v215
  %vm281 = vcmp.gt.f32.partialorder %v217, 0.0
  %vm282 = vcmp.gt.f32.partialorder %v218, 0.0
  %vm283 = vcmp.gt.f32.partialorder %v219, 0.0
  %vm284 = vcmp.gt.f32.partialorder %v220, 0.0
  %vm285 = vcmp.gt.f32.partialorder %v221, 0.0
  %vm286 = vcmp.gt.f32.partialorder %v222, 0.0
  %vm287 = vcmp.gt.f32.partialorder %v223, 0.0
  %vm288 = vcmp.gt.f32.partialorder %v224, 0.0
  %vm289 = vcmp.gt.f32.partialorder %v225, 0.0
  %vm290 = vcmp.gt.f32.partialorder %v226, 0.0
  %vm291 = vcmp.gt.f32.partialorder %v227, 0.0
  %vm292 = vcmp.gt.f32.partialorder %v228, 0.0
  %vm293 = vcmp.gt.f32.partialorder %v229, 0.0
  %vm294 = vcmp.gt.f32.partialorder %v230, 0.0
  %vm295 = vcmp.gt.f32.partialorder %v231, 0.0
  %vm296 = vcmp.gt.f32.partialorder %v232, 0.0
  %vm297 = vcmp.gt.f32.partialorder %v233, 0.0
  %vm298 = vcmp.gt.f32.partialorder %v234, 0.0
  %vm299 = vcmp.gt.f32.partialorder %v235, 0.0
  %vm300 = vcmp.gt.f32.partialorder %v236, 0.0
  %vm301 = vcmp.gt.f32.partialorder %v237, 0.0
  %vm302 = vcmp.gt.f32.partialorder %v238, 0.0
  %vm303 = vcmp.gt.f32.partialorder %v239, 0.0
  %vm304 = vcmp.gt.f32.partialorder %v240, 0.0
  %vm305 = vcmp.gt.f32.partialorder %v241, 0.0
  %vm306 = vcmp.gt.f32.partialorder %v242, 0.0
  %vm307 = vcmp.gt.f32.partialorder %v243, 0.0
  %vm308 = vcmp.gt.f32.partialorder %v244, 0.0
  %vm309 = vcmp.gt.f32.partialorder %v245, 0.0
  %vm310 = vcmp.gt.f32.partialorder %v246, 0.0
  %vm311 = vcmp.gt.f32.partialorder %v247, 0.0
  %vm312 = vcmp.gt.f32.partialorder %v248, 0.0
  %vm313 = vcmp.gt.f32.partialorder %v249, 0.0
  %vm314 = vcmp.gt.f32.partialorder %v250, 0.0
  %vm315 = vcmp.gt.f32.partialorder %v251, 0.0
  %vm316 = vcmp.gt.f32.partialorder %v252, 0.0
  %vm317 = vcmp.gt.f32.partialorder %v253, 0.0
  %vm318 = vcmp.gt.f32.partialorder %v254, 0.0
  %vm319 = vcmp.gt.f32.partialorder %v255, 0.0
  %vm320 = vcmp.gt.f32.partialorder %v256, 0.0
  %vm321 = vcmp.gt.f32.partialorder %v257, 0.0
  %vm322 = vcmp.gt.f32.partialorder %v258, 0.0
  %vm323 = vcmp.gt.f32.partialorder %v259, 0.0
  %vm324 = vcmp.gt.f32.partialorder %v260, 0.0
  %vm325 = vcmp.gt.f32.partialorder %v261, 0.0
  %vm326 = vcmp.gt.f32.partialorder %v262, 0.0
  %vm327 = vcmp.gt.f32.partialorder %v263, 0.0
  %vm328 = vcmp.gt.f32.partialorder %v264, 0.0
  %vm329 = vcmp.gt.f32.partialorder %v265, 0.0
  %vm330 = vcmp.gt.f32.partialorder %v266, 0.0
  %vm331 = vcmp.gt.f32.partialorder %v267, 0.0
  %vm332 = vcmp.gt.f32.partialorder %v268, 0.0
  %vm333 = vcmp.gt.f32.partialorder %v269, 0.0
  %vm334 = vcmp.gt.f32.partialorder %v270, 0.0
  %vm335 = vcmp.gt.f32.partialorder %v271, 0.0
  %vm336 = vcmp.gt.f32.partialorder %v272, 0.0
  %vm337 = vcmp.gt.f32.partialorder %v273, 0.0
  %vm338 = vcmp.gt.f32.partialorder %v274, 0.0
  %vm339 = vcmp.gt.f32.partialorder %v275, 0.0
  %vm340 = vcmp.gt.f32.partialorder %v276, 0.0
  %vm341 = vcmp.gt.f32.partialorder %v277, 0.0
  %vm342 = vcmp.gt.f32.partialorder %v278, 0.0
  %vm343 = vcmp.gt.f32.partialorder %v279, 0.0
  %vm344 = vcmp.gt.f32.partialorder %v280, 0.0
  %v345 = vmul.f32 %v217, 0.1
  %v346 = vmul.f32 %v218, 0.1
  %v347 = vmul.f32 %v219, 0.1
  %v348 = vmul.f32 %v220, 0.1
  %v349 = vmul.f32 %v221, 0.1
  %v350 = vmul.f32 %v222, 0.1
  %v351 = vmul.f32 %v223, 0.1
  %v352 = vmul.f32 %v224, 0.1
  %v353 = vmul.f32 %v225, 0.1
  %v354 = vmul.f32 %v226, 0.1
  %v355 = vmul.f32 %v227, 0.1
  %v356 = vmul.f32 %v228, 0.1
  %v357 = vmul.f32 %v229, 0.1
  %v358 = vmul.f32 %v230, 0.1
  %v359 = vmul.f32 %v231, 0.1
  %v360 = vmul.f32 %v232, 0.1
  %v361 = vmul.f32 %v233, 0.1
  %v362 = vmul.f32 %v234, 0.1
  %v363 = vmul.f32 %v235, 0.1
  %v364 = vmul.f32 %v236, 0.1
  %v365 = vmul.f32 %v237, 0.1
  %v366 = vmul.f32 %v238, 0.1
  %v367 = vmul.f32 %v239, 0.1
  %v368 = vmul.f32 %v240, 0.1
  %v369 = vmul.f32 %v241, 0.1
  %v370 = vmul.f32 %v242, 0.1
  %v371 = vmul.f32 %v243, 0.1
  %v372 = vmul.f32 %v244, 0.1
  %v373 = vmul.f32 %v245, 0.1
  %v374 = vmul.f32 %v246, 0.1
  %v375 = vmul.f32 %v247, 0.1
  %v376 = vmul.f32 %v248, 0.1
  %v377 = vmul.f32 %v249, 0.1
  %v378 = vmul.f32 %v250, 0.1
  %v379 = vmul.f32 %v251, 0.1
  %v380 = vmul.f32 %v252, 0.1
  %v381 = vmul.f32 %v253, 0.1
  %v382 = vmul.f32 %v254, 0.1
  %v383 = vmul.f32 %v255, 0.1
  %v384 = vmul.f32 %v256, 0.1
  %v385 = vmul.f32 %v257, 0.1
  %v386 = vmul.f32 %v258, 0.1
  %v387 = vmul.f32 %v259, 0.1
  %v388 = vmul.f32 %v260, 0.1
  %v389 = vmul.f32 %v261, 0.1
  %v390 = vmul.f32 %v262, 0.1
  %v391 = vmul.f32 %v263, 0.1
  %v392 = vmul.f32 %v264, 0.1
  %v393 = vmul.f32 %v265, 0.1
  %v394 = vmul.f32 %v266, 0.1
  %v395 = vmul.f32 %v267, 0.1
  %v396 = vmul.f32 %v268, 0.1
  %v397 = vmul.f32 %v269, 0.1
  %v398 = vmul.f32 %v270, 0.1
  %v399 = vmul.f32 %v271, 0.1
  %v400 = vmul.f32 %v272, 0.1
  %v401 = vmul.f32 %v273, 0.1
  %v402 = vmul.f32 %v274, 0.1
  %v403 = vmul.f32 %v275, 0.1
  %v404 = vmul.f32 %v276, 0.1
  %v405 = vmul.f32 %v277, 0.1
  %v406 = vmul.f32 %v278, 0.1
  %v407 = vmul.f32 %v279, 0.1
  %v408 = vmul.f32 %v280, 0.1
  %v409 = vsel %vm281, %v217, %v345
  %v410 = vsel %vm282, %v218, %v346
  %v411 = vsel %vm283, %v219, %v347
  %v412 = vsel %vm284, %v220, %v348
  %v413 = vsel %vm285, %v221, %v349
  %v414 = vsel %vm286, %v222, %v350
  %v415 = vsel %vm287, %v223, %v351
  %v416 = vsel %vm288, %v224, %v352
  %v417 = vsel %vm289, %v225, %v353
  %v418 = vsel %vm290, %v226, %v354
  %v419 = vsel %vm291, %v227, %v355
  %v420 = vsel %vm292, %v228, %v356
  %v421 = vsel %vm293, %v229, %v357
  %v422 = vsel %vm294, %v230, %v358
  %v423 = vsel %vm295, %v231, %v359
  %v424 = vsel %vm296, %v232, %v360
  %v425 = vsel %vm297, %v233, %v361
  %v426 = vsel %vm298, %v234, %v362
  %v427 = vsel %vm299, %v235, %v363
  %v428 = vsel %vm300, %v236, %v364
  %v429 = vsel %vm301, %v237, %v365
  %v430 = vsel %vm302, %v238, %v366
  %v431 = vsel %vm303, %v239, %v367
  %v432 = vsel %vm304, %v240, %v368
  %v433 = vsel %vm305, %v241, %v369
  %v434 = vsel %vm306, %v242, %v370
  %v435 = vsel %vm307, %v243, %v371
  %v436 = vsel %vm308, %v244, %v372
  %v437 = vsel %vm309, %v245, %v373
  %v438 = vsel %vm310, %v246, %v374
  %v439 = vsel %vm311, %v247, %v375
  %v440 = vsel %vm312, %v248, %v376
  %v441 = vsel %vm313, %v249, %v377
  %v442 = vsel %vm314, %v250, %v378
  %v443 = vsel %vm315, %v251, %v379
  %v444 = vsel %vm316, %v252, %v380
  %v445 = vsel %vm317, %v253, %v381
  %v446 = vsel %vm318, %v254, %v382
  %v447 = vsel %vm319, %v255, %v383
  %v448 = vsel %vm320, %v256, %v384
  %v449 = vsel %vm321, %v257, %v385
  %v450 = vsel %vm322, %v258, %v386
  %v451 = vsel %vm323, %v259, %v387
  %v452 = vsel %vm324, %v260, %v388
  %v453 = vsel %vm325, %v261, %v389
  %v454 = vsel %vm326, %v262, %v390
  %v455 = vsel %vm327, %v263, %v391
  %v456 = vsel %vm328, %v264, %v392
  %v457 = vsel %vm329, %v265, %v393
  %v458 = vsel %vm330, %v266, %v394
  %v459 = vsel %vm331, %v267, %v395
  %v460 = vsel %vm332, %v268, %v396
  %v461 = vsel %vm333, %v269, %v397
  %v462 = vsel %vm334, %v270, %v398
  %v463 = vsel %vm335, %v271, %v399
  %v464 = vsel %vm336, %v272, %v400
  %v465 = vsel %vm337, %v273, %v401
  %v466 = vsel %vm338, %v274, %v402
  %v467 = vsel %vm339, %v275, %v403
  %v468 = vsel %vm340, %v276, %v404
  %v469 = vsel %vm341, %v277, %v405
  %v470 = vsel %vm342, %v278, %v406
  %v471 = vsel %vm343, %v279, %v407
  %v472 = vsel %vm344, %v280, %v408
  %v473 = vld [vmem:[%s3] sm:$0xf]
  %v474 = vld [vmem:[%s3 + $0x4] sm:$0xf]
  %v475 = vld [vmem:[%s3 + $0x8] sm:$0xf]
  %v476 = vld [vmem:[%s3 + $0xc] sm:$0xf]
  %v477 = vld [vmem:[%s3 + $0x10] sm:$0xf]
  %v478 = vld [vmem:[%s3 + $0x14] sm:$0xf]
  %v479 = vld [vmem:[%s3 + $0x18] sm:$0xf]
  %v480 = vld [vmem:[%s3 + $0x1c] sm:$0xf]
  %v481 = vld [vmem:[%s3 + $0x20] sm:$0xf]
  %v482 = vld [vmem:[%s3 + $0x24] sm:$0xf]
  %v483 = vld [vmem:[%s3 + $0x28] sm:$0xf]
  %v484 = vld [vmem:[%s3 + $0x2c] sm:$0xf]
  %v485 = vld [vmem:[%s3 + $0x30] sm:$0xf]
  %v486 = vld [vmem:[%s3 + $0x34] sm:$0xf]
  %v487 = vld [vmem:[%s3 + $0x38] sm:$0xf]
  %v488 = vld [vmem:[%s3 + $0x3c] sm:$0xf]
  %v489 = vld [vmem:[%s3 + $0x40] sm:$0xf]
  %v490 = vld [vmem:[%s3 + $0x44] sm:$0xf]
  %v491 = vld [vmem:[%s3 + $0x48] sm:$0xf]
  %v492 = vld [vmem:[%s3 + $0x4c] sm:$0xf]
  %v493 = vld [vmem:[%s3 + $0x50] sm:$0xf]
  %v494 = vld [vmem:[%s3 + $0x54] sm:$0xf]
  %v495 = vld [vmem:[%s3 + $0x58] sm:$0xf]
  %v496 = vld [vmem:[%s3 + $0x5c] sm:$0xf]
  %v497 = vld [vmem:[%s3 + $0x60] sm:$0xf]
  %v498 = vld [vmem:[%s3 + $0x64] sm:$0xf]
  %v499 = vld [vmem:[%s3 + $0x68] sm:$0xf]
  %v500 = vld [vmem:[%s3 + $0x6c] sm:$0xf]
  %v501 = vld [vmem:[%s3 + $0x70] sm:$0xf]
  %v502 = vld [vmem:[%s3 + $0x74] sm:$0xf]
  %v503 = vld [vmem:[%s3 + $0x78] sm:$0xf]
  %v504 = vld [vmem:[%s3 + $0x7c] sm:$0xf]
  %v505 = vld [vmem:[%s3 + $0x80] sm:$0xf]
  %v506 = vld [vmem:[%s3 + $0x84] sm:$0xf]
  %v507 = vld [vmem:[%s3 + $0x88] sm:$0xf]
  %v508 = vld [vmem:[%s3 + $0x8c] sm:$0xf]
  %v509 = vld [vmem:[%s3 + $0x90] sm:$0xf]
  %v510 = vld [vmem:[%s3 + $0x94] sm:$0xf]
  %v511 = vld [vmem:[%s3 + $0x98] sm:$0xf]
  %v512 = vld [vmem:[%s3 + $0x9c] sm:$0xf]
  %v513 = vld [vmem:[%s3 + $0xa0] sm:$0xf]
  %v514 = vld [vmem:[%s3 + $0xa4] sm:$0xf]
  %v515 = vld [vmem:[%s3 + $0xa8] sm:$0xf]
  %v516 = vld [vmem:[%s3 + $0xac] sm:$0xf]
  %v517 = vld [vmem:[%s3 + $0xb0] sm:$0xf]
  %v518 = vld [vmem:[%s3 + $0xb4] sm:$0xf]
  %v519 = vld [vmem:[%s3 + $0xb8] sm:$0xf]
  %v520 = vld [vmem:[%s3 + $0xbc] sm:$0xf]
  %v521 = vld [vmem:[%s3 + $0xc0] sm:$0xf]
  %v522 = vld [vmem:[%s3 + $0xc4] sm:$0xf]
  %v523 = vld [vmem:[%s3 + $0xc8] sm:$0xf]
  %v524 = vld [vmem:[%s3 + $0xcc] sm:$0xf]
  %v525 = vld [vmem:[%s3 + $0xd0] sm:$0xf]
  %v526 = vld [vmem:[%s3 + $0xd4] sm:$0xf]
  %v527 = vld [vmem:[%s3 + $0xd8] sm:$0xf]
  %v528 = vld [vmem:[%s3 + $0xdc] sm:$0xf]
  %v529 = vld [vmem:[%s3 + $0xe0] sm:$0xf]
  %v530 = vld [vmem:[%s3 + $0xe4] sm:$0xf]
  %v531 = vld [vmem:[%s3 + $0xe8] sm:$0xf]
  %v532 = vld [vmem:[%s3 + $0xec] sm:$0xf]
  %v533 = vld [vmem:[%s3 + $0xf0] sm:$0xf]
  %v534 = vld [vmem:[%s3 + $0xf4] sm:$0xf]
  %v535 = vld [vmem:[%s3 + $0xf8] sm:$0xf]
  %v536 = vld [vmem:[%s3 + $0xfc] sm:$0xf]
  %v537 = vunpack.c.l.bf16 %v473
  %v538 = vunpack.c.l.bf16 %v474
  %v539 = vunpack.c.l.bf16 %v475
  %v540 = vunpack.c.l.bf16 %v476
  %v541 = vunpack.c.l.bf16 %v477
  %v542 = vunpack.c.l.bf16 %v478
  %v543 = vunpack.c.l.bf16 %v479
  %v544 = vunpack.c.l.bf16 %v480
  %v545 = vunpack.c.l.bf16 %v481
  %v546 = vunpack.c.l.bf16 %v482
  %v547 = vunpack.c.l.bf16 %v483
  %v548 = vunpack.c.l.bf16 %v484
  %v549 = vunpack.c.l.bf16 %v485
  %v550 = vunpack.c.l.bf16 %v486
  %v551 = vunpack.c.l.bf16 %v487
  %v552 = vunpack.c.l.bf16 %v488
  %v553 = vunpack.c.l.bf16 %v489
  %v554 = vunpack.c.l.bf16 %v490
  %v555 = vunpack.c.l.bf16 %v491
  %v556 = vunpack.c.l.bf16 %v492
  %v557 = vunpack.c.l.bf16 %v493
  %v558 = vunpack.c.l.bf16 %v494
  %v559 = vunpack.c.l.bf16 %v495
  %v560 = vunpack.c.l.bf16 %v496
  %v561 = vunpack.c.l.bf16 %v497
  %v562 = vunpack.c.l.bf16 %v498
  %v563 = vunpack.c.l.bf16 %v499
  %v564 = vunpack.c.l.bf16 %v500
  %v565 = vunpack.c.l.bf16 %v501
  %v566 = vunpack.c.l.bf16 %v502
  %v567 = vunpack.c.l.bf16 %v503
  %v568 = vunpack.c.l.bf16 %v504
  %v569 = vunpack.c.l.bf16 %v505
  %v570 = vunpack.c.l.bf16 %v506
  %v571 = vunpack.c.l.bf16 %v507
  %v572 = vunpack.c.l.bf16 %v508
  %v573 = vunpack.c.l.bf16 %v509
  %v574 = vunpack.c.l.bf16 %v510
  %v575 = vunpack.c.l.bf16 %v511
  %v576 = vunpack.c.l.bf16 %v512
  %v577 = vunpack.c.l.bf16 %v513
  %v578 = vunpack.c.l.bf16 %v514
  %v579 = vunpack.c.l.bf16 %v515
  %v580 = vunpack.c.l.bf16 %v516
  %v581 = vunpack.c.l.bf16 %v517
  %v582 = vunpack.c.l.bf16 %v518
  %v583 = vunpack.c.l.bf16 %v519
  %v584 = vunpack.c.l.bf16 %v520
  %v585 = vunpack.c.l.bf16 %v521
  %v586 = vunpack.c.l.bf16 %v522
  %v587 = vunpack.c.l.bf16 %v523
  %v588 = vunpack.c.l.bf16 %v524
  %v589 = vunpack.c.l.bf16 %v525
  %v590 = vunpack.c.l.bf16 %v526
  %v591 = vunpack.c.l.bf16 %v527
  %v592 = vunpack.c.l.bf16 %v528
  %v593 = vunpack.c.l.bf16 %v529
  %v594 = vunpack.c.l.bf16 %v530
  %v595 = vunpack.c.l.bf16 %v531
  %v596 = vunpack.c.l.bf16 %v532
  %v597 = vunpack.c.l.bf16 %v533
  %v598 = vunpack.c.l.bf16 %v534
  %v599 = vunpack.c.l.bf16 %v535
  %v600 = vunpack.c.l.bf16 %v536
  %v601 = vadd.f32 %v409, %v537
  %v602 = vadd.f32 %v410, %v538
  %v603 = vadd.f32 %v411, %v539
  %v604 = vadd.f32 %v412, %v540
  %v605 = vadd.f32 %v413, %v541
  %v606 = vadd.f32 %v414, %v542
  %v607 = vadd.f32 %v415, %v543
  %v608 = vadd.f32 %v416, %v544
  %v609 = vadd.f32 %v417, %v545
  %v610 = vadd.f32 %v418, %v546
  %v611 = vadd.f32 %v419, %v547
  %v612 = vadd.f32 %v420, %v548
  %v613 = vadd.f32 %v421, %v549
  %v614 = vadd.f32 %v422, %v550
  %v615 = vadd.f32 %v423, %v551
  %v616 = vadd.f32 %v424, %v552
  %v617 = vadd.f32 %v425, %v553
  %v618 = vadd.f32 %v426, %v554
  %v619 = vadd.f32 %v427, %v555
  %v620 = vadd.f32 %v428, %v556
  %v621 = vadd.f32 %v429, %v557
  %v622 = vadd.f32 %v430, %v558
  %v623 = vadd.f32 %v431, %v559
  %v624 = vadd.f32 %v432, %v560
  %v625 = vadd.f32 %v433, %v561
  %v626 = vadd.f32 %v434, %v562
  %v627 = vadd.f32 %v435, %v563
  %v628 = vadd.f32 %v436, %v564
  %v629 = vadd.f32 %v437, %v565
  %v630 = vadd.f32 %v438, %v566
  %v631 = vadd.f32 %v439, %v567
  %v632 = vadd.f32 %v440, %v568
  %v633 = vadd.f32 %v441, %v569
  %v634 = vadd.f32 %v442, %v570
  %v635 = vadd.f32 %v443, %v571
  %v636 = vadd.f32 %v444, %v572
  %v637 = vadd.f32 %v445, %v573
  %v638 = vadd.f32 %v446, %v574
  %v639 = vadd.f32 %v447, %v575
  %v640 = vadd.f32 %v448, %v576
  %v641 = vadd.f32 %v449, %v577
  %v642 = vadd.f32 %v450, %v578
  %v643 = vadd.f32 %v451, %v579
  %v644 = vadd.f32 %v452, %v580
  %v645 = vadd.f32 %v453, %v581
  %v646 = vadd.f32 %v454, %v582
  %v647 = vadd.f32 %v455, %v583
  %v648 = vadd.f32 %v456, %v584
  %v649 = vadd.f32 %v457, %v585
  %v650 = vadd.f32 %v458, %v586
  %v651 = vadd.f32 %v459, %v587
  %v652 = vadd.f32 %v460, %v588
  %v653 = vadd.f32 %v461, %v589
  %v654 = vadd.f32 %v462, %v590
  %v655 = vadd.f32 %v463, %v591
  %v656 = vadd.f32 %v464, %v592
  %v657 = vadd.f32 %v465, %v593
  %v658 = vadd.f32 %v466, %v594
  %v659 = vadd.f32 %v467, %v595
  %v660 = vadd.f32 %v468, %v596
  %v661 = vadd.f32 %v469, %v597
  %v662 = vadd.f32 %v470, %v598
  %v663 = vadd.f32 %v471, %v599
  %v664 = vadd.f32 %v472, %v600
  %v665 = vpack.c.bf16 %v601, %v601
  %v666 = vpack.c.bf16 %v602, %v602
  %v667 = vpack.c.bf16 %v603, %v603
  %v668 = vpack.c.bf16 %v604, %v604
  %v669 = vpack.c.bf16 %v605, %v605
  %v670 = vpack.c.bf16 %v606, %v606
  %v671 = vpack.c.bf16 %v607, %v607
  %v672 = vpack.c.bf16 %v608, %v608
  %v673 = vpack.c.bf16 %v609, %v609
  %v674 = vpack.c.bf16 %v610, %v610
  %v675 = vpack.c.bf16 %v611, %v611
  %v676 = vpack.c.bf16 %v612, %v612
  %v677 = vpack.c.bf16 %v613, %v613
  %v678 = vpack.c.bf16 %v614, %v614
  %v679 = vpack.c.bf16 %v615, %v615
  %v680 = vpack.c.bf16 %v616, %v616
  %v681 = vpack.c.bf16 %v617, %v617
  %v682 = vpack.c.bf16 %v618, %v618
  %v683 = vpack.c.bf16 %v619, %v619
  %v684 = vpack.c.bf16 %v620, %v620
  %v685 = vpack.c.bf16 %v621, %v621
  %v686 = vpack.c.bf16 %v622, %v622
  %v687 = vpack.c.bf16 %v623, %v623
  %v688 = vpack.c.bf16 %v624, %v624
  %v689 = vpack.c.bf16 %v625, %v625
  %v690 = vpack.c.bf16 %v626, %v626
  %v691 = vpack.c.bf16 %v627, %v627
  %v692 = vpack.c.bf16 %v628, %v628
  %v693 = vpack.c.bf16 %v629, %v629
  %v694 = vpack.c.bf16 %v630, %v630
  %v695 = vpack.c.bf16 %v631, %v631
  %v696 = vpack.c.bf16 %v632, %v632
  %v697 = vpack.c.bf16 %v633, %v633
  %v698 = vpack.c.bf16 %v634, %v634
  %v699 = vpack.c.bf16 %v635, %v635
  %v700 = vpack.c.bf16 %v636, %v636
  %v701 = vpack.c.bf16 %v637, %v637
  %v702 = vpack.c.bf16 %v638, %v638
  %v703 = vpack.c.bf16 %v639, %v639
  %v704 = vpack.c.bf16 %v640, %v640
  %v705 = vpack.c.bf16 %v641, %v641
  %v706 = vpack.c.bf16 %v642, %v642
  %v707 = vpack.c.bf16 %v643, %v643
  %v708 = vpack.c.bf16 %v644, %v644
  %v709 = vpack.c.bf16 %v645, %v645
  %v710 = vpack.c.bf16 %v646, %v646
  %v711 = vpack.c.bf16 %v647, %v647
  %v712 = vpack.c.bf16 %v648, %v648
  %v713 = vpack.c.bf16 %v649, %v649
  %v714 = vpack.c.bf16 %v650, %v650
  %v715 = vpack.c.bf16 %v651, %v651
  %v716 = vpack.c.bf16 %v652, %v652
  %v717 = vpack.c.bf16 %v653, %v653
  %v718 = vpack.c.bf16 %v654, %v654
  %v719 = vpack.c.bf16 %v655, %v655
  %v720 = vpack.c.bf16 %v656, %v656
  %v721 = vpack.c.bf16 %v657, %v657
  %v722 = vpack.c.bf16 %v658, %v658
  %v723 = vpack.c.bf16 %v659, %v659
  %v724 = vpack.c.bf16 %v660, %v660
  %v725 = vpack.c.bf16 %v661, %v661
  %v726 = vpack.c.bf16 %v662, %v662
  %v727 = vpack.c.bf16 %v663, %v663
  %v728 = vpack.c.bf16 %v664, %v664
  %729 = vst [vmem:[%s4] sm:$0xf] %v665
  %730 = vst [vmem:[%s4 + $0x4] sm:$0xf] %v666
  %731 = vst [vmem:[%s4 + $0x8] sm:$0xf] %v667
  %732 = vst [vmem:[%s4 + $0xc] sm:$0xf] %v668
  %733 = vst [vmem:[%s4 + $0x10] sm:$0xf] %v669
  %734 = vst [vmem:[%s4 + $0x14] sm:$0xf] %v670
  %735 = vst [vmem:[%s4 + $0x18] sm:$0xf] %v671
  %736 = vst [vmem:[%s4 + $0x1c] sm:$0xf] %v672
  %737 = vst [vmem:[%s4 + $0x20] sm:$0xf] %v673
  %738 = vst [vmem:[%s4 + $0x24] sm:$0xf] %v674
  %739 = vst [vmem:[%s4 + $0x28] sm:$0xf] %v675
  %740 = vst [vmem:[%s4 + $0x2c] sm:$0xf] %v676
  %741 = vst [vmem:[%s4 + $0x30] sm:$0xf] %v677
  %742 = vst [vmem:[%s4 + $0x34] sm:$0xf] %v678
  %743 = vst [vmem:[%s4 + $0x38] sm:$0xf] %v679
  %744 = vst [vmem:[%s4 + $0x3c] sm:$0xf] %v680
  %745 = vst [vmem:[%s4 + $0x40] sm:$0xf] %v681
  %746 = vst [vmem:[%s4 + $0x44] sm:$0xf] %v682
  %747 = vst [vmem:[%s4 + $0x48] sm:$0xf] %v683
  %748 = vst [vmem:[%s4 + $0x4c] sm:$0xf] %v684
  %749 = vst [vmem:[%s4 + $0x50] sm:$0xf] %v685
  %750 = vst [vmem:[%s4 + $0x54] sm:$0xf] %v686
  %751 = vst [vmem:[%s4 + $0x58] sm:$0xf] %v687
  %752 = vst [vmem:[%s4 + $0x5c] sm:$0xf] %v688
  %753 = vst [vmem:[%s4 + $0x60] sm:$0xf] %v689
  %754 = vst [vmem:[%s4 + $0x64] sm:$0xf] %v690
  %755 = vst [vmem:[%s4 + $0x68] sm:$0xf] %v691
  %756 = vst [vmem:[%s4 + $0x6c] sm:$0xf] %v692
  %757 = vst [vmem:[%s4 + $0x70] sm:$0xf] %v693
  %758 = vst [vmem:[%s4 + $0x74] sm:$0xf] %v694
  %759 = vst [vmem:[%s4 + $0x78] sm:$0xf] %v695
  %760 = vst [vmem:[%s4 + $0x7c] sm:$0xf] %v696
  %761 = vst [vmem:[%s4 + $0x80] sm:$0xf] %v697
  %762 = vst [vmem:[%s4 + $0x84] sm:$0xf] %v698
  %763 = vst [vmem:[%s4 + $0x88] sm:$0xf] %v699
  %764 = vst [vmem:[%s4 + $0x8c] sm:$0xf] %v700
  %765 = vst [vmem:[%s4 + $0x90] sm:$0xf] %v701
  %766 = vst [vmem:[%s4 + $0x94] sm:$0xf] %v702
  %767 = vst [vmem:[%s4 + $0x98] sm:$0xf] %v703
  %768 = vst [vmem:[%s4 + $0x9c] sm:$0xf] %v704
  %769 = vst [vmem:[%s4 + $0xa0] sm:$0xf] %v705
  %770 = vst [vmem:[%s4 + $0xa4] sm:$0xf] %v706
  %771 = vst [vmem:[%s4 + $0xa8] sm:$0xf] %v707
  %772 = vst [vmem:[%s4 + $0xac] sm:$0xf] %v708
  %773 = vst [vmem:[%s4 + $0xb0] sm:$0xf] %v709
  %774 = vst [vmem:[%s4 + $0xb4] sm:$0xf] %v710
  %775 = vst [vmem:[%s4 + $0xb8] sm:$0xf] %v711
  %776 = vst [vmem:[%s4 + $0xbc] sm:$0xf] %v712
  %777 = vst [vmem:[%s4 + $0xc0] sm:$0xf] %v713
  %778 = vst [vmem:[%s4 + $0xc4] sm:$0xf] %v714
  %779 = vst [vmem:[%s4 + $0xc8] sm:$0xf] %v715
  %780 = vst [vmem:[%s4 + $0xcc] sm:$0xf] %v716
  %781 = vst [vmem:[%s4 + $0xd0] sm:$0xf] %v717
  %782 = vst [vmem:[%s4 + $0xd4] sm:$0xf] %v718
  %783 = vst [vmem:[%s4 + $0xd8] sm:$0xf] %v719
  %784 = vst [vmem:[%s4 + $0xdc] sm:$0xf] %v720
  %785 = vst [vmem:[%s4 + $0xe0] sm:$0xf] %v721
  %786 = vst [vmem:[%s4 + $0xe4] sm:$0xf] %v722
  %787 = vst [vmem:[%s4 + $0xe8] sm:$0xf] %v723
  %788 = vst [vmem:[%s4 + $0xec] sm:$0xf] %v724
  %789 = vst [vmem:[%s4 + $0xf0] sm:$0xf] %v725
  %790 = vst [vmem:[%s4 + $0xf4] sm:$0xf] %v726
  %791 = vst [vmem:[%s4 + $0xf8] sm:$0xf] %v727
  %792 = vst [vmem:[%s4 + $0xfc] sm:$0xf] %v728
  // Predicated region
  $region18: #{residual_block_forward.9} parent=0 // pred_check
    _
  $region19: #{residual_block_forward.9} parent=0 // pred_check_branch
    %794 = sbr.rel (0) target = $region21
  $region20: #{residual_block_forward.9} parent=0 // pred_region
    _
  $region21: #{residual_block_forward.9} parent=0 // pred_fallthru
    _
  // Predicated region
  $region22: #{residual_block_forward.9} parent=0 // pred_check
    _
  $region23: #{residual_block_forward.9} parent=0 // pred_check_branch
    %796 = sbr.rel (0) target = $region25
  $region24: #{residual_block_forward.9} parent=0 // pred_region
    _
  $region25: #{residual_block_forward.9} parent=0 // pred_fallthru
    _

// kernel: residual_block_forward.7
$region0: #{residual_block_forward.7}
  #allocation0 [shape = 'u32[]', space=smem, size = 0x4, offset = 0x4, fixed_abs, tag = 'smem constant byte address 0x4 - core index']
  #allocation1 [shape = 'u32[72,128]{1,0:T(1,128)}', space=vmem, size = 0x9000, scoped, tag = 'internal scratch']
  %s0 = inlined_call_operand.vmem [shape: bf16[512,128], index: 0, kind: input, shape index: {}]
  %s1 = inlined_call_operand.vmem [shape: f32[1,128], index: 1, kind: input, shape index: {}]
  %s2 = inlined_call_operand.vmem [shape: f32[1,128], index: 2, kind: input, shape index: {}]
  %s3 = inlined_call_operand.vmem [shape: bf16[512,128], index: 3, kind: input, shape index: {}]
  %s4 = inlined_call_operand.vmem [shape: bf16[128,128], index: 4, kind: input, shape index: {}]
  %s5 = inlined_call_operand.vmem [shape: f32[1,128], index: 5, kind: input, shape index: {}]
  %s6 = inlined_call_operand.vmem [shape: bf16[512,128], index: 6, kind: output, shape index: {0}]
  %s7 = inlined_call_operand.vmem [shape: f32[1,2,128], index: 7, kind: output, shape index: {1}]
  %s8 = inlined_call_operand.vmem [shape: bf16[512,128], index: 8, kind: output, shape index: {2}]
  %9 = xla_tuple %s6, %s7, %s8
  %s10 = sld [smem:[#allocation0]]
  $region50: #{residual_block_forward.7} parent=0
    _
  %s12 = ssub.s32 1, %s10
  %s13 = scalar_select 0, %s12, %s10
  // Predicated region
  $region2: #{residual_block_forward.7} parent=0 // pred_check
    _
  $region3: #{residual_block_forward.7} parent=0 // pred_check_branch
    %15 = sbr.rel (0) target = $region5
  $region4: #{residual_block_forward.7} parent=0 // pred_region
    _
  $region5: #{residual_block_forward.7} parent=0 // pred_fallthru
    _
  // Predicated region
  $region6: #{residual_block_forward.7} parent=0 // pred_check
    _
  $region7: #{residual_block_forward.7} parent=0 // pred_check_branch
    %17 = sbr.rel (0) target = $region9
  $region8: #{residual_block_forward.7} parent=0 // pred_region
    _
  $region9: #{residual_block_forward.7} parent=0 // pred_fallthru
    _
  // Predicated region
  $region10: #{residual_block_forward.7} parent=0 // pred_check
    _
  $region11: #{residual_block_forward.7} parent=0 // pred_check_branch
    %19 = sbr.rel (0) target = $region13
  $region12: #{residual_block_forward.7} parent=0 // pred_region
    _
  $region13: #{residual_block_forward.7} parent=0 // pred_fallthru
    _
  // Predicated region
  $region14: #{residual_block_forward.7} parent=0 // pred_check
    _
  $region15: #{residual_block_forward.7} parent=0 // pred_check_branch
    %21 = sbr.rel (0) target = $region17
  $region16: #{residual_block_forward.7} parent=0 // pred_region
    _
  $region17: #{residual_block_forward.7} parent=0 // pred_fallthru
    _
  // Predicated region
  $region18: #{residual_block_forward.7} parent=0 // pred_check
    _
  $region19: #{residual_block_forward.7} parent=0 // pred_check_branch
    %23 = sbr.rel (0) target = $region21
  $region20: #{residual_block_forward.7} parent=0 // pred_region
    _
  $region21: #{residual_block_forward.7} parent=0 // pred_fallthru
    _
  // Predicated region
  $region22: #{residual_block_forward.7} parent=0 // pred_check
    _
  $region23: #{residual_block_forward.7} parent=0 // pred_check_branch
    %25 = sbr.rel (0) target = $region25
  $region24: #{residual_block_forward.7} parent=0 // pred_region
    _
  $region25: #{residual_block_forward.7} parent=0 // pred_fallthru
    _
  %v26 = vld [vmem:[%s0] sm:$0xf]
  %v27 = vld [vmem:[%s0 + $0x4] sm:$0xf]
  %v28 = vld [vmem:[%s0 + $0x8] sm:$0xf]
  %v29 = vld [vmem:[%s0 + $0xc] sm:$0xf]
  %v30 = vld [vmem:[%s0 + $0x10] sm:$0xf]
  %v31 = vld [vmem:[%s0 + $0x14] sm:$0xf]
  %v32 = vld [vmem:[%s0 + $0x18] sm:$0xf]
  %v33 = vld [vmem:[%s0 + $0x1c] sm:$0xf]
  %v34 = vld [vmem:[%s0 + $0x20] sm:$0xf]
  %v35 = vld [vmem:[%s0 + $0x24] sm:$0xf]
  %v36 = vld [vmem:[%s0 + $0x28] sm:$0xf]
  %v37 = vld [vmem:[%s0 + $0x2c] sm:$0xf]
  %v38 = vld [vmem:[%s0 + $0x30] sm:$0xf]
  %v39 = vld [vmem:[%s0 + $0x34] sm:$0xf]
  %v40 = vld [vmem:[%s0 + $0x38] sm:$0xf]
  %v41 = vld [vmem:[%s0 + $0x3c] sm:$0xf]
  %v42 = vld [vmem:[%s0 + $0x40] sm:$0xf]
  %v43 = vld [vmem:[%s0 + $0x44] sm:$0xf]
  %v44 = vld [vmem:[%s0 + $0x48] sm:$0xf]
  %v45 = vld [vmem:[%s0 + $0x4c] sm:$0xf]
  %v46 = vld [vmem:[%s0 + $0x50] sm:$0xf]
  %v47 = vld [vmem:[%s0 + $0x54] sm:$0xf]
  %v48 = vld [vmem:[%s0 + $0x58] sm:$0xf]
  %v49 = vld [vmem:[%s0 + $0x5c] sm:$0xf]
  %v50 = vld [vmem:[%s0 + $0x60] sm:$0xf]
  %v51 = vld [vmem:[%s0 + $0x64] sm:$0xf]
  %v52 = vld [vmem:[%s0 + $0x68] sm:$0xf]
  %v53 = vld [vmem:[%s0 + $0x6c] sm:$0xf]
  %v54 = vld [vmem:[%s0 + $0x70] sm:$0xf]
  %v55 = vld [vmem:[%s0 + $0x74] sm:$0xf]
  %v56 = vld [vmem:[%s0 + $0x78] sm:$0xf]
  %v57 = vld [vmem:[%s0 + $0x7c] sm:$0xf]
  %v58 = vld [vmem:[%s0 + $0x80] sm:$0xf]
  %v59 = vld [vmem:[%s0 + $0x84] sm:$0xf]
  %v60 = vld [vmem:[%s0 + $0x88] sm:$0xf]
  %v61 = vld [vmem:[%s0 + $0x8c] sm:$0xf]
  %v62 = vld [vmem:[%s0 + $0x90] sm:$0xf]
  %v63 = vld [vmem:[%s0 + $0x94] sm:$0xf]
  %v64 = vld [vmem:[%s0 + $0x98] sm:$0xf]
  %v65 = vld [vmem:[%s0 + $0x9c] sm:$0xf]
  %v66 = vld [vmem:[%s0 + $0xa0] sm:$0xf]
  %v67 = vld [vmem:[%s0 + $0xa4] sm:$0xf]
  %v68 = vld [vmem:[%s0 + $0xa8] sm:$0xf]
  %v69 = vld [vmem:[%s0 + $0xac] sm:$0xf]
  %v70 = vld [vmem:[%s0 + $0xb0] sm:$0xf]
  %v71 = vld [vmem:[%s0 + $0xb4] sm:$0xf]
  %v72 = vld [vmem:[%s0 + $0xb8] sm:$0xf]
  %v73 = vld [vmem:[%s0 + $0xbc] sm:$0xf]
  %v74 = vld [vmem:[%s0 + $0xc0] sm:$0xf]
  %v75 = vld [vmem:[%s0 + $0xc4] sm:$0xf]
  %v76 = vld [vmem:[%s0 + $0xc8] sm:$0xf]
  %v77 = vld [vmem:[%s0 + $0xcc] sm:$0xf]
  %v78 = vld [vmem:[%s0 + $0xd0] sm:$0xf]
  %v79 = vld [vmem:[%s0 + $0xd4] sm:$0xf]
  %v80 = vld [vmem:[%s0 + $0xd8] sm:$0xf]
  %v81 = vld [vmem:[%s0 + $0xdc] sm:$0xf]
  %v82 = vld [vmem:[%s0 + $0xe0] sm:$0xf]
  %v83 = vld [vmem:[%s0 + $0xe4] sm:$0xf]
  %v84 = vld [vmem:[%s0 + $0xe8] sm:$0xf]
  %v85 = vld [vmem:[%s0 + $0xec] sm:$0xf]
  %v86 = vld [vmem:[%s0 + $0xf0] sm:$0xf]
  %v87 = vld [vmem:[%s0 + $0xf4] sm:$0xf]
  %v88 = vld [vmem:[%s0 + $0xf8] sm:$0xf]
  %v89 = vld [vmem:[%s0 + $0xfc] sm:$0xf]
  %v90 = vunpack.c.l.bf16 %v26
  %v91 = vunpack.c.l.bf16 %v27
  %v92 = vunpack.c.l.bf16 %v28
  %v93 = vunpack.c.l.bf16 %v29
  %v94 = vunpack.c.l.bf16 %v30
  %v95 = vunpack.c.l.bf16 %v31
  %v96 = vunpack.c.l.bf16 %v32
  %v97 = vunpack.c.l.bf16 %v33
  %v98 = vunpack.c.l.bf16 %v34
  %v99 = vunpack.c.l.bf16 %v35
  %v100 = vunpack.c.l.bf16 %v36
  %v101 = vunpack.c.l.bf16 %v37
  %v102 = vunpack.c.l.bf16 %v38
  %v103 = vunpack.c.l.bf16 %v39
  %v104 = vunpack.c.l.bf16 %v40
  %v105 = vunpack.c.l.bf16 %v41
  %v106 = vunpack.c.l.bf16 %v42
  %v107 = vunpack.c.l.bf16 %v43
  %v108 = vunpack.c.l.bf16 %v44
  %v109 = vunpack.c.l.bf16 %v45
  %v110 = vunpack.c.l.bf16 %v46
  %v111 = vunpack.c.l.bf16 %v47
  %v112 = vunpack.c.l.bf16 %v48
  %v113 = vunpack.c.l.bf16 %v49
  %v114 = vunpack.c.l.bf16 %v50
  %v115 = vunpack.c.l.bf16 %v51
  %v116 = vunpack.c.l.bf16 %v52
  %v117 = vunpack.c.l.bf16 %v53
  %v118 = vunpack.c.l.bf16 %v54
  %v119 = vunpack.c.l.bf16 %v55
  %v120 = vunpack.c.l.bf16 %v56
  %v121 = vunpack.c.l.bf16 %v57
  %v122 = vunpack.c.l.bf16 %v58
  %v123 = vunpack.c.l.bf16 %v59
  %v124 = vunpack.c.l.bf16 %v60
  %v125 = vunpack.c.l.bf16 %v61
  %v126 = vunpack.c.l.bf16 %v62
  %v127 = vunpack.c.l.bf16 %v63
  %v128 = vunpack.c.l.bf16 %v64
  %v129 = vunpack.c.l.bf16 %v65
  %v130 = vunpack.c.l.bf16 %v66
  %v131 = vunpack.c.l.bf16 %v67
  %v132 = vunpack.c.l.bf16 %v68
  %v133 = vunpack.c.l.bf16 %v69
  %v134 = vunpack.c.l.bf16 %v70
  %v135 = vunpack.c.l.bf16 %v71
  %v136 = vunpack.c.l.bf16 %v72
  %v137 = vunpack.c.l.bf16 %v73
  %v138 = vunpack.c.l.bf16 %v74
  %v139 = vunpack.c.l.bf16 %v75
  %v140 = vunpack.c.l.bf16 %v76
  %v141 = vunpack.c.l.bf16 %v77
  %v142 = vunpack.c.l.bf16 %v78
  %v143 = vunpack.c.l.bf16 %v79
  %v144 = vunpack.c.l.bf16 %v80
  %v145 = vunpack.c.l.bf16 %v81
  %v146 = vunpack.c.l.bf16 %v82
  %v147 = vunpack.c.l.bf16 %v83
  %v148 = vunpack.c.l.bf16 %v84
  %v149 = vunpack.c.l.bf16 %v85
  %v150 = vunpack.c.l.bf16 %v86
  %v151 = vunpack.c.l.bf16 %v87
  %v152 = vunpack.c.l.bf16 %v88
  %v153 = vunpack.c.l.bf16 %v89
  %v154 = vld [vmem:[%s1] sm:$0x1]
  %v156 = vperm.slane %v154, 0
  %v158 = vmul.f32 %v90, %v156
  %v159 = vmul.f32 %v91, %v156
  %v160 = vmul.f32 %v92, %v156
  %v161 = vmul.f32 %v93, %v156
  %v162 = vmul.f32 %v94, %v156
  %v163 = vmul.f32 %v95, %v156
  %v164 = vmul.f32 %v96, %v156
  %v165 = vmul.f32 %v97, %v156
  %v166 = vmul.f32 %v98, %v156
  %v167 = vmul.f32 %v99, %v156
  %v168 = vmul.f32 %v100, %v156
  %v169 = vmul.f32 %v101, %v156
  %v170 = vmul.f32 %v102, %v156
  %v171 = vmul.f32 %v103, %v156
  %v172 = vmul.f32 %v104, %v156
  %v173 = vmul.f32 %v105, %v156
  %v174 = vmul.f32 %v106, %v156
  %v175 = vmul.f32 %v107, %v156
  %v176 = vmul.f32 %v108, %v156
  %v177 = vmul.f32 %v109, %v156
  %v178 = vmul.f32 %v110, %v156
  %v179 = vmul.f32 %v111, %v156
  %v180 = vmul.f32 %v112, %v156
  %v181 = vmul.f32 %v113, %v156
  %v182 = vmul.f32 %v114, %v156
  %v183 = vmul.f32 %v115, %v156
  %v184 = vmul.f32 %v116, %v156
  %v185 = vmul.f32 %v117, %v156
  %v186 = vmul.f32 %v118, %v156
  %v187 = vmul.f32 %v119, %v156
  %v188 = vmul.f32 %v120, %v156
  %v189 = vmul.f32 %v121, %v156
  %v190 = vmul.f32 %v122, %v156
  %v191 = vmul.f32 %v123, %v156
  %v192 = vmul.f32 %v124, %v156
  %v193 = vmul.f32 %v125, %v156
  %v194 = vmul.f32 %v126, %v156
  %v195 = vmul.f32 %v127, %v156
  %v196 = vmul.f32 %v128, %v156
  %v197 = vmul.f32 %v129, %v156
  %v198 = vmul.f32 %v130, %v156
  %v199 = vmul.f32 %v131, %v156
  %v200 = vmul.f32 %v132, %v156
  %v201 = vmul.f32 %v133, %v156
  %v202 = vmul.f32 %v134, %v156
  %v203 = vmul.f32 %v135, %v156
  %v204 = vmul.f32 %v136, %v156
  %v205 = vmul.f32 %v137, %v156
  %v206 = vmul.f32 %v138, %v156
  %v207 = vmul.f32 %v139, %v156
  %v208 = vmul.f32 %v140, %v156
  %v209 = vmul.f32 %v141, %v156
  %v210 = vmul.f32 %v142, %v156
  %v211 = vmul.f32 %v143, %v156
  %v212 = vmul.f32 %v144, %v156
  %v213 = vmul.f32 %v145, %v156
  %v214 = vmul.f32 %v146, %v156
  %v215 = vmul.f32 %v147, %v156
  %v216 = vmul.f32 %v148, %v156
  %v217 = vmul.f32 %v149, %v156
  %v218 = vmul.f32 %v150, %v156
  %v219 = vmul.f32 %v151, %v156
  %v220 = vmul.f32 %v152, %v156
  %v221 = vmul.f32 %v153, %v156
  %v222 = vld [vmem:[%s2] sm:$0x1]
  %v224 = vperm.slane %v222, 0
  %v226 = vadd.f32 %v158, %v224
  %v227 = vadd.f32 %v159, %v224
  %v228 = vadd.f32 %v160, %v224
  %v229 = vadd.f32 %v161, %v224
  %v230 = vadd.f32 %v162, %v224
  %v231 = vadd.f32 %v163, %v224
  %v232 = vadd.f32 %v164, %v224
  %v233 = vadd.f32 %v165, %v224
  %v234 = vadd.f32 %v166, %v224
  %v235 = vadd.f32 %v167, %v224
  %v236 = vadd.f32 %v168, %v224
  %v237 = vadd.f32 %v169, %v224
  %v238 = vadd.f32 %v170, %v224
  %v239 = vadd.f32 %v171, %v224
  %v240 = vadd.f32 %v172, %v224
  %v241 = vadd.f32 %v173, %v224
  %v242 = vadd.f32 %v174, %v224
  %v243 = vadd.f32 %v175, %v224
  %v244 = vadd.f32 %v176, %v224
  %v245 = vadd.f32 %v177, %v224
  %v246 = vadd.f32 %v178, %v224
  %v247 = vadd.f32 %v179, %v224
  %v248 = vadd.f32 %v180, %v224
  %v249 = vadd.f32 %v181, %v224
  %v250 = vadd.f32 %v182, %v224
  %v251 = vadd.f32 %v183, %v224
  %v252 = vadd.f32 %v184, %v224
  %v253 = vadd.f32 %v185, %v224
  %v254 = vadd.f32 %v186, %v224
  %v255 = vadd.f32 %v187, %v224
  %v256 = vadd.f32 %v188, %v224
  %v257 = vadd.f32 %v189, %v224
  %v258 = vadd.f32 %v190, %v224
  %v259 = vadd.f32 %v191, %v224
  %v260 = vadd.f32 %v192, %v224
  %v261 = vadd.f32 %v193, %v224
  %v262 = vadd.f32 %v194, %v224
  %v263 = vadd.f32 %v195, %v224
  %v264 = vadd.f32 %v196, %v224
  %v265 = vadd.f32 %v197, %v224
  %v266 = vadd.f32 %v198, %v224
  %v267 = vadd.f32 %v199, %v224
  %v268 = vadd.f32 %v200, %v224
  %v269 = vadd.f32 %v201, %v224
  %v270 = vadd.f32 %v202, %v224
  %v271 = vadd.f32 %v203, %v224
  %v272 = vadd.f32 %v204, %v224
  %v273 = vadd.f32 %v205, %v224
  %v274 = vadd.f32 %v206, %v224
  %v275 = vadd.f32 %v207, %v224
  %v276 = vadd.f32 %v208, %v224
  %v277 = vadd.f32 %v209, %v224
  %v278 = vadd.f32 %v210, %v224
  %v279 = vadd.f32 %v211, %v224
  %v280 = vadd.f32 %v212, %v224
  %v281 = vadd.f32 %v213, %v224
  %v282 = vadd.f32 %v214, %v224
  %v283 = vadd.f32 %v215, %v224
  %v284 = vadd.f32 %v216, %v224
  %v285 = vadd.f32 %v217, %v224
  %v286 = vadd.f32 %v218, %v224
  %v287 = vadd.f32 %v219, %v224
  %v288 = vadd.f32 %v220, %v224
  %v289 = vadd.f32 %v221, %v224
  %vm290 = vcmp.gt.f32.partialorder %v226, 0.0
  %vm291 = vcmp.gt.f32.partialorder %v227, 0.0
  %vm292 = vcmp.gt.f32.partialorder %v228, 0.0
  %vm293 = vcmp.gt.f32.partialorder %v229, 0.0
  %vm294 = vcmp.gt.f32.partialorder %v230, 0.0
  %vm295 = vcmp.gt.f32.partialorder %v231, 0.0
  %vm296 = vcmp.gt.f32.partialorder %v232, 0.0
  %vm297 = vcmp.gt.f32.partialorder %v233, 0.0
  %vm298 = vcmp.gt.f32.partialorder %v234, 0.0
  %vm299 = vcmp.gt.f32.partialorder %v235, 0.0
  %vm300 = vcmp.gt.f32.partialorder %v236, 0.0
  %vm301 = vcmp.gt.f32.partialorder %v237, 0.0
  %vm302 = vcmp.gt.f32.partialorder %v238, 0.0
  %vm303 = vcmp.gt.f32.partialorder %v239, 0.0
  %vm304 = vcmp.gt.f32.partialorder %v240, 0.0
  %vm305 = vcmp.gt.f32.partialorder %v241, 0.0
  %vm306 = vcmp.gt.f32.partialorder %v242, 0.0
  %vm307 = vcmp.gt.f32.partialorder %v243, 0.0
  %vm308 = vcmp.gt.f32.partialorder %v244, 0.0
  %vm309 = vcmp.gt.f32.partialorder %v245, 0.0
  %vm310 = vcmp.gt.f32.partialorder %v246, 0.0
  %vm311 = vcmp.gt.f32.partialorder %v247, 0.0
  %vm312 = vcmp.gt.f32.partialorder %v248, 0.0
  %vm313 = vcmp.gt.f32.partialorder %v249, 0.0
  %vm314 = vcmp.gt.f32.partialorder %v250, 0.0
  %vm315 = vcmp.gt.f32.partialorder %v251, 0.0
  %vm316 = vcmp.gt.f32.partialorder %v252, 0.0
  %vm317 = vcmp.gt.f32.partialorder %v253, 0.0
  %vm318 = vcmp.gt.f32.partialorder %v254, 0.0
  %vm319 = vcmp.gt.f32.partialorder %v255, 0.0
  %vm320 = vcmp.gt.f32.partialorder %v256, 0.0
  %vm321 = vcmp.gt.f32.partialorder %v257, 0.0
  %vm322 = vcmp.gt.f32.partialorder %v258, 0.0
  %vm323 = vcmp.gt.f32.partialorder %v259, 0.0
  %vm324 = vcmp.gt.f32.partialorder %v260, 0.0
  %vm325 = vcmp.gt.f32.partialorder %v261, 0.0
  %vm326 = vcmp.gt.f32.partialorder %v262, 0.0
  %vm327 = vcmp.gt.f32.partialorder %v263, 0.0
  %vm328 = vcmp.gt.f32.partialorder %v264, 0.0
  %vm329 = vcmp.gt.f32.partialorder %v265, 0.0
  %vm330 = vcmp.gt.f32.partialorder %v266, 0.0
  %vm331 = vcmp.gt.f32.partialorder %v267, 0.0
  %vm332 = vcmp.gt.f32.partialorder %v268, 0.0
  %vm333 = vcmp.gt.f32.partialorder %v269, 0.0
  %vm334 = vcmp.gt.f32.partialorder %v270, 0.0
  %vm335 = vcmp.gt.f32.partialorder %v271, 0.0
  %vm336 = vcmp.gt.f32.partialorder %v272, 0.0
  %vm337 = vcmp.gt.f32.partialorder %v273, 0.0
  %vm338 = vcmp.gt.f32.partialorder %v274, 0.0
  %vm339 = vcmp.gt.f32.partialorder %v275, 0.0
  %vm340 = vcmp.gt.f32.partialorder %v276, 0.0
  %vm341 = vcmp.gt.f32.partialorder %v277, 0.0
  %vm342 = vcmp.gt.f32.partialorder %v278, 0.0
  %vm343 = vcmp.gt.f32.partialorder %v279, 0.0
  %vm344 = vcmp.gt.f32.partialorder %v280, 0.0
  %vm345 = vcmp.gt.f32.partialorder %v281, 0.0
  %vm346 = vcmp.gt.f32.partialorder %v282, 0.0
  %vm347 = vcmp.gt.f32.partialorder %v283, 0.0
  %vm348 = vcmp.gt.f32.partialorder %v284, 0.0
  %vm349 = vcmp.gt.f32.partialorder %v285, 0.0
  %vm350 = vcmp.gt.f32.partialorder %v286, 0.0
  %vm351 = vcmp.gt.f32.partialorder %v287, 0.0
  %vm352 = vcmp.gt.f32.partialorder %v288, 0.0
  %vm353 = vcmp.gt.f32.partialorder %v289, 0.0
  %v354 = vmul.f32 %v226, 0.1
  %v355 = vmul.f32 %v227, 0.1
  %v356 = vmul.f32 %v228, 0.1
  %v357 = vmul.f32 %v229, 0.1
  %v358 = vmul.f32 %v230, 0.1
  %v359 = vmul.f32 %v231, 0.1
  %v360 = vmul.f32 %v232, 0.1
  %v361 = vmul.f32 %v233, 0.1
  %v362 = vmul.f32 %v234, 0.1
  %v363 = vmul.f32 %v235, 0.1
  %v364 = vmul.f32 %v236, 0.1
  %v365 = vmul.f32 %v237, 0.1
  %v366 = vmul.f32 %v238, 0.1
  %v367 = vmul.f32 %v239, 0.1
  %v368 = vmul.f32 %v240, 0.1
  %v369 = vmul.f32 %v241, 0.1
  %v370 = vmul.f32 %v242, 0.1
  %v371 = vmul.f32 %v243, 0.1
  %v372 = vmul.f32 %v244, 0.1
  %v373 = vmul.f32 %v245, 0.1
  %v374 = vmul.f32 %v246, 0.1
  %v375 = vmul.f32 %v247, 0.1
  %v376 = vmul.f32 %v248, 0.1
  %v377 = vmul.f32 %v249, 0.1
  %v378 = vmul.f32 %v250, 0.1
  %v379 = vmul.f32 %v251, 0.1
  %v380 = vmul.f32 %v252, 0.1
  %v381 = vmul.f32 %v253, 0.1
  %v382 = vmul.f32 %v254, 0.1
  %v383 = vmul.f32 %v255, 0.1
  %v384 = vmul.f32 %v256, 0.1
  %v385 = vmul.f32 %v257, 0.1
  %v386 = vmul.f32 %v258, 0.1
  %v387 = vmul.f32 %v259, 0.1
  %v388 = vmul.f32 %v260, 0.1
  %v389 = vmul.f32 %v261, 0.1
  %v390 = vmul.f32 %v262, 0.1
  %v391 = vmul.f32 %v263, 0.1
  %v392 = vmul.f32 %v264, 0.1
  %v393 = vmul.f32 %v265, 0.1
  %v394 = vmul.f32 %v266, 0.1
  %v395 = vmul.f32 %v267, 0.1
  %v396 = vmul.f32 %v268, 0.1
  %v397 = vmul.f32 %v269, 0.1
  %v398 = vmul.f32 %v270, 0.1
  %v399 = vmul.f32 %v271, 0.1
  %v400 = vmul.f32 %v272, 0.1
  %v401 = vmul.f32 %v273, 0.1
  %v402 = vmul.f32 %v274, 0.1
  %v403 = vmul.f32 %v275, 0.1
  %v404 = vmul.f32 %v276, 0.1
  %v405 = vmul.f32 %v277, 0.1
  %v406 = vmul.f32 %v278, 0.1
  %v407 = vmul.f32 %v279, 0.1
  %v408 = vmul.f32 %v280, 0.1
  %v409 = vmul.f32 %v281, 0.1
  %v410 = vmul.f32 %v282, 0.1
  %v411 = vmul.f32 %v283, 0.1
  %v412 = vmul.f32 %v284, 0.1
  %v413 = vmul.f32 %v285, 0.1
  %v414 = vmul.f32 %v286, 0.1
  %v415 = vmul.f32 %v287, 0.1
  %v416 = vmul.f32 %v288, 0.1
  %v417 = vmul.f32 %v289, 0.1
  %v418 = vsel %vm290, %v226, %v354
  %v419 = vsel %vm291, %v227, %v355
  %v420 = vsel %vm292, %v228, %v356
  %v421 = vsel %vm293, %v229, %v357
  %v422 = vsel %vm294, %v230, %v358
  %v423 = vsel %vm295, %v231, %v359
  %v424 = vsel %vm296, %v232, %v360
  %v425 = vsel %vm297, %v233, %v361
  %v426 = vsel %vm298, %v234, %v362
  %v427 = vsel %vm299, %v235, %v363
  %v428 = vsel %vm300, %v236, %v364
  %v429 = vsel %vm301, %v237, %v365
  %v430 = vsel %vm302, %v238, %v366
  %v431 = vsel %vm303, %v239, %v367
  %v432 = vsel %vm304, %v240, %v368
  %v433 = vsel %vm305, %v241, %v369
  %v434 = vsel %vm306, %v242, %v370
  %v435 = vsel %vm307, %v243, %v371
  %v436 = vsel %vm308, %v244, %v372
  %v437 = vsel %vm309, %v245, %v373
  %v438 = vsel %vm310, %v246, %v374
  %v439 = vsel %vm311, %v247, %v375
  %v440 = vsel %vm312, %v248, %v376
  %v441 = vsel %vm313, %v249, %v377
  %v442 = vsel %vm314, %v250, %v378
  %v443 = vsel %vm315, %v251, %v379
  %v444 = vsel %vm316, %v252, %v380
  %v445 = vsel %vm317, %v253, %v381
  %v446 = vsel %vm318, %v254, %v382
  %v447 = vsel %vm319, %v255, %v383
  %v448 = vsel %vm320, %v256, %v384
  %v449 = vsel %vm321, %v257, %v385
  %v450 = vsel %vm322, %v258, %v386
  %v451 = vsel %vm323, %v259, %v387
  %v452 = vsel %vm324, %v260, %v388
  %v453 = vsel %vm325, %v261, %v389
  %v454 = vsel %vm326, %v262, %v390
  %v455 = vsel %vm327, %v263, %v391
  %v456 = vsel %vm328, %v264, %v392
  %v457 = vsel %vm329, %v265, %v393
  %v458 = vsel %vm330, %v266, %v394
  %v459 = vsel %vm331, %v267, %v395
  %v460 = vsel %vm332, %v268, %v396
  %v461 = vsel %vm333, %v269, %v397
  %v462 = vsel %vm334, %v270, %v398
  %v463 = vsel %vm335, %v271, %v399
  %v464 = vsel %vm336, %v272, %v400
  %v465 = vsel %vm337, %v273, %v401
  %v466 = vsel %vm338, %v274, %v402
  %v467 = vsel %vm339, %v275, %v403
  %v468 = vsel %vm340, %v276, %v404
  %v469 = vsel %vm341, %v277, %v405
  %v470 = vsel %vm342, %v278, %v406
  %v471 = vsel %vm343, %v279, %v407
  %v472 = vsel %vm344, %v280, %v408
  %v473 = vsel %vm345, %v281, %v409
  %v474 = vsel %vm346, %v282, %v410
  %v475 = vsel %vm347, %v283, %v411
  %v476 = vsel %vm348, %v284, %v412
  %v477 = vsel %vm349, %v285, %v413
  %v478 = vsel %vm350, %v286, %v414
  %v479 = vsel %vm351, %v287, %v415
  %v480 = vsel %vm352, %v288, %v416
  %v481 = vsel %vm353, %v289, %v417
  %v482 = vld [vmem:[%s3] sm:$0xf]
  %v483 = vld [vmem:[%s3 + $0x4] sm:$0xf]
  %v484 = vld [vmem:[%s3 + $0x8] sm:$0xf]
  %v485 = vld [vmem:[%s3 + $0xc] sm:$0xf]
  %v486 = vld [vmem:[%s3 + $0x10] sm:$0xf]
  %v487 = vld [vmem:[%s3 + $0x14] sm:$0xf]
  %v488 = vld [vmem:[%s3 + $0x18] sm:$0xf]
  %v489 = vld [vmem:[%s3 + $0x1c] sm:$0xf]
  %v490 = vld [vmem:[%s3 + $0x20] sm:$0xf]
  %v491 = vld [vmem:[%s3 + $0x24] sm:$0xf]
  %v492 = vld [vmem:[%s3 + $0x28] sm:$0xf]
  %v493 = vld [vmem:[%s3 + $0x2c] sm:$0xf]
  %v494 = vld [vmem:[%s3 + $0x30] sm:$0xf]
  %v495 = vld [vmem:[%s3 + $0x34] sm:$0xf]
  %v496 = vld [vmem:[%s3 + $0x38] sm:$0xf]
  %v497 = vld [vmem:[%s3 + $0x3c] sm:$0xf]
  %v498 = vld [vmem:[%s3 + $0x40] sm:$0xf]
  %v499 = vld [vmem:[%s3 + $0x44] sm:$0xf]
  %v500 = vld [vmem:[%s3 + $0x48] sm:$0xf]
  %v501 = vld [vmem:[%s3 + $0x4c] sm:$0xf]
  %v502 = vld [vmem:[%s3 + $0x50] sm:$0xf]
  %v503 = vld [vmem:[%s3 + $0x54] sm:$0xf]
  %v504 = vld [vmem:[%s3 + $0x58] sm:$0xf]
  %v505 = vld [vmem:[%s3 + $0x5c] sm:$0xf]
  %v506 = vld [vmem:[%s3 + $0x60] sm:$0xf]
  %v507 = vld [vmem:[%s3 + $0x64] sm:$0xf]
  %v508 = vld [vmem:[%s3 + $0x68] sm:$0xf]
  %v509 = vld [vmem:[%s3 + $0x6c] sm:$0xf]
  %v510 = vld [vmem:[%s3 + $0x70] sm:$0xf]
  %v511 = vld [vmem:[%s3 + $0x74] sm:$0xf]
  %v512 = vld [vmem:[%s3 + $0x78] sm:$0xf]
  %v513 = vld [vmem:[%s3 + $0x7c] sm:$0xf]
  %v514 = vld [vmem:[%s3 + $0x80] sm:$0xf]
  %v515 = vld [vmem:[%s3 + $0x84] sm:$0xf]
  %v516 = vld [vmem:[%s3 + $0x88] sm:$0xf]
  %v517 = vld [vmem:[%s3 + $0x8c] sm:$0xf]
  %v518 = vld [vmem:[%s3 + $0x90] sm:$0xf]
  %v519 = vld [vmem:[%s3 + $0x94] sm:$0xf]
  %v520 = vld [vmem:[%s3 + $0x98] sm:$0xf]
  %v521 = vld [vmem:[%s3 + $0x9c] sm:$0xf]
  %v522 = vld [vmem:[%s3 + $0xa0] sm:$0xf]
  %v523 = vld [vmem:[%s3 + $0xa4] sm:$0xf]
  %v524 = vld [vmem:[%s3 + $0xa8] sm:$0xf]
  %v525 = vld [vmem:[%s3 + $0xac] sm:$0xf]
  %v526 = vld [vmem:[%s3 + $0xb0] sm:$0xf]
  %v527 = vld [vmem:[%s3 + $0xb4] sm:$0xf]
  %v528 = vld [vmem:[%s3 + $0xb8] sm:$0xf]
  %v529 = vld [vmem:[%s3 + $0xbc] sm:$0xf]
  %v530 = vld [vmem:[%s3 + $0xc0] sm:$0xf]
  %v531 = vld [vmem:[%s3 + $0xc4] sm:$0xf]
  %v532 = vld [vmem:[%s3 + $0xc8] sm:$0xf]
  %v533 = vld [vmem:[%s3 + $0xcc] sm:$0xf]
  %v534 = vld [vmem:[%s3 + $0xd0] sm:$0xf]
  %v535 = vld [vmem:[%s3 + $0xd4] sm:$0xf]
  %v536 = vld [vmem:[%s3 + $0xd8] sm:$0xf]
  %v537 = vld [vmem:[%s3 + $0xdc] sm:$0xf]
  %v538 = vld [vmem:[%s3 + $0xe0] sm:$0xf]
  %v539 = vld [vmem:[%s3 + $0xe4] sm:$0xf]
  %v540 = vld [vmem:[%s3 + $0xe8] sm:$0xf]
  %v541 = vld [vmem:[%s3 + $0xec] sm:$0xf]
  %v542 = vld [vmem:[%s3 + $0xf0] sm:$0xf]
  %v543 = vld [vmem:[%s3 + $0xf4] sm:$0xf]
  %v544 = vld [vmem:[%s3 + $0xf8] sm:$0xf]
  %v545 = vld [vmem:[%s3 + $0xfc] sm:$0xf]
  %v546 = vunpack.c.l.bf16 %v482
  %v547 = vunpack.c.l.bf16 %v483
  %v548 = vunpack.c.l.bf16 %v484
  %v549 = vunpack.c.l.bf16 %v485
  %v550 = vunpack.c.l.bf16 %v486
  %v551 = vunpack.c.l.bf16 %v487
  %v552 = vunpack.c.l.bf16 %v488
  %v553 = vunpack.c.l.bf16 %v489
  %v554 = vunpack.c.l.bf16 %v490
  %v555 = vunpack.c.l.bf16 %v491
  %v556 = vunpack.c.l.bf16 %v492
  %v557 = vunpack.c.l.bf16 %v493
  %v558 = vunpack.c.l.bf16 %v494
  %v559 = vunpack.c.l.bf16 %v495
  %v560 = vunpack.c.l.bf16 %v496
  %v561 = vunpack.c.l.bf16 %v497
  %v562 = vunpack.c.l.bf16 %v498
  %v563 = vunpack.c.l.bf16 %v499
  %v564 = vunpack.c.l.bf16 %v500
  %v565 = vunpack.c.l.bf16 %v501
  %v566 = vunpack.c.l.bf16 %v502
  %v567 = vunpack.c.l.bf16 %v503
  %v568 = vunpack.c.l.bf16 %v504
  %v569 = vunpack.c.l.bf16 %v505
  %v570 = vunpack.c.l.bf16 %v506
  %v571 = vunpack.c.l.bf16 %v507
  %v572 = vunpack.c.l.bf16 %v508
  %v573 = vunpack.c.l.bf16 %v509
  %v574 = vunpack.c.l.bf16 %v510
  %v575 = vunpack.c.l.bf16 %v511
  %v576 = vunpack.c.l.bf16 %v512
  %v577 = vunpack.c.l.bf16 %v513
  %v578 = vunpack.c.l.bf16 %v514
  %v579 = vunpack.c.l.bf16 %v515
  %v580 = vunpack.c.l.bf16 %v516
  %v581 = vunpack.c.l.bf16 %v517
  %v582 = vunpack.c.l.bf16 %v518
  %v583 = vunpack.c.l.bf16 %v519
  %v584 = vunpack.c.l.bf16 %v520
  %v585 = vunpack.c.l.bf16 %v521
  %v586 = vunpack.c.l.bf16 %v522
  %v587 = vunpack.c.l.bf16 %v523
  %v588 = vunpack.c.l.bf16 %v524
  %v589 = vunpack.c.l.bf16 %v525
  %v590 = vunpack.c.l.bf16 %v526
  %v591 = vunpack.c.l.bf16 %v527
  %v592 = vunpack.c.l.bf16 %v528
  %v593 = vunpack.c.l.bf16 %v529
  %v594 = vunpack.c.l.bf16 %v530
  %v595 = vunpack.c.l.bf16 %v531
  %v596 = vunpack.c.l.bf16 %v532
  %v597 = vunpack.c.l.bf16 %v533
  %v598 = vunpack.c.l.bf16 %v534
  %v599 = vunpack.c.l.bf16 %v535
  %v600 = vunpack.c.l.bf16 %v536
  %v601 = vunpack.c.l.bf16 %v537
  %v602 = vunpack.c.l.bf16 %v538
  %v603 = vunpack.c.l.bf16 %v539
  %v604 = vunpack.c.l.bf16 %v540
  %v605 = vunpack.c.l.bf16 %v541
  %v606 = vunpack.c.l.bf16 %v542
  %v607 = vunpack.c.l.bf16 %v543
  %v608 = vunpack.c.l.bf16 %v544
  %v609 = vunpack.c.l.bf16 %v545
  %v610 = vadd.f32 %v418, %v546
  %v611 = vadd.f32 %v419, %v547
  %v612 = vadd.f32 %v420, %v548
  %v613 = vadd.f32 %v421, %v549
  %v614 = vadd.f32 %v422, %v550
  %v615 = vadd.f32 %v423, %v551
  %v616 = vadd.f32 %v424, %v552
  %v617 = vadd.f32 %v425, %v553
  %v618 = vadd.f32 %v426, %v554
  %v619 = vadd.f32 %v427, %v555
  %v620 = vadd.f32 %v428, %v556
  %v621 = vadd.f32 %v429, %v557
  %v622 = vadd.f32 %v430, %v558
  %v623 = vadd.f32 %v431, %v559
  %v624 = vadd.f32 %v432, %v560
  %v625 = vadd.f32 %v433, %v561
  %v626 = vadd.f32 %v434, %v562
  %v627 = vadd.f32 %v435, %v563
  %v628 = vadd.f32 %v436, %v564
  %v629 = vadd.f32 %v437, %v565
  %v630 = vadd.f32 %v438, %v566
  %v631 = vadd.f32 %v439, %v567
  %v632 = vadd.f32 %v440, %v568
  %v633 = vadd.f32 %v441, %v569
  %v634 = vadd.f32 %v442, %v570
  %v635 = vadd.f32 %v443, %v571
  %v636 = vadd.f32 %v444, %v572
  %v637 = vadd.f32 %v445, %v573
  %v638 = vadd.f32 %v446, %v574
  %v639 = vadd.f32 %v447, %v575
  %v640 = vadd.f32 %v448, %v576
  %v641 = vadd.f32 %v449, %v577
  %v642 = vadd.f32 %v450, %v578
  %v643 = vadd.f32 %v451, %v579
  %v644 = vadd.f32 %v452, %v580
  %v645 = vadd.f32 %v453, %v581
  %v646 = vadd.f32 %v454, %v582
  %v647 = vadd.f32 %v455, %v583
  %v648 = vadd.f32 %v456, %v584
  %v649 = vadd.f32 %v457, %v585
  %v650 = vadd.f32 %v458, %v586
  %v651 = vadd.f32 %v459, %v587
  %v652 = vadd.f32 %v460, %v588
  %v653 = vadd.f32 %v461, %v589
  %v654 = vadd.f32 %v462, %v590
  %v655 = vadd.f32 %v463, %v591
  %v656 = vadd.f32 %v464, %v592
  %v657 = vadd.f32 %v465, %v593
  %v658 = vadd.f32 %v466, %v594
  %v659 = vadd.f32 %v467, %v595
  %v660 = vadd.f32 %v468, %v596
  %v661 = vadd.f32 %v469, %v597
  %v662 = vadd.f32 %v470, %v598
  %v663 = vadd.f32 %v471, %v599
  %v664 = vadd.f32 %v472, %v600
  %v665 = vadd.f32 %v473, %v601
  %v666 = vadd.f32 %v474, %v602
  %v667 = vadd.f32 %v475, %v603
  %v668 = vadd.f32 %v476, %v604
  %v669 = vadd.f32 %v477, %v605
  %v670 = vadd.f32 %v478, %v606
  %v671 = vadd.f32 %v479, %v607
  %v672 = vadd.f32 %v480, %v608
  %v673 = vadd.f32 %v481, %v609
  %v674 = vpack.c.bf16 %v610, %v610
  %v675 = vpack.c.bf16 %v611, %v611
  %v676 = vpack.c.bf16 %v612, %v612
  %v677 = vpack.c.bf16 %v613, %v613
  %v678 = vpack.c.bf16 %v614, %v614
  %v679 = vpack.c.bf16 %v615, %v615
  %v680 = vpack.c.bf16 %v616, %v616
  %v681 = vpack.c.bf16 %v617, %v617
  %v682 = vpack.c.bf16 %v618, %v618
  %v683 = vpack.c.bf16 %v619, %v619
  %v684 = vpack.c.bf16 %v620, %v620
  %v685 = vpack.c.bf16 %v621, %v621
  %v686 = vpack.c.bf16 %v622, %v622
  %v687 = vpack.c.bf16 %v623, %v623
  %v688 = vpack.c.bf16 %v624, %v624
  %v689 = vpack.c.bf16 %v625, %v625
  %v690 = vpack.c.bf16 %v626, %v626
  %v691 = vpack.c.bf16 %v627, %v627
  %v692 = vpack.c.bf16 %v628, %v628
  %v693 = vpack.c.bf16 %v629, %v629
  %v694 = vpack.c.bf16 %v630, %v630
  %v695 = vpack.c.bf16 %v631, %v631
  %v696 = vpack.c.bf16 %v632, %v632
  %v697 = vpack.c.bf16 %v633, %v633
  %v698 = vpack.c.bf16 %v634, %v634
  %v699 = vpack.c.bf16 %v635, %v635
  %v700 = vpack.c.bf16 %v636, %v636
  %v701 = vpack.c.bf16 %v637, %v637
  %v702 = vpack.c.bf16 %v638, %v638
  %v703 = vpack.c.bf16 %v639, %v639
  %v704 = vpack.c.bf16 %v640, %v640
  %v705 = vpack.c.bf16 %v641, %v641
  %v706 = vpack.c.bf16 %v642, %v642
  %v707 = vpack.c.bf16 %v643, %v643
  %v708 = vpack.c.bf16 %v644, %v644
  %v709 = vpack.c.bf16 %v645, %v645
  %v710 = vpack.c.bf16 %v646, %v646
  %v711 = vpack.c.bf16 %v647, %v647
  %v712 = vpack.c.bf16 %v648, %v648
  %v713 = vpack.c.bf16 %v649, %v649
  %v714 = vpack.c.bf16 %v650, %v650
  %v715 = vpack.c.bf16 %v651, %v651
  %v716 = vpack.c.bf16 %v652, %v652
  %v717 = vpack.c.bf16 %v653, %v653
  %v718 = vpack.c.bf16 %v654, %v654
  %v719 = vpack.c.bf16 %v655, %v655
  %v720 = vpack.c.bf16 %v656, %v656
  %v721 = vpack.c.bf16 %v657, %v657
  %v722 = vpack.c.bf16 %v658, %v658
  %v723 = vpack.c.bf16 %v659, %v659
  %v724 = vpack.c.bf16 %v660, %v660
  %v725 = vpack.c.bf16 %v661, %v661
  %v726 = vpack.c.bf16 %v662, %v662
  %v727 = vpack.c.bf16 %v663, %v663
  %v728 = vpack.c.bf16 %v664, %v664
  %v729 = vpack.c.bf16 %v665, %v665
  %v730 = vpack.c.bf16 %v666, %v666
  %v731 = vpack.c.bf16 %v667, %v667
  %v732 = vpack.c.bf16 %v668, %v668
  %v733 = vpack.c.bf16 %v669, %v669
  %v734 = vpack.c.bf16 %v670, %v670
  %v735 = vpack.c.bf16 %v671, %v671
  %v736 = vpack.c.bf16 %v672, %v672
  %v737 = vpack.c.bf16 %v673, %v673
  %738 = vst [vmem:[%s8] sm:$0xf] %v674
  %739 = vst [vmem:[%s8 + $0x4] sm:$0xf] %v675
  %740 = vst [vmem:[%s8 + $0x8] sm:$0xf] %v676
  %741 = vst [vmem:[%s8 + $0xc] sm:$0xf] %v677
  %742 = vst [vmem:[%s8 + $0x10] sm:$0xf] %v678
  %743 = vst [vmem:[%s8 + $0x14] sm:$0xf] %v679
  %744 = vst [vmem:[%s8 + $0x18] sm:$0xf] %v680
  %745 = vst [vmem:[%s8 + $0x1c] sm:$0xf] %v681
  %746 = vst [vmem:[%s8 + $0x20] sm:$0xf] %v682
  %747 = vst [vmem:[%s8 + $0x24] sm:$0xf] %v683
  %748 = vst [vmem:[%s8 + $0x28] sm:$0xf] %v684
  %749 = vst [vmem:[%s8 + $0x2c] sm:$0xf] %v685
  %750 = vst [vmem:[%s8 + $0x30] sm:$0xf] %v686
  %751 = vst [vmem:[%s8 + $0x34] sm:$0xf] %v687
  %752 = vst [vmem:[%s8 + $0x38] sm:$0xf] %v688
  %753 = vst [vmem:[%s8 + $0x3c] sm:$0xf] %v689
  %754 = vst [vmem:[%s8 + $0x40] sm:$0xf] %v690
  %755 = vst [vmem:[%s8 + $0x44] sm:$0xf] %v691
  %756 = vst [vmem:[%s8 + $0x48] sm:$0xf] %v692
  %757 = vst [vmem:[%s8 + $0x4c] sm:$0xf] %v693
  %758 = vst [vmem:[%s8 + $0x50] sm:$0xf] %v694
  %759 = vst [vmem:[%s8 + $0x54] sm:$0xf] %v695
  %760 = vst [vmem:[%s8 + $0x58] sm:$0xf] %v696
  %761 = vst [vmem:[%s8 + $0x5c] sm:$0xf] %v697
  %762 = vst [vmem:[%s8 + $0x60] sm:$0xf] %v698
  %763 = vst [vmem:[%s8 + $0x64] sm:$0xf] %v699
  %764 = vst [vmem:[%s8 + $0x68] sm:$0xf] %v700
  %765 = vst [vmem:[%s8 + $0x6c] sm:$0xf] %v701
  %766 = vst [vmem:[%s8 + $0x70] sm:$0xf] %v702
  %767 = vst [vmem:[%s8 + $0x74] sm:$0xf] %v703
  %768 = vst [vmem:[%s8 + $0x78] sm:$0xf] %v704
  %769 = vst [vmem:[%s8 + $0x7c] sm:$0xf] %v705
  %770 = vst [vmem:[%s8 + $0x80] sm:$0xf] %v706
  %771 = vst [vmem:[%s8 + $0x84] sm:$0xf] %v707
  %772 = vst [vmem:[%s8 + $0x88] sm:$0xf] %v708
  %773 = vst [vmem:[%s8 + $0x8c] sm:$0xf] %v709
  %774 = vst [vmem:[%s8 + $0x90] sm:$0xf] %v710
  %775 = vst [vmem:[%s8 + $0x94] sm:$0xf] %v711
  %776 = vst [vmem:[%s8 + $0x98] sm:$0xf] %v712
  %777 = vst [vmem:[%s8 + $0x9c] sm:$0xf] %v713
  %778 = vst [vmem:[%s8 + $0xa0] sm:$0xf] %v714
  %779 = vst [vmem:[%s8 + $0xa4] sm:$0xf] %v715
  %780 = vst [vmem:[%s8 + $0xa8] sm:$0xf] %v716
  %781 = vst [vmem:[%s8 + $0xac] sm:$0xf] %v717
  %782 = vst [vmem:[%s8 + $0xb0] sm:$0xf] %v718
  %783 = vst [vmem:[%s8 + $0xb4] sm:$0xf] %v719
  %784 = vst [vmem:[%s8 + $0xb8] sm:$0xf] %v720
  %785 = vst [vmem:[%s8 + $0xbc] sm:$0xf] %v721
  %786 = vst [vmem:[%s8 + $0xc0] sm:$0xf] %v722
  %787 = vst [vmem:[%s8 + $0xc4] sm:$0xf] %v723
  %788 = vst [vmem:[%s8 + $0xc8] sm:$0xf] %v724
  %789 = vst [vmem:[%s8 + $0xcc] sm:$0xf] %v725
  %790 = vst [vmem:[%s8 + $0xd0] sm:$0xf] %v726
  %791 = vst [vmem:[%s8 + $0xd4] sm:$0xf] %v727
  %792 = vst [vmem:[%s8 + $0xd8] sm:$0xf] %v728
  %793 = vst [vmem:[%s8 + $0xdc] sm:$0xf] %v729
  %794 = vst [vmem:[%s8 + $0xe0] sm:$0xf] %v730
  %795 = vst [vmem:[%s8 + $0xe4] sm:$0xf] %v731
  %796 = vst [vmem:[%s8 + $0xe8] sm:$0xf] %v732
  %797 = vst [vmem:[%s8 + $0xec] sm:$0xf] %v733
  %798 = vst [vmem:[%s8 + $0xf0] sm:$0xf] %v734
  %799 = vst [vmem:[%s8 + $0xf4] sm:$0xf] %v735
  %800 = vst [vmem:[%s8 + $0xf8] sm:$0xf] %v736
  %801 = vst [vmem:[%s8 + $0xfc] sm:$0xf] %v737
  %v802 = vld [vmem:[%s4] sm:$0xf]
  %v803 = vld [vmem:[%s4 + $0x4] sm:$0xf]
  %v804 = vld [vmem:[%s4 + $0x8] sm:$0xf]
  %v805 = vld [vmem:[%s4 + $0xc] sm:$0xf]
  %v806 = vld [vmem:[%s4 + $0x10] sm:$0xf]
  %v807 = vld [vmem:[%s4 + $0x14] sm:$0xf]
  %v808 = vld [vmem:[%s4 + $0x18] sm:$0xf]
  %v809 = vld [vmem:[%s4 + $0x1c] sm:$0xf]
  %v810 = vld [vmem:[%s4 + $0x20] sm:$0xf]
  %v811 = vld [vmem:[%s4 + $0x24] sm:$0xf]
  %v812 = vld [vmem:[%s4 + $0x28] sm:$0xf]
  %v813 = vld [vmem:[%s4 + $0x2c] sm:$0xf]
  %v814 = vld [vmem:[%s4 + $0x30] sm:$0xf]
  %v815 = vld [vmem:[%s4 + $0x34] sm:$0xf]
  %v816 = vld [vmem:[%s4 + $0x38] sm:$0xf]
  %v817 = vld [vmem:[%s4 + $0x3c] sm:$0xf]
  %v818 = vld [vmem:[%s5] sm:$0x1]
  %v820 = vperm.slane %v818, 0
  %v886 = vunpack.c.l.b16 %v674
  %v887 = vunpack.c.l.b16 %v675
  %v888 = vunpack.c.l.b16 %v676
  %v889 = vunpack.c.l.b16 %v677
  %v890 = vunpack.c.l.b16 %v678
  %v891 = vunpack.c.l.b16 %v679
  %v892 = vunpack.c.l.b16 %v680
  %v893 = vunpack.c.l.b16 %v681
  %v894 = vunpack.c.l.b16 %v682
  %v895 = vunpack.c.l.b16 %v683
  %v896 = vunpack.c.l.b16 %v684
  %v897 = vunpack.c.l.b16 %v685
  %v898 = vunpack.c.l.b16 %v686
  %v899 = vunpack.c.l.b16 %v687
  %v900 = vunpack.c.l.b16 %v688
  %v901 = vunpack.c.l.b16 %v689
  %v902 = vunpack.c.l.b16 %v690
  %v903 = vunpack.c.l.b16 %v691
  %v904 = vunpack.c.l.b16 %v692
  %v905 = vunpack.c.l.b16 %v693
  %v906 = vunpack.c.l.b16 %v694
  %v907 = vunpack.c.l.b16 %v695
  %v908 = vunpack.c.l.b16 %v696
  %v909 = vunpack.c.l.b16 %v697
  %v910 = vunpack.c.l.b16 %v698
  %v911 = vunpack.c.l.b16 %v699
  %v912 = vunpack.c.l.b16 %v700
  %v913 = vunpack.c.l.b16 %v701
  %v914 = vunpack.c.l.b16 %v702
  %v915 = vunpack.c.l.b16 %v703
  %v916 = vunpack.c.l.b16 %v704
  %v917 = vunpack.c.l.b16 %v705
  %v918 = vunpack.c.l.b16 %v706
  %v919 = vunpack.c.l.b16 %v707
  %v920 = vunpack.c.l.b16 %v708
  %v921 = vunpack.c.l.b16 %v709
  %v922 = vunpack.c.l.b16 %v710
  %v923 = vunpack.c.l.b16 %v711
  %v924 = vunpack.c.l.b16 %v712
  %v925 = vunpack.c.l.b16 %v713
  %v926 = vunpack.c.l.b16 %v714
  %v927 = vunpack.c.l.b16 %v715
  %v928 = vunpack.c.l.b16 %v716
  %v929 = vunpack.c.l.b16 %v717
  %v930 = vunpack.c.l.b16 %v718
  %v931 = vunpack.c.l.b16 %v719
  %v932 = vunpack.c.l.b16 %v720
  %v933 = vunpack.c.l.b16 %v721
  %v934 = vunpack.c.l.b16 %v722
  %v935 = vunpack.c.l.b16 %v723
  %v936 = vunpack.c.l.b16 %v724
  %v937 = vunpack.c.l.b16 %v725
  %v938 = vunpack.c.l.b16 %v726
  %v939 = vunpack.c.l.b16 %v727
  %v940 = vunpack.c.l.b16 %v728
  %v941 = vunpack.c.l.b16 %v729
  %v942 = vunpack.c.l.b16 %v730
  %v943 = vunpack.c.l.b16 %v731
  %v944 = vunpack.c.l.b16 %v732
  %v945 = vunpack.c.l.b16 %v733
  %v946 = vunpack.c.l.b16 %v734
  %v947 = vunpack.c.l.b16 %v735
  %v948 = vunpack.c.l.b16 %v736
  %v949 = vunpack.c.l.b16 %v737
  %v950 = vpack.c.b16 %v887, %v886
  %v951 = vpack.c.b16 %v889, %v888
  %v952 = vpack.c.b16 %v891, %v890
  %v953 = vpack.c.b16 %v893, %v892
  %v954 = vpack.c.b16 %v895, %v894
  %v955 = vpack.c.b16 %v897, %v896
  %v956 = vpack.c.b16 %v899, %v898
  %v957 = vpack.c.b16 %v901, %v900
  %v958 = vpack.c.b16 %v903, %v902
  %v959 = vpack.c.b16 %v905, %v904
  %v960 = vpack.c.b16 %v907, %v906
  %v961 = vpack.c.b16 %v909, %v908
  %v962 = vpack.c.b16 %v911, %v910
  %v963 = vpack.c.b16 %v913, %v912
  %v964 = vpack.c.b16 %v915, %v914
  %v965 = vpack.c.b16 %v917, %v916
  %v966 = vpack.c.b16 %v919, %v918
  %v967 = vpack.c.b16 %v921, %v920
  %v968 = vpack.c.b16 %v923, %v922
  %v969 = vpack.c.b16 %v925, %v924
  %v970 = vpack.c.b16 %v927, %v926
  %v971 = vpack.c.b16 %v929, %v928
  %v972 = vpack.c.b16 %v931, %v930
  %v973 = vpack.c.b16 %v933, %v932
  %v974 = vpack.c.b16 %v935, %v934
  %v975 = vpack.c.b16 %v937, %v936
  %v976 = vpack.c.b16 %v939, %v938
  %v977 = vpack.c.b16 %v941, %v940
  %v978 = vpack.c.b16 %v943, %v942
  %v979 = vpack.c.b16 %v945, %v944
  %v980 = vpack.c.b16 %v947, %v946
  %v981 = vpack.c.b16 %v949, %v948
  %v1030 = vunpack.c.l.b16 %v802
  %v1031 = vunpack.c.l.b16 %v803
  %v1032 = vunpack.c.l.b16 %v804
  %v1033 = vunpack.c.l.b16 %v805
  %v1034 = vunpack.c.l.b16 %v806
  %v1035 = vunpack.c.l.b16 %v807
  %v1036 = vunpack.c.l.b16 %v808
  %v1037 = vunpack.c.l.b16 %v809
  %v1038 = vunpack.c.l.b16 %v810
  %v1039 = vunpack.c.l.b16 %v811
  %v1040 = vunpack.c.l.b16 %v812
  %v1041 = vunpack.c.l.b16 %v813
  %v1042 = vunpack.c.l.b16 %v814
  %v1043 = vunpack.c.l.b16 %v815
  %v1044 = vunpack.c.l.b16 %v816
  %v1045 = vunpack.c.l.b16 %v817
  %v1046 = vpack.c.b16 %v1031, %v1030
  %v1047 = vpack.c.b16 %v1033, %v1032
  %v1048 = vpack.c.b16 %v1035, %v1034
  %v1049 = vpack.c.b16 %v1037, %v1036
  %v1050 = vpack.c.b16 %v1039, %v1038
  %v1051 = vpack.c.b16 %v1041, %v1040
  %v1052 = vpack.c.b16 %v1043, %v1042
  %v1053 = vpack.c.b16 %v1045, %v1044
  %1062 = vmatpush.bf16.msra.mxu0 %v1053
  %1063 = vmatpush.bf16.msra.mxu0 %v1052
  %1064 = vmatpush.bf16.msra.mxu0 %v1051
  %1065 = vmatpush.bf16.msra.mxu0 %v1050
  %1066 = vmatpush.bf16.msra.mxu0 %v1049
  %1067 = vmatpush.bf16.msra.mxu0 %v1048
  %1068 = vmatpush.bf16.msra.mxu0 %v1047
  %1069 = vmatpush.bf16.msra.mxu0 %v1046
  %1070 = vmatmul.bf16.gmra.mxu0 %v950
  %v1071 = vpop.f32.mrf.mxu0
  %v1072 = vadd.f32 %v820, %v1071
  %v1073 = vpop.f32.mrf.mxu0
  %v1074 = vadd.f32 %v820, %v1073
  %1075 = vmatmul.bf16.gmra.mxu0 %v951
  %v1076 = vpop.f32.mrf.mxu0
  %v1077 = vadd.f32 %v820, %v1076
  %v1078 = vpop.f32.mrf.mxu0
  %v1079 = vadd.f32 %v820, %v1078
  %1080 = vmatmul.bf16.gmra.mxu0 %v952
  %v1081 = vpop.f32.mrf.mxu0
  %v1082 = vadd.f32 %v820, %v1081
  %v1083 = vpop.f32.mrf.mxu0
  %v1084 = vadd.f32 %v820, %v1083
  %1085 = vmatmul.bf16.gmra.mxu0 %v953
  %v1086 = vpop.f32.mrf.mxu0
  %v1087 = vadd.f32 %v820, %v1086
  %v1088 = vpop.f32.mrf.mxu0
  %v1089 = vadd.f32 %v820, %v1088
  %1090 = vmatmul.bf16.gmra.mxu0 %v954
  %v1091 = vpop.f32.mrf.mxu0
  %v1092 = vadd.f32 %v820, %v1091
  %v1093 = vpop.f32.mrf.mxu0
  %v1094 = vadd.f32 %v820, %v1093
  %1095 = vmatmul.bf16.gmra.mxu0 %v955
  %v1096 = vpop.f32.mrf.mxu0
  %v1097 = vadd.f32 %v820, %v1096
  %v1098 = vpop.f32.mrf.mxu0
  %v1099 = vadd.f32 %v820, %v1098
  %1100 = vmatmul.bf16.gmra.mxu0 %v956
  %v1101 = vpop.f32.mrf.mxu0
  %v1102 = vadd.f32 %v820, %v1101
  %v1103 = vpop.f32.mrf.mxu0
  %v1104 = vadd.f32 %v820, %v1103
  %1105 = vmatmul.bf16.gmra.mxu0 %v957
  %v1106 = vpop.f32.mrf.mxu0
  %v1107 = vadd.f32 %v820, %v1106
  %v1108 = vpop.f32.mrf.mxu0
  %v1109 = vadd.f32 %v820, %v1108
  %1110 = vmatmul.bf16.gmra.mxu0 %v958
  %v1111 = vpop.f32.mrf.mxu0
  %v1112 = vadd.f32 %v820, %v1111
  %v1113 = vpop.f32.mrf.mxu0
  %v1114 = vadd.f32 %v820, %v1113
  %1115 = vmatmul.bf16.gmra.mxu0 %v959
  %v1116 = vpop.f32.mrf.mxu0
  %v1117 = vadd.f32 %v820, %v1116
  %v1118 = vpop.f32.mrf.mxu0
  %v1119 = vadd.f32 %v820, %v1118
  %1120 = vmatmul.bf16.gmra.mxu0 %v960
  %v1121 = vpop.f32.mrf.mxu0
  %v1122 = vadd.f32 %v820, %v1121
  %v1123 = vpop.f32.mrf.mxu0
  %v1124 = vadd.f32 %v820, %v1123
  %1125 = vmatmul.bf16.gmra.mxu0 %v961
  %v1126 = vpop.f32.mrf.mxu0
  %v1127 = vadd.f32 %v820, %v1126
  %v1128 = vpop.f32.mrf.mxu0
  %v1129 = vadd.f32 %v820, %v1128
  %1130 = vmatmul.bf16.gmra.mxu0 %v962
  %v1131 = vpop.f32.mrf.mxu0
  %v1132 = vadd.f32 %v820, %v1131
  %v1133 = vpop.f32.mrf.mxu0
  %v1134 = vadd.f32 %v820, %v1133
  %1135 = vmatmul.bf16.gmra.mxu0 %v963
  %v1136 = vpop.f32.mrf.mxu0
  %v1137 = vadd.f32 %v820, %v1136
  %v1138 = vpop.f32.mrf.mxu0
  %v1139 = vadd.f32 %v820, %v1138
  %1140 = vmatmul.bf16.gmra.mxu0 %v964
  %v1141 = vpop.f32.mrf.mxu0
  %v1142 = vadd.f32 %v820, %v1141
  %v1143 = vpop.f32.mrf.mxu0
  %v1144 = vadd.f32 %v820, %v1143
  %1145 = vmatmul.bf16.gmra.mxu0 %v965
  %v1146 = vpop.f32.mrf.mxu0
  %v1147 = vadd.f32 %v820, %v1146
  %v1148 = vpop.f32.mrf.mxu0
  %v1149 = vadd.f32 %v820, %v1148
  %1150 = vmatmul.bf16.gmra.mxu0 %v966
  %v1151 = vpop.f32.mrf.mxu0
  %v1152 = vadd.f32 %v820, %v1151
  %v1153 = vpop.f32.mrf.mxu0
  %v1154 = vadd.f32 %v820, %v1153
  %1155 = vmatmul.bf16.gmra.mxu0 %v967
  %v1156 = vpop.f32.mrf.mxu0
  %v1157 = vadd.f32 %v820, %v1156
  %v1158 = vpop.f32.mrf.mxu0
  %v1159 = vadd.f32 %v820, %v1158
  %1160 = vmatmul.bf16.gmra.mxu0 %v968
  %v1161 = vpop.f32.mrf.mxu0
  %v1162 = vadd.f32 %v820, %v1161
  %v1163 = vpop.f32.mrf.mxu0
  %v1164 = vadd.f32 %v820, %v1163
  %1165 = vmatmul.bf16.gmra.mxu0 %v969
  %v1166 = vpop.f32.mrf.mxu0
  %v1167 = vadd.f32 %v820, %v1166
  %v1168 = vpop.f32.mrf.mxu0
  %v1169 = vadd.f32 %v820, %v1168
  %1170 = vmatmul.bf16.gmra.mxu0 %v970
  %v1171 = vpop.f32.mrf.mxu0
  %v1172 = vadd.f32 %v820, %v1171
  %v1173 = vpop.f32.mrf.mxu0
  %v1174 = vadd.f32 %v820, %v1173
  %1175 = vmatmul.bf16.gmra.mxu0 %v971
  %v1176 = vpop.f32.mrf.mxu0
  %v1177 = vadd.f32 %v820, %v1176
  %v1178 = vpop.f32.mrf.mxu0
  %v1179 = vadd.f32 %v820, %v1178
  %1180 = vmatmul.bf16.gmra.mxu0 %v972
  %v1181 = vpop.f32.mrf.mxu0
  %v1182 = vadd.f32 %v820, %v1181
  %v1183 = vpop.f32.mrf.mxu0
  %v1184 = vadd.f32 %v820, %v1183
  %1185 = vmatmul.bf16.gmra.mxu0 %v973
  %v1186 = vpop.f32.mrf.mxu0
  %v1187 = vadd.f32 %v820, %v1186
  %v1188 = vpop.f32.mrf.mxu0
  %v1189 = vadd.f32 %v820, %v1188
  %1190 = vmatmul.bf16.gmra.mxu0 %v974
  %v1191 = vpop.f32.mrf.mxu0
  %v1192 = vadd.f32 %v820, %v1191
  %v1193 = vpop.f32.mrf.mxu0
  %v1194 = vadd.f32 %v820, %v1193
  %1195 = vmatmul.bf16.gmra.mxu0 %v975
  %v1196 = vpop.f32.mrf.mxu0
  %v1197 = vadd.f32 %v820, %v1196
  %v1198 = vpop.f32.mrf.mxu0
  %v1199 = vadd.f32 %v820, %v1198
  %1200 = vmatmul.bf16.gmra.mxu0 %v976
  %v1201 = vpop.f32.mrf.mxu0
  %v1202 = vadd.f32 %v820, %v1201
  %v1203 = vpop.f32.mrf.mxu0
  %v1204 = vadd.f32 %v820, %v1203
  %1205 = vmatmul.bf16.gmra.mxu0 %v977
  %v1206 = vpop.f32.mrf.mxu0
  %v1207 = vadd.f32 %v820, %v1206
  %v1208 = vpop.f32.mrf.mxu0
  %v1209 = vadd.f32 %v820, %v1208
  %1210 = vmatmul.bf16.gmra.mxu0 %v978
  %v1211 = vpop.f32.mrf.mxu0
  %v1212 = vadd.f32 %v820, %v1211
  %v1213 = vpop.f32.mrf.mxu0
  %v1214 = vadd.f32 %v820, %v1213
  %1215 = vmatmul.bf16.gmra.mxu0 %v979
  %v1216 = vpop.f32.mrf.mxu0
  %v1217 = vadd.f32 %v820, %v1216
  %v1218 = vpop.f32.mrf.mxu0
  %v1219 = vadd.f32 %v820, %v1218
  %1220 = vmatmul.bf16.gmra.mxu0 %v980
  %v1221 = vpop.f32.mrf.mxu0
  %v1222 = vadd.f32 %v820, %v1221
  %v1223 = vpop.f32.mrf.mxu0
  %v1224 = vadd.f32 %v820, %v1223
  %1225 = vmatmul.bf16.gmra.mxu0 %v981
  %v1226 = vpop.f32.mrf.mxu0
  %v1227 = vadd.f32 %v820, %v1226
  %v1228 = vpop.f32.mrf.mxu0
  %v1229 = vadd.f32 %v820, %v1228
  %1230 = vdwg.mxu0
  %v1231 = vpack.c.bf16 %v1072, %v1072
  %v1232 = vpack.c.bf16 %v1074, %v1074
  %v1233 = vpack.c.bf16 %v1077, %v1077
  %v1234 = vpack.c.bf16 %v1079, %v1079
  %v1235 = vpack.c.bf16 %v1082, %v1082
  %v1236 = vpack.c.bf16 %v1084, %v1084
  %v1237 = vpack.c.bf16 %v1087, %v1087
  %v1238 = vpack.c.bf16 %v1089, %v1089
  %v1239 = vpack.c.bf16 %v1092, %v1092
  %v1240 = vpack.c.bf16 %v1094, %v1094
  %v1241 = vpack.c.bf16 %v1097, %v1097
  %v1242 = vpack.c.bf16 %v1099, %v1099
  %v1243 = vpack.c.bf16 %v1102, %v1102
  %v1244 = vpack.c.bf16 %v1104, %v1104
  %v1245 = vpack.c.bf16 %v1107, %v1107
  %v1246 = vpack.c.bf16 %v1109, %v1109
  %v1247 = vpack.c.bf16 %v1112, %v1112
  %v1248 = vpack.c.bf16 %v1114, %v1114
  %v1249 = vpack.c.bf16 %v1117, %v1117
  %v1250 = vpack.c.bf16 %v1119, %v1119
  %v1251 = vpack.c.bf16 %v1122, %v1122
  %v1252 = vpack.c.bf16 %v1124, %v1124
  %v1253 = vpack.c.bf16 %v1127, %v1127
  %v1254 = vpack.c.bf16 %v1129, %v1129
  %v1255 = vpack.c.bf16 %v1132, %v1132
  %v1256 = vpack.c.bf16 %v1134, %v1134
  %v1257 = vpack.c.bf16 %v1137, %v1137
  %v1258 = vpack.c.bf16 %v1139, %v1139
  %v1259 = vpack.c.bf16 %v1142, %v1142
  %v1260 = vpack.c.bf16 %v1144, %v1144
  %v1261 = vpack.c.bf16 %v1147, %v1147
  %v1262 = vpack.c.bf16 %v1149, %v1149
  %v1263 = vpack.c.bf16 %v1152, %v1152
  %v1264 = vpack.c.bf16 %v1154, %v1154
  %v1265 = vpack.c.bf16 %v1157, %v1157
  %v1266 = vpack.c.bf16 %v1159, %v1159
  %v1267 = vpack.c.bf16 %v1162, %v1162
  %v1268 = vpack.c.bf16 %v1164, %v1164
  %v1269 = vpack.c.bf16 %v1167, %v1167
  %v1270 = vpack.c.bf16 %v1169, %v1169
  %v1271 = vpack.c.bf16 %v1172, %v1172
  %v1272 = vpack.c.bf16 %v1174, %v1174
  %v1273 = vpack.c.bf16 %v1177, %v1177
  %v1274 = vpack.c.bf16 %v1179, %v1179
  %v1275 = vpack.c.bf16 %v1182, %v1182
  %v1276 = vpack.c.bf16 %v1184, %v1184
  %v1277 = vpack.c.bf16 %v1187, %v1187
  %v1278 = vpack.c.bf16 %v1189, %v1189
  %v1279 = vpack.c.bf16 %v1192, %v1192
  %v1280 = vpack.c.bf16 %v1194, %v1194
  %v1281 = vpack.c.bf16 %v1197, %v1197
  %v1282 = vpack.c.bf16 %v1199, %v1199
  %v1283 = vpack.c.bf16 %v1202, %v1202
  %v1284 = vpack.c.bf16 %v1204, %v1204
  %v1285 = vpack.c.bf16 %v1207, %v1207
  %v1286 = vpack.c.bf16 %v1209, %v1209
  %v1287 = vpack.c.bf16 %v1212, %v1212
  %v1288 = vpack.c.bf16 %v1214, %v1214
  %v1289 = vpack.c.bf16 %v1217, %v1217
  %v1290 = vpack.c.bf16 %v1219, %v1219
  %v1291 = vpack.c.bf16 %v1222, %v1222
  %v1292 = vpack.c.bf16 %v1224, %v1224
  %v1293 = vpack.c.bf16 %v1227, %v1227
  %v1294 = vpack.c.bf16 %v1229, %v1229
  %1295 = vst [vmem:[%s6] sm:$0xf] %v1231
  %1296 = vst [vmem:[%s6 + $0x4] sm:$0xf] %v1232
  %1297 = vst [vmem:[%s6 + $0x8] sm:$0xf] %v1233
  %1298 = vst [vmem:[%s6 + $0xc] sm:$0xf] %v1234
  %1299 = vst [vmem:[%s6 + $0x10] sm:$0xf] %v1235
  %1300 = vst [vmem:[%s6 + $0x14] sm:$0xf] %v1236
  %1301 = vst [vmem:[%s6 + $0x18] sm:$0xf] %v1237
  %1302 = vst [vmem:[%s6 + $0x1c] sm:$0xf] %v1238
  %1303 = vst [vmem:[%s6 + $0x20] sm:$0xf] %v1239
  %1304 = vst [vmem:[%s6 + $0x24] sm:$0xf] %v1240
  %1305 = vst [vmem:[%s6 + $0x28] sm:$0xf] %v1241
  %1306 = vst [vmem:[%s6 + $0x2c] sm:$0xf] %v1242
  %1307 = vst [vmem:[%s6 + $0x30] sm:$0xf] %v1243
  %1308 = vst [vmem:[%s6 + $0x34] sm:$0xf] %v1244
  %1309 = vst [vmem:[%s6 + $0x38] sm:$0xf] %v1245
  %1310 = vst [vmem:[%s6 + $0x3c] sm:$0xf] %v1246
  %1311 = vst [vmem:[%s6 + $0x40] sm:$0xf] %v1247
  %1312 = vst [vmem:[%s6 + $0x44] sm:$0xf] %v1248
  %1313 = vst [vmem:[%s6 + $0x48] sm:$0xf] %v1249
  %1314 = vst [vmem:[%s6 + $0x4c] sm:$0xf] %v1250
  %1315 = vst [vmem:[%s6 + $0x50] sm:$0xf] %v1251
  %1316 = vst [vmem:[%s6 + $0x54] sm:$0xf] %v1252
  %1317 = vst [vmem:[%s6 + $0x58] sm:$0xf] %v1253
  %1318 = vst [vmem:[%s6 + $0x5c] sm:$0xf] %v1254
  %1319 = vst [vmem:[%s6 + $0x60] sm:$0xf] %v1255
  %1320 = vst [vmem:[%s6 + $0x64] sm:$0xf] %v1256
  %1321 = vst [vmem:[%s6 + $0x68] sm:$0xf] %v1257
  %1322 = vst [vmem:[%s6 + $0x6c] sm:$0xf] %v1258
  %1323 = vst [vmem:[%s6 + $0x70] sm:$0xf] %v1259
  %1324 = vst [vmem:[%s6 + $0x74] sm:$0xf] %v1260
  %1325 = vst [vmem:[%s6 + $0x78] sm:$0xf] %v1261
  %1326 = vst [vmem:[%s6 + $0x7c] sm:$0xf] %v1262
  %1327 = vst [vmem:[%s6 + $0x80] sm:$0xf] %v1263
  %1328 = vst [vmem:[%s6 + $0x84] sm:$0xf] %v1264
  %1329 = vst [vmem:[%s6 + $0x88] sm:$0xf] %v1265
  %1330 = vst [vmem:[%s6 + $0x8c] sm:$0xf] %v1266
  %1331 = vst [vmem:[%s6 + $0x90] sm:$0xf] %v1267
  %1332 = vst [vmem:[%s6 + $0x94] sm:$0xf] %v1268
  %1333 = vst [vmem:[%s6 + $0x98] sm:$0xf] %v1269
  %1334 = vst [vmem:[%s6 + $0x9c] sm:$0xf] %v1270
  %1335 = vst [vmem:[%s6 + $0xa0] sm:$0xf] %v1271
  %1336 = vst [vmem:[%s6 + $0xa4] sm:$0xf] %v1272
  %1337 = vst [vmem:[%s6 + $0xa8] sm:$0xf] %v1273
  %1338 = vst [vmem:[%s6 + $0xac] sm:$0xf] %v1274
  %1339 = vst [vmem:[%s6 + $0xb0] sm:$0xf] %v1275
  %1340 = vst [vmem:[%s6 + $0xb4] sm:$0xf] %v1276
  %1341 = vst [vmem:[%s6 + $0xb8] sm:$0xf] %v1277
  %1342 = vst [vmem:[%s6 + $0xbc] sm:$0xf] %v1278
  %1343 = vst [vmem:[%s6 + $0xc0] sm:$0xf] %v1279
  %1344 = vst [vmem:[%s6 + $0xc4] sm:$0xf] %v1280
  %1345 = vst [vmem:[%s6 + $0xc8] sm:$0xf] %v1281
  %1346 = vst [vmem:[%s6 + $0xcc] sm:$0xf] %v1282
  %1347 = vst [vmem:[%s6 + $0xd0] sm:$0xf] %v1283
  %1348 = vst [vmem:[%s6 + $0xd4] sm:$0xf] %v1284
  %1349 = vst [vmem:[%s6 + $0xd8] sm:$0xf] %v1285
  %1350 = vst [vmem:[%s6 + $0xdc] sm:$0xf] %v1286
  %1351 = vst [vmem:[%s6 + $0xe0] sm:$0xf] %v1287
  %1352 = vst [vmem:[%s6 + $0xe4] sm:$0xf] %v1288
  %1353 = vst [vmem:[%s6 + $0xe8] sm:$0xf] %v1289
  %1354 = vst [vmem:[%s6 + $0xec] sm:$0xf] %v1290
  %1355 = vst [vmem:[%s6 + $0xf0] sm:$0xf] %v1291
  %1356 = vst [vmem:[%s6 + $0xf4] sm:$0xf] %v1292
  %1357 = vst [vmem:[%s6 + $0xf8] sm:$0xf] %v1293
  %1358 = vst [vmem:[%s6 + $0xfc] sm:$0xf] %v1294
  %v1359 = vadd.f32 %v1072, %v1074
  %v1360 = vadd.f32 %v1359, %v1077
  %v1361 = vadd.f32 %v1360, %v1079
  %v1362 = vadd.f32 %v1361, %v1082
  %v1363 = vadd.f32 %v1362, %v1084
  %v1364 = vadd.f32 %v1363, %v1087
  %v1365 = vadd.f32 %v1364, %v1089
  %v1366 = vadd.f32 %v1365, %v1092
  %v1367 = vadd.f32 %v1366, %v1094
  %v1368 = vadd.f32 %v1367, %v1097
  %v1369 = vadd.f32 %v1368, %v1099
  %v1370 = vadd.f32 %v1369, %v1102
  %v1371 = vadd.f32 %v1370, %v1104
  %v1372 = vadd.f32 %v1371, %v1107
  %v1373 = vadd.f32 %v1372, %v1109
  %v1374 = vadd.f32 %v1373, %v1112
  %v1375 = vadd.f32 %v1374, %v1114
  %v1376 = vadd.f32 %v1375, %v1117
  %v1377 = vadd.f32 %v1376, %v1119
  %v1378 = vadd.f32 %v1377, %v1122
  %v1379 = vadd.f32 %v1378, %v1124
  %v1380 = vadd.f32 %v1379, %v1127
  %v1381 = vadd.f32 %v1380, %v1129
  %v1382 = vadd.f32 %v1381, %v1132
  %v1383 = vadd.f32 %v1382, %v1134
  %v1384 = vadd.f32 %v1383, %v1137
  %v1385 = vadd.f32 %v1384, %v1139
  %v1386 = vadd.f32 %v1385, %v1142
  %v1387 = vadd.f32 %v1386, %v1144
  %v1388 = vadd.f32 %v1387, %v1147
  %v1389 = vadd.f32 %v1388, %v1149
  %v1390 = vadd.f32 %v1389, %v1152
  %v1391 = vadd.f32 %v1390, %v1154
  %v1392 = vadd.f32 %v1391, %v1157
  %v1393 = vadd.f32 %v1392, %v1159
  %v1394 = vadd.f32 %v1393, %v1162
  %v1395 = vadd.f32 %v1394, %v1164
  %v1396 = vadd.f32 %v1395, %v1167
  %v1397 = vadd.f32 %v1396, %v1169
  %v1398 = vadd.f32 %v1397, %v1172
  %v1399 = vadd.f32 %v1398, %v1174
  %v1400 = vadd.f32 %v1399, %v1177
  %v1401 = vadd.f32 %v1400, %v1179
  %v1402 = vadd.f32 %v1401, %v1182
  %v1403 = vadd.f32 %v1402, %v1184
  %v1404 = vadd.f32 %v1403, %v1187
  %v1405 = vadd.f32 %v1404, %v1189
  %v1406 = vadd.f32 %v1405, %v1192
  %v1407 = vadd.f32 %v1406, %v1194
  %v1408 = vadd.f32 %v1407, %v1197
  %v1409 = vadd.f32 %v1408, %v1199
  %v1410 = vadd.f32 %v1409, %v1202
  %v1411 = vadd.f32 %v1410, %v1204
  %v1412 = vadd.f32 %v1411, %v1207
  %v1413 = vadd.f32 %v1412, %v1209
  %v1414 = vadd.f32 %v1413, %v1212
  %v1415 = vadd.f32 %v1414, %v1214
  %v1416 = vadd.f32 %v1415, %v1217
  %v1417 = vadd.f32 %v1416, %v1219
  %v1418 = vadd.f32 %v1417, %v1222
  %v1419 = vadd.f32 %v1418, %v1224
  %v1420 = vadd.f32 %v1419, %v1227
  %v1421 = vadd.f32 %v1420, %v1229
  %v1422 = vrot.slane %v1421, 4
  %v1423 = vadd.f32 %v1421, %v1422
  %v1424 = vrot.slane %v1423, 2
  %v1425 = vadd.f32 %v1423, %v1424
  %v1426 = vrot.slane %v1425, 1
  %v1427 = vadd.f32 %v1425, %v1426
  %v1428 = vmul.f32 %v1072, %v1072
  %v1429 = vmul.f32 %v1074, %v1074
  %v1430 = vmul.f32 %v1077, %v1077
  %v1431 = vmul.f32 %v1079, %v1079
  %v1432 = vmul.f32 %v1082, %v1082
  %v1433 = vmul.f32 %v1084, %v1084
  %v1434 = vmul.f32 %v1087, %v1087
  %v1435 = vmul.f32 %v1089, %v1089
  %v1436 = vmul.f32 %v1092, %v1092
  %v1437 = vmul.f32 %v1094, %v1094
  %v1438 = vmul.f32 %v1097, %v1097
  %v1439 = vmul.f32 %v1099, %v1099
  %v1440 = vmul.f32 %v1102, %v1102
  %v1441 = vmul.f32 %v1104, %v1104
  %v1442 = vmul.f32 %v1107, %v1107
  %v1443 = vmul.f32 %v1109, %v1109
  %v1444 = vmul.f32 %v1112, %v1112
  %v1445 = vmul.f32 %v1114, %v1114
  %v1446 = vmul.f32 %v1117, %v1117
  %v1447 = vmul.f32 %v1119, %v1119
  %v1448 = vmul.f32 %v1122, %v1122
  %v1449 = vmul.f32 %v1124, %v1124
  %v1450 = vmul.f32 %v1127, %v1127
  %v1451 = vmul.f32 %v1129, %v1129
  %v1452 = vmul.f32 %v1132, %v1132
  %v1453 = vmul.f32 %v1134, %v1134
  %v1454 = vmul.f32 %v1137, %v1137
  %v1455 = vmul.f32 %v1139, %v1139
  %v1456 = vmul.f32 %v1142, %v1142
  %v1457 = vmul.f32 %v1144, %v1144
  %v1458 = vmul.f32 %v1147, %v1147
  %v1459 = vmul.f32 %v1149, %v1149
  %v1460 = vmul.f32 %v1152, %v1152
  %v1461 = vmul.f32 %v1154, %v1154
  %v1462 = vmul.f32 %v1157, %v1157
  %v1463 = vmul.f32 %v1159, %v1159
  %v1464 = vmul.f32 %v1162, %v1162
  %v1465 = vmul.f32 %v1164, %v1164
  %v1466 = vmul.f32 %v1167, %v1167
  %v1467 = vmul.f32 %v1169, %v1169
  %v1468 = vmul.f32 %v1172, %v1172
  %v1469 = vmul.f32 %v1174, %v1174
  %v1470 = vmul.f32 %v1177, %v1177
  %v1471 = vmul.f32 %v1179, %v1179
  %v1472 = vmul.f32 %v1182, %v1182
  %v1473 = vmul.f32 %v1184, %v1184
  %v1474 = vmul.f32 %v1187, %v1187
  %v1475 = vmul.f32 %v1189, %v1189
  %v1476 = vmul.f32 %v1192, %v1192
  %v1477 = vmul.f32 %v1194, %v1194
  %v1478 = vmul.f32 %v1197, %v1197
  %v1479 = vmul.f32 %v1199, %v1199
  %v1480 = vmul.f32 %v1202, %v1202
  %v1481 = vmul.f32 %v1204, %v1204
  %v1482 = vmul.f32 %v1207, %v1207
  %v1483 = vmul.f32 %v1209, %v1209
  %v1484 = vmul.f32 %v1212, %v1212
  %v1485 = vmul.f32 %v1214, %v1214
  %v1486 = vmul.f32 %v1217, %v1217
  %v1487 = vmul.f32 %v1219, %v1219
  %v1488 = vmul.f32 %v1222, %v1222
  %v1489 = vmul.f32 %v1224, %v1224
  %v1490 = vmul.f32 %v1227, %v1227
  %v1491 = vmul.f32 %v1229, %v1229
  %v1492 = vadd.f32 %v1428, %v1429
  %v1493 = vadd.f32 %v1492, %v1430
  %v1494 = vadd.f32 %v1493, %v1431
  %v1495 = vadd.f32 %v1494, %v1432
  %v1496 = vadd.f32 %v1495, %v1433
  %v1497 = vadd.f32 %v1496, %v1434
  %v1498 = vadd.f32 %v1497, %v1435
  %v1499 = vadd.f32 %v1498, %v1436
  %v1500 = vadd.f32 %v1499, %v1437
  %v1501 = vadd.f32 %v1500, %v1438
  %v1502 = vadd.f32 %v1501, %v1439
  %v1503 = vadd.f32 %v1502, %v1440
  %v1504 = vadd.f32 %v1503, %v1441
  %v1505 = vadd.f32 %v1504, %v1442
  %v1506 = vadd.f32 %v1505, %v1443
  %v1507 = vadd.f32 %v1506, %v1444
  %v1508 = vadd.f32 %v1507, %v1445
  %v1509 = vadd.f32 %v1508, %v1446
  %v1510 = vadd.f32 %v1509, %v1447
  %v1511 = vadd.f32 %v1510, %v1448
  %v1512 = vadd.f32 %v1511, %v1449
  %v1513 = vadd.f32 %v1512, %v1450
  %v1514 = vadd.f32 %v1513, %v1451
  %v1515 = vadd.f32 %v1514, %v1452
  %v1516 = vadd.f32 %v1515, %v1453
  %v1517 = vadd.f32 %v1516, %v1454
  %v1518 = vadd.f32 %v1517, %v1455
  %v1519 = vadd.f32 %v1518, %v1456
  %v1520 = vadd.f32 %v1519, %v1457
  %v1521 = vadd.f32 %v1520, %v1458
  %v1522 = vadd.f32 %v1521, %v1459
  %v1523 = vadd.f32 %v1522, %v1460
  %v1524 = vadd.f32 %v1523, %v1461
  %v1525 = vadd.f32 %v1524, %v1462
  %v1526 = vadd.f32 %v1525, %v1463
  %v1527 = vadd.f32 %v1526, %v1464
  %v1528 = vadd.f32 %v1527, %v1465
  %v1529 = vadd.f32 %v1528, %v1466
  %v1530 = vadd.f32 %v1529, %v1467
  %v1531 = vadd.f32 %v1530, %v1468
  %v1532 = vadd.f32 %v1531, %v1469
  %v1533 = vadd.f32 %v1532, %v1470
  %v1534 = vadd.f32 %v1533, %v1471
  %v1535 = vadd.f32 %v1534, %v1472
  %v1536 = vadd.f32 %v1535, %v1473
  %v1537 = vadd.f32 %v1536, %v1474
  %v1538 = vadd.f32 %v1537, %v1475
  %v1539 = vadd.f32 %v1538, %v1476
  %v1540 = vadd.f32 %v1539, %v1477
  %v1541 = vadd.f32 %v1540, %v1478
  %v1542 = vadd.f32 %v1541, %v1479
  %v1543 = vadd.f32 %v1542, %v1480
  %v1544 = vadd.f32 %v1543, %v1481
  %v1545 = vadd.f32 %v1544, %v1482
  %v1546 = vadd.f32 %v1545, %v1483
  %v1547 = vadd.f32 %v1546, %v1484
  %v1548 = vadd.f32 %v1547, %v1485
  %v1549 = vadd.f32 %v1548, %v1486
  %v1550 = vadd.f32 %v1549, %v1487
  %v1551 = vadd.f32 %v1550, %v1488
  %v1552 = vadd.f32 %v1551, %v1489
  %v1553 = vadd.f32 %v1552, %v1490
  %v1554 = vadd.f32 %v1553, %v1491
  %v1555 = vrot.slane %v1554, 4
  %v1556 = vadd.f32 %v1554, %v1555
  %v1557 = vrot.slane %v1556, 2
  %v1558 = vadd.f32 %v1556, %v1557
  %v1559 = vrot.slane %v1558, 1
  %v1560 = vadd.f32 %v1558, %v1559
  %vm1561 = vcmask 1040384
  %v1562 = vsel %vm1561, %v1427, %v1560
  %1563 = vst [vmem:[%s7] sm:$0x3] %v1562
  // Predicated region
  $region26: #{residual_block_forward.7} parent=0 // pred_check
    _
  $region27: #{residual_block_forward.7} parent=0 // pred_check_branch
    %1565 = sbr.rel (0) target = $region29
  $region28: #{residual_block_forward.7} parent=0 // pred_region
    _
  $region29: #{residual_block_forward.7} parent=0 // pred_fallthru
    _
  // Predicated region
  $region30: #{residual_block_forward.7} parent=0 // pred_check
    _
  $region31: #{residual_block_forward.7} parent=0 // pred_check_branch
    %1567 = sbr.rel (0) target = $region33
  $region32: #{residual_block_forward.7} parent=0 // pred_region
    _
  $region33: #{residual_block_forward.7} parent=0 // pred_fallthru
    _
  // Predicated region
  $region34: #{residual_block_forward.7} parent=0 // pred_check
    _
  $region35: #{residual_block_forward.7} parent=0 // pred_check_branch
    %1569 = sbr.rel (0) target = $region37
  $region36: #{residual_block_forward.7} parent=0 // pred_region
    _
  $region37: #{residual_block_forward.7} parent=0 // pred_fallthru
    _
  // Predicated region
  $region38: #{residual_block_forward.7} parent=0 // pred_check
    _
  $region39: #{residual_block_forward.7} parent=0 // pred_check_branch
    %1571 = sbr.rel (0) target = $region41
  $region40: #{residual_block_forward.7} parent=0 // pred_region
    _
  $region41: #{residual_block_forward.7} parent=0 // pred_fallthru
    _
  // Predicated region
  $region42: #{residual_block_forward.7} parent=0 // pred_check
    _
  $region43: #{residual_block_forward.7} parent=0 // pred_check_branch
    %1573 = sbr.rel (0) target = $region45
  $region44: #{residual_block_forward.7} parent=0 // pred_region
    _
  $region45: #{residual_block_forward.7} parent=0 // pred_fallthru
    _
  // Predicated region
  $region46: #{residual_block_forward.7} parent=0 // pred_check
    _
  $region47: #{residual_block_forward.7} parent=0 // pred_check_branch
    %1575 = sbr.rel (0) target = $region49
  $region48: #{residual_block_forward.7} parent=0 // pred_region
    _
  $region49: #{residual_block_forward.7} parent=0 // pred_fallthru
    _

// kernel: residual_block_forward.6
$region0: #{residual_block_forward.6}
  #allocation0 [shape = 'u32[]', space=smem, size = 0x4, offset = 0x4, fixed_abs, tag = 'smem constant byte address 0x4 - core index']
  #allocation1 [shape = 'u32[72,128]{1,0:T(1,128)}', space=vmem, size = 0x9000, scoped, tag = 'internal scratch']
  #allocation2 [shape = 'bf16[188,128]{1,0:T(8,128)(2,1)}', space=vmem, size = 0xc000, scoped, tag = 'scratch operand']
  %s0 = inlined_call_operand.vmem [shape: bf16[2,16,16,128], index: 0, kind: input, shape index: {}, may-alias: {0,1,2}]
  %s1 = inlined_call_operand.vmem [shape: bf16[2,16,16,128], index: 1, kind: input, shape index: {}, may-alias: {0,1,2}]
  %s2 = inlined_call_operand.vmem [shape: bf16[2,16,16,128], index: 2, kind: input, shape index: {}, may-alias: {0,1,2}]
  %s3 = inlined_call_operand.vmem [shape: f32[1,128], index: 3, kind: input, shape index: {}]
  %s4 = inlined_call_operand.vmem [shape: f32[1,128], index: 4, kind: input, shape index: {}]
  %s5 = inlined_call_operand.vmem [shape: bf16[9,128,128], index: 5, kind: input, shape index: {}]
  %s6 = inlined_call_operand.vmem [shape: f32[1,128], index: 6, kind: input, shape index: {}]
  %s7 = inlined_call_operand.vmem [shape: bf16[2,16,16,128], index: 7, kind: output, shape index: {0}]
  %s8 = inlined_call_operand.vmem [shape: f32[4,2,128], index: 8, kind: output, shape index: {1}]
  %9 = xla_tuple %s7, %s8
  %s10 = sld [smem:[#allocation0]]
  $region69: #{residual_block_forward.6} parent=0
    _
  %s12 = ssub.s32 1, %s10
  %s13 = scalar_select 0, %s12, %s10
  loop: start=0, step=1, limit=6
  $region2: #{residual_block_forward.6} parent=0 // loop_pre_header
    _
  $region3: #{residual_block_forward.6} parent=0 // loop_header
    %s15 = sphi 0, %s19
    %p16 = scmp.ge.s32.totalorder %s15, 6
    %s22 = sphi 0, %s34
    %s23 = sphi 0, %s30
    %s24 = sphi 0, %s22
    %s25 = sphi 0, %s23
    %s26 = sphi 0, %s24
    %s27 = sphi 0, %s25
    %s39 = sphi 0, %s41
    %s42 = sphi 0, %s39
    %s43 = sphi 0, %s42
    %s59 = sphi 0, %s43
    %s75 = sphi 0, %s77
    %s78 = sphi 0, %s75
    %s79 = sphi 0, %s78
    %s95 = sphi 0, %s79
    %s111 = sphi 0, %s113
    %s114 = sphi 0, %s111
    %s115 = sphi 0, %s114
    %s131 = sphi 0, %s115
    %s135 = sphi 0, %s135
    %s137 = sphi 0, %s135
    %s138 = sphi 0, %s137
    %s152 = sphi 0, %s138
    %s156 = sphi 0, %s156
    %s158 = sphi 0, %s156
    %s159 = sphi 0, %s158
    %s173 = sphi 0, %s159
    %s177 = sphi 0, %s177
    %s179 = sphi 0, %s177
    %s180 = sphi 0, %s179
    %s194 = sphi 0, %s180
    %s198 = sphi 0, %s198
    %s200 = sphi 0, %s198
    %s201 = sphi 0, %s200
    %s215 = sphi 0, %s201
    %s223 = sphi 0, %s225
    %s226 = sphi 0, %s223
    %s227 = sphi 0, %s226
    %s243 = sphi 0, %s227
    %s253 = sphi 0, %s255
    %s256 = sphi 0, %s253
    %s257 = sphi 0, %s256
    %s273 = sphi 0, %s257
  $region4: #{residual_block_forward.6} parent=0 // loop_header_branch
    %18 = sbr.rel (%p16) target = $region8
  $region5: #{residual_block_forward.6} parent=0 // loop_body
    %s20 = ssub.s32 %s15, 1
    %s21 = ssub.s32 %s15, 2
    %s28 = sadd.s32 1, %s23
    %p29 = scmp.ge.s32.totalorder %s28, 2
    %s30 = scalar_select %p29, 0, %s28
    %s31 = sadd.s32 1, %s22
    %s32 = scalar_select %p29, %s31, %s22
    %p33 = scmp.ge.s32.totalorder %s32, 2
    %s34 = scalar_select %p33, 0, %s32
    %s35 = ssub.s32 %s22, %s34
    %s36 = ssub.s32 %s23, %s30
    %s37 = sor.u32 %s35, %s36
    %p38 = scmp.eq.s32.totalorder %s37, 0
    %s40 = sadd.s32 %s39, 1
    %s41 = scalar_select %p38, %s39, %s40
    %p44 = pneg %p38
    %p45 = scmp.eq.s32.totalorder %s15, 3
    %p46 = por %p44, %p45
    %p47 = scmp.ne.s32.totalorder %s39, %s42
    %p48 = scmp.eq.s32.totalorder %s15, 0
    %p49 = por %p47, %p48
    %p50 = scmp.ne.s32.totalorder %s39, %s42
    %p51 = scmp.eq.s32.totalorder %s20, 3
    %p52 = por %p50, %p51
    %p53 = scmp.ne.s32.totalorder %s42, %s43
    %p54 = scmp.eq.s32.totalorder %s20, 0
    %p55 = por %p53, %p54
    %p56 = scmp.ne.s32.totalorder %s42, %s43
    %p57 = scmp.eq.s32.totalorder %s21, 3
    %p58 = por %p56, %p57
    %p60 = scmp.ne.s32.totalorder %s43, %s59
    %p61 = scmp.eq.s32.totalorder %s21, 0
    %p62 = por %p60, %p61
    %s63 = smul.u32 %s23, 8
    %s64 = ssub.s32 %s63, 1
    %p65 = scmp.gt.s32.totalorder %s64, 0
    %s66 = scalar_select %p65, %s64, 0
    %s67 = smul.u32 %s30, 8
    %s68 = ssub.s32 %s67, 1
    %p69 = scmp.gt.s32.totalorder %s68, 0
    %s70 = scalar_select %p69, %s68, 0
    %s71 = ssub.s32 %s22, %s34
    %s72 = ssub.s32 %s66, %s70
    %s73 = sor.u32 %s71, %s72
    %p74 = scmp.eq.s32.totalorder %s73, 0
    %s76 = sadd.s32 %s75, 1
    %s77 = scalar_select %p74, %s75, %s76
    %p80 = pneg %p74
    %p81 = scmp.eq.s32.totalorder %s15, 3
    %p82 = por %p80, %p81
    %p83 = scmp.ne.s32.totalorder %s75, %s78
    %p84 = scmp.eq.s32.totalorder %s15, 0
    %p85 = por %p83, %p84
    %p86 = scmp.ne.s32.totalorder %s75, %s78
    %p87 = scmp.eq.s32.totalorder %s20, 3
    %p88 = por %p86, %p87
    %p89 = scmp.ne.s32.totalorder %s78, %s79
    %p90 = scmp.eq.s32.totalorder %s20, 0
    %p91 = por %p89, %p90
    %p92 = scmp.ne.s32.totalorder %s78, %s79
    %p93 = scmp.eq.s32.totalorder %s21, 3
    %p94 = por %p92, %p93
    %p96 = scmp.ne.s32.totalorder %s79, %s95
    %p97 = scmp.eq.s32.totalorder %s21, 0
    %p98 = por %p96, %p97
    %s99 = smul.u32 %s23, 8
    %s100 = sadd.s32 %s99, 8
    %p101 = scmp.lt.s32.totalorder %s100, 15
    %s102 = scalar_select %p101, %s100, 15
    %s103 = smul.u32 %s30, 8
    %s104 = sadd.s32 %s103, 8
    %p105 = scmp.lt.s32.totalorder %s104, 15
    %s106 = scalar_select %p105, %s104, 15
    %s107 = ssub.s32 %s22, %s34
    %s108 = ssub.s32 %s102, %s106
    %s109 = sor.u32 %s107, %s108
    %p110 = scmp.eq.s32.totalorder %s109, 0
    %s112 = sadd.s32 %s111, 1
    %s113 = scalar_select %p110, %s111, %s112
    %p116 = pneg %p110
    %p117 = scmp.eq.s32.totalorder %s15, 3
    %p118 = por %p116, %p117
    %p119 = scmp.ne.s32.totalorder %s111, %s114
    %p120 = scmp.eq.s32.totalorder %s15, 0
    %p121 = por %p119, %p120
    %p122 = scmp.ne.s32.totalorder %s111, %s114
    %p123 = scmp.eq.s32.totalorder %s20, 3
    %p124 = por %p122, %p123
    %p125 = scmp.ne.s32.totalorder %s114, %s115
    %p126 = scmp.eq.s32.totalorder %s20, 0
    %p127 = por %p125, %p126
    %p128 = scmp.ne.s32.totalorder %s114, %s115
    %p129 = scmp.eq.s32.totalorder %s21, 3
    %p130 = por %p128, %p129
    %p132 = scmp.ne.s32.totalorder %s115, %s131
    %p133 = scmp.eq.s32.totalorder %s21, 0
    %p134 = por %p132, %p133
    %s136 = sadd.s32 %s135, 1
    %p139 = scmp.eq.s32.totalorder %s15, 3
    %p140 = scmp.ne.s32.totalorder %s135, %s137
    %p141 = scmp.eq.s32.totalorder %s15, 0
    %p142 = por %p140, %p141
    %p143 = scmp.ne.s32.totalorder %s135, %s137
    %p144 = scmp.eq.s32.totalorder %s20, 3
    %p145 = por %p143, %p144
    %p146 = scmp.ne.s32.totalorder %s137, %s138
    %p147 = scmp.eq.s32.totalorder %s20, 0
    %p148 = por %p146, %p147
    %p149 = scmp.ne.s32.totalorder %s137, %s138
    %p150 = scmp.eq.s32.totalorder %s21, 3
    %p151 = por %p149, %p150
    %p153 = scmp.ne.s32.totalorder %s138, %s152
    %p154 = scmp.eq.s32.totalorder %s21, 0
    %p155 = por %p153, %p154
    %s157 = sadd.s32 %s156, 1
    %p160 = scmp.eq.s32.totalorder %s15, 3
    %p161 = scmp.ne.s32.totalorder %s156, %s158
    %p162 = scmp.eq.s32.totalorder %s15, 0
    %p163 = por %p161, %p162
    %p164 = scmp.ne.s32.totalorder %s156, %s158
    %p165 = scmp.eq.s32.totalorder %s20, 3
    %p166 = por %p164, %p165
    %p167 = scmp.ne.s32.totalorder %s158, %s159
    %p168 = scmp.eq.s32.totalorder %s20, 0
    %p169 = por %p167, %p168
    %p170 = scmp.ne.s32.totalorder %s158, %s159
    %p171 = scmp.eq.s32.totalorder %s21, 3
    %p172 = por %p170, %p171
    %p174 = scmp.ne.s32.totalorder %s159, %s173
    %p175 = scmp.eq.s32.totalorder %s21, 0
    %p176 = por %p174, %p175
    %s178 = sadd.s32 %s177, 1
    %p181 = scmp.eq.s32.totalorder %s15, 3
    %p182 = scmp.ne.s32.totalorder %s177, %s179
    %p183 = scmp.eq.s32.totalorder %s15, 0
    %p184 = por %p182, %p183
    %p185 = scmp.ne.s32.totalorder %s177, %s179
    %p186 = scmp.eq.s32.totalorder %s20, 3
    %p187 = por %p185, %p186
    %p188 = scmp.ne.s32.totalorder %s179, %s180
    %p189 = scmp.eq.s32.totalorder %s20, 0
    %p190 = por %p188, %p189
    %p191 = scmp.ne.s32.totalorder %s179, %s180
    %p192 = scmp.eq.s32.totalorder %s21, 3
    %p193 = por %p191, %p192
    %p195 = scmp.ne.s32.totalorder %s180, %s194
    %p196 = scmp.eq.s32.totalorder %s21, 0
    %p197 = por %p195, %p196
    %s199 = sadd.s32 %s198, 1
    %p202 = scmp.eq.s32.totalorder %s15, 3
    %p203 = scmp.ne.s32.totalorder %s198, %s200
    %p204 = scmp.eq.s32.totalorder %s15, 0
    %p205 = por %p203, %p204
    %p206 = scmp.ne.s32.totalorder %s198, %s200
    %p207 = scmp.eq.s32.totalorder %s20, 3
    %p208 = por %p206, %p207
    %p209 = scmp.ne.s32.totalorder %s200, %s201
    %p210 = scmp.eq.s32.totalorder %s20, 0
    %p211 = por %p209, %p210
    %p212 = scmp.ne.s32.totalorder %s200, %s201
    %p213 = scmp.eq.s32.totalorder %s21, 3
    %p214 = por %p212, %p213
    %p216 = scmp.ne.s32.totalorder %s201, %s215
    %p217 = scmp.eq.s32.totalorder %s21, 0
    %p218 = por %p216, %p217
    %s219 = ssub.s32 %s22, %s34
    %s220 = ssub.s32 %s23, %s30
    %s221 = sor.u32 %s219, %s220
    %p222 = scmp.eq.s32.totalorder %s221, 0
    %s224 = sadd.s32 %s223, 1
    %s225 = scalar_select %p222, %s223, %s224
    %p228 = pneg %p222
    %p229 = scmp.eq.s32.totalorder %s15, 3
    %p230 = por %p228, %p229
    %p231 = scmp.ne.s32.totalorder %s223, %s226
    %p232 = scmp.eq.s32.totalorder %s15, 0
    %p233 = por %p231, %p232
    %p234 = scmp.ne.s32.totalorder %s223, %s226
    %p235 = scmp.eq.s32.totalorder %s20, 3
    %p236 = por %p234, %p235
    %p237 = scmp.ne.s32.totalorder %s226, %s227
    %p238 = scmp.eq.s32.totalorder %s20, 0
    %p239 = por %p237, %p238
    %p240 = scmp.ne.s32.totalorder %s226, %s227
    %p241 = scmp.eq.s32.totalorder %s21, 3
    %p242 = por %p240, %p241
    %p244 = scmp.ne.s32.totalorder %s227, %s243
    %p245 = scmp.eq.s32.totalorder %s21, 0
    %p246 = por %p244, %p245
    %s247 = smul.u32 %s22, 2
    %s248 = sadd.s32 %s247, %s23
    %s249 = smul.u32 %s34, 2
    %s250 = sadd.s32 %s249, %s30
    %s251 = ssub.s32 %s248, %s250
    %p252 = scmp.eq.s32.totalorder %s251, 0
    %s254 = sadd.s32 %s253, 1
    %s255 = scalar_select %p252, %s253, %s254
    %p258 = pneg %p252
    %p259 = scmp.eq.s32.totalorder %s15, 3
    %p260 = por %p258, %p259
    %p261 = scmp.ne.s32.totalorder %s253, %s256
    %p262 = scmp.eq.s32.totalorder %s15, 0
    %p263 = por %p261, %p262
    %p264 = scmp.ne.s32.totalorder %s253, %s256
    %p265 = scmp.eq.s32.totalorder %s20, 3
    %p266 = por %p264, %p265
    %p267 = scmp.ne.s32.totalorder %s256, %s257
    %p268 = scmp.eq.s32.totalorder %s20, 0
    %p269 = por %p267, %p268
    %p270 = scmp.ne.s32.totalorder %s256, %s257
    %p271 = scmp.eq.s32.totalorder %s21, 3
    %p272 = por %p270, %p271
    %p274 = scmp.ne.s32.totalorder %s257, %s273
    %p275 = scmp.eq.s32.totalorder %s21, 0
    %p276 = por %p274, %p275
    %p277 = scmp.le.s32.totalorder 1, %s15
    %p278 = scmp.lt.s32.totalorder %s15, 5
    %p279 = pnand %p277, %p278
    %p280 = pneg %p279
    // Predicated region
    $region9: #{residual_block_forward.6} parent=5 // pred_check
      _
    $region10: #{residual_block_forward.6} parent=5 // pred_check_branch
      %282 = sbr.rel (%p279) target = $region12
    $region11: #{residual_block_forward.6} parent=5 // pred_region
      %s283 = ssub.s32 %s15, 1
      // Predicated region
      $region13: #{residual_block_forward.6} parent=11 // pred_check
        %p284 = pneg %p148
      $region14: #{residual_block_forward.6} parent=11 // pred_check_branch
        %286 = sbr.rel (%p284) target = $region16
      $region15: #{residual_block_forward.6} parent=11 // pred_region
        _
      $region16: #{residual_block_forward.6} parent=11 // pred_fallthru
        _
      // Predicated region
      $region17: #{residual_block_forward.6} parent=11 // pred_check
        %p287 = pneg %p169
      $region18: #{residual_block_forward.6} parent=11 // pred_check_branch
        %289 = sbr.rel (%p287) target = $region20
      $region19: #{residual_block_forward.6} parent=11 // pred_region
        _
      $region20: #{residual_block_forward.6} parent=11 // pred_fallthru
        _
      // Predicated region
      $region21: #{residual_block_forward.6} parent=11 // pred_check
        %p290 = pneg %p190
      $region22: #{residual_block_forward.6} parent=11 // pred_check_branch
        %292 = sbr.rel (%p290) target = $region24
      $region23: #{residual_block_forward.6} parent=11 // pred_region
        _
      $region24: #{residual_block_forward.6} parent=11 // pred_fallthru
        _
      // Predicated region
      $region25: #{residual_block_forward.6} parent=11 // pred_check
        %p293 = pneg %p211
      $region26: #{residual_block_forward.6} parent=11 // pred_check_branch
        %295 = sbr.rel (%p293) target = $region28
      $region27: #{residual_block_forward.6} parent=11 // pred_region
        _
      $region28: #{residual_block_forward.6} parent=11 // pred_fallthru
        _
    $region12: #{residual_block_forward.6} parent=5 // pred_fallthru
      _
    %p296 = scmp.lt.s32.totalorder %s15, 4
    // Predicated region
    $region29: #{residual_block_forward.6} parent=5 // pred_check
      %p297 = pneg %p296
    $region30: #{residual_block_forward.6} parent=5 // pred_check_branch
      %299 = sbr.rel (%p297) target = $region32
    $region31: #{residual_block_forward.6} parent=5 // pred_region
      // Predicated region
      $region33: #{residual_block_forward.6} parent=31 // pred_check
        %p300 = pneg %p49
      $region34: #{residual_block_forward.6} parent=31 // pred_check_branch
        %302 = sbr.rel (%p300) target = $region36
      $region35: #{residual_block_forward.6} parent=31 // pred_region
        %s303 = smul.u32 8, %s23
        %p304 = scmp.lt.s32.totalorder %s22, 1
        %s305 = scalar_select %p304, %s22, 1
        %p306 = scmp.lt.s32.totalorder %s303, 15
        %s307 = scalar_select %p306, %s303, 15
        %s308 = smul.addr %s307, 2
        %s309 = smul.addr %s305, 32
        %s310 = sadd.s32 %s308, %s309
        %s311 = smul.addr %s310, 4
        %s312 = scalar_lea.vmem %s0, %s311
        %s313 = smul.u32 8, %s23
      $region36: #{residual_block_forward.6} parent=31 // pred_fallthru
        _
      // Predicated region
      $region37: #{residual_block_forward.6} parent=31 // pred_check
        %p314 = pneg %p85
      $region38: #{residual_block_forward.6} parent=31 // pred_check_branch
        %316 = sbr.rel (%p314) target = $region40
      $region39: #{residual_block_forward.6} parent=31 // pred_region
        %s317 = smul.u32 %s23, 8
        %s318 = ssub.s32 %s317, 1
        %p319 = scmp.gt.s32.totalorder %s318, 0
        %s320 = scalar_select %p319, %s318, 0
        %p321 = scmp.lt.s32.totalorder %s22, 1
        %s322 = scalar_select %p321, %s22, 1
        %p323 = scmp.lt.s32.totalorder %s320, 15
        %s324 = scalar_select %p323, %s320, 15
        %s325 = smul.addr %s324, 2
        %s326 = smul.addr %s322, 32
        %s327 = sadd.s32 %s325, %s326
        %s328 = smul.addr %s327, 4
        %s329 = scalar_lea.vmem %s1, %s328
        %s330 = smul.u32 %s23, 8
        %s331 = ssub.s32 %s330, 1
        %p332 = scmp.gt.s32.totalorder %s331, 0
        %s333 = scalar_select %p332, %s331, 0
      $region40: #{residual_block_forward.6} parent=31 // pred_fallthru
        _
      // Predicated region
      $region41: #{residual_block_forward.6} parent=31 // pred_check
        %p334 = pneg %p121
      $region42: #{residual_block_forward.6} parent=31 // pred_check_branch
        %336 = sbr.rel (%p334) target = $region44
      $region43: #{residual_block_forward.6} parent=31 // pred_region
        %s337 = smul.u32 %s23, 8
        %s338 = sadd.s32 %s337, 8
        %p339 = scmp.lt.s32.totalorder %s338, 15
        %s340 = scalar_select %p339, %s338, 15
        %p341 = scmp.lt.s32.totalorder %s22, 1
        %s342 = scalar_select %p341, %s22, 1
        %p343 = scmp.lt.s32.totalorder %s340, 15
        %s344 = scalar_select %p343, %s340, 15
        %s345 = smul.addr %s344, 2
        %s346 = smul.addr %s342, 32
        %s347 = sadd.s32 %s345, %s346
        %s348 = smul.addr %s347, 4
        %s349 = scalar_lea.vmem %s2, %s348
        %s350 = smul.u32 %s23, 8
        %s351 = sadd.s32 %s350, 8
        %p352 = scmp.lt.s32.totalorder %s351, 15
        %s353 = scalar_select %p352, %s351, 15
      $region44: #{residual_block_forward.6} parent=31 // pred_fallthru
        _
    $region32: #{residual_block_forward.6} parent=5 // pred_fallthru
      _
    %p354 = scmp.le.s32.totalorder 1, %s15
    %p355 = scmp.lt.s32.totalorder %s15, 5
    %p356 = pnand %p354, %p355
    %p357 = pneg %p356
    // Predicated region
    $region45: #{residual_block_forward.6} parent=5 // pred_check
      _
    $region46: #{residual_block_forward.6} parent=5 // pred_check_branch
      %359 = sbr.rel (%p356) target = $region48
    $region47: #{residual_block_forward.6} parent=5 // pred_region
      %s360 = ssub.s32 %s15, 1
      %s361 = smul.u32 8, %s25
      %p362 = scmp.lt.s32.totalorder %s24, 1
      %s363 = scalar_select %p362, %s24, 1
      %p364 = scmp.lt.s32.totalorder %s361, 15
      %s365 = scalar_select %p364, %s361, 15
      %s366 = smul.addr %s365, 2
      %s367 = smul.addr %s363, 32
      %s368 = sadd.s32 %s366, %s367
      %s369 = smul.addr %s368, 4
      %s370 = scalar_lea.vmem %s0, %s369
      %p371 = pneg %p55
      %p372 = pneg %p52
      %s373 = smul.u32 %s25, 8
      %s374 = ssub.s32 %s373, 1
      %p375 = scmp.gt.s32.totalorder %s374, 0
      %s376 = scalar_select %p375, %s374, 0
      %p377 = scmp.lt.s32.totalorder %s24, 1
      %s378 = scalar_select %p377, %s24, 1
      %p379 = scmp.lt.s32.totalorder %s376, 15
      %s380 = scalar_select %p379, %s376, 15
      %s381 = smul.addr %s380, 2
      %s382 = smul.addr %s378, 32
      %s383 = sadd.s32 %s381, %s382
      %s384 = smul.addr %s383, 4
      %s385 = scalar_lea.vmem %s1, %s384
      %p386 = pneg %p91
      %p387 = pneg %p88
      %s388 = smul.u32 %s25, 8
      %s389 = sadd.s32 %s388, 8
      %p390 = scmp.lt.s32.totalorder %s389, 15
      %s391 = scalar_select %p390, %s389, 15
      %p392 = scmp.lt.s32.totalorder %s24, 1
      %s393 = scalar_select %p392, %s24, 1
      %p394 = scmp.lt.s32.totalorder %s391, 15
      %s395 = scalar_select %p394, %s391, 15
      %s396 = smul.addr %s395, 2
      %s397 = smul.addr %s393, 32
      %s398 = sadd.s32 %s396, %s397
      %s399 = smul.addr %s398, 4
      %s400 = scalar_lea.vmem %s2, %s399
      %p401 = pneg %p127
      %p402 = pneg %p124
      %p403 = pneg %p148
      %p404 = pneg %p145
      %p405 = pneg %p169
      %p406 = pneg %p166
      %p407 = pneg %p190
      %p408 = pneg %p187
      %p409 = pneg %p211
      %p410 = pneg %p208
      %p411 = pneg %p239
      %p412 = pneg %p236
      %s413 = smul.u32 8, %s25
      %p414 = scmp.lt.s32.totalorder %s24, 1
      %s415 = scalar_select %p414, %s24, 1
      %p416 = scmp.lt.s32.totalorder %s413, 15
      %s417 = scalar_select %p416, %s413, 15
      %s418 = smul.addr %s417, 2
      %s419 = smul.addr %s415, 32
      %s420 = sadd.s32 %s418, %s419
      %s421 = smul.addr %s420, 4
      %s422 = scalar_lea.vmem %s7, %s421
      %p423 = pneg %p269
      %p424 = pneg %p266
      %s425 = smul.u32 %s24, 2
      %s426 = sadd.s32 %s425, %s25
      %p427 = scmp.lt.s32.totalorder %s426, 3
      %s428 = scalar_select %p427, %s426, 3
      %s429 = smul.addr %s428, 2
      %s430 = scalar_lea.vmem %s8, %s429
      %s431 = smul.u32 8, %s25
      %p432 = scmp.lt.s32.totalorder %s24, 1
      %s433 = scalar_select %p432, %s24, 1
      %p434 = scmp.lt.s32.totalorder %s431, 15
      %s435 = scalar_select %p434, %s431, 15
      %s436 = smul.addr %s435, 2
      %s437 = smul.addr %s433, 32
      %s438 = sadd.s32 %s436, %s437
      %s439 = smul.addr %s438, 4
      %s440 = scalar_lea.vmem %s0, %s439
      %s441 = smul.u32 8, %s25
      %s442 = smul.u32 %s25, 8
      %s443 = ssub.s32 %s442, 1
      %p444 = scmp.gt.s32.totalorder %s443, 0
      %s445 = scalar_select %p444, %s443, 0
      %p446 = scmp.lt.s32.totalorder %s24, 1
      %s447 = scalar_select %p446, %s24, 1
      %p448 = scmp.lt.s32.totalorder %s445, 15
      %s449 = scalar_select %p448, %s445, 15
      %s450 = smul.addr %s449, 2
      %s451 = smul.addr %s447, 32
      %s452 = sadd.s32 %s450, %s451
      %s453 = smul.addr %s452, 4
      %s454 = scalar_lea.vmem %s1, %s453
      %s455 = smul.u32 %s25, 8
      %s456 = ssub.s32 %s455, 1
      %p457 = scmp.gt.s32.totalorder %s456, 0
      %s458 = scalar_select %p457, %s456, 0
      %s459 = smul.u32 %s25, 8
      %s460 = sadd.s32 %s459, 8
      %p461 = scmp.lt.s32.totalorder %s460, 15
      %s462 = scalar_select %p461, %s460, 15
      %p463 = scmp.lt.s32.totalorder %s24, 1
      %s464 = scalar_select %p463, %s24, 1
      %p465 = scmp.lt.s32.totalorder %s462, 15
      %s466 = scalar_select %p465, %s462, 15
      %s467 = smul.addr %s466, 2
      %s468 = smul.addr %s464, 32
      %s469 = sadd.s32 %s467, %s468
      %s470 = smul.addr %s469, 4
      %s471 = scalar_lea.vmem %s2, %s470
      %s472 = smul.u32 %s25, 8
      %s473 = sadd.s32 %s472, 8
      %p474 = scmp.lt.s32.totalorder %s473, 15
      %s475 = scalar_select %p474, %s473, 15
      %s476 = smul.u32 8, %s25
      %p477 = scmp.lt.s32.totalorder %s24, 1
      %s478 = scalar_select %p477, %s24, 1
      %p479 = scmp.lt.s32.totalorder %s476, 15
      %s480 = scalar_select %p479, %s476, 15
      %s481 = smul.addr %s480, 2
      %s482 = smul.addr %s478, 32
      %s483 = sadd.s32 %s481, %s482
      %s484 = smul.addr %s483, 4
      %s485 = scalar_lea.vmem %s7, %s484
      %s486 = smul.u32 8, %s25
      %s487 = smul.u32 %s24, 2
      %s488 = sadd.s32 %s487, %s25
      %p489 = scmp.lt.s32.totalorder %s488, 3
      %s490 = scalar_select %p489, %s488, 3
      %s491 = smul.addr %s490, 2
      %s492 = scalar_lea.vmem %s8, %s491
      %s493 = smul.u32 %s24, 2
      %s494 = sadd.s32 %s493, %s25
      %v496 = vld [vmem:[%s3] sm:$0x1]
      %v497 = vld [vmem:[%s4] sm:$0x1]
      %v498 = vld [vmem:[%s454] sm:$0xf]
      %v499 = vld [vmem:[%s454 + $0x4] sm:$0xf]
      %v500 = vunpack.c.l.bf16 %v498
      %v501 = vunpack.c.l.bf16 %v499
      %v503 = vperm.slane %v496, 0
      %v505 = vmul.f32 %v500, %v503
      %v506 = vmul.f32 %v501, %v503
      %v508 = vperm.slane %v497, 0
      %v510 = vadd.f32 %v505, %v508
      %v511 = vadd.f32 %v506, %v508
      %vm512 = vcmp.gt.f32.partialorder %v510, 0.0
      %vm513 = vcmp.gt.f32.partialorder %v511, 0.0
      %v514 = vmul.f32 %v510, 0.1
      %v515 = vmul.f32 %v511, 0.1
      %v516 = vsel %vm512, %v510, %v514
      %v517 = vsel %vm513, %v511, %v515
      %p518 = scmp.gt.s32.totalorder %s25, 0
      %s519 = scalar_select %p518, 1, 0
      %s520 = scvt.s32.f32 %s519
      %v521 = vstv %s520
      %v522 = vmul.f32 %v516, %v521
      %v523 = vmul.f32 %v517, %v521
      %v524 = vpack.c.bf16 %v522, %v522
      %v525 = vpack.c.bf16 %v523, %v523
      %v526 = vld [vmem:[%s440] sm:$0xf]
      %v527 = vld [vmem:[%s440 + $0x4] sm:$0xf]
      %v528 = vld [vmem:[%s440 + $0x8] sm:$0xf]
      %v529 = vld [vmem:[%s440 + $0xc] sm:$0xf]
      %v530 = vld [vmem:[%s440 + $0x10] sm:$0xf]
      %v531 = vld [vmem:[%s440 + $0x14] sm:$0xf]
      %v532 = vld [vmem:[%s440 + $0x18] sm:$0xf]
      %v533 = vld [vmem:[%s440 + $0x1c] sm:$0xf]
      %v534 = vld [vmem:[%s440 + $0x20] sm:$0xf]
      %v535 = vld [vmem:[%s440 + $0x24] sm:$0xf]
      %v536 = vld [vmem:[%s440 + $0x28] sm:$0xf]
      %v537 = vld [vmem:[%s440 + $0x2c] sm:$0xf]
      %v538 = vld [vmem:[%s440 + $0x30] sm:$0xf]
      %v539 = vld [vmem:[%s440 + $0x34] sm:$0xf]
      %v540 = vld [vmem:[%s440 + $0x38] sm:$0xf]
      %v541 = vld [vmem:[%s440 + $0x3c] sm:$0xf]
      %v542 = vunpack.c.l.bf16 %v526
      %v543 = vunpack.c.l.bf16 %v527
      %v544 = vunpack.c.l.bf16 %v528
      %v545 = vunpack.c.l.bf16 %v529
      %v546 = vunpack.c.l.bf16 %v530
      %v547 = vunpack.c.l.bf16 %v531
      %v548 = vunpack.c.l.bf16 %v532
      %v549 = vunpack.c.l.bf16 %v533
      %v550 = vunpack.c.l.bf16 %v534
      %v551 = vunpack.c.l.bf16 %v535
      %v552 = vunpack.c.l.bf16 %v536
      %v553 = vunpack.c.l.bf16 %v537
      %v554 = vunpack.c.l.bf16 %v538
      %v555 = vunpack.c.l.bf16 %v539
      %v556 = vunpack.c.l.bf16 %v540
      %v557 = vunpack.c.l.bf16 %v541
      %v558 = vmul.f32 %v542, %v503
      %v559 = vmul.f32 %v543, %v503
      %v560 = vmul.f32 %v544, %v503
      %v561 = vmul.f32 %v545, %v503
      %v562 = vmul.f32 %v546, %v503
      %v563 = vmul.f32 %v547, %v503
      %v564 = vmul.f32 %v548, %v503
      %v565 = vmul.f32 %v549, %v503
      %v566 = vmul.f32 %v550, %v503
      %v567 = vmul.f32 %v551, %v503
      %v568 = vmul.f32 %v552, %v503
      %v569 = vmul.f32 %v553, %v503
      %v570 = vmul.f32 %v554, %v503
      %v571 = vmul.f32 %v555, %v503
      %v572 = vmul.f32 %v556, %v503
      %v573 = vmul.f32 %v557, %v503
      %v574 = vadd.f32 %v558, %v508
      %v575 = vadd.f32 %v559, %v508
      %v576 = vadd.f32 %v560, %v508
      %v577 = vadd.f32 %v561, %v508
      %v578 = vadd.f32 %v562, %v508
      %v579 = vadd.f32 %v563, %v508
      %v580 = vadd.f32 %v564, %v508
      %v581 = vadd.f32 %v565, %v508
      %v582 = vadd.f32 %v566, %v508
      %v583 = vadd.f32 %v567, %v508
      %v584 = vadd.f32 %v568, %v508
      %v585 = vadd.f32 %v569, %v508
      %v586 = vadd.f32 %v570, %v508
      %v587 = vadd.f32 %v571, %v508
      %v588 = vadd.f32 %v572, %v508
      %v589 = vadd.f32 %v573, %v508
      %vm590 = vcmp.gt.f32.partialorder %v574, 0.0
      %vm591 = vcmp.gt.f32.partialorder %v575, 0.0
      %vm592 = vcmp.gt.f32.partialorder %v576, 0.0
      %vm593 = vcmp.gt.f32.partialorder %v577, 0.0
      %vm594 = vcmp.gt.f32.partialorder %v578, 0.0
      %vm595 = vcmp.gt.f32.partialorder %v579, 0.0
      %vm596 = vcmp.gt.f32.partialorder %v580, 0.0
      %vm597 = vcmp.gt.f32.partialorder %v581, 0.0
      %vm598 = vcmp.gt.f32.partialorder %v582, 0.0
      %vm599 = vcmp.gt.f32.partialorder %v583, 0.0
      %vm600 = vcmp.gt.f32.partialorder %v584, 0.0
      %vm601 = vcmp.gt.f32.partialorder %v585, 0.0
      %vm602 = vcmp.gt.f32.partialorder %v586, 0.0
      %vm603 = vcmp.gt.f32.partialorder %v587, 0.0
      %vm604 = vcmp.gt.f32.partialorder %v588, 0.0
      %vm605 = vcmp.gt.f32.partialorder %v589, 0.0
      %v606 = vmul.f32 %v574, 0.1
      %v607 = vmul.f32 %v575, 0.1
      %v608 = vmul.f32 %v576, 0.1
      %v609 = vmul.f32 %v577, 0.1
      %v610 = vmul.f32 %v578, 0.1
      %v611 = vmul.f32 %v579, 0.1
      %v612 = vmul.f32 %v580, 0.1
      %v613 = vmul.f32 %v581, 0.1
      %v614 = vmul.f32 %v582, 0.1
      %v615 = vmul.f32 %v583, 0.1
      %v616 = vmul.f32 %v584, 0.1
      %v617 = vmul.f32 %v585, 0.1
      %v618 = vmul.f32 %v586, 0.1
      %v619 = vmul.f32 %v587, 0.1
      %v620 = vmul.f32 %v588, 0.1
      %v621 = vmul.f32 %v589, 0.1
      %v622 = vsel %vm590, %v574, %v606
      %v623 = vsel %vm591, %v575, %v607
      %v624 = vsel %vm592, %v576, %v608
      %v625 = vsel %vm593, %v577, %v609
      %v626 = vsel %vm594, %v578, %v610
      %v627 = vsel %vm595, %v579, %v611
      %v628 = vsel %vm596, %v580, %v612
      %v629 = vsel %vm597, %v581, %v613
      %v630 = vsel %vm598, %v582, %v614
      %v631 = vsel %vm599, %v583, %v615
      %v632 = vsel %vm600, %v584, %v616
      %v633 = vsel %vm601, %v585, %v617
      %v634 = vsel %vm602, %v586, %v618
      %v635 = vsel %vm603, %v587, %v619
      %v636 = vsel %vm604, %v588, %v620
      %v637 = vsel %vm605, %v589, %v621
      %v638 = vpack.c.bf16 %v622, %v622
      %v639 = vpack.c.bf16 %v623, %v623
      %v640 = vpack.c.bf16 %v624, %v624
      %v641 = vpack.c.bf16 %v625, %v625
      %v642 = vpack.c.bf16 %v626, %v626
      %v643 = vpack.c.bf16 %v627, %v627
      %v644 = vpack.c.bf16 %v628, %v628
      %v645 = vpack.c.bf16 %v629, %v629
      %v646 = vpack.c.bf16 %v630, %v630
      %v647 = vpack.c.bf16 %v631, %v631
      %v648 = vpack.c.bf16 %v632, %v632
      %v649 = vpack.c.bf16 %v633, %v633
      %v650 = vpack.c.bf16 %v634, %v634
      %v651 = vpack.c.bf16 %v635, %v635
      %v652 = vpack.c.bf16 %v636, %v636
      %v653 = vpack.c.bf16 %v637, %v637
      %v654 = vld [vmem:[%s471] sm:$0xf]
      %v655 = vld [vmem:[%s471 + $0x4] sm:$0xf]
      %v656 = vunpack.c.l.bf16 %v654
      %v657 = vunpack.c.l.bf16 %v655
      %v658 = vmul.f32 %v656, %v503
      %v659 = vmul.f32 %v657, %v503
      %v660 = vadd.f32 %v658, %v508
      %v661 = vadd.f32 %v659, %v508
      %vm662 = vcmp.gt.f32.partialorder %v660, 0.0
      %vm663 = vcmp.gt.f32.partialorder %v661, 0.0
      %v664 = vmul.f32 %v660, 0.1
      %v665 = vmul.f32 %v661, 0.1
      %v666 = vsel %vm662, %v660, %v664
      %v667 = vsel %vm663, %v661, %v665
      %p668 = scmp.lt.s32.totalorder %s25, 1
      %s669 = scalar_select %p668, 1, 0
      %s670 = scvt.s32.f32 %s669
      %v671 = vstv %s670
      %v672 = vmul.f32 %v666, %v671
      %v673 = vmul.f32 %v667, %v671
      %v674 = vpack.c.bf16 %v672, %v672
      %v675 = vpack.c.bf16 %v673, %v673
      %v696 = vunpack.c.l.b16 %v524
      %v697 = vunpack.c.l.b16 %v525
      %v698 = vunpack.c.l.b16 %v638
      %v699 = vunpack.c.l.b16 %v639
      %v700 = vunpack.c.l.b16 %v640
      %v701 = vunpack.c.l.b16 %v641
      %v702 = vunpack.c.l.b16 %v642
      %v703 = vunpack.c.l.b16 %v643
      %v704 = vunpack.c.l.b16 %v644
      %v705 = vunpack.c.l.b16 %v645
      %v706 = vunpack.c.l.b16 %v646
      %v707 = vunpack.c.l.b16 %v647
      %v708 = vunpack.c.l.b16 %v648
      %v709 = vunpack.c.l.b16 %v649
      %v710 = vunpack.c.l.b16 %v650
      %v711 = vunpack.c.l.b16 %v651
      %v712 = vunpack.c.l.b16 %v652
      %v713 = vunpack.c.l.b16 %v653
      %v714 = vunpack.c.l.b16 %v674
      %v715 = vunpack.c.l.b16 %v675
      %v716 = vpack.c.b16 %v697, %v696
      %v717 = vpack.c.b16 %v699, %v698
      %v718 = vpack.c.b16 %v701, %v700
      %v719 = vpack.c.b16 %v703, %v702
      %v720 = vpack.c.b16 %v705, %v704
      %v721 = vpack.c.b16 %v707, %v706
      %v722 = vpack.c.b16 %v709, %v708
      %v723 = vpack.c.b16 %v711, %v710
      %v724 = vpack.c.b16 %v713, %v712
      %v725 = vpack.c.b16 %v715, %v714
      %v727 = vshrl.u32 %v716, 16
      %v729 = vrot.slane %v727, 7
      %v730 = vshll.u32 %v716, 16
      %v732 = vor.u32 %v729, %v730
      %v734 = vshrl.u32 %v717, 16
      %v736 = vrot.slane %v734, 7
      %v737 = vshll.u32 %v717, 16
      %v739 = vor.u32 %v736, %v737
      %v741 = vshrl.u32 %v718, 16
      %v743 = vrot.slane %v741, 7
      %v744 = vshll.u32 %v718, 16
      %v746 = vor.u32 %v743, %v744
      %v748 = vshrl.u32 %v719, 16
      %v750 = vrot.slane %v748, 7
      %v751 = vshll.u32 %v719, 16
      %v753 = vor.u32 %v750, %v751
      %v755 = vshrl.u32 %v720, 16
      %v757 = vrot.slane %v755, 7
      %v758 = vshll.u32 %v720, 16
      %v760 = vor.u32 %v757, %v758
      %v762 = vshrl.u32 %v721, 16
      %v764 = vrot.slane %v762, 7
      %v765 = vshll.u32 %v721, 16
      %v767 = vor.u32 %v764, %v765
      %v769 = vshrl.u32 %v722, 16
      %v771 = vrot.slane %v769, 7
      %v772 = vshll.u32 %v722, 16
      %v774 = vor.u32 %v771, %v772
      %v776 = vshrl.u32 %v723, 16
      %v778 = vrot.slane %v776, 7
      %v779 = vshll.u32 %v723, 16
      %v781 = vor.u32 %v778, %v779
      %v783 = vshrl.u32 %v724, 16
      %v785 = vrot.slane %v783, 7
      %v786 = vshll.u32 %v724, 16
      %v788 = vor.u32 %v785, %v786
      %v790 = vshrl.u32 %v725, 16
      %v792 = vrot.slane %v790, 7
      %v793 = vshll.u32 %v725, 16
      %v795 = vor.u32 %v792, %v793
      %vm816 = vcmask 1040384
      %vm817 = vsmask.f32 256
      %vm818 = vmand %vm816, %vm817
      %v819 = vsel %vm818, 0, %v732
      %v820 = vsel %vm818, 0, %v739
      %v821 = vsel %vm818, 0, %v746
      %v822 = vsel %vm818, 0, %v753
      %v823 = vsel %vm818, 0, %v760
      %v824 = vsel %vm818, 0, %v767
      %v825 = vsel %vm818, 0, %v774
      %v826 = vsel %vm818, 0, %v781
      %v827 = vsel %vm818, 0, %v788
      %v828 = vsel %vm818, 0, %v795
      %v829 = vsel %vm818, %v729, 0
      %v830 = vsel %vm818, %v736, 0
      %v831 = vsel %vm818, %v743, 0
      %v832 = vsel %vm818, %v750, 0
      %v833 = vsel %vm818, %v757, 0
      %v834 = vsel %vm818, %v764, 0
      %v835 = vsel %vm818, %v771, 0
      %v836 = vsel %vm818, %v778, 0
      %v837 = vsel %vm818, %v785, 0
      %v838 = vsel %vm818, %v792, 0
      %v849 = vrot.slane %v819, 1
      %v850 = vrot.slane %v819, 2
      %v851 = vrot.slane %v819, 3
      %v852 = vrot.slane %v819, 4
      %v853 = vrot.slane %v819, 5
      %v854 = vrot.slane %v819, 6
      %v855 = vrot.slane %v819, 7
      %v856 = vrot.slane %v820, 1
      %v857 = vrot.slane %v820, 2
      %v858 = vrot.slane %v820, 3
      %v859 = vrot.slane %v820, 4
      %v860 = vrot.slane %v820, 5
      %v861 = vrot.slane %v820, 6
      %v862 = vrot.slane %v820, 7
      %v863 = vrot.slane %v821, 1
      %v864 = vrot.slane %v821, 2
      %v865 = vrot.slane %v821, 3
      %v866 = vrot.slane %v821, 4
      %v867 = vrot.slane %v821, 5
      %v868 = vrot.slane %v821, 6
      %v869 = vrot.slane %v821, 7
      %v870 = vrot.slane %v822, 1
      %v871 = vrot.slane %v822, 2
      %v872 = vrot.slane %v822, 3
      %v873 = vrot.slane %v822, 4
      %v874 = vrot.slane %v822, 5
      %v875 = vrot.slane %v822, 6
      %v876 = vrot.slane %v822, 7
      %v877 = vrot.slane %v823, 1
      %v878 = vrot.slane %v823, 2
      %v879 = vrot.slane %v823, 3
      %v880 = vrot.slane %v823, 4
      %v881 = vrot.slane %v823, 5
      %v882 = vrot.slane %v823, 6
      %v883 = vrot.slane %v823, 7
      %v884 = vrot.slane %v824, 1
      %v885 = vrot.slane %v824, 2
      %v886 = vrot.slane %v824, 3
      %v887 = vrot.slane %v824, 4
      %v888 = vrot.slane %v824, 5
      %v889 = vrot.slane %v824, 6
      %v890 = vrot.slane %v824, 7
      %v891 = vrot.slane %v825, 1
      %v892 = vrot.slane %v825, 2
      %v893 = vrot.slane %v825, 3
      %v894 = vrot.slane %v825, 4
      %v895 = vrot.slane %v825, 5
      %v896 = vrot.slane %v825, 6
      %v897 = vrot.slane %v825, 7
      %v898 = vrot.slane %v826, 1
      %v899 = vrot.slane %v826, 2
      %v900 = vrot.slane %v826, 3
      %v901 = vrot.slane %v826, 4
      %v902 = vrot.slane %v826, 5
      %v903 = vrot.slane %v826, 6
      %v904 = vrot.slane %v826, 7
      %v905 = vrot.slane %v827, 1
      %v906 = vrot.slane %v827, 2
      %v907 = vrot.slane %v827, 3
      %v908 = vrot.slane %v827, 4
      %v909 = vrot.slane %v827, 5
      %v910 = vrot.slane %v827, 6
      %v911 = vrot.slane %v827, 7
      %v912 = vrot.slane %v828, 1
      %v913 = vrot.slane %v828, 2
      %v914 = vrot.slane %v828, 3
      %v915 = vrot.slane %v828, 4
      %v916 = vrot.slane %v828, 5
      %v917 = vrot.slane %v828, 6
      %v918 = vrot.slane %v828, 7
      %920 = vst [vmem:[#allocation1] ss:$4 sm:$0xff] %v819
      %s922 = scalar_lea.vmem [#allocation1], 1
      %923 = vst [vmem:[%s922] ss:$4 sm:$0xff] %v849
      %s925 = scalar_lea.vmem [#allocation1], 2
      %926 = vst [vmem:[%s925] ss:$4 sm:$0xff] %v850
      %s928 = scalar_lea.vmem [#allocation1], 3
      %929 = vst [vmem:[%s928] ss:$4 sm:$0xff] %v851
      %s931 = scalar_lea.vmem [#allocation1], 32
      %932 = vst [vmem:[%s931] ss:$4 sm:$0xff] %v852
      %s934 = scalar_lea.vmem [#allocation1], 33
      %935 = vst [vmem:[%s934] ss:$4 sm:$0xff] %v853
      %s937 = scalar_lea.vmem [#allocation1], 34
      %938 = vst [vmem:[%s937] ss:$4 sm:$0xff] %v854
      %s940 = scalar_lea.vmem [#allocation1], 35
      %941 = vst [vmem:[%s940] ss:$4 sm:$0xff] %v855
      %v942 = vld [vmem:[#allocation1] sm:$0xff]
      %v943 = vld [vmem:[#allocation1 + $0x20] sm:$0xff]
      %945 = vst [vmem:[#allocation1] ss:$4 sm:$0xff] %v829
      %947 = vst [vmem:[%s922] ss:$4 sm:$0xff] %v820
      %949 = vst [vmem:[%s925] ss:$4 sm:$0xff] %v856
      %951 = vst [vmem:[%s928] ss:$4 sm:$0xff] %v857
      %953 = vst [vmem:[%s931] ss:$4 sm:$0xff] %v858
      %955 = vst [vmem:[%s934] ss:$4 sm:$0xff] %v859
      %957 = vst [vmem:[%s937] ss:$4 sm:$0xff] %v860
      %959 = vst [vmem:[%s940] ss:$4 sm:$0xff] %v861
      %v960 = vld [vmem:[#allocation1] sm:$0xff]
      %v961 = vld [vmem:[#allocation1 + $0x20] sm:$0xff]
      %963 = vst [vmem:[#allocation1] ss:$4 sm:$0xff] %v862
      %965 = vst [vmem:[%s922] ss:$4 sm:$0xff] %v830
      %967 = vst [vmem:[%s925] ss:$4 sm:$0xff] %v821
      %969 = vst [vmem:[%s928] ss:$4 sm:$0xff] %v863
      %971 = vst [vmem:[%s931] ss:$4 sm:$0xff] %v864
      %973 = vst [vmem:[%s934] ss:$4 sm:$0xff] %v865
      %975 = vst [vmem:[%s937] ss:$4 sm:$0xff] %v866
      %977 = vst [vmem:[%s940] ss:$4 sm:$0xff] %v867
      %v978 = vld [vmem:[#allocation1] sm:$0xff]
      %v979 = vld [vmem:[#allocation1 + $0x20] sm:$0xff]
      %981 = vst [vmem:[#allocation1] ss:$4 sm:$0xff] %v868
      %983 = vst [vmem:[%s922] ss:$4 sm:$0xff] %v869
      %985 = vst [vmem:[%s925] ss:$4 sm:$0xff] %v831
      %987 = vst [vmem:[%s928] ss:$4 sm:$0xff] %v822
      %989 = vst [vmem:[%s931] ss:$4 sm:$0xff] %v870
      %991 = vst [vmem:[%s934] ss:$4 sm:$0xff] %v871
      %993 = vst [vmem:[%s937] ss:$4 sm:$0xff] %v872
      %995 = vst [vmem:[%s940] ss:$4 sm:$0xff] %v873
      %v996 = vld [vmem:[#allocation1] sm:$0xff]
      %v997 = vld [vmem:[#allocation1 + $0x20] sm:$0xff]
      %999 = vst [vmem:[#allocation1] ss:$4 sm:$0xff] %v874
      %1001 = vst [vmem:[%s922] ss:$4 sm:$0xff] %v875
      %1003 = vst [vmem:[%s925] ss:$4 sm:$0xff] %v876
      %1005 = vst [vmem:[%s928] ss:$4 sm:$0xff] %v832
      %1007 = vst [vmem:[%s931] ss:$4 sm:$0xff] %v823
      %1009 = vst [vmem:[%s934] ss:$4 sm:$0xff] %v877
      %1011 = vst [vmem:[%s937] ss:$4 sm:$0xff] %v878
      %1013 = vst [vmem:[%s940] ss:$4 sm:$0xff] %v879
      %v1014 = vld [vmem:[#allocation1] sm:$0xff]
      %v1015 = vld [vmem:[#allocation1 + $0x20] sm:$0xff]
      %1017 = vst [vmem:[#allocation1] ss:$4 sm:$0xff] %v880
      %1019 = vst [vmem:[%s922] ss:$4 sm:$0xff] %v881
      %1021 = vst [vmem:[%s925] ss:$4 sm:$0xff] %v882
      %1023 = vst [vmem:[%s928] ss:$4 sm:$0xff] %v883
      %1025 = vst [vmem:[%s931] ss:$4 sm:$0xff] %v833
      %1027 = vst [vmem:[%s934] ss:$4 sm:$0xff] %v824
      %1029 = vst [vmem:[%s937] ss:$4 sm:$0xff] %v884
      %1031 = vst [vmem:[%s940] ss:$4 sm:$0xff] %v885
      %v1032 = vld [vmem:[#allocation1] sm:$0xff]
      %v1033 = vld [vmem:[#allocation1 + $0x20] sm:$0xff]
      %1035 = vst [vmem:[#allocation1] ss:$4 sm:$0xff] %v886
      %1037 = vst [vmem:[%s922] ss:$4 sm:$0xff] %v887
      %1039 = vst [vmem:[%s925] ss:$4 sm:$0xff] %v888
      %1041 = vst [vmem:[%s928] ss:$4 sm:$0xff] %v889
      %1043 = vst [vmem:[%s931] ss:$4 sm:$0xff] %v890
      %1045 = vst [vmem:[%s934] ss:$4 sm:$0xff] %v834
      %1047 = vst [vmem:[%s937] ss:$4 sm:$0xff] %v825
      %1049 = vst [vmem:[%s940] ss:$4 sm:$0xff] %v891
      %v1050 = vld [vmem:[#allocation1] sm:$0xff]
      %v1051 = vld [vmem:[#allocation1 + $0x20] sm:$0xff]
      %1053 = vst [vmem:[#allocation1] ss:$4 sm:$0xff] %v892
      %1055 = vst [vmem:[%s922] ss:$4 sm:$0xff] %v893
      %1057 = vst [vmem:[%s925] ss:$4 sm:$0xff] %v894
      %1059 = vst [vmem:[%s928] ss:$4 sm:$0xff] %v895
      %1061 = vst [vmem:[%s931] ss:$4 sm:$0xff] %v896
      %1063 = vst [vmem:[%s934] ss:$4 sm:$0xff] %v897
      %1065 = vst [vmem:[%s937] ss:$4 sm:$0xff] %v835
      %1067 = vst [vmem:[%s940] ss:$4 sm:$0xff] %v826
      %v1068 = vld [vmem:[#allocation1] sm:$0xff]
      %v1069 = vld [vmem:[#allocation1 + $0x20] sm:$0xff]
      %1071 = vst [vmem:[#allocation1] ss:$4 sm:$0xff] %v898
      %1073 = vst [vmem:[%s922] ss:$4 sm:$0xff] %v899
      %1075 = vst [vmem:[%s925] ss:$4 sm:$0xff] %v900
      %1077 = vst [vmem:[%s928] ss:$4 sm:$0xff] %v901
      %1079 = vst [vmem:[%s931] ss:$4 sm:$0xff] %v902
      %1081 = vst [vmem:[%s934] ss:$4 sm:$0xff] %v903
      %1083 = vst [vmem:[%s937] ss:$4 sm:$0xff] %v904
      %1085 = vst [vmem:[%s940] ss:$4 sm:$0xff] %v836
      %v1086 = vld [vmem:[#allocation1] sm:$0xff]
      %v1087 = vld [vmem:[#allocation1 + $0x20] sm:$0xff]
      %1089 = vst [vmem:[#allocation1] ss:$4 sm:$0xff] %v827
      %1091 = vst [vmem:[%s922] ss:$4 sm:$0xff] %v905
      %1093 = vst [vmem:[%s925] ss:$4 sm:$0xff] %v906
      %1095 = vst [vmem:[%s928] ss:$4 sm:$0xff] %v907
      %1097 = vst [vmem:[%s931] ss:$4 sm:$0xff] %v908
      %1099 = vst [vmem:[%s934] ss:$4 sm:$0xff] %v909
      %1101 = vst [vmem:[%s937] ss:$4 sm:$0xff] %v910
      %1103 = vst [vmem:[%s940] ss:$4 sm:$0xff] %v911
      %v1104 = vld [vmem:[#allocation1] sm:$0xff]
      %v1105 = vld [vmem:[#allocation1 + $0x20] sm:$0xff]
      %1107 = vst [vmem:[#allocation1] ss:$4 sm:$0xff] %v837
      %1109 = vst [vmem:[%s922] ss:$4 sm:$0xff] %v828
      %1111 = vst [vmem:[%s925] ss:$4 sm:$0xff] %v912
      %1113 = vst [vmem:[%s928] ss:$4 sm:$0xff] %v913
      %1115 = vst [vmem:[%s931] ss:$4 sm:$0xff] %v914
      %1117 = vst [vmem:[%s934] ss:$4 sm:$0xff] %v915
      %1119 = vst [vmem:[%s937] ss:$4 sm:$0xff] %v916
      %1121 = vst [vmem:[%s940] ss:$4 sm:$0xff] %v917
      %v1122 = vld [vmem:[#allocation1] sm:$0xff]
      %v1123 = vld [vmem:[#allocation1 + $0x20] sm:$0xff]
      %1125 = vst [vmem:[#allocation1] ss:$4 sm:$0xff] %v918
      %1127 = vst [vmem:[%s922] ss:$4 sm:$0xff] %v838
      %v1128 = vld [vmem:[#allocation1] sm:$0xff]
      %1152 = vst [vmem:[#allocation2] sm:$0xf] %v942
      %1153 = vst [vmem:[#allocation2 + $0x4] sm:$0xf] %v943
      %1154 = vst [vmem:[#allocation2 + $0x8] sm:$0xf] %v960
      %1155 = vst [vmem:[#allocation2 + $0xc] sm:$0xf] %v961
      %1156 = vst [vmem:[#allocation2 + $0x10] sm:$0xf] %v978
      %1157 = vst [vmem:[#allocation2 + $0x14] sm:$0xf] %v979
      %1158 = vst [vmem:[#allocation2 + $0x18] sm:$0xf] %v996
      %1159 = vst [vmem:[#allocation2 + $0x1c] sm:$0xf] %v997
      %1160 = vst [vmem:[#allocation2 + $0x20] sm:$0xf] %v1014
      %1161 = vst [vmem:[#allocation2 + $0x24] sm:$0xf] %v1015
      %1162 = vst [vmem:[#allocation2 + $0x28] sm:$0xf] %v1032
      %1163 = vst [vmem:[#allocation2 + $0x2c] sm:$0xf] %v1033
      %1164 = vst [vmem:[#allocation2 + $0x30] sm:$0xf] %v1050
      %1165 = vst [vmem:[#allocation2 + $0x34] sm:$0xf] %v1051
      %1166 = vst [vmem:[#allocation2 + $0x38] sm:$0xf] %v1068
      %1167 = vst [vmem:[#allocation2 + $0x3c] sm:$0xf] %v1069
      %1168 = vst [vmem:[#allocation2 + $0x40] sm:$0xf] %v1086
      %1169 = vst [vmem:[#allocation2 + $0x44] sm:$0xf] %v1087
      %1170 = vst [vmem:[#allocation2 + $0x48] sm:$0xf] %v1104
      %1171 = vst [vmem:[#allocation2 + $0x4c] sm:$0xf] %v1105
      %1172 = vst [vmem:[#allocation2 + $0x50] sm:$0xf] %v1122
      %1173 = vst [vmem:[#allocation2 + $0x54] sm:$0xf] %v1123
      %1174 = vst [vmem:[#allocation2 + $0x58] sm:$0x3] %v1128
      %v1175 = vld [vmem:[#allocation2] sm:$0xf]
      %v1176 = vld [vmem:[#allocation2 + $0x4] sm:$0xf]
      %v1177 = vld [vmem:[#allocation2 + $0x8] sm:$0xf]
      %v1178 = vld [vmem:[#allocation2 + $0xc] sm:$0xf]
      %v1179 = vld [vmem:[#allocation2 + $0x10] sm:$0xf]
      %v1180 = vld [vmem:[#allocation2 + $0x14] sm:$0xf]
      %v1181 = vld [vmem:[#allocation2 + $0x18] sm:$0xf]
      %v1182 = vld [vmem:[#allocation2 + $0x1c] sm:$0xf]
      %v1183 = vld [vmem:[#allocation2 + $0x20] sm:$0xf]
      %v1184 = vld [vmem:[#allocation2 + $0x24] sm:$0xf]
      %v1185 = vld [vmem:[#allocation2 + $0x28] sm:$0xf]
      %v1186 = vld [vmem:[#allocation2 + $0x2c] sm:$0xf]
      %v1187 = vld [vmem:[#allocation2 + $0x30] sm:$0xf]
      %v1188 = vld [vmem:[#allocation2 + $0x34] sm:$0xf]
      %v1189 = vld [vmem:[#allocation2 + $0x38] sm:$0xf]
      %v1190 = vld [vmem:[#allocation2 + $0x3c] sm:$0xf]
      %v1191 = vld [vmem:[#allocation2 + $0x40] sm:$0xf]
      %v1192 = vld [vmem:[#allocation2 + $0x44] sm:$0xf]
      %v1193 = vld [vmem:[%s5] sm:$0xf]
      %v1194 = vld [vmem:[%s5 + $0x4] sm:$0xf]
      %v1195 = vld [vmem:[%s5 + $0x8] sm:$0xf]
      %v1196 = vld [vmem:[%s5 + $0xc] sm:$0xf]
      %v1197 = vld [vmem:[%s5 + $0x10] sm:$0xf]
      %v1198 = vld [vmem:[%s5 + $0x14] sm:$0xf]
      %v1199 = vld [vmem:[%s5 + $0x18] sm:$0xf]
      %v1200 = vld [vmem:[%s5 + $0x1c] sm:$0xf]
      %v1201 = vld [vmem:[%s5 + $0x20] sm:$0xf]
      %v1202 = vld [vmem:[%s5 + $0x24] sm:$0xf]
      %v1203 = vld [vmem:[%s5 + $0x28] sm:$0xf]
      %v1204 = vld [vmem:[%s5 + $0x2c] sm:$0xf]
      %v1205 = vld [vmem:[%s5 + $0x30] sm:$0xf]
      %v1206 = vld [vmem:[%s5 + $0x34] sm:$0xf]
      %v1207 = vld [vmem:[%s5 + $0x38] sm:$0xf]
      %v1208 = vld [vmem:[%s5 + $0x3c] sm:$0xf]
      %v1209 = vld [vmem:[#allocation2 + $0x48] sm:$0x1]
      %s1210 = scalar_lea.vmem %s5, 64
      %v1211 = vld [vmem:[%s1210] sm:$0xf]
      %v1212 = vld [vmem:[%s1210 + $0x4] sm:$0xf]
      %v1213 = vld [vmem:[%s1210 + $0x8] sm:$0xf]
      %v1214 = vld [vmem:[%s1210 + $0xc] sm:$0xf]
      %v1215 = vld [vmem:[%s1210 + $0x10] sm:$0xf]
      %v1216 = vld [vmem:[%s1210 + $0x14] sm:$0xf]
      %v1217 = vld [vmem:[%s1210 + $0x18] sm:$0xf]
      %v1218 = vld [vmem:[%s1210 + $0x1c] sm:$0xf]
      %v1219 = vld [vmem:[%s1210 + $0x20] sm:$0xf]
      %v1220 = vld [vmem:[%s1210 + $0x24] sm:$0xf]
      %v1221 = vld [vmem:[%s1210 + $0x28] sm:$0xf]
      %v1222 = vld [vmem:[%s1210 + $0x2c] sm:$0xf]
      %v1223 = vld [vmem:[%s1210 + $0x30] sm:$0xf]
      %v1224 = vld [vmem:[%s1210 + $0x34] sm:$0xf]
      %v1225 = vld [vmem:[%s1210 + $0x38] sm:$0xf]
      %v1226 = vld [vmem:[%s1210 + $0x3c] sm:$0xf]
      %v1246 = vunpack.c.l.b16 %v1175
      %v1247 = vunpack.c.l.b16 %v1176
      %v1248 = vunpack.c.l.b16 %v1177
      %v1249 = vunpack.c.l.b16 %v1178
      %v1250 = vunpack.c.l.b16 %v1179
      %v1251 = vunpack.c.l.b16 %v1180
      %v1252 = vunpack.c.l.b16 %v1181
      %v1253 = vunpack.c.l.b16 %v1182
      %v1254 = vunpack.c.l.b16 %v1183
      %v1255 = vunpack.c.l.b16 %v1184
      %v1256 = vunpack.c.l.b16 %v1185
      %v1257 = vunpack.c.l.b16 %v1186
      %v1258 = vunpack.c.l.b16 %v1187
      %v1259 = vunpack.c.l.b16 %v1188
      %v1260 = vunpack.c.l.b16 %v1189
      %v1261 = vunpack.c.l.b16 %v1190
      %v1262 = vunpack.c.l.b16 %v1191
      %v1263 = vunpack.c.l.b16 %v1192
      %v1264 = vunpack.c.l.b16 %v1209
      %v1265 = vpack.c.b16 %v1247, %v1246
      %v1266 = vpack.c.b16 %v1249, %v1248
      %v1267 = vpack.c.b16 %v1251, %v1250
      %v1268 = vpack.c.b16 %v1253, %v1252
      %v1269 = vpack.c.b16 %v1255, %v1254
      %v1270 = vpack.c.b16 %v1257, %v1256
      %v1271 = vpack.c.b16 %v1259, %v1258
      %v1272 = vpack.c.b16 %v1261, %v1260
      %v1273 = vpack.c.b16 %v1263, %v1262
      %v1274 = vpack.c.b16 %v1264, %v1264
      %vm1275 = vsmask.f32 7424
      %v1277 = vshrl.u32 %v1265, 16
      %v1279 = vshll.u32 %v1265, 16
      %v1281 = vrot.slane %v1279, 1
      %v1282 = vor.u32 %v1277, %v1281
      %v1284 = vshll.u32 %v1266, 16
      %v1286 = vrot.slane %v1284, 1
      %v1287 = vsel %vm1275, %v1282, %v1286
      %v1288 = vshrl.u32 %v1266, 16
      %v1290 = vor.u32 %v1288, %v1286
      %v1292 = vshll.u32 %v1267, 16
      %v1294 = vrot.slane %v1292, 1
      %v1295 = vsel %vm1275, %v1290, %v1294
      %v1296 = vshrl.u32 %v1267, 16
      %v1298 = vor.u32 %v1296, %v1294
      %v1300 = vshll.u32 %v1268, 16
      %v1302 = vrot.slane %v1300, 1
      %v1303 = vsel %vm1275, %v1298, %v1302
      %v1304 = vshrl.u32 %v1268, 16
      %v1306 = vor.u32 %v1304, %v1302
      %v1308 = vshll.u32 %v1269, 16
      %v1310 = vrot.slane %v1308, 1
      %v1311 = vsel %vm1275, %v1306, %v1310
      %v1312 = vshrl.u32 %v1269, 16
      %v1314 = vor.u32 %v1312, %v1310
      %v1316 = vshll.u32 %v1270, 16
      %v1318 = vrot.slane %v1316, 1
      %v1319 = vsel %vm1275, %v1314, %v1318
      %v1320 = vshrl.u32 %v1270, 16
      %v1322 = vor.u32 %v1320, %v1318
      %v1324 = vshll.u32 %v1271, 16
      %v1326 = vrot.slane %v1324, 1
      %v1327 = vsel %vm1275, %v1322, %v1326
      %v1328 = vshrl.u32 %v1271, 16
      %v1330 = vor.u32 %v1328, %v1326
      %v1332 = vshll.u32 %v1272, 16
      %v1334 = vrot.slane %v1332, 1
      %v1335 = vsel %vm1275, %v1330, %v1334
      %v1336 = vshrl.u32 %v1272, 16
      %v1338 = vor.u32 %v1336, %v1334
      %v1340 = vshll.u32 %v1273, 16
      %v1342 = vrot.slane %v1340, 1
      %v1343 = vsel %vm1275, %v1338, %v1342
      %v1344 = vshrl.u32 %v1273, 16
      %v1346 = vor.u32 %v1344, %v1342
      %v1348 = vshll.u32 %v1274, 16
      %v1350 = vrot.slane %v1348, 1
      %v1351 = vsel %vm1275, %v1346, %v1350
      %v1377 = vunpack.c.l.b16 %v1211
      %v1378 = vunpack.c.l.b16 %v1212
      %v1379 = vunpack.c.l.b16 %v1213
      %v1380 = vunpack.c.l.b16 %v1214
      %v1381 = vunpack.c.l.b16 %v1215
      %v1382 = vunpack.c.l.b16 %v1216
      %v1383 = vunpack.c.l.b16 %v1217
      %v1384 = vunpack.c.l.b16 %v1218
      %v1385 = vunpack.c.l.b16 %v1219
      %v1386 = vunpack.c.l.b16 %v1220
      %v1387 = vunpack.c.l.b16 %v1221
      %v1388 = vunpack.c.l.b16 %v1222
      %v1389 = vunpack.c.l.b16 %v1223
      %v1390 = vunpack.c.l.b16 %v1224
      %v1391 = vunpack.c.l.b16 %v1225
      %v1392 = vunpack.c.l.b16 %v1226
      %v1393 = vpack.c.b16 %v1378, %v1377
      %v1394 = vpack.c.b16 %v1380, %v1379
      %v1395 = vpack.c.b16 %v1382, %v1381
      %v1396 = vpack.c.b16 %v1384, %v1383
      %v1397 = vpack.c.b16 %v1386, %v1385
      %v1398 = vpack.c.b16 %v1388, %v1387
      %v1399 = vpack.c.b16 %v1390, %v1389
      %v1400 = vpack.c.b16 %v1392, %v1391
      %1409 = vmatpush.bf16.msra.mxu0 %v1400
      %1410 = vmatpush.bf16.msra.mxu0 %v1399
      %1411 = vmatpush.bf16.msra.mxu0 %v1398
      %1412 = vmatpush.bf16.msra.mxu0 %v1397
      %1413 = vmatpush.bf16.msra.mxu0 %v1396
      %1414 = vmatpush.bf16.msra.mxu0 %v1395
      %1415 = vmatpush.bf16.msra.mxu0 %v1394
      %1416 = vmatpush.bf16.msra.mxu0 %v1393
      %1417 = vmatmul.bf16.gmra.mxu0 %v1287
      %v1418 = vpop.f32.mrf.mxu0
      %v1419 = vadd.f32 0.0, %v1418
      %v1420 = vpop.f32.mrf.mxu0
      %v1421 = vadd.f32 0.0, %v1420
      %1422 = vmatmul.bf16.gmra.mxu0 %v1295
      %v1423 = vpop.f32.mrf.mxu0
      %v1424 = vadd.f32 0.0, %v1423
      %v1425 = vpop.f32.mrf.mxu0
      %v1426 = vadd.f32 0.0, %v1425
      %1427 = vmatmul.bf16.gmra.mxu0 %v1303
      %v1428 = vpop.f32.mrf.mxu0
      %v1429 = vadd.f32 0.0, %v1428
      %v1430 = vpop.f32.mrf.mxu0
      %v1431 = vadd.f32 0.0, %v1430
      %1432 = vmatmul.bf16.gmra.mxu0 %v1311
      %v1433 = vpop.f32.mrf.mxu0
      %v1434 = vadd.f32 0.0, %v1433
      %v1435 = vpop.f32.mrf.mxu0
      %v1436 = vadd.f32 0.0, %v1435
      %1437 = vmatmul.bf16.gmra.mxu0 %v1319
      %v1438 = vpop.f32.mrf.mxu0
      %v1439 = vadd.f32 0.0, %v1438
      %v1440 = vpop.f32.mrf.mxu0
      %v1441 = vadd.f32 0.0, %v1440
      %1442 = vmatmul.bf16.gmra.mxu0 %v1327
      %v1443 = vpop.f32.mrf.mxu0
      %v1444 = vadd.f32 0.0, %v1443
      %v1445 = vpop.f32.mrf.mxu0
      %v1446 = vadd.f32 0.0, %v1445
      %1447 = vmatmul.bf16.gmra.mxu0 %v1335
      %v1448 = vpop.f32.mrf.mxu0
      %v1449 = vadd.f32 0.0, %v1448
      %v1450 = vpop.f32.mrf.mxu0
      %v1451 = vadd.f32 0.0, %v1450
      %1452 = vmatmul.bf16.gmra.mxu0 %v1343
      %v1453 = vpop.f32.mrf.mxu0
      %v1454 = vadd.f32 0.0, %v1453
      %v1455 = vpop.f32.mrf.mxu0
      %v1456 = vadd.f32 0.0, %v1455
      %1457 = vmatmul.bf16.gmra.mxu0 %v1351
      %v1458 = vpop.f32.mrf.mxu0
      %v1459 = vadd.f32 0.0, %v1458
      %v1460 = vpop.f32.mrf.mxu0
      %v1461 = vadd.f32 0.0, %v1460
      %1462 = vdwg.mxu0
      %v1488 = vunpack.c.l.b16 %v1193
      %v1489 = vunpack.c.l.b16 %v1194
      %v1490 = vunpack.c.l.b16 %v1195
      %v1491 = vunpack.c.l.b16 %v1196
      %v1492 = vunpack.c.l.b16 %v1197
      %v1493 = vunpack.c.l.b16 %v1198
      %v1494 = vunpack.c.l.b16 %v1199
      %v1495 = vunpack.c.l.b16 %v1200
      %v1496 = vunpack.c.l.b16 %v1201
      %v1497 = vunpack.c.l.b16 %v1202
      %v1498 = vunpack.c.l.b16 %v1203
      %v1499 = vunpack.c.l.b16 %v1204
      %v1500 = vunpack.c.l.b16 %v1205
      %v1501 = vunpack.c.l.b16 %v1206
      %v1502 = vunpack.c.l.b16 %v1207
      %v1503 = vunpack.c.l.b16 %v1208
      %v1504 = vpack.c.b16 %v1489, %v1488
      %v1505 = vpack.c.b16 %v1491, %v1490
      %v1506 = vpack.c.b16 %v1493, %v1492
      %v1507 = vpack.c.b16 %v1495, %v1494
      %v1508 = vpack.c.b16 %v1497, %v1496
      %v1509 = vpack.c.b16 %v1499, %v1498
      %v1510 = vpack.c.b16 %v1501, %v1500
      %v1511 = vpack.c.b16 %v1503, %v1502
      %1520 = vmatpush.bf16.msra.mxu0 %v1511
      %1521 = vmatpush.bf16.msra.mxu0 %v1510
      %1522 = vmatpush.bf16.msra.mxu0 %v1509
      %1523 = vmatpush.bf16.msra.mxu0 %v1508
      %1524 = vmatpush.bf16.msra.mxu0 %v1507
      %1525 = vmatpush.bf16.msra.mxu0 %v1506
      %1526 = vmatpush.bf16.msra.mxu0 %v1505
      %1527 = vmatpush.bf16.msra.mxu0 %v1504
      %1528 = vmatmul.bf16.gmra.mxu0 %v1265
      %v1529 = vpop.f32.mrf.mxu0
      %v1530 = vadd.f32 %v1419, %v1529
      %v1531 = vpop.f32.mrf.mxu0
      %v1532 = vadd.f32 %v1421, %v1531
      %1533 = vmatmul.bf16.gmra.mxu0 %v1266
      %v1534 = vpop.f32.mrf.mxu0
      %v1535 = vadd.f32 %v1424, %v1534
      %v1536 = vpop.f32.mrf.mxu0
      %v1537 = vadd.f32 %v1426, %v1536
      %1538 = vmatmul.bf16.gmra.mxu0 %v1267
      %v1539 = vpop.f32.mrf.mxu0
      %v1540 = vadd.f32 %v1429, %v1539
      %v1541 = vpop.f32.mrf.mxu0
      %v1542 = vadd.f32 %v1431, %v1541
      %1543 = vmatmul.bf16.gmra.mxu0 %v1268
      %v1544 = vpop.f32.mrf.mxu0
      %v1545 = vadd.f32 %v1434, %v1544
      %v1546 = vpop.f32.mrf.mxu0
      %v1547 = vadd.f32 %v1436, %v1546
      %1548 = vmatmul.bf16.gmra.mxu0 %v1269
      %v1549 = vpop.f32.mrf.mxu0
      %v1550 = vadd.f32 %v1439, %v1549
      %v1551 = vpop.f32.mrf.mxu0
      %v1552 = vadd.f32 %v1441, %v1551
      %1553 = vmatmul.bf16.gmra.mxu0 %v1270
      %v1554 = vpop.f32.mrf.mxu0
      %v1555 = vadd.f32 %v1444, %v1554
      %v1556 = vpop.f32.mrf.mxu0
      %v1557 = vadd.f32 %v1446, %v1556
      %1558 = vmatmul.bf16.gmra.mxu0 %v1271
      %v1559 = vpop.f32.mrf.mxu0
      %v1560 = vadd.f32 %v1449, %v1559
      %v1561 = vpop.f32.mrf.mxu0
      %v1562 = vadd.f32 %v1451, %v1561
      %1563 = vmatmul.bf16.gmra.mxu0 %v1272
      %v1564 = vpop.f32.mrf.mxu0
      %v1565 = vadd.f32 %v1454, %v1564
      %v1566 = vpop.f32.mrf.mxu0
      %v1567 = vadd.f32 %v1456, %v1566
      %1568 = vmatmul.bf16.gmra.mxu0 %v1273
      %v1569 = vpop.f32.mrf.mxu0
      %v1570 = vadd.f32 %v1459, %v1569
      %v1571 = vpop.f32.mrf.mxu0
      %v1572 = vadd.f32 %v1461, %v1571
      %1573 = vdwg.mxu0
      %v1574 = vld [vmem:[#allocation2] sm:$0xe]
      %s1575 = scalar_lea.vmem %s5, 128
      %v1576 = vld [vmem:[%s1575] sm:$0xf]
      %v1577 = vld [vmem:[%s1575 + $0x4] sm:$0xf]
      %v1578 = vld [vmem:[%s1575 + $0x8] sm:$0xf]
      %v1579 = vld [vmem:[%s1575 + $0xc] sm:$0xf]
      %v1580 = vld [vmem:[%s1575 + $0x10] sm:$0xf]
      %v1581 = vld [vmem:[%s1575 + $0x14] sm:$0xf]
      %v1582 = vld [vmem:[%s1575 + $0x18] sm:$0xf]
      %v1583 = vld [vmem:[%s1575 + $0x1c] sm:$0xf]
      %v1584 = vld [vmem:[%s1575 + $0x20] sm:$0xf]
      %v1585 = vld [vmem:[%s1575 + $0x24] sm:$0xf]
      %v1586 = vld [vmem:[%s1575 + $0x28] sm:$0xf]
      %v1587 = vld [vmem:[%s1575 + $0x2c] sm:$0xf]
      %v1588 = vld [vmem:[%s1575 + $0x30] sm:$0xf]
      %v1589 = vld [vmem:[%s1575 + $0x34] sm:$0xf]
      %v1590 = vld [vmem:[%s1575 + $0x38] sm:$0xf]
      %v1591 = vld [vmem:[%s1575 + $0x3c] sm:$0xf]
      %v1593 = vunpack.c.l.b16 %v1574
      %v1594 = vpack.c.b16 %v1247, %v1593
      %vm1595 = vcmask 1046528
      %v1596 = vrot.slane %v1594, 1
      %v1597 = vrot.slane %v1266, 1
      %v1598 = vsel %vm1595, %v1596, %v1597
      %v1599 = vrot.slane %v1267, 1
      %v1600 = vsel %vm1595, %v1597, %v1599
      %v1601 = vrot.slane %v1268, 1
      %v1602 = vsel %vm1595, %v1599, %v1601
      %v1603 = vrot.slane %v1269, 1
      %v1604 = vsel %vm1595, %v1601, %v1603
      %v1605 = vrot.slane %v1270, 1
      %v1606 = vsel %vm1595, %v1603, %v1605
      %v1607 = vrot.slane %v1271, 1
      %v1608 = vsel %vm1595, %v1605, %v1607
      %v1609 = vrot.slane %v1272, 1
      %v1610 = vsel %vm1595, %v1607, %v1609
      %v1611 = vrot.slane %v1273, 1
      %v1612 = vsel %vm1595, %v1609, %v1611
      %v1613 = vrot.slane %v1274, 1
      %v1614 = vsel %vm1595, %v1611, %v1613
      %v1640 = vunpack.c.l.b16 %v1576
      %v1641 = vunpack.c.l.b16 %v1577
      %v1642 = vunpack.c.l.b16 %v1578
      %v1643 = vunpack.c.l.b16 %v1579
      %v1644 = vunpack.c.l.b16 %v1580
      %v1645 = vunpack.c.l.b16 %v1581
      %v1646 = vunpack.c.l.b16 %v1582
      %v1647 = vunpack.c.l.b16 %v1583
      %v1648 = vunpack.c.l.b16 %v1584
      %v1649 = vunpack.c.l.b16 %v1585
      %v1650 = vunpack.c.l.b16 %v1586
      %v1651 = vunpack.c.l.b16 %v1587
      %v1652 = vunpack.c.l.b16 %v1588
      %v1653 = vunpack.c.l.b16 %v1589
      %v1654 = vunpack.c.l.b16 %v1590
      %v1655 = vunpack.c.l.b16 %v1591
      %v1656 = vpack.c.b16 %v1641, %v1640
      %v1657 = vpack.c.b16 %v1643, %v1642
      %v1658 = vpack.c.b16 %v1645, %v1644
      %v1659 = vpack.c.b16 %v1647, %v1646
      %v1660 = vpack.c.b16 %v1649, %v1648
      %v1661 = vpack.c.b16 %v1651, %v1650
      %v1662 = vpack.c.b16 %v1653, %v1652
      %v1663 = vpack.c.b16 %v1655, %v1654
      %1672 = vmatpush.bf16.msra.mxu0 %v1663
      %1673 = vmatpush.bf16.msra.mxu0 %v1662
      %1674 = vmatpush.bf16.msra.mxu0 %v1661
      %1675 = vmatpush.bf16.msra.mxu0 %v1660
      %1676 = vmatpush.bf16.msra.mxu0 %v1659
      %1677 = vmatpush.bf16.msra.mxu0 %v1658
      %1678 = vmatpush.bf16.msra.mxu0 %v1657
      %1679 = vmatpush.bf16.msra.mxu0 %v1656
      %1680 = vmatmul.bf16.gmra.mxu0 %v1598
      %v1681 = vpop.f32.mrf.mxu0
      %v1682 = vadd.f32 0.0, %v1681
      %v1683 = vpop.f32.mrf.mxu0
      %v1684 = vadd.f32 0.0, %v1683
      %1685 = vmatmul.bf16.gmra.mxu0 %v1600
      %v1686 = vpop.f32.mrf.mxu0
      %v1687 = vadd.f32 0.0, %v1686
      %v1688 = vpop.f32.mrf.mxu0
      %v1689 = vadd.f32 0.0, %v1688
      %1690 = vmatmul.bf16.gmra.mxu0 %v1602
      %v1691 = vpop.f32.mrf.mxu0
      %v1692 = vadd.f32 0.0, %v1691
      %v1693 = vpop.f32.mrf.mxu0
      %v1694 = vadd.f32 0.0, %v1693
      %1695 = vmatmul.bf16.gmra.mxu0 %v1604
      %v1696 = vpop.f32.mrf.mxu0
      %v1697 = vadd.f32 0.0, %v1696
      %v1698 = vpop.f32.mrf.mxu0
      %v1699 = vadd.f32 0.0, %v1698
      %1700 = vmatmul.bf16.gmra.mxu0 %v1606
      %v1701 = vpop.f32.mrf.mxu0
      %v1702 = vadd.f32 0.0, %v1701
      %v1703 = vpop.f32.mrf.mxu0
      %v1704 = vadd.f32 0.0, %v1703
      %1705 = vmatmul.bf16.gmra.mxu0 %v1608
      %v1706 = vpop.f32.mrf.mxu0
      %v1707 = vadd.f32 0.0, %v1706
      %v1708 = vpop.f32.mrf.mxu0
      %v1709 = vadd.f32 0.0, %v1708
      %1710 = vmatmul.bf16.gmra.mxu0 %v1610
      %v1711 = vpop.f32.mrf.mxu0
      %v1712 = vadd.f32 0.0, %v1711
      %v1713 = vpop.f32.mrf.mxu0
      %v1714 = vadd.f32 0.0, %v1713
      %1715 = vmatmul.bf16.gmra.mxu0 %v1612
      %v1716 = vpop.f32.mrf.mxu0
      %v1717 = vadd.f32 0.0, %v1716
      %v1718 = vpop.f32.mrf.mxu0
      %v1719 = vadd.f32 0.0, %v1718
      %1720 = vmatmul.bf16.gmra.mxu0 %v1614
      %v1721 = vpop.f32.mrf.mxu0
      %v1722 = vadd.f32 0.0, %v1721
      %v1723 = vpop.f32.mrf.mxu0
      %v1724 = vadd.f32 0.0, %v1723
      %1725 = vdwg.mxu0
      %v1726 = vadd.f32 %v1530, %v1682
      %v1727 = vadd.f32 %v1532, %v1684
      %v1728 = vadd.f32 %v1535, %v1687
      %v1729 = vadd.f32 %v1537, %v1689
      %v1730 = vadd.f32 %v1540, %v1692
      %v1731 = vadd.f32 %v1542, %v1694
      %v1732 = vadd.f32 %v1545, %v1697
      %v1733 = vadd.f32 %v1547, %v1699
      %v1734 = vadd.f32 %v1550, %v1702
      %v1735 = vadd.f32 %v1552, %v1704
      %v1736 = vadd.f32 %v1555, %v1707
      %v1737 = vadd.f32 %v1557, %v1709
      %v1738 = vadd.f32 %v1560, %v1712
      %v1739 = vadd.f32 %v1562, %v1714
      %v1740 = vadd.f32 %v1565, %v1717
      %v1741 = vadd.f32 %v1567, %v1719
      %v1742 = vadd.f32 %v1570, %v1722
      %v1743 = vadd.f32 %v1572, %v1724
      %v1744 = vld [vmem:[#allocation2 + $0x8] sm:$0xe]
      %v1745 = vld [vmem:[#allocation2 + $0xc] sm:$0xf]
      %v1746 = vld [vmem:[#allocation2 + $0x10] sm:$0xf]
      %v1747 = vld [vmem:[#allocation2 + $0x14] sm:$0xf]
      %v1748 = vld [vmem:[#allocation2 + $0x18] sm:$0xf]
      %v1749 = vld [vmem:[#allocation2 + $0x1c] sm:$0xf]
      %v1750 = vld [vmem:[#allocation2 + $0x20] sm:$0xf]
      %v1751 = vld [vmem:[#allocation2 + $0x24] sm:$0xf]
      %v1752 = vld [vmem:[#allocation2 + $0x28] sm:$0xf]
      %v1753 = vld [vmem:[#allocation2 + $0x2c] sm:$0xf]
      %v1754 = vld [vmem:[#allocation2 + $0x30] sm:$0xf]
      %v1755 = vld [vmem:[#allocation2 + $0x34] sm:$0xf]
      %v1756 = vld [vmem:[#allocation2 + $0x38] sm:$0xf]
      %v1757 = vld [vmem:[#allocation2 + $0x3c] sm:$0xf]
      %v1758 = vld [vmem:[#allocation2 + $0x40] sm:$0xf]
      %v1759 = vld [vmem:[#allocation2 + $0x44] sm:$0xf]
      %v1760 = vld [vmem:[#allocation2 + $0x48] sm:$0xf]
      %v1761 = vld [vmem:[#allocation2 + $0x4c] sm:$0xf]
      %v1762 = vld [vmem:[#allocation2 + $0x50] sm:$0x1]
      %s1763 = scalar_lea.vmem %s5, 192
      %v1764 = vld [vmem:[%s1763] sm:$0xf]
      %v1765 = vld [vmem:[%s1763 + $0x4] sm:$0xf]
      %v1766 = vld [vmem:[%s1763 + $0x8] sm:$0xf]
      %v1767 = vld [vmem:[%s1763 + $0xc] sm:$0xf]
      %v1768 = vld [vmem:[%s1763 + $0x10] sm:$0xf]
      %v1769 = vld [vmem:[%s1763 + $0x14] sm:$0xf]
      %v1770 = vld [vmem:[%s1763 + $0x18] sm:$0xf]
      %v1771 = vld [vmem:[%s1763 + $0x1c] sm:$0xf]
      %v1772 = vld [vmem:[%s1763 + $0x20] sm:$0xf]
      %v1773 = vld [vmem:[%s1763 + $0x24] sm:$0xf]
      %v1774 = vld [vmem:[%s1763 + $0x28] sm:$0xf]
      %v1775 = vld [vmem:[%s1763 + $0x2c] sm:$0xf]
      %v1776 = vld [vmem:[%s1763 + $0x30] sm:$0xf]
      %v1777 = vld [vmem:[%s1763 + $0x34] sm:$0xf]
      %v1778 = vld [vmem:[%s1763 + $0x38] sm:$0xf]
      %v1779 = vld [vmem:[%s1763 + $0x3c] sm:$0xf]
      %v1799 = vunpack.c.l.b16 %v1744
      %v1800 = vunpack.c.l.b16 %v1745
      %v1801 = vunpack.c.l.b16 %v1746
      %v1802 = vunpack.c.l.b16 %v1747
      %v1803 = vunpack.c.l.b16 %v1748
      %v1804 = vunpack.c.l.b16 %v1749
      %v1805 = vunpack.c.l.b16 %v1750
      %v1806 = vunpack.c.l.b16 %v1751
      %v1807 = vunpack.c.l.b16 %v1752
      %v1808 = vunpack.c.l.b16 %v1753
      %v1809 = vunpack.c.l.b16 %v1754
      %v1810 = vunpack.c.l.b16 %v1755
      %v1811 = vunpack.c.l.b16 %v1756
      %v1812 = vunpack.c.l.b16 %v1757
      %v1813 = vunpack.c.l.b16 %v1758
      %v1814 = vunpack.c.l.b16 %v1759
      %v1815 = vunpack.c.l.b16 %v1760
      %v1816 = vunpack.c.l.b16 %v1761
      %v1817 = vunpack.c.l.b16 %v1762
      %v1818 = vpack.c.b16 %v1800, %v1799
      %v1819 = vpack.c.b16 %v1802, %v1801
      %v1820 = vpack.c.b16 %v1804, %v1803
      %v1821 = vpack.c.b16 %v1806, %v1805
      %v1822 = vpack.c.b16 %v1808, %v1807
      %v1823 = vpack.c.b16 %v1810, %v1809
      %v1824 = vpack.c.b16 %v1812, %v1811
      %v1825 = vpack.c.b16 %v1814, %v1813
      %v1826 = vpack.c.b16 %v1816, %v1815
      %v1827 = vpack.c.b16 %v1817, %v1817
      %v1828 = vrot.slane %v1818, 1
      %v1829 = vrot.slane %v1819, 1
      %v1830 = vsel %vm1595, %v1828, %v1829
      %v1831 = vrot.slane %v1820, 1
      %v1832 = vsel %vm1595, %v1829, %v1831
      %v1833 = vrot.slane %v1821, 1
      %v1834 = vsel %vm1595, %v1831, %v1833
      %v1835 = vrot.slane %v1822, 1
      %v1836 = vsel %vm1595, %v1833, %v1835
      %v1837 = vrot.slane %v1823, 1
      %v1838 = vsel %vm1595, %v1835, %v1837
      %v1839 = vrot.slane %v1824, 1
      %v1840 = vsel %vm1595, %v1837, %v1839
      %v1841 = vrot.slane %v1825, 1
      %v1842 = vsel %vm1595, %v1839, %v1841
      %v1843 = vrot.slane %v1826, 1
      %v1844 = vsel %vm1595, %v1841, %v1843
      %v1845 = vrot.slane %v1827, 1
      %v1846 = vsel %vm1595, %v1843, %v1845
      %v1872 = vunpack.c.l.b16 %v1764
      %v1873 = vunpack.c.l.b16 %v1765
      %v1874 = vunpack.c.l.b16 %v1766
      %v1875 = vunpack.c.l.b16 %v1767
      %v1876 = vunpack.c.l.b16 %v1768
      %v1877 = vunpack.c.l.b16 %v1769
      %v1878 = vunpack.c.l.b16 %v1770
      %v1879 = vunpack.c.l.b16 %v1771
      %v1880 = vunpack.c.l.b16 %v1772
      %v1881 = vunpack.c.l.b16 %v1773
      %v1882 = vunpack.c.l.b16 %v1774
      %v1883 = vunpack.c.l.b16 %v1775
      %v1884 = vunpack.c.l.b16 %v1776
      %v1885 = vunpack.c.l.b16 %v1777
      %v1886 = vunpack.c.l.b16 %v1778
      %v1887 = vunpack.c.l.b16 %v1779
      %v1888 = vpack.c.b16 %v1873, %v1872
      %v1889 = vpack.c.b16 %v1875, %v1874
      %v1890 = vpack.c.b16 %v1877, %v1876
      %v1891 = vpack.c.b16 %v1879, %v1878
      %v1892 = vpack.c.b16 %v1881, %v1880
      %v1893 = vpack.c.b16 %v1883, %v1882
      %v1894 = vpack.c.b16 %v1885, %v1884
      %v1895 = vpack.c.b16 %v1887, %v1886
      %1904 = vmatpush.bf16.msra.mxu0 %v1895
      %1905 = vmatpush.bf16.msra.mxu0 %v1894
      %1906 = vmatpush.bf16.msra.mxu0 %v1893
      %1907 = vmatpush.bf16.msra.mxu0 %v1892
      %1908 = vmatpush.bf16.msra.mxu0 %v1891
      %1909 = vmatpush.bf16.msra.mxu0 %v1890
      %1910 = vmatpush.bf16.msra.mxu0 %v1889
      %1911 = vmatpush.bf16.msra.mxu0 %v1888
      %1912 = vmatmul.bf16.gmra.mxu0 %v1830
      %v1913 = vpop.f32.mrf.mxu0
      %v1914 = vadd.f32 0.0, %v1913
      %v1915 = vpop.f32.mrf.mxu0
      %v1916 = vadd.f32 0.0, %v1915
      %1917 = vmatmul.bf16.gmra.mxu0 %v1832
      %v1918 = vpop.f32.mrf.mxu0
      %v1919 = vadd.f32 0.0, %v1918
      %v1920 = vpop.f32.mrf.mxu0
      %v1921 = vadd.f32 0.0, %v1920
      %1922 = vmatmul.bf16.gmra.mxu0 %v1834
      %v1923 = vpop.f32.mrf.mxu0
      %v1924 = vadd.f32 0.0, %v1923
      %v1925 = vpop.f32.mrf.mxu0
      %v1926 = vadd.f32 0.0, %v1925
      %1927 = vmatmul.bf16.gmra.mxu0 %v1836
      %v1928 = vpop.f32.mrf.mxu0
      %v1929 = vadd.f32 0.0, %v1928
      %v1930 = vpop.f32.mrf.mxu0
      %v1931 = vadd.f32 0.0, %v1930
      %1932 = vmatmul.bf16.gmra.mxu0 %v1838
      %v1933 = vpop.f32.mrf.mxu0
      %v1934 = vadd.f32 0.0, %v1933
      %v1935 = vpop.f32.mrf.mxu0
      %v1936 = vadd.f32 0.0, %v1935
      %1937 = vmatmul.bf16.gmra.mxu0 %v1840
      %v1938 = vpop.f32.mrf.mxu0
      %v1939 = vadd.f32 0.0, %v1938
      %v1940 = vpop.f32.mrf.mxu0
      %v1941 = vadd.f32 0.0, %v1940
      %1942 = vmatmul.bf16.gmra.mxu0 %v1842
      %v1943 = vpop.f32.mrf.mxu0
      %v1944 = vadd.f32 0.0, %v1943
      %v1945 = vpop.f32.mrf.mxu0
      %v1946 = vadd.f32 0.0, %v1945
      %1947 = vmatmul.bf16.gmra.mxu0 %v1844
      %v1948 = vpop.f32.mrf.mxu0
      %v1949 = vadd.f32 0.0, %v1948
      %v1950 = vpop.f32.mrf.mxu0
      %v1951 = vadd.f32 0.0, %v1950
      %1952 = vmatmul.bf16.gmra.mxu0 %v1846
      %v1953 = vpop.f32.mrf.mxu0
      %v1954 = vadd.f32 0.0, %v1953
      %v1955 = vpop.f32.mrf.mxu0
      %v1956 = vadd.f32 0.0, %v1955
      %1957 = vdwg.mxu0
      %v1958 = vadd.f32 %v1726, %v1914
      %v1959 = vadd.f32 %v1727, %v1916
      %v1960 = vadd.f32 %v1728, %v1919
      %v1961 = vadd.f32 %v1729, %v1921
      %v1962 = vadd.f32 %v1730, %v1924
      %v1963 = vadd.f32 %v1731, %v1926
      %v1964 = vadd.f32 %v1732, %v1929
      %v1965 = vadd.f32 %v1733, %v1931
      %v1966 = vadd.f32 %v1734, %v1934
      %v1967 = vadd.f32 %v1735, %v1936
      %v1968 = vadd.f32 %v1736, %v1939
      %v1969 = vadd.f32 %v1737, %v1941
      %v1970 = vadd.f32 %v1738, %v1944
      %v1971 = vadd.f32 %v1739, %v1946
      %v1972 = vadd.f32 %v1740, %v1949
      %v1973 = vadd.f32 %v1741, %v1951
      %v1974 = vadd.f32 %v1742, %v1954
      %v1975 = vadd.f32 %v1743, %v1956
      %v1976 = vld [vmem:[#allocation2 + $0x50] sm:$0x3]
      %s1977 = scalar_lea.vmem %s5, 256
      %v1978 = vld [vmem:[%s1977] sm:$0xf]
      %v1979 = vld [vmem:[%s1977 + $0x4] sm:$0xf]
      %v1980 = vld [vmem:[%s1977 + $0x8] sm:$0xf]
      %v1981 = vld [vmem:[%s1977 + $0xc] sm:$0xf]
      %v1982 = vld [vmem:[%s1977 + $0x10] sm:$0xf]
      %v1983 = vld [vmem:[%s1977 + $0x14] sm:$0xf]
      %v1984 = vld [vmem:[%s1977 + $0x18] sm:$0xf]
      %v1985 = vld [vmem:[%s1977 + $0x1c] sm:$0xf]
      %v1986 = vld [vmem:[%s1977 + $0x20] sm:$0xf]
      %v1987 = vld [vmem:[%s1977 + $0x24] sm:$0xf]
      %v1988 = vld [vmem:[%s1977 + $0x28] sm:$0xf]
      %v1989 = vld [vmem:[%s1977 + $0x2c] sm:$0xf]
      %v1990 = vld [vmem:[%s1977 + $0x30] sm:$0xf]
      %v1991 = vld [vmem:[%s1977 + $0x34] sm:$0xf]
      %v1992 = vld [vmem:[%s1977 + $0x38] sm:$0xf]
      %v1993 = vld [vmem:[%s1977 + $0x3c] sm:$0xf]
      %v1995 = vunpack.c.l.b16 %v1976
      %v1996 = vpack.c.b16 %v1995, %v1995
      %vm1997 = vsmask.f32 6400
      %v1999 = vshrl.u32 %v1818, 16
      %v2001 = vrot.slane %v1999, 1
      %v2002 = vshll.u32 %v1818, 16
      %v2004 = vrot.slane %v2002, 2
      %v2005 = vor.u32 %v2001, %v2004
      %v2007 = vshrl.u32 %v1819, 16
      %v2009 = vrot.slane %v2007, 1
      %v2010 = vshll.u32 %v1819, 16
      %v2012 = vrot.slane %v2010, 2
      %v2013 = vor.u32 %v2009, %v2012
      %v2014 = vsel %vm1997, %v2005, %v2013
      %v2016 = vshrl.u32 %v1820, 16
      %v2018 = vrot.slane %v2016, 1
      %v2019 = vshll.u32 %v1820, 16
      %v2021 = vrot.slane %v2019, 2
      %v2022 = vor.u32 %v2018, %v2021
      %v2023 = vsel %vm1997, %v2013, %v2022
      %v2025 = vshrl.u32 %v1821, 16
      %v2027 = vrot.slane %v2025, 1
      %v2028 = vshll.u32 %v1821, 16
      %v2030 = vrot.slane %v2028, 2
      %v2031 = vor.u32 %v2027, %v2030
      %v2032 = vsel %vm1997, %v2022, %v2031
      %v2034 = vshrl.u32 %v1822, 16
      %v2036 = vrot.slane %v2034, 1
      %v2037 = vshll.u32 %v1822, 16
      %v2039 = vrot.slane %v2037, 2
      %v2040 = vor.u32 %v2036, %v2039
      %v2041 = vsel %vm1997, %v2031, %v2040
      %v2043 = vshrl.u32 %v1823, 16
      %v2045 = vrot.slane %v2043, 1
      %v2046 = vshll.u32 %v1823, 16
      %v2048 = vrot.slane %v2046, 2
      %v2049 = vor.u32 %v2045, %v2048
      %v2050 = vsel %vm1997, %v2040, %v2049
      %v2052 = vshrl.u32 %v1824, 16
      %v2054 = vrot.slane %v2052, 1
      %v2055 = vshll.u32 %v1824, 16
      %v2057 = vrot.slane %v2055, 2
      %v2058 = vor.u32 %v2054, %v2057
      %v2059 = vsel %vm1997, %v2049, %v2058
      %v2061 = vshrl.u32 %v1825, 16
      %v2063 = vrot.slane %v2061, 1
      %v2064 = vshll.u32 %v1825, 16
      %v2066 = vrot.slane %v2064, 2
      %v2067 = vor.u32 %v2063, %v2066
      %v2068 = vsel %vm1997, %v2058, %v2067
      %v2070 = vshrl.u32 %v1826, 16
      %v2072 = vrot.slane %v2070, 1
      %v2073 = vshll.u32 %v1826, 16
      %v2075 = vrot.slane %v2073, 2
      %v2076 = vor.u32 %v2072, %v2075
      %v2077 = vsel %vm1997, %v2067, %v2076
      %v2079 = vshrl.u32 %v1996, 16
      %v2081 = vrot.slane %v2079, 1
      %v2082 = vshll.u32 %v1996, 16
      %v2084 = vrot.slane %v2082, 2
      %v2085 = vor.u32 %v2081, %v2084
      %v2086 = vsel %vm1997, %v2076, %v2085
      %v2112 = vunpack.c.l.b16 %v1978
      %v2113 = vunpack.c.l.b16 %v1979
      %v2114 = vunpack.c.l.b16 %v1980
      %v2115 = vunpack.c.l.b16 %v1981
      %v2116 = vunpack.c.l.b16 %v1982
      %v2117 = vunpack.c.l.b16 %v1983
      %v2118 = vunpack.c.l.b16 %v1984
      %v2119 = vunpack.c.l.b16 %v1985
      %v2120 = vunpack.c.l.b16 %v1986
      %v2121 = vunpack.c.l.b16 %v1987
      %v2122 = vunpack.c.l.b16 %v1988
      %v2123 = vunpack.c.l.b16 %v1989
      %v2124 = vunpack.c.l.b16 %v1990
      %v2125 = vunpack.c.l.b16 %v1991
      %v2126 = vunpack.c.l.b16 %v1992
      %v2127 = vunpack.c.l.b16 %v1993
      %v2128 = vpack.c.b16 %v2113, %v2112
      %v2129 = vpack.c.b16 %v2115, %v2114
      %v2130 = vpack.c.b16 %v2117, %v2116
      %v2131 = vpack.c.b16 %v2119, %v2118
      %v2132 = vpack.c.b16 %v2121, %v2120
      %v2133 = vpack.c.b16 %v2123, %v2122
      %v2134 = vpack.c.b16 %v2125, %v2124
      %v2135 = vpack.c.b16 %v2127, %v2126
      %2144 = vmatpush.bf16.msra.mxu0 %v2135
      %2145 = vmatpush.bf16.msra.mxu0 %v2134
      %2146 = vmatpush.bf16.msra.mxu0 %v2133
      %2147 = vmatpush.bf16.msra.mxu0 %v2132
      %2148 = vmatpush.bf16.msra.mxu0 %v2131
      %2149 = vmatpush.bf16.msra.mxu0 %v2130
      %2150 = vmatpush.bf16.msra.mxu0 %v2129
      %2151 = vmatpush.bf16.msra.mxu0 %v2128
      %2152 = vmatmul.bf16.gmra.mxu0 %v2014
      %v2153 = vpop.f32.mrf.mxu0
      %v2154 = vadd.f32 0.0, %v2153
      %v2155 = vpop.f32.mrf.mxu0
      %v2156 = vadd.f32 0.0, %v2155
      %2157 = vmatmul.bf16.gmra.mxu0 %v2023
      %v2158 = vpop.f32.mrf.mxu0
      %v2159 = vadd.f32 0.0, %v2158
      %v2160 = vpop.f32.mrf.mxu0
      %v2161 = vadd.f32 0.0, %v2160
      %2162 = vmatmul.bf16.gmra.mxu0 %v2032
      %v2163 = vpop.f32.mrf.mxu0
      %v2164 = vadd.f32 0.0, %v2163
      %v2165 = vpop.f32.mrf.mxu0
      %v2166 = vadd.f32 0.0, %v2165
      %2167 = vmatmul.bf16.gmra.mxu0 %v2041
      %v2168 = vpop.f32.mrf.mxu0
      %v2169 = vadd.f32 0.0, %v2168
      %v2170 = vpop.f32.mrf.mxu0
      %v2171 = vadd.f32 0.0, %v2170
      %2172 = vmatmul.bf16.gmra.mxu0 %v2050
      %v2173 = vpop.f32.mrf.mxu0
      %v2174 = vadd.f32 0.0, %v2173
      %v2175 = vpop.f32.mrf.mxu0
      %v2176 = vadd.f32 0.0, %v2175
      %2177 = vmatmul.bf16.gmra.mxu0 %v2059
      %v2178 = vpop.f32.mrf.mxu0
      %v2179 = vadd.f32 0.0, %v2178
      %v2180 = vpop.f32.mrf.mxu0
      %v2181 = vadd.f32 0.0, %v2180
      %2182 = vmatmul.bf16.gmra.mxu0 %v2068
      %v2183 = vpop.f32.mrf.mxu0
      %v2184 = vadd.f32 0.0, %v2183
      %v2185 = vpop.f32.mrf.mxu0
      %v2186 = vadd.f32 0.0, %v2185
      %2187 = vmatmul.bf16.gmra.mxu0 %v2077
      %v2188 = vpop.f32.mrf.mxu0
      %v2189 = vadd.f32 0.0, %v2188
      %v2190 = vpop.f32.mrf.mxu0
      %v2191 = vadd.f32 0.0, %v2190
      %2192 = vmatmul.bf16.gmra.mxu0 %v2086
      %v2193 = vpop.f32.mrf.mxu0
      %v2194 = vadd.f32 0.0, %v2193
      %v2195 = vpop.f32.mrf.mxu0
      %v2196 = vadd.f32 0.0, %v2195
      %2197 = vdwg.mxu0
      %v2198 = vadd.f32 %v1958, %v2154
      %v2199 = vadd.f32 %v1959, %v2156
      %v2200 = vadd.f32 %v1960, %v2159
      %v2201 = vadd.f32 %v1961, %v2161
      %v2202 = vadd.f32 %v1962, %v2164
      %v2203 = vadd.f32 %v1963, %v2166
      %v2204 = vadd.f32 %v1964, %v2169
      %v2205 = vadd.f32 %v1965, %v2171
      %v2206 = vadd.f32 %v1966, %v2174
      %v2207 = vadd.f32 %v1967, %v2176
      %v2208 = vadd.f32 %v1968, %v2179
      %v2209 = vadd.f32 %v1969, %v2181
      %v2210 = vadd.f32 %v1970, %v2184
      %v2211 = vadd.f32 %v1971, %v2186
      %v2212 = vadd.f32 %v1972, %v2189
      %v2213 = vadd.f32 %v1973, %v2191
      %v2214 = vadd.f32 %v1974, %v2194
      %v2215 = vadd.f32 %v1975, %v2196
      %v2216 = vld [vmem:[#allocation2 + $0x8] sm:$0xc]
      %s2217 = scalar_lea.vmem %s5, 320
      %v2218 = vld [vmem:[%s2217] sm:$0xf]
      %v2219 = vld [vmem:[%s2217 + $0x4] sm:$0xf]
      %v2220 = vld [vmem:[%s2217 + $0x8] sm:$0xf]
      %v2221 = vld [vmem:[%s2217 + $0xc] sm:$0xf]
      %v2222 = vld [vmem:[%s2217 + $0x10] sm:$0xf]
      %v2223 = vld [vmem:[%s2217 + $0x14] sm:$0xf]
      %v2224 = vld [vmem:[%s2217 + $0x18] sm:$0xf]
      %v2225 = vld [vmem:[%s2217 + $0x1c] sm:$0xf]
      %v2226 = vld [vmem:[%s2217 + $0x20] sm:$0xf]
      %v2227 = vld [vmem:[%s2217 + $0x24] sm:$0xf]
      %v2228 = vld [vmem:[%s2217 + $0x28] sm:$0xf]
      %v2229 = vld [vmem:[%s2217 + $0x2c] sm:$0xf]
      %v2230 = vld [vmem:[%s2217 + $0x30] sm:$0xf]
      %v2231 = vld [vmem:[%s2217 + $0x34] sm:$0xf]
      %v2232 = vld [vmem:[%s2217 + $0x38] sm:$0xf]
      %v2233 = vld [vmem:[%s2217 + $0x3c] sm:$0xf]
      %v2235 = vunpack.c.l.b16 %v2216
      %v2236 = vpack.c.b16 %v1800, %v2235
      %vm2237 = vcmask 1045504
      %v2238 = vrot.slane %v2236, 2
      %v2239 = vrot.slane %v1819, 2
      %v2240 = vsel %vm2237, %v2238, %v2239
      %v2241 = vrot.slane %v1820, 2
      %v2242 = vsel %vm2237, %v2239, %v2241
      %v2243 = vrot.slane %v1821, 2
      %v2244 = vsel %vm2237, %v2241, %v2243
      %v2245 = vrot.slane %v1822, 2
      %v2246 = vsel %vm2237, %v2243, %v2245
      %v2247 = vrot.slane %v1823, 2
      %v2248 = vsel %vm2237, %v2245, %v2247
      %v2249 = vrot.slane %v1824, 2
      %v2250 = vsel %vm2237, %v2247, %v2249
      %v2251 = vrot.slane %v1825, 2
      %v2252 = vsel %vm2237, %v2249, %v2251
      %v2253 = vrot.slane %v1826, 2
      %v2254 = vsel %vm2237, %v2251, %v2253
      %v2255 = vrot.slane %v1996, 2
      %v2256 = vsel %vm2237, %v2253, %v2255
      %v2282 = vunpack.c.l.b16 %v2218
      %v2283 = vunpack.c.l.b16 %v2219
      %v2284 = vunpack.c.l.b16 %v2220
      %v2285 = vunpack.c.l.b16 %v2221
      %v2286 = vunpack.c.l.b16 %v2222
      %v2287 = vunpack.c.l.b16 %v2223
      %v2288 = vunpack.c.l.b16 %v2224
      %v2289 = vunpack.c.l.b16 %v2225
      %v2290 = vunpack.c.l.b16 %v2226
      %v2291 = vunpack.c.l.b16 %v2227
      %v2292 = vunpack.c.l.b16 %v2228
      %v2293 = vunpack.c.l.b16 %v2229
      %v2294 = vunpack.c.l.b16 %v2230
      %v2295 = vunpack.c.l.b16 %v2231
      %v2296 = vunpack.c.l.b16 %v2232
      %v2297 = vunpack.c.l.b16 %v2233
      %v2298 = vpack.c.b16 %v2283, %v2282
      %v2299 = vpack.c.b16 %v2285, %v2284
      %v2300 = vpack.c.b16 %v2287, %v2286
      %v2301 = vpack.c.b16 %v2289, %v2288
      %v2302 = vpack.c.b16 %v2291, %v2290
      %v2303 = vpack.c.b16 %v2293, %v2292
      %v2304 = vpack.c.b16 %v2295, %v2294
      %v2305 = vpack.c.b16 %v2297, %v2296
      %2314 = vmatpush.bf16.msra.mxu0 %v2305
      %2315 = vmatpush.bf16.msra.mxu0 %v2304
      %2316 = vmatpush.bf16.msra.mxu0 %v2303
      %2317 = vmatpush.bf16.msra.mxu0 %v2302
      %2318 = vmatpush.bf16.msra.mxu0 %v2301
      %2319 = vmatpush.bf16.msra.mxu0 %v2300
      %2320 = vmatpush.bf16.msra.mxu0 %v2299
      %2321 = vmatpush.bf16.msra.mxu0 %v2298
      %2322 = vmatmul.bf16.gmra.mxu0 %v2240
      %v2323 = vpop.f32.mrf.mxu0
      %v2324 = vadd.f32 0.0, %v2323
      %v2325 = vpop.f32.mrf.mxu0
      %v2326 = vadd.f32 0.0, %v2325
      %2327 = vmatmul.bf16.gmra.mxu0 %v2242
      %v2328 = vpop.f32.mrf.mxu0
      %v2329 = vadd.f32 0.0, %v2328
      %v2330 = vpop.f32.mrf.mxu0
      %v2331 = vadd.f32 0.0, %v2330
      %2332 = vmatmul.bf16.gmra.mxu0 %v2244
      %v2333 = vpop.f32.mrf.mxu0
      %v2334 = vadd.f32 0.0, %v2333
      %v2335 = vpop.f32.mrf.mxu0
      %v2336 = vadd.f32 0.0, %v2335
      %2337 = vmatmul.bf16.gmra.mxu0 %v2246
      %v2338 = vpop.f32.mrf.mxu0
      %v2339 = vadd.f32 0.0, %v2338
      %v2340 = vpop.f32.mrf.mxu0
      %v2341 = vadd.f32 0.0, %v2340
      %2342 = vmatmul.bf16.gmra.mxu0 %v2248
      %v2343 = vpop.f32.mrf.mxu0
      %v2344 = vadd.f32 0.0, %v2343
      %v2345 = vpop.f32.mrf.mxu0
      %v2346 = vadd.f32 0.0, %v2345
      %2347 = vmatmul.bf16.gmra.mxu0 %v2250
      %v2348 = vpop.f32.mrf.mxu0
      %v2349 = vadd.f32 0.0, %v2348
      %v2350 = vpop.f32.mrf.mxu0
      %v2351 = vadd.f32 0.0, %v2350
      %2352 = vmatmul.bf16.gmra.mxu0 %v2252
      %v2353 = vpop.f32.mrf.mxu0
      %v2354 = vadd.f32 0.0, %v2353
      %v2355 = vpop.f32.mrf.mxu0
      %v2356 = vadd.f32 0.0, %v2355
      %2357 = vmatmul.bf16.gmra.mxu0 %v2254
      %v2358 = vpop.f32.mrf.mxu0
      %v2359 = vadd.f32 0.0, %v2358
      %v2360 = vpop.f32.mrf.mxu0
      %v2361 = vadd.f32 0.0, %v2360
      %2362 = vmatmul.bf16.gmra.mxu0 %v2256
      %v2363 = vpop.f32.mrf.mxu0
      %v2364 = vadd.f32 0.0, %v2363
      %v2365 = vpop.f32.mrf.mxu0
      %v2366 = vadd.f32 0.0, %v2365
      %2367 = vdwg.mxu0
      %v2368 = vadd.f32 %v2198, %v2324
      %v2369 = vadd.f32 %v2199, %v2326
      %v2370 = vadd.f32 %v2200, %v2329
      %v2371 = vadd.f32 %v2201, %v2331
      %v2372 = vadd.f32 %v2202, %v2334
      %v2373 = vadd.f32 %v2203, %v2336
      %v2374 = vadd.f32 %v2204, %v2339
      %v2375 = vadd.f32 %v2205, %v2341
      %v2376 = vadd.f32 %v2206, %v2344
      %v2377 = vadd.f32 %v2207, %v2346
      %v2378 = vadd.f32 %v2208, %v2349
      %v2379 = vadd.f32 %v2209, %v2351
      %v2380 = vadd.f32 %v2210, %v2354
      %v2381 = vadd.f32 %v2211, %v2356
      %v2382 = vadd.f32 %v2212, %v2359
      %v2383 = vadd.f32 %v2213, %v2361
      %v2384 = vadd.f32 %v2214, %v2364
      %v2385 = vadd.f32 %v2215, %v2366
      %v2386 = vld [vmem:[#allocation2 + $0x10] sm:$0xc]
      %v2387 = vld [vmem:[#allocation2 + $0x14] sm:$0xf]
      %v2388 = vld [vmem:[#allocation2 + $0x18] sm:$0xf]
      %v2389 = vld [vmem:[#allocation2 + $0x1c] sm:$0xf]
      %v2390 = vld [vmem:[#allocation2 + $0x20] sm:$0xf]
      %v2391 = vld [vmem:[#allocation2 + $0x24] sm:$0xf]
      %v2392 = vld [vmem:[#allocation2 + $0x28] sm:$0xf]
      %v2393 = vld [vmem:[#allocation2 + $0x2c] sm:$0xf]
      %v2394 = vld [vmem:[#allocation2 + $0x30] sm:$0xf]
      %v2395 = vld [vmem:[#allocation2 + $0x34] sm:$0xf]
      %v2396 = vld [vmem:[#allocation2 + $0x38] sm:$0xf]
      %v2397 = vld [vmem:[#allocation2 + $0x3c] sm:$0xf]
      %v2398 = vld [vmem:[#allocation2 + $0x40] sm:$0xf]
      %v2399 = vld [vmem:[#allocation2 + $0x44] sm:$0xf]
      %v2400 = vld [vmem:[#allocation2 + $0x48] sm:$0xf]
      %v2401 = vld [vmem:[#allocation2 + $0x4c] sm:$0xf]
      %v2402 = vld [vmem:[#allocation2 + $0x50] sm:$0xf]
      %v2403 = vld [vmem:[#allocation2 + $0x54] sm:$0xf]
      %v2404 = vld [vmem:[#allocation2 + $0x58] sm:$0x3]
      %s2405 = scalar_lea.vmem %s5, 384
      %v2406 = vld [vmem:[%s2405] sm:$0xf]
      %v2407 = vld [vmem:[%s2405 + $0x4] sm:$0xf]
      %v2408 = vld [vmem:[%s2405 + $0x8] sm:$0xf]
      %v2409 = vld [vmem:[%s2405 + $0xc] sm:$0xf]
      %v2410 = vld [vmem:[%s2405 + $0x10] sm:$0xf]
      %v2411 = vld [vmem:[%s2405 + $0x14] sm:$0xf]
      %v2412 = vld [vmem:[%s2405 + $0x18] sm:$0xf]
      %v2413 = vld [vmem:[%s2405 + $0x1c] sm:$0xf]
      %v2414 = vld [vmem:[%s2405 + $0x20] sm:$0xf]
      %v2415 = vld [vmem:[%s2405 + $0x24] sm:$0xf]
      %v2416 = vld [vmem:[%s2405 + $0x28] sm:$0xf]
      %v2417 = vld [vmem:[%s2405 + $0x2c] sm:$0xf]
      %v2418 = vld [vmem:[%s2405 + $0x30] sm:$0xf]
      %v2419 = vld [vmem:[%s2405 + $0x34] sm:$0xf]
      %v2420 = vld [vmem:[%s2405 + $0x38] sm:$0xf]
      %v2421 = vld [vmem:[%s2405 + $0x3c] sm:$0xf]
      %v2441 = vunpack.c.l.b16 %v2386
      %v2442 = vunpack.c.l.b16 %v2387
      %v2443 = vunpack.c.l.b16 %v2388
      %v2444 = vunpack.c.l.b16 %v2389
      %v2445 = vunpack.c.l.b16 %v2390
      %v2446 = vunpack.c.l.b16 %v2391
      %v2447 = vunpack.c.l.b16 %v2392
      %v2448 = vunpack.c.l.b16 %v2393
      %v2449 = vunpack.c.l.b16 %v2394
      %v2450 = vunpack.c.l.b16 %v2395
      %v2451 = vunpack.c.l.b16 %v2396
      %v2452 = vunpack.c.l.b16 %v2397
      %v2453 = vunpack.c.l.b16 %v2398
      %v2454 = vunpack.c.l.b16 %v2399
      %v2455 = vunpack.c.l.b16 %v2400
      %v2456 = vunpack.c.l.b16 %v2401
      %v2457 = vunpack.c.l.b16 %v2402
      %v2458 = vunpack.c.l.b16 %v2403
      %v2459 = vunpack.c.l.b16 %v2404
      %v2460 = vpack.c.b16 %v2442, %v2441
      %v2461 = vpack.c.b16 %v2444, %v2443
      %v2462 = vpack.c.b16 %v2446, %v2445
      %v2463 = vpack.c.b16 %v2448, %v2447
      %v2464 = vpack.c.b16 %v2450, %v2449
      %v2465 = vpack.c.b16 %v2452, %v2451
      %v2466 = vpack.c.b16 %v2454, %v2453
      %v2467 = vpack.c.b16 %v2456, %v2455
      %v2468 = vpack.c.b16 %v2458, %v2457
      %v2469 = vpack.c.b16 %v2459, %v2459
      %v2470 = vrot.slane %v2460, 2
      %v2471 = vrot.slane %v2461, 2
      %v2472 = vsel %vm2237, %v2470, %v2471
      %v2473 = vrot.slane %v2462, 2
      %v2474 = vsel %vm2237, %v2471, %v2473
      %v2475 = vrot.slane %v2463, 2
      %v2476 = vsel %vm2237, %v2473, %v2475
      %v2477 = vrot.slane %v2464, 2
      %v2478 = vsel %vm2237, %v2475, %v2477
      %v2479 = vrot.slane %v2465, 2
      %v2480 = vsel %vm2237, %v2477, %v2479
      %v2481 = vrot.slane %v2466, 2
      %v2482 = vsel %vm2237, %v2479, %v2481
      %v2483 = vrot.slane %v2467, 2
      %v2484 = vsel %vm2237, %v2481, %v2483
      %v2485 = vrot.slane %v2468, 2
      %v2486 = vsel %vm2237, %v2483, %v2485
      %v2487 = vrot.slane %v2469, 2
      %v2488 = vsel %vm2237, %v2485, %v2487
      %v2514 = vunpack.c.l.b16 %v2406
      %v2515 = vunpack.c.l.b16 %v2407
      %v2516 = vunpack.c.l.b16 %v2408
      %v2517 = vunpack.c.l.b16 %v2409
      %v2518 = vunpack.c.l.b16 %v2410
      %v2519 = vunpack.c.l.b16 %v2411
      %v2520 = vunpack.c.l.b16 %v2412
      %v2521 = vunpack.c.l.b16 %v2413
      %v2522 = vunpack.c.l.b16 %v2414
      %v2523 = vunpack.c.l.b16 %v2415
      %v2524 = vunpack.c.l.b16 %v2416
      %v2525 = vunpack.c.l.b16 %v2417
      %v2526 = vunpack.c.l.b16 %v2418
      %v2527 = vunpack.c.l.b16 %v2419
      %v2528 = vunpack.c.l.b16 %v2420
      %v2529 = vunpack.c.l.b16 %v2421
      %v2530 = vpack.c.b16 %v2515, %v2514
      %v2531 = vpack.c.b16 %v2517, %v2516
      %v2532 = vpack.c.b16 %v2519, %v2518
      %v2533 = vpack.c.b16 %v2521, %v2520
      %v2534 = vpack.c.b16 %v2523, %v2522
      %v2535 = vpack.c.b16 %v2525, %v2524
      %v2536 = vpack.c.b16 %v2527, %v2526
      %v2537 = vpack.c.b16 %v2529, %v2528
      %2546 = vmatpush.bf16.msra.mxu0 %v2537
      %2547 = vmatpush.bf16.msra.mxu0 %v2536
      %2548 = vmatpush.bf16.msra.mxu0 %v2535
      %2549 = vmatpush.bf16.msra.mxu0 %v2534
      %2550 = vmatpush.bf16.msra.mxu0 %v2533
      %2551 = vmatpush.bf16.msra.mxu0 %v2532
      %2552 = vmatpush.bf16.msra.mxu0 %v2531
      %2553 = vmatpush.bf16.msra.mxu0 %v2530
      %2554 = vmatmul.bf16.gmra.mxu0 %v2472
      %v2555 = vpop.f32.mrf.mxu0
      %v2556 = vadd.f32 0.0, %v2555
      %v2557 = vpop.f32.mrf.mxu0
      %v2558 = vadd.f32 0.0, %v2557
      %2559 = vmatmul.bf16.gmra.mxu0 %v2474
      %v2560 = vpop.f32.mrf.mxu0
      %v2561 = vadd.f32 0.0, %v2560
      %v2562 = vpop.f32.mrf.mxu0
      %v2563 = vadd.f32 0.0, %v2562
      %2564 = vmatmul.bf16.gmra.mxu0 %v2476
      %v2565 = vpop.f32.mrf.mxu0
      %v2566 = vadd.f32 0.0, %v2565
      %v2567 = vpop.f32.mrf.mxu0
      %v2568 = vadd.f32 0.0, %v2567
      %2569 = vmatmul.bf16.gmra.mxu0 %v2478
      %v2570 = vpop.f32.mrf.mxu0
      %v2571 = vadd.f32 0.0, %v2570
      %v2572 = vpop.f32.mrf.mxu0
      %v2573 = vadd.f32 0.0, %v2572
      %2574 = vmatmul.bf16.gmra.mxu0 %v2480
      %v2575 = vpop.f32.mrf.mxu0
      %v2576 = vadd.f32 0.0, %v2575
      %v2577 = vpop.f32.mrf.mxu0
      %v2578 = vadd.f32 0.0, %v2577
      %2579 = vmatmul.bf16.gmra.mxu0 %v2482
      %v2580 = vpop.f32.mrf.mxu0
      %v2581 = vadd.f32 0.0, %v2580
      %v2582 = vpop.f32.mrf.mxu0
      %v2583 = vadd.f32 0.0, %v2582
      %2584 = vmatmul.bf16.gmra.mxu0 %v2484
      %v2585 = vpop.f32.mrf.mxu0
      %v2586 = vadd.f32 0.0, %v2585
      %v2587 = vpop.f32.mrf.mxu0
      %v2588 = vadd.f32 0.0, %v2587
      %2589 = vmatmul.bf16.gmra.mxu0 %v2486
      %v2590 = vpop.f32.mrf.mxu0
      %v2591 = vadd.f32 0.0, %v2590
      %v2592 = vpop.f32.mrf.mxu0
      %v2593 = vadd.f32 0.0, %v2592
      %2594 = vmatmul.bf16.gmra.mxu0 %v2488
      %v2595 = vpop.f32.mrf.mxu0
      %v2596 = vadd.f32 0.0, %v2595
      %v2597 = vpop.f32.mrf.mxu0
      %v2598 = vadd.f32 0.0, %v2597
      %2599 = vdwg.mxu0
      %v2600 = vadd.f32 %v2368, %v2556
      %v2601 = vadd.f32 %v2369, %v2558
      %v2602 = vadd.f32 %v2370, %v2561
      %v2603 = vadd.f32 %v2371, %v2563
      %v2604 = vadd.f32 %v2372, %v2566
      %v2605 = vadd.f32 %v2373, %v2568
      %v2606 = vadd.f32 %v2374, %v2571
      %v2607 = vadd.f32 %v2375, %v2573
      %v2608 = vadd.f32 %v2376, %v2576
      %v2609 = vadd.f32 %v2377, %v2578
      %v2610 = vadd.f32 %v2378, %v2581
      %v2611 = vadd.f32 %v2379, %v2583
      %v2612 = vadd.f32 %v2380, %v2586
      %v2613 = vadd.f32 %v2381, %v2588
      %v2614 = vadd.f32 %v2382, %v2591
      %v2615 = vadd.f32 %v2383, %v2593
      %v2616 = vadd.f32 %v2384, %v2596
      %v2617 = vadd.f32 %v2385, %v2598
      %v2618 = vld [vmem:[#allocation2 + $0x58] sm:$0x7]
      %s2619 = scalar_lea.vmem %s5, 448
      %v2620 = vld [vmem:[%s2619] sm:$0xf]
      %v2621 = vld [vmem:[%s2619 + $0x4] sm:$0xf]
      %v2622 = vld [vmem:[%s2619 + $0x8] sm:$0xf]
      %v2623 = vld [vmem:[%s2619 + $0xc] sm:$0xf]
      %v2624 = vld [vmem:[%s2619 + $0x10] sm:$0xf]
      %v2625 = vld [vmem:[%s2619 + $0x14] sm:$0xf]
      %v2626 = vld [vmem:[%s2619 + $0x18] sm:$0xf]
      %v2627 = vld [vmem:[%s2619 + $0x1c] sm:$0xf]
      %v2628 = vld [vmem:[%s2619 + $0x20] sm:$0xf]
      %v2629 = vld [vmem:[%s2619 + $0x24] sm:$0xf]
      %v2630 = vld [vmem:[%s2619 + $0x28] sm:$0xf]
      %v2631 = vld [vmem:[%s2619 + $0x2c] sm:$0xf]
      %v2632 = vld [vmem:[%s2619 + $0x30] sm:$0xf]
      %v2633 = vld [vmem:[%s2619 + $0x34] sm:$0xf]
      %v2634 = vld [vmem:[%s2619 + $0x38] sm:$0xf]
      %v2635 = vld [vmem:[%s2619 + $0x3c] sm:$0xf]
      %v2637 = vunpack.c.l.b16 %v2618
      %v2638 = vpack.c.b16 %v2637, %v2637
      %vm2639 = vsmask.f32 5376
      %v2641 = vshrl.u32 %v2460, 16
      %v2643 = vrot.slane %v2641, 2
      %v2644 = vshll.u32 %v2460, 16
      %v2646 = vrot.slane %v2644, 3
      %v2647 = vor.u32 %v2643, %v2646
      %v2649 = vshrl.u32 %v2461, 16
      %v2651 = vrot.slane %v2649, 2
      %v2652 = vshll.u32 %v2461, 16
      %v2654 = vrot.slane %v2652, 3
      %v2655 = vor.u32 %v2651, %v2654
      %v2656 = vsel %vm2639, %v2647, %v2655
      %v2658 = vshrl.u32 %v2462, 16
      %v2660 = vrot.slane %v2658, 2
      %v2661 = vshll.u32 %v2462, 16
      %v2663 = vrot.slane %v2661, 3
      %v2664 = vor.u32 %v2660, %v2663
      %v2665 = vsel %vm2639, %v2655, %v2664
      %v2667 = vshrl.u32 %v2463, 16
      %v2669 = vrot.slane %v2667, 2
      %v2670 = vshll.u32 %v2463, 16
      %v2672 = vrot.slane %v2670, 3
      %v2673 = vor.u32 %v2669, %v2672
      %v2674 = vsel %vm2639, %v2664, %v2673
      %v2676 = vshrl.u32 %v2464, 16
      %v2678 = vrot.slane %v2676, 2
      %v2679 = vshll.u32 %v2464, 16
      %v2681 = vrot.slane %v2679, 3
      %v2682 = vor.u32 %v2678, %v2681
      %v2683 = vsel %vm2639, %v2673, %v2682
      %v2685 = vshrl.u32 %v2465, 16
      %v2687 = vrot.slane %v2685, 2
      %v2688 = vshll.u32 %v2465, 16
      %v2690 = vrot.slane %v2688, 3
      %v2691 = vor.u32 %v2687, %v2690
      %v2692 = vsel %vm2639, %v2682, %v2691
      %v2694 = vshrl.u32 %v2466, 16
      %v2696 = vrot.slane %v2694, 2
      %v2697 = vshll.u32 %v2466, 16
      %v2699 = vrot.slane %v2697, 3
      %v2700 = vor.u32 %v2696, %v2699
      %v2701 = vsel %vm2639, %v2691, %v2700
      %v2703 = vshrl.u32 %v2467, 16
      %v2705 = vrot.slane %v2703, 2
      %v2706 = vshll.u32 %v2467, 16
      %v2708 = vrot.slane %v2706, 3
      %v2709 = vor.u32 %v2705, %v2708
      %v2710 = vsel %vm2639, %v2700, %v2709
      %v2712 = vshrl.u32 %v2468, 16
      %v2714 = vrot.slane %v2712, 2
      %v2715 = vshll.u32 %v2468, 16
      %v2717 = vrot.slane %v2715, 3
      %v2718 = vor.u32 %v2714, %v2717
      %v2719 = vsel %vm2639, %v2709, %v2718
      %v2721 = vshrl.u32 %v2638, 16
      %v2723 = vrot.slane %v2721, 2
      %v2724 = vshll.u32 %v2638, 16
      %v2726 = vrot.slane %v2724, 3
      %v2727 = vor.u32 %v2723, %v2726
      %v2728 = vsel %vm2639, %v2718, %v2727
      %v2754 = vunpack.c.l.b16 %v2620
      %v2755 = vunpack.c.l.b16 %v2621
      %v2756 = vunpack.c.l.b16 %v2622
      %v2757 = vunpack.c.l.b16 %v2623
      %v2758 = vunpack.c.l.b16 %v2624
      %v2759 = vunpack.c.l.b16 %v2625
      %v2760 = vunpack.c.l.b16 %v2626
      %v2761 = vunpack.c.l.b16 %v2627
      %v2762 = vunpack.c.l.b16 %v2628
      %v2763 = vunpack.c.l.b16 %v2629
      %v2764 = vunpack.c.l.b16 %v2630
      %v2765 = vunpack.c.l.b16 %v2631
      %v2766 = vunpack.c.l.b16 %v2632
      %v2767 = vunpack.c.l.b16 %v2633
      %v2768 = vunpack.c.l.b16 %v2634
      %v2769 = vunpack.c.l.b16 %v2635
      %v2770 = vpack.c.b16 %v2755, %v2754
      %v2771 = vpack.c.b16 %v2757, %v2756
      %v2772 = vpack.c.b16 %v2759, %v2758
      %v2773 = vpack.c.b16 %v2761, %v2760
      %v2774 = vpack.c.b16 %v2763, %v2762
      %v2775 = vpack.c.b16 %v2765, %v2764
      %v2776 = vpack.c.b16 %v2767, %v2766
      %v2777 = vpack.c.b16 %v2769, %v2768
      %2786 = vmatpush.bf16.msra.mxu0 %v2777
      %2787 = vmatpush.bf16.msra.mxu0 %v2776
      %2788 = vmatpush.bf16.msra.mxu0 %v2775
      %2789 = vmatpush.bf16.msra.mxu0 %v2774
      %2790 = vmatpush.bf16.msra.mxu0 %v2773
      %2791 = vmatpush.bf16.msra.mxu0 %v2772
      %2792 = vmatpush.bf16.msra.mxu0 %v2771
      %2793 = vmatpush.bf16.msra.mxu0 %v2770
      %2794 = vmatmul.bf16.gmra.mxu0 %v2656
      %v2795 = vpop.f32.mrf.mxu0
      %v2796 = vadd.f32 0.0, %v2795
      %v2797 = vpop.f32.mrf.mxu0
      %v2798 = vadd.f32 0.0, %v2797
      %2799 = vmatmul.bf16.gmra.mxu0 %v2665
      %v2800 = vpop.f32.mrf.mxu0
      %v2801 = vadd.f32 0.0, %v2800
      %v2802 = vpop.f32.mrf.mxu0
      %v2803 = vadd.f32 0.0, %v2802
      %2804 = vmatmul.bf16.gmra.mxu0 %v2674
      %v2805 = vpop.f32.mrf.mxu0
      %v2806 = vadd.f32 0.0, %v2805
      %v2807 = vpop.f32.mrf.mxu0
      %v2808 = vadd.f32 0.0, %v2807
      %2809 = vmatmul.bf16.gmra.mxu0 %v2683
      %v2810 = vpop.f32.mrf.mxu0
      %v2811 = vadd.f32 0.0, %v2810
      %v2812 = vpop.f32.mrf.mxu0
      %v2813 = vadd.f32 0.0, %v2812
      %2814 = vmatmul.bf16.gmra.mxu0 %v2692
      %v2815 = vpop.f32.mrf.mxu0
      %v2816 = vadd.f32 0.0, %v2815
      %v2817 = vpop.f32.mrf.mxu0
      %v2818 = vadd.f32 0.0, %v2817
      %2819 = vmatmul.bf16.gmra.mxu0 %v2701
      %v2820 = vpop.f32.mrf.mxu0
      %v2821 = vadd.f32 0.0, %v2820
      %v2822 = vpop.f32.mrf.mxu0
      %v2823 = vadd.f32 0.0, %v2822
      %2824 = vmatmul.bf16.gmra.mxu0 %v2710
      %v2825 = vpop.f32.mrf.mxu0
      %v2826 = vadd.f32 0.0, %v2825
      %v2827 = vpop.f32.mrf.mxu0
      %v2828 = vadd.f32 0.0, %v2827
      %2829 = vmatmul.bf16.gmra.mxu0 %v2719
      %v2830 = vpop.f32.mrf.mxu0
      %v2831 = vadd.f32 0.0, %v2830
      %v2832 = vpop.f32.mrf.mxu0
      %v2833 = vadd.f32 0.0, %v2832
      %2834 = vmatmul.bf16.gmra.mxu0 %v2728
      %v2835 = vpop.f32.mrf.mxu0
      %v2836 = vadd.f32 0.0, %v2835
      %v2837 = vpop.f32.mrf.mxu0
      %v2838 = vadd.f32 0.0, %v2837
      %2839 = vdwg.mxu0
      %v2840 = vadd.f32 %v2600, %v2796
      %v2841 = vadd.f32 %v2601, %v2798
      %v2842 = vadd.f32 %v2602, %v2801
      %v2843 = vadd.f32 %v2603, %v2803
      %v2844 = vadd.f32 %v2604, %v2806
      %v2845 = vadd.f32 %v2605, %v2808
      %v2846 = vadd.f32 %v2606, %v2811
      %v2847 = vadd.f32 %v2607, %v2813
      %v2848 = vadd.f32 %v2608, %v2816
      %v2849 = vadd.f32 %v2609, %v2818
      %v2850 = vadd.f32 %v2610, %v2821
      %v2851 = vadd.f32 %v2611, %v2823
      %v2852 = vadd.f32 %v2612, %v2826
      %v2853 = vadd.f32 %v2613, %v2828
      %v2854 = vadd.f32 %v2614, %v2831
      %v2855 = vadd.f32 %v2615, %v2833
      %v2856 = vadd.f32 %v2616, %v2836
      %v2857 = vadd.f32 %v2617, %v2838
      %v2858 = vld [vmem:[#allocation2 + $0x10] sm:$0x8]
      %s2859 = scalar_lea.vmem %s5, 512
      %v2860 = vld [vmem:[%s2859] sm:$0xf]
      %v2861 = vld [vmem:[%s2859 + $0x4] sm:$0xf]
      %v2862 = vld [vmem:[%s2859 + $0x8] sm:$0xf]
      %v2863 = vld [vmem:[%s2859 + $0xc] sm:$0xf]
      %v2864 = vld [vmem:[%s2859 + $0x10] sm:$0xf]
      %v2865 = vld [vmem:[%s2859 + $0x14] sm:$0xf]
      %v2866 = vld [vmem:[%s2859 + $0x18] sm:$0xf]
      %v2867 = vld [vmem:[%s2859 + $0x1c] sm:$0xf]
      %v2868 = vld [vmem:[%s2859 + $0x20] sm:$0xf]
      %v2869 = vld [vmem:[%s2859 + $0x24] sm:$0xf]
      %v2870 = vld [vmem:[%s2859 + $0x28] sm:$0xf]
      %v2871 = vld [vmem:[%s2859 + $0x2c] sm:$0xf]
      %v2872 = vld [vmem:[%s2859 + $0x30] sm:$0xf]
      %v2873 = vld [vmem:[%s2859 + $0x34] sm:$0xf]
      %v2874 = vld [vmem:[%s2859 + $0x38] sm:$0xf]
      %v2875 = vld [vmem:[%s2859 + $0x3c] sm:$0xf]
      %v2877 = vunpack.c.l.b16 %v2858
      %v2878 = vpack.c.b16 %v2442, %v2877
      %vm2879 = vcmask 1044480
      %v2880 = vrot.slane %v2878, 3
      %v2881 = vrot.slane %v2461, 3
      %v2882 = vsel %vm2879, %v2880, %v2881
      %v2883 = vrot.slane %v2462, 3
      %v2884 = vsel %vm2879, %v2881, %v2883
      %v2885 = vrot.slane %v2463, 3
      %v2886 = vsel %vm2879, %v2883, %v2885
      %v2887 = vrot.slane %v2464, 3
      %v2888 = vsel %vm2879, %v2885, %v2887
      %v2889 = vrot.slane %v2465, 3
      %v2890 = vsel %vm2879, %v2887, %v2889
      %v2891 = vrot.slane %v2466, 3
      %v2892 = vsel %vm2879, %v2889, %v2891
      %v2893 = vrot.slane %v2467, 3
      %v2894 = vsel %vm2879, %v2891, %v2893
      %v2895 = vrot.slane %v2468, 3
      %v2896 = vsel %vm2879, %v2893, %v2895
      %v2897 = vrot.slane %v2638, 3
      %v2898 = vsel %vm2879, %v2895, %v2897
      %v2924 = vunpack.c.l.b16 %v2860
      %v2925 = vunpack.c.l.b16 %v2861
      %v2926 = vunpack.c.l.b16 %v2862
      %v2927 = vunpack.c.l.b16 %v2863
      %v2928 = vunpack.c.l.b16 %v2864
      %v2929 = vunpack.c.l.b16 %v2865
      %v2930 = vunpack.c.l.b16 %v2866
      %v2931 = vunpack.c.l.b16 %v2867
      %v2932 = vunpack.c.l.b16 %v2868
      %v2933 = vunpack.c.l.b16 %v2869
      %v2934 = vunpack.c.l.b16 %v2870
      %v2935 = vunpack.c.l.b16 %v2871
      %v2936 = vunpack.c.l.b16 %v2872
      %v2937 = vunpack.c.l.b16 %v2873
      %v2938 = vunpack.c.l.b16 %v2874
      %v2939 = vunpack.c.l.b16 %v2875
      %v2940 = vpack.c.b16 %v2925, %v2924
      %v2941 = vpack.c.b16 %v2927, %v2926
      %v2942 = vpack.c.b16 %v2929, %v2928
      %v2943 = vpack.c.b16 %v2931, %v2930
      %v2944 = vpack.c.b16 %v2933, %v2932
      %v2945 = vpack.c.b16 %v2935, %v2934
      %v2946 = vpack.c.b16 %v2937, %v2936
      %v2947 = vpack.c.b16 %v2939, %v2938
      %2956 = vmatpush.bf16.msra.mxu0 %v2947
      %2957 = vmatpush.bf16.msra.mxu0 %v2946
      %2958 = vmatpush.bf16.msra.mxu0 %v2945
      %2959 = vmatpush.bf16.msra.mxu0 %v2944
      %2960 = vmatpush.bf16.msra.mxu0 %v2943
      %2961 = vmatpush.bf16.msra.mxu0 %v2942
      %2962 = vmatpush.bf16.msra.mxu0 %v2941
      %2963 = vmatpush.bf16.msra.mxu0 %v2940
      %2964 = vmatmul.bf16.gmra.mxu0 %v2882
      %v2965 = vpop.f32.mrf.mxu0
      %v2966 = vadd.f32 0.0, %v2965
      %v2967 = vpop.f32.mrf.mxu0
      %v2968 = vadd.f32 0.0, %v2967
      %2969 = vmatmul.bf16.gmra.mxu0 %v2884
      %v2970 = vpop.f32.mrf.mxu0
      %v2971 = vadd.f32 0.0, %v2970
      %v2972 = vpop.f32.mrf.mxu0
      %v2973 = vadd.f32 0.0, %v2972
      %2974 = vmatmul.bf16.gmra.mxu0 %v2886
      %v2975 = vpop.f32.mrf.mxu0
      %v2976 = vadd.f32 0.0, %v2975
      %v2977 = vpop.f32.mrf.mxu0
      %v2978 = vadd.f32 0.0, %v2977
      %2979 = vmatmul.bf16.gmra.mxu0 %v2888
      %v2980 = vpop.f32.mrf.mxu0
      %v2981 = vadd.f32 0.0, %v2980
      %v2982 = vpop.f32.mrf.mxu0
      %v2983 = vadd.f32 0.0, %v2982
      %2984 = vmatmul.bf16.gmra.mxu0 %v2890
      %v2985 = vpop.f32.mrf.mxu0
      %v2986 = vadd.f32 0.0, %v2985
      %v2987 = vpop.f32.mrf.mxu0
      %v2988 = vadd.f32 0.0, %v2987
      %2989 = vmatmul.bf16.gmra.mxu0 %v2892
      %v2990 = vpop.f32.mrf.mxu0
      %v2991 = vadd.f32 0.0, %v2990
      %v2992 = vpop.f32.mrf.mxu0
      %v2993 = vadd.f32 0.0, %v2992
      %2994 = vmatmul.bf16.gmra.mxu0 %v2894
      %v2995 = vpop.f32.mrf.mxu0
      %v2996 = vadd.f32 0.0, %v2995
      %v2997 = vpop.f32.mrf.mxu0
      %v2998 = vadd.f32 0.0, %v2997
      %2999 = vmatmul.bf16.gmra.mxu0 %v2896
      %v3000 = vpop.f32.mrf.mxu0
      %v3001 = vadd.f32 0.0, %v3000
      %v3002 = vpop.f32.mrf.mxu0
      %v3003 = vadd.f32 0.0, %v3002
      %3004 = vmatmul.bf16.gmra.mxu0 %v2898
      %v3005 = vpop.f32.mrf.mxu0
      %v3006 = vadd.f32 0.0, %v3005
      %v3007 = vpop.f32.mrf.mxu0
      %v3008 = vadd.f32 0.0, %v3007
      %3009 = vdwg.mxu0
      %v3010 = vadd.f32 %v2840, %v2966
      %v3011 = vadd.f32 %v2841, %v2968
      %v3012 = vadd.f32 %v2842, %v2971
      %v3013 = vadd.f32 %v2843, %v2973
      %v3014 = vadd.f32 %v2844, %v2976
      %v3015 = vadd.f32 %v2845, %v2978
      %v3016 = vadd.f32 %v2846, %v2981
      %v3017 = vadd.f32 %v2847, %v2983
      %v3018 = vadd.f32 %v2848, %v2986
      %v3019 = vadd.f32 %v2849, %v2988
      %v3020 = vadd.f32 %v2850, %v2991
      %v3021 = vadd.f32 %v2851, %v2993
      %v3022 = vadd.f32 %v2852, %v2996
      %v3023 = vadd.f32 %v2853, %v2998
      %v3024 = vadd.f32 %v2854, %v3001
      %v3025 = vadd.f32 %v2855, %v3003
      %v3026 = vadd.f32 %v2856, %v3006
      %v3027 = vadd.f32 %v2857, %v3008
      %v3046 = vrot.slane %v3010, 2
      %v3047 = vrot.slane %v3010, 4
      %v3048 = vrot.slane %v3010, 6
      %v3049 = vrot.slane %v3011, 2
      %v3050 = vrot.slane %v3011, 4
      %v3051 = vrot.slane %v3011, 6
      %v3052 = vrot.slane %v3012, 2
      %v3053 = vrot.slane %v3012, 4
      %v3054 = vrot.slane %v3012, 6
      %v3055 = vrot.slane %v3013, 2
      %v3056 = vrot.slane %v3013, 4
      %v3057 = vrot.slane %v3013, 6
      %v3058 = vrot.slane %v3014, 4
      %v3059 = vrot.slane %v3014, 6
      %v3060 = vrot.slane %v3015, 2
      %v3061 = vrot.slane %v3015, 4
      %v3062 = vrot.slane %v3015, 6
      %v3063 = vrot.slane %v3016, 2
      %v3064 = vrot.slane %v3016, 6
      %v3065 = vrot.slane %v3017, 2
      %v3066 = vrot.slane %v3017, 4
      %v3067 = vrot.slane %v3017, 6
      %v3068 = vrot.slane %v3018, 2
      %v3069 = vrot.slane %v3018, 4
      %v3070 = vrot.slane %v3019, 2
      %v3071 = vrot.slane %v3019, 4
      %v3072 = vrot.slane %v3019, 6
      %v3073 = vrot.slane %v3020, 2
      %v3074 = vrot.slane %v3020, 4
      %v3075 = vrot.slane %v3020, 6
      %v3076 = vrot.slane %v3021, 2
      %v3077 = vrot.slane %v3021, 4
      %v3078 = vrot.slane %v3021, 6
      %v3079 = vrot.slane %v3022, 2
      %v3080 = vrot.slane %v3022, 4
      %v3081 = vrot.slane %v3022, 6
      %v3082 = vrot.slane %v3023, 4
      %v3083 = vrot.slane %v3023, 6
      %v3084 = vrot.slane %v3024, 2
      %v3085 = vrot.slane %v3024, 4
      %v3086 = vrot.slane %v3024, 6
      %v3087 = vrot.slane %v3025, 2
      %v3088 = vrot.slane %v3025, 6
      %v3089 = vrot.slane %v3026, 2
      %v3090 = vrot.slane %v3026, 4
      %v3091 = vrot.slane %v3026, 6
      %v3092 = vrot.slane %v3027, 2
      %v3093 = vrot.slane %v3027, 4
      %v3142 = vld [vmem:[%s6] sm:$0x1]
      %v3144 = vperm.slane %v3142, 0
      %v3146 = vrot.slane %v3144, 2
      %v3147 = vrot.slane %v3144, 4
      %v3148 = vrot.slane %v3144, 6
      %v3152 = vadd.f32 %v3010, %v3144
      %v3153 = vadd.f32 %v3046, %v3146
      %v3154 = vadd.f32 %v3047, %v3147
      %v3155 = vadd.f32 %v3048, %v3148
      %v3156 = vadd.f32 %v3011, %v3144
      %v3157 = vadd.f32 %v3049, %v3146
      %v3158 = vadd.f32 %v3050, %v3147
      %v3159 = vadd.f32 %v3051, %v3148
      %v3160 = vadd.f32 %v3052, %v3144
      %v3161 = vadd.f32 %v3053, %v3146
      %v3162 = vadd.f32 %v3054, %v3147
      %v3163 = vadd.f32 %v3013, %v3148
      %v3164 = vadd.f32 %v3055, %v3144
      %v3165 = vadd.f32 %v3056, %v3146
      %v3166 = vadd.f32 %v3057, %v3147
      %v3167 = vadd.f32 %v3014, %v3148
      %v3168 = vadd.f32 %v3058, %v3144
      %v3169 = vadd.f32 %v3059, %v3146
      %v3170 = vadd.f32 %v3015, %v3147
      %v3171 = vadd.f32 %v3060, %v3148
      %v3172 = vadd.f32 %v3061, %v3144
      %v3173 = vadd.f32 %v3062, %v3146
      %v3174 = vadd.f32 %v3016, %v3147
      %v3175 = vadd.f32 %v3063, %v3148
      %v3176 = vadd.f32 %v3064, %v3144
      %v3177 = vadd.f32 %v3017, %v3146
      %v3178 = vadd.f32 %v3065, %v3147
      %v3179 = vadd.f32 %v3066, %v3148
      %v3180 = vadd.f32 %v3067, %v3144
      %v3181 = vadd.f32 %v3018, %v3146
      %v3182 = vadd.f32 %v3068, %v3147
      %v3183 = vadd.f32 %v3069, %v3148
      %v3184 = vadd.f32 %v3019, %v3144
      %v3185 = vadd.f32 %v3070, %v3146
      %v3186 = vadd.f32 %v3071, %v3147
      %v3187 = vadd.f32 %v3072, %v3148
      %v3188 = vadd.f32 %v3020, %v3144
      %v3189 = vadd.f32 %v3073, %v3146
      %v3190 = vadd.f32 %v3074, %v3147
      %v3191 = vadd.f32 %v3075, %v3148
      %v3192 = vadd.f32 %v3076, %v3144
      %v3193 = vadd.f32 %v3077, %v3146
      %v3194 = vadd.f32 %v3078, %v3147
      %v3195 = vadd.f32 %v3022, %v3148
      %v3196 = vadd.f32 %v3079, %v3144
      %v3197 = vadd.f32 %v3080, %v3146
      %v3198 = vadd.f32 %v3081, %v3147
      %v3199 = vadd.f32 %v3023, %v3148
      %v3200 = vadd.f32 %v3082, %v3144
      %v3201 = vadd.f32 %v3083, %v3146
      %v3202 = vadd.f32 %v3024, %v3147
      %v3203 = vadd.f32 %v3084, %v3148
      %v3204 = vadd.f32 %v3085, %v3144
      %v3205 = vadd.f32 %v3086, %v3146
      %v3206 = vadd.f32 %v3025, %v3147
      %v3207 = vadd.f32 %v3087, %v3148
      %v3208 = vadd.f32 %v3088, %v3144
      %v3209 = vadd.f32 %v3026, %v3146
      %v3210 = vadd.f32 %v3089, %v3147
      %v3211 = vadd.f32 %v3090, %v3148
      %v3212 = vadd.f32 %v3091, %v3144
      %v3213 = vadd.f32 %v3027, %v3146
      %v3214 = vadd.f32 %v3092, %v3147
      %v3215 = vadd.f32 %v3093, %v3148
      %3280 = vst [vmem:[#allocation1] ss:$4 sm:$0xff] %v3152
      %s3281 = scalar_lea.vmem [#allocation1], 1
      %3282 = vst [vmem:[%s3281] ss:$4 sm:$0xff] %v3153
      %s3283 = scalar_lea.vmem [#allocation1], 2
      %3284 = vst [vmem:[%s3283] ss:$4 sm:$0xff] %v3154
      %s3285 = scalar_lea.vmem [#allocation1], 3
      %3286 = vst [vmem:[%s3285] ss:$4 sm:$0xff] %v3155
      %s3287 = scalar_lea.vmem [#allocation1], 32
      %3288 = vst [vmem:[%s3287] ss:$4 sm:$0xff] %v3156
      %s3289 = scalar_lea.vmem [#allocation1], 33
      %3290 = vst [vmem:[%s3289] ss:$4 sm:$0xff] %v3157
      %s3291 = scalar_lea.vmem [#allocation1], 34
      %3292 = vst [vmem:[%s3291] ss:$4 sm:$0xff] %v3158
      %s3293 = scalar_lea.vmem [#allocation1], 35
      %3294 = vst [vmem:[%s3293] ss:$4 sm:$0xff] %v3159
      %v3295 = vld.sshfl [vmem:[#allocation1] sm:$0xff pattern:$0x73625140]
      %v3296 = vld.sshfl [vmem:[#allocation1 + $0x20] sm:$0xff pattern:$0x73625140]
      %3297 = vst [vmem:[#allocation1] ss:$4 sm:$0xff] %v3160
      %3298 = vst [vmem:[%s3281] ss:$4 sm:$0xff] %v3161
      %3299 = vst [vmem:[%s3283] ss:$4 sm:$0xff] %v3162
      %3300 = vst [vmem:[%s3285] ss:$4 sm:$0xff] %v3163
      %3301 = vst [vmem:[%s3287] ss:$4 sm:$0xff] %v3164
      %3302 = vst [vmem:[%s3289] ss:$4 sm:$0xff] %v3165
      %3303 = vst [vmem:[%s3291] ss:$4 sm:$0xff] %v3166
      %3304 = vst [vmem:[%s3293] ss:$4 sm:$0xff] %v3167
      %v3305 = vld.sshfl [vmem:[#allocation1] sm:$0xff pattern:$0x73625140]
      %v3306 = vld.sshfl [vmem:[#allocation1 + $0x20] sm:$0xff pattern:$0x73625140]
      %3307 = vst [vmem:[#allocation1] ss:$4 sm:$0xff] %v3168
      %3308 = vst [vmem:[%s3281] ss:$4 sm:$0xff] %v3169
      %3309 = vst [vmem:[%s3283] ss:$4 sm:$0xff] %v3170
      %3310 = vst [vmem:[%s3285] ss:$4 sm:$0xff] %v3171
      %3311 = vst [vmem:[%s3287] ss:$4 sm:$0xff] %v3172
      %3312 = vst [vmem:[%s3289] ss:$4 sm:$0xff] %v3173
      %3313 = vst [vmem:[%s3291] ss:$4 sm:$0xff] %v3174
      %3314 = vst [vmem:[%s3293] ss:$4 sm:$0xff] %v3175
      %v3315 = vld.sshfl [vmem:[#allocation1] sm:$0xff pattern:$0x73625140]
      %v3316 = vld.sshfl [vmem:[#allocation1 + $0x20] sm:$0xff pattern:$0x73625140]
      %3317 = vst [vmem:[#allocation1] ss:$4 sm:$0xff] %v3176
      %3318 = vst [vmem:[%s3281] ss:$4 sm:$0xff] %v3177
      %3319 = vst [vmem:[%s3283] ss:$4 sm:$0xff] %v3178
      %3320 = vst [vmem:[%s3285] ss:$4 sm:$0xff] %v3179
      %3321 = vst [vmem:[%s3287] ss:$4 sm:$0xff] %v3180
      %3322 = vst [vmem:[%s3289] ss:$4 sm:$0xff] %v3181
      %3323 = vst [vmem:[%s3291] ss:$4 sm:$0xff] %v3182
      %3324 = vst [vmem:[%s3293] ss:$4 sm:$0xff] %v3183
      %v3325 = vld.sshfl [vmem:[#allocation1] sm:$0xff pattern:$0x73625140]
      %v3326 = vld.sshfl [vmem:[#allocation1 + $0x20] sm:$0xff pattern:$0x73625140]
      %3327 = vst [vmem:[#allocation1] ss:$4 sm:$0xff] %v3184
      %3328 = vst [vmem:[%s3281] ss:$4 sm:$0xff] %v3185
      %3329 = vst [vmem:[%s3283] ss:$4 sm:$0xff] %v3186
      %3330 = vst [vmem:[%s3285] ss:$4 sm:$0xff] %v3187
      %3331 = vst [vmem:[%s3287] ss:$4 sm:$0xff] %v3188
      %3332 = vst [vmem:[%s3289] ss:$4 sm:$0xff] %v3189
      %3333 = vst [vmem:[%s3291] ss:$4 sm:$0xff] %v3190
      %3334 = vst [vmem:[%s3293] ss:$4 sm:$0xff] %v3191
      %v3335 = vld.sshfl [vmem:[#allocation1] sm:$0xff pattern:$0x73625140]
      %v3336 = vld.sshfl [vmem:[#allocation1 + $0x20] sm:$0xff pattern:$0x73625140]
      %3337 = vst [vmem:[#allocation1] ss:$4 sm:$0xff] %v3192
      %3338 = vst [vmem:[%s3281] ss:$4 sm:$0xff] %v3193
      %3339 = vst [vmem:[%s3283] ss:$4 sm:$0xff] %v3194
      %3340 = vst [vmem:[%s3285] ss:$4 sm:$0xff] %v3195
      %3341 = vst [vmem:[%s3287] ss:$4 sm:$0xff] %v3196
      %3342 = vst [vmem:[%s3289] ss:$4 sm:$0xff] %v3197
      %3343 = vst [vmem:[%s3291] ss:$4 sm:$0xff] %v3198
      %3344 = vst [vmem:[%s3293] ss:$4 sm:$0xff] %v3199
      %v3345 = vld.sshfl [vmem:[#allocation1] sm:$0xff pattern:$0x73625140]
      %v3346 = vld.sshfl [vmem:[#allocation1 + $0x20] sm:$0xff pattern:$0x73625140]
      %3347 = vst [vmem:[#allocation1] ss:$4 sm:$0xff] %v3200
      %3348 = vst [vmem:[%s3281] ss:$4 sm:$0xff] %v3201
      %3349 = vst [vmem:[%s3283] ss:$4 sm:$0xff] %v3202
      %3350 = vst [vmem:[%s3285] ss:$4 sm:$0xff] %v3203
      %3351 = vst [vmem:[%s3287] ss:$4 sm:$0xff] %v3204
      %3352 = vst [vmem:[%s3289] ss:$4 sm:$0xff] %v3205
      %3353 = vst [vmem:[%s3291] ss:$4 sm:$0xff] %v3206
      %3354 = vst [vmem:[%s3293] ss:$4 sm:$0xff] %v3207
      %v3355 = vld.sshfl [vmem:[#allocation1] sm:$0xff pattern:$0x73625140]
      %v3356 = vld.sshfl [vmem:[#allocation1 + $0x20] sm:$0xff pattern:$0x73625140]
      %3357 = vst [vmem:[#allocation1] ss:$4 sm:$0xff] %v3208
      %3358 = vst [vmem:[%s3281] ss:$4 sm:$0xff] %v3209
      %3359 = vst [vmem:[%s3283] ss:$4 sm:$0xff] %v3210
      %3360 = vst [vmem:[%s3285] ss:$4 sm:$0xff] %v3211
      %3361 = vst [vmem:[%s3287] ss:$4 sm:$0xff] %v3212
      %3362 = vst [vmem:[%s3289] ss:$4 sm:$0xff] %v3213
      %3363 = vst [vmem:[%s3291] ss:$4 sm:$0xff] %v3214
      %3364 = vst [vmem:[%s3293] ss:$4 sm:$0xff] %v3215
      %v3365 = vld.sshfl [vmem:[#allocation1] sm:$0xff pattern:$0x73625140]
      %v3366 = vld.sshfl [vmem:[#allocation1 + $0x20] sm:$0xff pattern:$0x73625140]
      %v3383 = vpack.c.bf16 %v3295, %v3295
      %v3384 = vpack.c.bf16 %v3296, %v3296
      %v3385 = vpack.c.bf16 %v3305, %v3305
      %v3386 = vpack.c.bf16 %v3306, %v3306
      %v3387 = vpack.c.bf16 %v3315, %v3315
      %v3388 = vpack.c.bf16 %v3316, %v3316
      %v3389 = vpack.c.bf16 %v3325, %v3325
      %v3390 = vpack.c.bf16 %v3326, %v3326
      %v3391 = vpack.c.bf16 %v3335, %v3335
      %v3392 = vpack.c.bf16 %v3336, %v3336
      %v3393 = vpack.c.bf16 %v3345, %v3345
      %v3394 = vpack.c.bf16 %v3346, %v3346
      %v3395 = vpack.c.bf16 %v3355, %v3355
      %v3396 = vpack.c.bf16 %v3356, %v3356
      %v3397 = vpack.c.bf16 %v3365, %v3365
      %v3398 = vpack.c.bf16 %v3366, %v3366
      %3399 = vst [vmem:[%s485] sm:$0xf] %v3383
      %3400 = vst [vmem:[%s485 + $0x4] sm:$0xf] %v3384
      %3401 = vst [vmem:[%s485 + $0x8] sm:$0xf] %v3385
      %3402 = vst [vmem:[%s485 + $0xc] sm:$0xf] %v3386
      %3403 = vst [vmem:[%s485 + $0x10] sm:$0xf] %v3387
      %3404 = vst [vmem:[%s485 + $0x14] sm:$0xf] %v3388
      %3405 = vst [vmem:[%s485 + $0x18] sm:$0xf] %v3389
      %3406 = vst [vmem:[%s485 + $0x1c] sm:$0xf] %v3390
      %3407 = vst [vmem:[%s485 + $0x20] sm:$0xf] %v3391
      %3408 = vst [vmem:[%s485 + $0x24] sm:$0xf] %v3392
      %3409 = vst [vmem:[%s485 + $0x28] sm:$0xf] %v3393
      %3410 = vst [vmem:[%s485 + $0x2c] sm:$0xf] %v3394
      %3411 = vst [vmem:[%s485 + $0x30] sm:$0xf] %v3395
      %3412 = vst [vmem:[%s485 + $0x34] sm:$0xf] %v3396
      %3413 = vst [vmem:[%s485 + $0x38] sm:$0xf] %v3397
      %3414 = vst [vmem:[%s485 + $0x3c] sm:$0xf] %v3398
      %3415 = vst [vmem:[#allocation1] ss:$4 sm:$0xff] %v3152
      %s3416 = scalar_lea.vmem [#allocation1], 1
      %3417 = vst [vmem:[%s3416] ss:$4 sm:$0xff] %v3153
      %s3418 = scalar_lea.vmem [#allocation1], 2
      %3419 = vst [vmem:[%s3418] ss:$4 sm:$0xff] %v3154
      %s3420 = scalar_lea.vmem [#allocation1], 3
      %3421 = vst [vmem:[%s3420] ss:$4 sm:$0xff] %v3155
      %s3422 = scalar_lea.vmem [#allocation1], 32
      %3423 = vst [vmem:[%s3422] ss:$4 sm:$0xff] %v3156
      %s3424 = scalar_lea.vmem [#allocation1], 33
      %3425 = vst [vmem:[%s3424] ss:$4 sm:$0xff] %v3157
      %s3426 = scalar_lea.vmem [#allocation1], 34
      %3427 = vst [vmem:[%s3426] ss:$4 sm:$0xff] %v3158
      %s3428 = scalar_lea.vmem [#allocation1], 35
      %3429 = vst [vmem:[%s3428] ss:$4 sm:$0xff] %v3159
      %v3430 = vld.sshfl [vmem:[#allocation1] sm:$0xff pattern:$0x73625140]
      %v3431 = vld.sshfl [vmem:[#allocation1 + $0x20] sm:$0xff pattern:$0x73625140]
      %3432 = vst [vmem:[#allocation1] ss:$4 sm:$0xff] %v3160
      %3433 = vst [vmem:[%s3416] ss:$4 sm:$0xff] %v3161
      %3434 = vst [vmem:[%s3418] ss:$4 sm:$0xff] %v3162
      %3435 = vst [vmem:[%s3420] ss:$4 sm:$0xff] %v3163
      %3436 = vst [vmem:[%s3422] ss:$4 sm:$0xff] %v3164
      %3437 = vst [vmem:[%s3424] ss:$4 sm:$0xff] %v3165
      %3438 = vst [vmem:[%s3426] ss:$4 sm:$0xff] %v3166
      %3439 = vst [vmem:[%s3428] ss:$4 sm:$0xff] %v3167
      %v3440 = vld.sshfl [vmem:[#allocation1] sm:$0xff pattern:$0x73625140]
      %v3441 = vld.sshfl [vmem:[#allocation1 + $0x20] sm:$0xff pattern:$0x73625140]
      %3442 = vst [vmem:[#allocation1] ss:$4 sm:$0xff] %v3168
      %3443 = vst [vmem:[%s3416] ss:$4 sm:$0xff] %v3169
      %3444 = vst [vmem:[%s3418] ss:$4 sm:$0xff] %v3170
      %3445 = vst [vmem:[%s3420] ss:$4 sm:$0xff] %v3171
      %3446 = vst [vmem:[%s3422] ss:$4 sm:$0xff] %v3172
      %3447 = vst [vmem:[%s3424] ss:$4 sm:$0xff] %v3173
      %3448 = vst [vmem:[%s3426] ss:$4 sm:$0xff] %v3174
      %3449 = vst [vmem:[%s3428] ss:$4 sm:$0xff] %v3175
      %v3450 = vld.sshfl [vmem:[#allocation1] sm:$0xff pattern:$0x73625140]
      %v3451 = vld.sshfl [vmem:[#allocation1 + $0x20] sm:$0xff pattern:$0x73625140]
      %3452 = vst [vmem:[#allocation1] ss:$4 sm:$0xff] %v3176
      %3453 = vst [vmem:[%s3416] ss:$4 sm:$0xff] %v3177
      %3454 = vst [vmem:[%s3418] ss:$4 sm:$0xff] %v3178
      %3455 = vst [vmem:[%s3420] ss:$4 sm:$0xff] %v3179
      %3456 = vst [vmem:[%s3422] ss:$4 sm:$0xff] %v3180
      %3457 = vst [vmem:[%s3424] ss:$4 sm:$0xff] %v3181
      %3458 = vst [vmem:[%s3426] ss:$4 sm:$0xff] %v3182
      %3459 = vst [vmem:[%s3428] ss:$4 sm:$0xff] %v3183
      %v3460 = vld.sshfl [vmem:[#allocation1] sm:$0xff pattern:$0x73625140]
      %v3461 = vld.sshfl [vmem:[#allocation1 + $0x20] sm:$0xff pattern:$0x73625140]
      %3462 = vst [vmem:[#allocation1] ss:$4 sm:$0xff] %v3184
      %3463 = vst [vmem:[%s3416] ss:$4 sm:$0xff] %v3185
      %3464 = vst [vmem:[%s3418] ss:$4 sm:$0xff] %v3186
      %3465 = vst [vmem:[%s3420] ss:$4 sm:$0xff] %v3187
      %3466 = vst [vmem:[%s3422] ss:$4 sm:$0xff] %v3188
      %3467 = vst [vmem:[%s3424] ss:$4 sm:$0xff] %v3189
      %3468 = vst [vmem:[%s3426] ss:$4 sm:$0xff] %v3190
      %3469 = vst [vmem:[%s3428] ss:$4 sm:$0xff] %v3191
      %v3470 = vld.sshfl [vmem:[#allocation1] sm:$0xff pattern:$0x73625140]
      %v3471 = vld.sshfl [vmem:[#allocation1 + $0x20] sm:$0xff pattern:$0x73625140]
      %3472 = vst [vmem:[#allocation1] ss:$4 sm:$0xff] %v3192
      %3473 = vst [vmem:[%s3416] ss:$4 sm:$0xff] %v3193
      %3474 = vst [vmem:[%s3418] ss:$4 sm:$0xff] %v3194
      %3475 = vst [vmem:[%s3420] ss:$4 sm:$0xff] %v3195
      %3476 = vst [vmem:[%s3422] ss:$4 sm:$0xff] %v3196
      %3477 = vst [vmem:[%s3424] ss:$4 sm:$0xff] %v3197
      %3478 = vst [vmem:[%s3426] ss:$4 sm:$0xff] %v3198
      %3479 = vst [vmem:[%s3428] ss:$4 sm:$0xff] %v3199
      %v3480 = vld.sshfl [vmem:[#allocation1] sm:$0xff pattern:$0x73625140]
      %v3481 = vld.sshfl [vmem:[#allocation1 + $0x20] sm:$0xff pattern:$0x73625140]
      %3482 = vst [vmem:[#allocation1] ss:$4 sm:$0xff] %v3200
      %3483 = vst [vmem:[%s3416] ss:$4 sm:$0xff] %v3201
      %3484 = vst [vmem:[%s3418] ss:$4 sm:$0xff] %v3202
      %3485 = vst [vmem:[%s3420] ss:$4 sm:$0xff] %v3203
      %3486 = vst [vmem:[%s3422] ss:$4 sm:$0xff] %v3204
      %3487 = vst [vmem:[%s3424] ss:$4 sm:$0xff] %v3205
      %3488 = vst [vmem:[%s3426] ss:$4 sm:$0xff] %v3206
      %3489 = vst [vmem:[%s3428] ss:$4 sm:$0xff] %v3207
      %v3490 = vld.sshfl [vmem:[#allocation1] sm:$0xff pattern:$0x73625140]
      %v3491 = vld.sshfl [vmem:[#allocation1 + $0x20] sm:$0xff pattern:$0x73625140]
      %3492 = vst [vmem:[#allocation1] ss:$4 sm:$0xff] %v3208
      %3493 = vst [vmem:[%s3416] ss:$4 sm:$0xff] %v3209
      %3494 = vst [vmem:[%s3418] ss:$4 sm:$0xff] %v3210
      %3495 = vst [vmem:[%s3420] ss:$4 sm:$0xff] %v3211
      %3496 = vst [vmem:[%s3422] ss:$4 sm:$0xff] %v3212
      %3497 = vst [vmem:[%s3424] ss:$4 sm:$0xff] %v3213
      %3498 = vst [vmem:[%s3426] ss:$4 sm:$0xff] %v3214
      %3499 = vst [vmem:[%s3428] ss:$4 sm:$0xff] %v3215
      %v3500 = vld.sshfl [vmem:[#allocation1] sm:$0xff pattern:$0x73625140]
      %v3501 = vld.sshfl [vmem:[#allocation1 + $0x20] sm:$0xff pattern:$0x73625140]
      %v3518 = vadd.f32 %v3430, %v3431
      %v3519 = vadd.f32 %v3518, %v3440
      %v3520 = vadd.f32 %v3519, %v3441
      %v3521 = vadd.f32 %v3520, %v3450
      %v3522 = vadd.f32 %v3521, %v3451
      %v3523 = vadd.f32 %v3522, %v3460
      %v3524 = vadd.f32 %v3523, %v3461
      %v3525 = vadd.f32 %v3524, %v3470
      %v3526 = vadd.f32 %v3525, %v3471
      %v3527 = vadd.f32 %v3526, %v3480
      %v3528 = vadd.f32 %v3527, %v3481
      %v3529 = vadd.f32 %v3528, %v3490
      %v3530 = vadd.f32 %v3529, %v3491
      %v3531 = vadd.f32 %v3530, %v3500
      %v3532 = vadd.f32 %v3531, %v3501
      %v3533 = vrot.slane %v3532, 4
      %v3534 = vadd.f32 %v3532, %v3533
      %v3535 = vrot.slane %v3534, 2
      %v3536 = vadd.f32 %v3534, %v3535
      %v3537 = vrot.slane %v3536, 1
      %v3538 = vadd.f32 %v3536, %v3537
      %v3539 = vmul.f32 %v3152, %v3152
      %v3540 = vmul.f32 %v3153, %v3153
      %v3541 = vmul.f32 %v3154, %v3154
      %v3542 = vmul.f32 %v3155, %v3155
      %v3543 = vmul.f32 %v3156, %v3156
      %v3544 = vmul.f32 %v3157, %v3157
      %v3545 = vmul.f32 %v3158, %v3158
      %v3546 = vmul.f32 %v3159, %v3159
      %v3547 = vmul.f32 %v3160, %v3160
      %v3548 = vmul.f32 %v3161, %v3161
      %v3549 = vmul.f32 %v3162, %v3162
      %v3550 = vmul.f32 %v3163, %v3163
      %v3551 = vmul.f32 %v3164, %v3164
      %v3552 = vmul.f32 %v3165, %v3165
      %v3553 = vmul.f32 %v3166, %v3166
      %v3554 = vmul.f32 %v3167, %v3167
      %v3555 = vmul.f32 %v3168, %v3168
      %v3556 = vmul.f32 %v3169, %v3169
      %v3557 = vmul.f32 %v3170, %v3170
      %v3558 = vmul.f32 %v3171, %v3171
      %v3559 = vmul.f32 %v3172, %v3172
      %v3560 = vmul.f32 %v3173, %v3173
      %v3561 = vmul.f32 %v3174, %v3174
      %v3562 = vmul.f32 %v3175, %v3175
      %v3563 = vmul.f32 %v3176, %v3176
      %v3564 = vmul.f32 %v3177, %v3177
      %v3565 = vmul.f32 %v3178, %v3178
      %v3566 = vmul.f32 %v3179, %v3179
      %v3567 = vmul.f32 %v3180, %v3180
      %v3568 = vmul.f32 %v3181, %v3181
      %v3569 = vmul.f32 %v3182, %v3182
      %v3570 = vmul.f32 %v3183, %v3183
      %v3571 = vmul.f32 %v3184, %v3184
      %v3572 = vmul.f32 %v3185, %v3185
      %v3573 = vmul.f32 %v3186, %v3186
      %v3574 = vmul.f32 %v3187, %v3187
      %v3575 = vmul.f32 %v3188, %v3188
      %v3576 = vmul.f32 %v3189, %v3189
      %v3577 = vmul.f32 %v3190, %v3190
      %v3578 = vmul.f32 %v3191, %v3191
      %v3579 = vmul.f32 %v3192, %v3192
      %v3580 = vmul.f32 %v3193, %v3193
      %v3581 = vmul.f32 %v3194, %v3194
      %v3582 = vmul.f32 %v3195, %v3195
      %v3583 = vmul.f32 %v3196, %v3196
      %v3584 = vmul.f32 %v3197, %v3197
      %v3585 = vmul.f32 %v3198, %v3198
      %v3586 = vmul.f32 %v3199, %v3199
      %v3587 = vmul.f32 %v3200, %v3200
      %v3588 = vmul.f32 %v3201, %v3201
      %v3589 = vmul.f32 %v3202, %v3202
      %v3590 = vmul.f32 %v3203, %v3203
      %v3591 = vmul.f32 %v3204, %v3204
      %v3592 = vmul.f32 %v3205, %v3205
      %v3593 = vmul.f32 %v3206, %v3206
      %v3594 = vmul.f32 %v3207, %v3207
      %v3595 = vmul.f32 %v3208, %v3208
      %v3596 = vmul.f32 %v3209, %v3209
      %v3597 = vmul.f32 %v3210, %v3210
      %v3598 = vmul.f32 %v3211, %v3211
      %v3599 = vmul.f32 %v3212, %v3212
      %v3600 = vmul.f32 %v3213, %v3213
      %v3601 = vmul.f32 %v3214, %v3214
      %v3602 = vmul.f32 %v3215, %v3215
      %3667 = vst [vmem:[#allocation1] ss:$4 sm:$0xff] %v3539
      %s3668 = scalar_lea.vmem [#allocation1], 1
      %3669 = vst [vmem:[%s3668] ss:$4 sm:$0xff] %v3540
      %s3670 = scalar_lea.vmem [#allocation1], 2
      %3671 = vst [vmem:[%s3670] ss:$4 sm:$0xff] %v3541
      %s3672 = scalar_lea.vmem [#allocation1], 3
      %3673 = vst [vmem:[%s3672] ss:$4 sm:$0xff] %v3542
      %s3674 = scalar_lea.vmem [#allocation1], 32
      %3675 = vst [vmem:[%s3674] ss:$4 sm:$0xff] %v3543
      %s3676 = scalar_lea.vmem [#allocation1], 33
      %3677 = vst [vmem:[%s3676] ss:$4 sm:$0xff] %v3544
      %s3678 = scalar_lea.vmem [#allocation1], 34
      %3679 = vst [vmem:[%s3678] ss:$4 sm:$0xff] %v3545
      %s3680 = scalar_lea.vmem [#allocation1], 35
      %3681 = vst [vmem:[%s3680] ss:$4 sm:$0xff] %v3546
      %v3682 = vld.sshfl [vmem:[#allocation1] sm:$0xff pattern:$0x73625140]
      %v3683 = vld.sshfl [vmem:[#allocation1 + $0x20] sm:$0xff pattern:$0x73625140]
      %3684 = vst [vmem:[#allocation1] ss:$4 sm:$0xff] %v3547
      %3685 = vst [vmem:[%s3668] ss:$4 sm:$0xff] %v3548
      %3686 = vst [vmem:[%s3670] ss:$4 sm:$0xff] %v3549
      %3687 = vst [vmem:[%s3672] ss:$4 sm:$0xff] %v3550
      %3688 = vst [vmem:[%s3674] ss:$4 sm:$0xff] %v3551
      %3689 = vst [vmem:[%s3676] ss:$4 sm:$0xff] %v3552
      %3690 = vst [vmem:[%s3678] ss:$4 sm:$0xff] %v3553
      %3691 = vst [vmem:[%s3680] ss:$4 sm:$0xff] %v3554
      %v3692 = vld.sshfl [vmem:[#allocation1] sm:$0xff pattern:$0x73625140]
      %v3693 = vld.sshfl [vmem:[#allocation1 + $0x20] sm:$0xff pattern:$0x73625140]
      %3694 = vst [vmem:[#allocation1] ss:$4 sm:$0xff] %v3555
      %3695 = vst [vmem:[%s3668] ss:$4 sm:$0xff] %v3556
      %3696 = vst [vmem:[%s3670] ss:$4 sm:$0xff] %v3557
      %3697 = vst [vmem:[%s3672] ss:$4 sm:$0xff] %v3558
      %3698 = vst [vmem:[%s3674] ss:$4 sm:$0xff] %v3559
      %3699 = vst [vmem:[%s3676] ss:$4 sm:$0xff] %v3560
      %3700 = vst [vmem:[%s3678] ss:$4 sm:$0xff] %v3561
      %3701 = vst [vmem:[%s3680] ss:$4 sm:$0xff] %v3562
      %v3702 = vld.sshfl [vmem:[#allocation1] sm:$0xff pattern:$0x73625140]
      %v3703 = vld.sshfl [vmem:[#allocation1 + $0x20] sm:$0xff pattern:$0x73625140]
      %3704 = vst [vmem:[#allocation1] ss:$4 sm:$0xff] %v3563
      %3705 = vst [vmem:[%s3668] ss:$4 sm:$0xff] %v3564
      %3706 = vst [vmem:[%s3670] ss:$4 sm:$0xff] %v3565
      %3707 = vst [vmem:[%s3672] ss:$4 sm:$0xff] %v3566
      %3708 = vst [vmem:[%s3674] ss:$4 sm:$0xff] %v3567
      %3709 = vst [vmem:[%s3676] ss:$4 sm:$0xff] %v3568
      %3710 = vst [vmem:[%s3678] ss:$4 sm:$0xff] %v3569
      %3711 = vst [vmem:[%s3680] ss:$4 sm:$0xff] %v3570
      %v3712 = vld.sshfl [vmem:[#allocation1] sm:$0xff pattern:$0x73625140]
      %v3713 = vld.sshfl [vmem:[#allocation1 + $0x20] sm:$0xff pattern:$0x73625140]
      %3714 = vst [vmem:[#allocation1] ss:$4 sm:$0xff] %v3571
      %3715 = vst [vmem:[%s3668] ss:$4 sm:$0xff] %v3572
      %3716 = vst [vmem:[%s3670] ss:$4 sm:$0xff] %v3573
      %3717 = vst [vmem:[%s3672] ss:$4 sm:$0xff] %v3574
      %3718 = vst [vmem:[%s3674] ss:$4 sm:$0xff] %v3575
      %3719 = vst [vmem:[%s3676] ss:$4 sm:$0xff] %v3576
      %3720 = vst [vmem:[%s3678] ss:$4 sm:$0xff] %v3577
      %3721 = vst [vmem:[%s3680] ss:$4 sm:$0xff] %v3578
      %v3722 = vld.sshfl [vmem:[#allocation1] sm:$0xff pattern:$0x73625140]
      %v3723 = vld.sshfl [vmem:[#allocation1 + $0x20] sm:$0xff pattern:$0x73625140]
      %3724 = vst [vmem:[#allocation1] ss:$4 sm:$0xff] %v3579
      %3725 = vst [vmem:[%s3668] ss:$4 sm:$0xff] %v3580
      %3726 = vst [vmem:[%s3670] ss:$4 sm:$0xff] %v3581
      %3727 = vst [vmem:[%s3672] ss:$4 sm:$0xff] %v3582
      %3728 = vst [vmem:[%s3674] ss:$4 sm:$0xff] %v3583
      %3729 = vst [vmem:[%s3676] ss:$4 sm:$0xff] %v3584
      %3730 = vst [vmem:[%s3678] ss:$4 sm:$0xff] %v3585
      %3731 = vst [vmem:[%s3680] ss:$4 sm:$0xff] %v3586
      %v3732 = vld.sshfl [vmem:[#allocation1] sm:$0xff pattern:$0x73625140]
      %v3733 = vld.sshfl [vmem:[#allocation1 + $0x20] sm:$0xff pattern:$0x73625140]
      %3734 = vst [vmem:[#allocation1] ss:$4 sm:$0xff] %v3587
      %3735 = vst [vmem:[%s3668] ss:$4 sm:$0xff] %v3588
      %3736 = vst [vmem:[%s3670] ss:$4 sm:$0xff] %v3589
      %3737 = vst [vmem:[%s3672] ss:$4 sm:$0xff] %v3590
      %3738 = vst [vmem:[%s3674] ss:$4 sm:$0xff] %v3591
      %3739 = vst [vmem:[%s3676] ss:$4 sm:$0xff] %v3592
      %3740 = vst [vmem:[%s3678] ss:$4 sm:$0xff] %v3593
      %3741 = vst [vmem:[%s3680] ss:$4 sm:$0xff] %v3594
      %v3742 = vld.sshfl [vmem:[#allocation1] sm:$0xff pattern:$0x73625140]
      %v3743 = vld.sshfl [vmem:[#allocation1 + $0x20] sm:$0xff pattern:$0x73625140]
      %3744 = vst [vmem:[#allocation1] ss:$4 sm:$0xff] %v3595
      %3745 = vst [vmem:[%s3668] ss:$4 sm:$0xff] %v3596
      %3746 = vst [vmem:[%s3670] ss:$4 sm:$0xff] %v3597
      %3747 = vst [vmem:[%s3672] ss:$4 sm:$0xff] %v3598
      %3748 = vst [vmem:[%s3674] ss:$4 sm:$0xff] %v3599
      %3749 = vst [vmem:[%s3676] ss:$4 sm:$0xff] %v3600
      %3750 = vst [vmem:[%s3678] ss:$4 sm:$0xff] %v3601
      %3751 = vst [vmem:[%s3680] ss:$4 sm:$0xff] %v3602
      %v3752 = vld.sshfl [vmem:[#allocation1] sm:$0xff pattern:$0x73625140]
      %v3753 = vld.sshfl [vmem:[#allocation1 + $0x20] sm:$0xff pattern:$0x73625140]
      %v3770 = vadd.f32 %v3682, %v3683
      %v3771 = vadd.f32 %v3770, %v3692
      %v3772 = vadd.f32 %v3771, %v3693
      %v3773 = vadd.f32 %v3772, %v3702
      %v3774 = vadd.f32 %v3773, %v3703
      %v3775 = vadd.f32 %v3774, %v3712
      %v3776 = vadd.f32 %v3775, %v3713
      %v3777 = vadd.f32 %v3776, %v3722
      %v3778 = vadd.f32 %v3777, %v3723
      %v3779 = vadd.f32 %v3778, %v3732
      %v3780 = vadd.f32 %v3779, %v3733
      %v3781 = vadd.f32 %v3780, %v3742
      %v3782 = vadd.f32 %v3781, %v3743
      %v3783 = vadd.f32 %v3782, %v3752
      %v3784 = vadd.f32 %v3783, %v3753
      %v3785 = vrot.slane %v3784, 4
      %v3786 = vadd.f32 %v3784, %v3785
      %v3787 = vrot.slane %v3786, 2
      %v3788 = vadd.f32 %v3786, %v3787
      %v3789 = vrot.slane %v3788, 1
      %v3790 = vadd.f32 %v3788, %v3789
      %vm3791 = vcmask 1040384
      %v3792 = vsel %vm3791, %v3538, %v3790
      %3793 = vst [vmem:[%s492] sm:$0x3] %v3792
      %s3794 = smul.u32 8, %s25
      %p3795 = scmp.lt.s32.totalorder %s24, 1
      %s3796 = scalar_select %p3795, %s24, 1
      %p3797 = scmp.lt.s32.totalorder %s3794, 15
      %s3798 = scalar_select %p3797, %s3794, 15
      %s3799 = smul.addr %s3798, 2
      %s3800 = smul.addr %s3796, 32
      %s3801 = sadd.s32 %s3799, %s3800
      %s3802 = smul.addr %s3801, 4
      %s3803 = scalar_lea.vmem %s7, %s3802
      %s3804 = smul.u32 %s24, 2
      %s3805 = sadd.s32 %s3804, %s25
      %p3806 = scmp.lt.s32.totalorder %s3805, 3
      %s3807 = scalar_select %p3806, %s3805, 3
      %s3808 = smul.addr %s3807, 2
      %s3809 = scalar_lea.vmem %s8, %s3808
      // Predicated region
      $region49: #{residual_block_forward.6} parent=47 // pred_check
        %p3810 = pneg %p236
      $region50: #{residual_block_forward.6} parent=47 // pred_check_branch
        %3812 = sbr.rel (%p3810) target = $region52
      $region51: #{residual_block_forward.6} parent=47 // pred_region
        %s3813 = smul.u32 8, %s25
      $region52: #{residual_block_forward.6} parent=47 // pred_fallthru
        _
      // Predicated region
      $region53: #{residual_block_forward.6} parent=47 // pred_check
        %p3814 = pneg %p266
      $region54: #{residual_block_forward.6} parent=47 // pred_check_branch
        %3816 = sbr.rel (%p3814) target = $region56
      $region55: #{residual_block_forward.6} parent=47 // pred_region
        %s3817 = smul.u32 %s24, 2
        %s3818 = sadd.s32 %s3817, %s25
      $region56: #{residual_block_forward.6} parent=47 // pred_fallthru
        _
    $region48: #{residual_block_forward.6} parent=5 // pred_fallthru
      _
    %p3819 = scmp.le.s32.totalorder 2, %s15
    // Predicated region
    $region57: #{residual_block_forward.6} parent=5 // pred_check
      %p3820 = pneg %p3819
    $region58: #{residual_block_forward.6} parent=5 // pred_check_branch
      %3822 = sbr.rel (%p3820) target = $region60
    $region59: #{residual_block_forward.6} parent=5 // pred_region
      %s3823 = ssub.s32 %s15, 2
      // Predicated region
      $region61: #{residual_block_forward.6} parent=59 // pred_check
        %p3824 = pneg %p242
      $region62: #{residual_block_forward.6} parent=59 // pred_check_branch
        %3826 = sbr.rel (%p3824) target = $region64
      $region63: #{residual_block_forward.6} parent=59 // pred_region
        %s3827 = smul.u32 8, %s27
        %p3828 = scmp.lt.s32.totalorder %s26, 1
        %s3829 = scalar_select %p3828, %s26, 1
        %p3830 = scmp.lt.s32.totalorder %s3827, 15
        %s3831 = scalar_select %p3830, %s3827, 15
        %s3832 = smul.addr %s3831, 2
        %s3833 = smul.addr %s3829, 32
        %s3834 = sadd.s32 %s3832, %s3833
        %s3835 = smul.addr %s3834, 4
        %s3836 = scalar_lea.vmem %s7, %s3835
      $region64: #{residual_block_forward.6} parent=59 // pred_fallthru
        _
      // Predicated region
      $region65: #{residual_block_forward.6} parent=59 // pred_check
        %p3837 = pneg %p272
      $region66: #{residual_block_forward.6} parent=59 // pred_check_branch
        %3839 = sbr.rel (%p3837) target = $region68
      $region67: #{residual_block_forward.6} parent=59 // pred_region
        %s3840 = smul.u32 %s26, 2
        %s3841 = sadd.s32 %s3840, %s27
        %p3842 = scmp.lt.s32.totalorder %s3841, 3
        %s3843 = scalar_select %p3842, %s3841, 3
        %s3844 = smul.addr %s3843, 2
        %s3845 = scalar_lea.vmem %s8, %s3844
      $region68: #{residual_block_forward.6} parent=59 // pred_fallthru
        _
    $region60: #{residual_block_forward.6} parent=5 // pred_fallthru
      _
  $region6: #{residual_block_forward.6} parent=0 // loop_footer
    %s19 = sadd.s32 1, %s15
  $region7: #{residual_block_forward.6} parent=0 // loop_footer_branch
    %14 = sbr.rel target = $region3
  $region8: #{residual_block_forward.6} parent=0 // loop_exit
    _

</llo_original>
